<compile_context>
chip_gen: v7x
topology: tpu7x:2x2x1
jax: 0.10.0
libtpu: 0.0.40
codegen_flags: <defaults>
</compile_context>

<pallas_src>
import functools

import jax
import jax.numpy as jnp
import numpy as np
from jax.experimental import pallas as pl
from jax.experimental.pallas import tpu as pltpu

LANES = 128
EPS = 1e-5


def _round_up(x, m):
    return (x + m - 1) // m * m


def _pad_last(a, target):
    c = a.shape[-1]
    if c == target:
        return a
    pad = [(0, 0)] * (a.ndim - 1) + [(0, target - c)]
    return jnp.pad(a, pad)


def _full_spec(shape):
    zeros = (0,) * len(shape)
    # TODO(synk): mark these invariant operands single-buffered
    # (pipeline_mode=pl.Buffered(1)) once verified on the target jaxlib;
    # recovers ~one weight block of VMEM on the 64 MiB v7x part.
    return pl.BlockSpec(shape, lambda *_: zeros)


def _prep_weight(w_hwio, cp_in, cp_out):
    """(3,3,Cin,Cout) HWIO -> channel-padded, kx folded into K: (3, 3*cp_in, cp_out) bf16."""
    kh, kw, ci, co = w_hwio.shape
    w = jnp.pad(w_hwio, ((0, 0), (0, 0), (0, cp_in - ci), (0, cp_out - co)))
    return w.reshape(kh, kw * cp_in, cp_out).astype(jnp.bfloat16)


# ----------------------------------------------------------------------------
# Kernel 1: [optional fused BN+ReLU on input] + 3x3 conv + bias
#           + per-image BN partial sums.   grid = (batch, n_row_tiles)
# ----------------------------------------------------------------------------
def conv_stats_kernel(*refs, TH, H, W, apply_act):
    if apply_act:
        (x_hbm, w_ref, b_ref, sc_ref, sh_ref,
         h_ref, st_ref, xbuf, sem) = refs
    else:
        (x_hbm, w_ref, b_ref,
         h_ref, st_ref, xbuf, sem) = refs
        sc_ref = sh_ref = None

    b = pl.program_id(0)
    i = pl.program_id(1)
    n = pl.num_programs(1)
    cin = xbuf.shape[-1]
    cout = w_ref.shape[-1]
    slot = i & 1

    # --- halo'd input window straight from the UNPADDED (B, H, W, cin) tensor:
    # 3 DMAs per row tile (TH-row body always; 1-row top/bottom halo only where
    # they exist).  Rows that were not DMA'd (image border) hold stale VMEM and
    # are zeroed by the validity mask below.
    def dma(kind, j, s):
        if kind == 0:      # body rows [j*TH, j*TH+TH) -> buffer rows [1, TH+1)
            return pltpu.make_async_copy(
                x_hbm.at[b, pl.ds(j * TH, TH)],
                xbuf.at[s, pl.ds(1, TH)], sem.at[s, 0])
        if kind == 1:      # top halo row j*TH-1 -> buffer row 0
            return pltpu.make_async_copy(
                x_hbm.at[b, pl.ds(j * TH - 1, 1)],
                xbuf.at[s, pl.ds(0, 1)], sem.at[s, 1])
        # bottom halo row j*TH+TH -> buffer row TH+1
        return pltpu.make_async_copy(
            x_hbm.at[b, pl.ds(j * TH + TH, 1)],
            xbuf.at[s, pl.ds(TH + 1, 1)], sem.at[s, 2])

    def start_tile(j, s):
        dma(0, j, s).start()

        @pl.when(j > 0)
        def _():
            dma(1, j, s).start()

        @pl.when(j < n - 1)
        def _():
            dma(2, j, s).start()

    def wait_tile(j, s):
        dma(0, j, s).wait()

        @pl.when(j > 0)
        def _():
            dma(1, j, s).wait()

        @pl.when(j < n - 1)
        def _():
            dma(2, j, s).wait()

    # Prime the double buffer at the first row tile of every image.
    # TODO(synk): cross-image prefetch (start (b+1, 0) at the last row tile)
    # would hide the once-per-image DMA exposure but conflicts with keeping the
    # batch axis "parallel" for megacore (v7x); batch-parallel wins here.
    @pl.when(i == 0)
    def _():
        start_tile(i, slot)

    # Wait for this tile's window (descriptors rebuilt identically).
    wait_tile(i, slot)

    # Prefetch the next row tile of this image; overlaps the compute below.
    @pl.when(i + 1 < n)
    def _():
        start_tile(i + 1, (i + 1) & 1)

    xt = xbuf[slot]                                   # (TH+2, W, cin) bf16

    # Buffer row r holds logical image row i*TH - 1 + r; rows outside [0, H)
    # are the conv's zero padding (and may contain stale VMEM) -> mask to zero.
    r = jax.lax.broadcasted_iota(jnp.int32, (TH + 2, 1, 1), 0) + i * TH - 1
    valid = (r >= 0) & (r < H)

    if apply_act:
        # BN+ReLU of the previous stage fused onto the input path, restricted
        # to the W valid columns (f32 VPU math), then back to bf16 for the MXU.
        x32 = xt.astype(jnp.float32) * sc_ref[...] + sh_ref[...]
        a = jnp.where(valid, jnp.maximum(x32, 0.0), 0.0).astype(jnp.bfloat16)
    else:
        a = jnp.where(valid, xt, jnp.zeros((), xt.dtype))

    # Build the kx-shifted im2col slab ONCE per tile: (TH+2, W, 3*cin),
    # K ordered [kx=0 | kx=1 | kx=2] to match the folded weight layout.
    zcol = jnp.zeros((TH + 2, 1, cin), a.dtype)
    left = jnp.concatenate([zcol, a[:, :W - 1, :]], axis=1)    # input col x-1
    right = jnp.concatenate([a[:, 1:, :], zcol], axis=1)       # input col x+1
    big = jnp.concatenate([left, a, right], axis=-1)

    # 3x3 conv as 3 wide-K bf16 MXU matmuls (kx folded into the contraction).
    acc = jnp.zeros((TH * W, cout), jnp.float32)
    for ky in range(3):
        patch = big[ky:ky + TH].reshape(TH * W, 3 * cin)
        acc = acc + jnp.dot(patch, w_ref[ky],
                            preferred_element_type=jnp.float32)
    acc = acc + b_ref[...]                            # conv bias

    hb = acc.astype(h_ref.dtype)                      # bf16 intermediate
    h_ref[...] = hb.reshape(1, TH, W, cout)

    # Batch-norm partial sums, computed from the same (bf16-rounded) values the
    # next stage normalizes; accumulated in the resident per-image stats block.
    h32 = hb.astype(jnp.float32)
    s1 = jnp.sum(h32, axis=0, keepdims=True)
    s2 = jnp.sum(h32 * h32, axis=0, keepdims=True)

    @pl.when(i == 0)
    def _():
        st_ref[...] = jnp.zeros_like(st_ref)

    st_ref[...] += jnp.concatenate([s1, s2], axis=0).reshape(1, 2, cout)


def _conv_stage(x, w, bias, scale_in, shift_in, *, TH, vmem_limit, apply_act):
    """x: (B, H, W, cp_in) bf16, UNPADDED spatially.  Returns pre-BN conv output
    (bf16, lane-dense) and per-image (sum, sumsq) stats (B, 2, cp_out)."""
    B, H, W, cin = x.shape
    cout = w.shape[-1]
    n_row_tiles = H // TH

    kernel = functools.partial(conv_stats_kernel, TH=TH, H=H, W=W,
                               apply_act=apply_act)

    in_specs = [pl.BlockSpec(memory_space=pl.ANY),    # input stays in HBM
                _full_spec(w.shape),
                _full_spec(bias.shape)]
    args = [x, w, bias]
    if apply_act:
        in_specs += [_full_spec(scale_in.shape), _full_spec(shift_in.shape)]
        args += [scale_in, shift_in]

    h, stats = pl.pallas_call(
        kernel,
        grid=(B, n_row_tiles),
        in_specs=in_specs,
        out_specs=[
            pl.BlockSpec((1, TH, W, cout), lambda b, i: (b, i, 0, 0)),
            # Stats block resident across the row-tile axis (written once per b).
            pl.BlockSpec((1, 2, cout), lambda b, i: (b, 0, 0)),
        ],
        out_shape=[
            jax.ShapeDtypeStruct((B, H, W, cout), jnp.bfloat16),
            jax.ShapeDtypeStruct((B, 2, cout), jnp.float32),
        ],
        scratch_shapes=[
            pltpu.VMEM((2, TH + 2, W, cin), jnp.bfloat16),   # halo double buffer
            pltpu.SemaphoreType.DMA((2, 3)),                 # slot x {body, top, bot}
        ],
        compiler_params=pltpu.CompilerParams(
            # Row-tile axis must stay "arbitrary": stats accumulator + double
            # buffer carry.  Batch axis is parallel for megacore (v7x).
            dimension_semantics=("parallel", "arbitrary"),
            vmem_limit_bytes=vmem_limit,
        ),
    )(*args)
    return h, stats


# ----------------------------------------------------------------------------
# Kernel 2: tiled elementwise BN + ReLU finalize (bf16 out).
# ----------------------------------------------------------------------------
def bn_relu_kernel(h_ref, sc_ref, sh_ref, o_ref):
    x = h_ref[...].astype(jnp.float32)
    o_ref[...] = jnp.maximum(x * sc_ref[...] + sh_ref[...], 0.0).astype(o_ref.dtype)


def _bn_relu_stage(h, scale, shift, *, TH, vmem_limit):
    B, H, W, c = h.shape
    return pl.pallas_call(
        bn_relu_kernel,
        grid=(B, H // TH),
        in_specs=[pl.BlockSpec((1, TH, W, c), lambda b, i: (b, i, 0, 0)),
                  _full_spec(scale.shape),
                  _full_spec(shift.shape)],
        out_specs=pl.BlockSpec((1, TH, W, c), lambda b, i: (b, i, 0, 0)),
        out_shape=jax.ShapeDtypeStruct((B, H, W, c), jnp.bfloat16),
        compiler_params=pltpu.CompilerParams(
            dimension_semantics=("parallel", "parallel"),
            vmem_limit_bytes=vmem_limit,
        ),
    )(h, scale, shift)


# ----------------------------------------------------------------------------
# BN finalize (tiny per-channel math) + generation-aware tiling heuristics
# ----------------------------------------------------------------------------
def _bn_scale_shift(stats, gamma, beta, count):
    s = jnp.sum(stats, axis=0)                           # (2, C)
    mean = s[0] / count
    var = jnp.maximum(s[1] / count - mean * mean, 0.0)   # biased batch variance
    scale = gamma * jax.lax.rsqrt(var + EPS)             # (1, C)
    shift = beta - mean * scale
    return scale, shift


def _vmem_config():
    """(vmem_limit_bytes, per-step tile budget) sized for the actual generation:
    96/36 MiB on 128 MiB-VMEM parts (v5e/v6e), 40/12 MiB on 64 MiB parts (v7x)."""
    cap = 64 * 1024 * 1024
    try:
        info = pltpu.get_tpu_info()
        cap = int(getattr(info, "vmem_capacity_bytes", cap) or cap)
    except Exception:
        pass
    if cap >= 100 * 1024 * 1024:
        return 96 * 1024 * 1024, 36 * 1024 * 1024
    return 40 * 1024 * 1024, 12 * 1024 * 1024


def _pick_row_tile(H, W, cin, cout, budget_bytes):
    # Largest row tile dividing H that fits the per-step working set, with a
    # preference for TH*W % 256 == 0 so the matmul M fills 256-wide MXU pushes.
    fixed = 2 * (9 * cin * cout * 2) + 16 * (cin + cout) * 4   # weights (x2 bufs) + vectors
    feasible = []
    for d in range(1, H + 1):
        if H % d:
            continue
        est = (2 * (d + 2) * W * cin * 2       # double-buffered halo input (bf16)
               + (d + 2) * W * 3 * cin * 2     # im2col slab (bf16)
               + (d + 2) * W * cin * 4         # fused-BN f32 temp
               + d * W * cout * 4              # f32 accumulator
               + 2 * d * W * cout * 2          # double-buffered output tile (bf16)
               + fixed)
        if est <= budget_bytes:
            feasible.append(d)
    if not feasible:
        return 1
    aligned = [d for d in feasible if (d * W) % 256 == 0]
    return max(aligned) if aligned else max(feasible)


# ----------------------------------------------------------------------------
# VGGBlock wrapper (NCHW in / NCHW out, like the PyTorch module)
# ----------------------------------------------------------------------------
def vgg_block(x_nchw, params, *, row_tile=None):
    x = jnp.transpose(x_nchw, (0, 2, 3, 1))                       # NCHW -> NHWC
    B, H, W, Cin = x.shape
    Cmid = params["g1"].shape[-1]
    Cout = params["g2"].shape[-1]
    cpi, cpm, cpo = (_round_up(c, LANES) for c in (Cin, Cmid, Cout))

    vmem_limit, tile_budget = _vmem_config()
    TH = row_tile if row_tile is not None else _pick_row_tile(
        H, W, max(cpi, cpm), max(cpm, cpo), tile_budget)
    assert H % TH == 0, (H, TH)

    w1 = _prep_weight(params["w1"], cpi, cpm)
    w2 = _prep_weight(params["w2"], cpm, cpo)
    b1 = _pad_last(params["b1"], cpm)
    b2 = _pad_last(params["b2"], cpo)
    g1 = _pad_last(params["g1"], cpm)
    be1 = _pad_last(params["be1"], cpm)
    g2 = _pad_last(params["g2"], cpo)
    be2 = _pad_last(params["be2"], cpo)

    count = float(B * H * W)

    # ---- stage 1: conv1 + batch statistics (input read unpadded from HBM) ----
    x1 = _pad_last(x, cpi).astype(jnp.bfloat16)
    h1, st1 = _conv_stage(x1, w1, b1, None, None,
                          TH=TH, vmem_limit=vmem_limit, apply_act=False)
    scale1, shift1 = _bn_scale_shift(st1, g1, be1, count)

    # ---- stage 2: BN1+ReLU fused onto conv2's input path; h1 is read
    #      unpadded, so there is no jnp.pad HBM round-trip over it ----
    h2, st2 = _conv_stage(h1, w2, b2, scale1, shift1,
                          TH=TH, vmem_limit=vmem_limit, apply_act=True)
    scale2, shift2 = _bn_scale_shift(st2, g2, be2, count)

    # ---- finalize: BN2 + ReLU (bf16 out); channel crop + transpose + f32 cast
    #      fuse into one XLA pass.
    # TODO(synk): return NHWC directly if the caller accepts it, dropping the
    # transpose pass entirely.
    y = _bn_relu_stage(h2, scale2, shift2, TH=TH, vmem_limit=vmem_limit)
    return jnp.transpose(y[..., :Cout].astype(jnp.float32), (0, 3, 1, 2))


# ----------------------------------------------------------------------------
# Pure-JAX f32 reference (mirrors the PyTorch module in training mode)
# ----------------------------------------------------------------------------
def vgg_block_ref(x_nchw, params):
    x = jnp.transpose(x_nchw, (0, 2, 3, 1)).astype(jnp.float32)

    def conv(x, w, b):
        y = jax.lax.conv_general_dilated(
            x, w, window_strides=(1, 1), padding="SAME",
            dimension_numbers=("NHWC", "HWIO", "NHWC"))
        return y + b.reshape(1, 1, 1, -1)

    def bn_relu(x, g, be):
        m = jnp.mean(x, axis=(0, 1, 2), keepdims=True)
        v = jnp.mean((x - m) ** 2, axis=(0, 1, 2), keepdims=True)
        y = (x - m) * jax.lax.rsqrt(v + EPS) * g.reshape(1, 1, 1, -1) \
            + be.reshape(1, 1, 1, -1)
        return jnp.maximum(y, 0.0)

    h = bn_relu(conv(x, params["w1"], params["b1"]), params["g1"], params["be1"])
    h = bn_relu(conv(h, params["w2"], params["b2"]), params["g2"], params["be2"])
    return jnp.transpose(h, (0, 3, 1, 2))


# ----------------------------------------------------------------------------
# Deterministic parameter init (shapes follow VGGBlock.__init__)
# ----------------------------------------------------------------------------
def init_params(key, in_channels, middle_channels, out_channels):
    ks = jax.random.split(key, 8)
    s1 = 1.0 / np.sqrt(in_channels * 9)
    s2 = 1.0 / np.sqrt(middle_channels * 9)
    return {
        "w1": jax.random.uniform(ks[0], (3, 3, in_channels, middle_channels),
                                 jnp.float32, -s1, s1),
        "b1": jax.random.uniform(ks[1], (1, middle_channels), jnp.float32, -s1, s1),
        "g1": 1.0 + 0.1 * jax.random.normal(ks[2], (1, middle_channels), jnp.float32),
        "be1": 0.1 * jax.random.normal(ks[3], (1, middle_channels), jnp.float32),
        "w2": jax.random.uniform(ks[4], (3, 3, middle_channels, out_channels),
                                 jnp.float32, -s2, s2),
        "b2": jax.random.uniform(ks[5], (1, out_channels), jnp.float32, -s2, s2),
        "g2": 1.0 + 0.1 * jax.random.normal(ks[6], (1, out_channels), jnp.float32),
        "be2": 0.1 * jax.random.normal(ks[7], (1, out_channels), jnp.float32),
    }


if __name__ == "__main__":
    key = jax.random.PRNGKey(0)
    k_x, k_p = jax.random.split(key)

    B, Cin, Cmid, Cout, H, W = 2, 4, 8, 4, 16, 16
    x = jax.random.normal(k_x, (B, Cin, H, W), jnp.float32)   # NCHW, like PyTorch
    params = init_params(k_p, Cin, Cmid, Cout)

    ref = jax.block_until_ready(vgg_block_ref(x, params))

    # Multi-row-tile path (exercises the 3-DMA halo assembly + double buffering).
    fwd_halo = jax.jit(functools.partial(vgg_block, row_tile=8))
    out = jax.block_until_ready(fwd_halo(x, params))
    assert out.shape == (B, Cout, H, W), out.shape
    # bf16 MXU inputs, bf16 intermediates and bf16 final store => relaxed tol.
    np.testing.assert_allclose(np.asarray(out), np.asarray(ref),
                               rtol=4e-2, atol=4e-2)

    # Auto-tiled path (generation-aware tile selection, single row tile here).
    fwd_auto = jax.jit(vgg_block)
    out2 = jax.block_until_ready(fwd_auto(x, params))
    np.testing.assert_allclose(np.asarray(out2), np.asarray(ref),
                               rtol=4e-2, atol=4e-2)

    print("KERNEL_OK")
</pallas_src>

<mosaic_0001>
module attributes {stable_mosaic.version = 11 : i64} {
  func.func @conv_stats_kernel(%arg0: i32, %arg1: i32, %arg2: memref<2x16x16x128xbf16, #tpu.memory_space<any>>, %arg3: memref<3x384x128xbf16, #tpu.memory_space<vmem>>, %arg4: memref<1x128xf32, #tpu.memory_space<vmem>>, %arg5: memref<1x8x16x128xbf16, #tpu.memory_space<vmem>>, %arg6: memref<1x2x128xf32, #tpu.memory_space<vmem>>, %arg7: memref<2x10x16x128xbf16, #tpu.memory_space<vmem>>, %arg8: memref<2x3x!tpu.dma_semaphore, #tpu.memory_space<semaphore_mem>>) attributes {dimension_semantics = [#tpu.dimension_semantics<parallel>, #tpu.dimension_semantics<arbitrary>], iteration_bounds = array<i64: 2, 2>, scalar_prefetch = 0 : i64, scratch_operands = 2 : i64, tpu.core_type = #tpu.core_type<tc>, window_params = [{}, {pipeline_mode = #tpu.pipeline_mode<synchronous>, transform_indices = @transform_1, window_bounds = array<i64: 3, 384, 128>}, {pipeline_mode = #tpu.pipeline_mode<synchronous>, transform_indices = @transform_2, window_bounds = array<i64: 1, 128>}, {transform_indices = @transform_3, window_bounds = array<i64: 1, 8, 16, 128>}, {transform_indices = @transform_4, window_bounds = array<i64: 1, 2, 128>}]} {
    %c1_i32 = arith.constant 1 : i32
    %0 = arith.andi %arg1, %c1_i32 : i32
    %c0_i32 = arith.constant 0 : i32
    %1 = arith.cmpi eq, %arg1, %c0_i32 : i32
    %2 = arith.extui %1 : i1 to i32
    %c0_i32_0 = arith.constant 0 : i32
    %3 = arith.cmpi ne, %2, %c0_i32_0 : i32
    scf.if %3 {
      %c8_i32_46 = arith.constant 8 : i32
      %84 = arith.muli %arg1, %c8_i32_46 : i32
      %c0_i32_47 = arith.constant 0 : i32
      %c0_i32_48 = arith.constant 0 : i32
      %c0_i32_49 = arith.constant 0 : i32
      %85 = tpu.memref_slice %arg2[%arg0, %84, %c0_i32_48, %c0_i32_49] : memref<2x16x16x128xbf16, #tpu.memory_space<any>> -> memref<1x8x16x128xbf16, #tpu.memory_space<any>>
      %86 = tpu.memref_squeeze %85 : memref<1x8x16x128xbf16, #tpu.memory_space<any>> -> memref<8x16x128xbf16, #tpu.memory_space<any>>
      %c1_i32_50 = arith.constant 1 : i32
      %c0_i32_51 = arith.constant 0 : i32
      %c0_i32_52 = arith.constant 0 : i32
      %87 = tpu.memref_slice %arg7[%0, %c1_i32_50, %c0_i32_51, %c0_i32_52] : memref<2x10x16x128xbf16, #tpu.memory_space<vmem>> -> memref<1x8x16x128xbf16, #tpu.memory_space<vmem>>
      %88 = tpu.memref_squeeze %87 : memref<1x8x16x128xbf16, #tpu.memory_space<vmem>> -> memref<8x16x128xbf16, #tpu.memory_space<vmem>>
      %89 = tpu.memref_slice %arg8[%0, %c0_i32_47] : memref<2x3x!tpu.dma_semaphore, #tpu.memory_space<semaphore_mem>> -> memref<1x1x!tpu.dma_semaphore, #tpu.memory_space<semaphore_mem>>
      %90 = tpu.memref_squeeze %89 : memref<1x1x!tpu.dma_semaphore, #tpu.memory_space<semaphore_mem>> -> memref<!tpu.dma_semaphore, #tpu.memory_space<semaphore_mem>>
      tpu.enqueue_dma source(%86 : memref<8x16x128xbf16, #tpu.memory_space<any>>) target(%88 : memref<8x16x128xbf16, #tpu.memory_space<vmem>>) target_semaphore(%90 : memref<!tpu.dma_semaphore, #tpu.memory_space<semaphore_mem>>)
      %c0_i32_53 = arith.constant 0 : i32
      %91 = arith.cmpi sgt, %arg1, %c0_i32_53 : i32
      %92 = arith.extui %91 : i1 to i32
      %c0_i32_54 = arith.constant 0 : i32
      %93 = arith.cmpi ne, %92, %c0_i32_54 : i32
      scf.if %93 {
        %c8_i32_57 = arith.constant 8 : i32
        %97 = arith.muli %arg1, %c8_i32_57 : i32
        %c1_i32_58 = arith.constant 1 : i32
        %98 = arith.subi %97, %c1_i32_58 : i32
        %c1_i32_59 = arith.constant 1 : i32
        %c0_i32_60 = arith.constant 0 : i32
        %c0_i32_61 = arith.constant 0 : i32
        %99 = tpu.memref_slice %arg2[%arg0, %98, %c0_i32_60, %c0_i32_61] : memref<2x16x16x128xbf16, #tpu.memory_space<any>> -> memref<1x1x16x128xbf16, #tpu.memory_space<any>>
        %100 = tpu.memref_squeeze %99 : memref<1x1x16x128xbf16, #tpu.memory_space<any>> -> memref<1x16x128xbf16, #tpu.memory_space<any>>
        %c0_i32_62 = arith.constant 0 : i32
        %c0_i32_63 = arith.constant 0 : i32
        %c0_i32_64 = arith.constant 0 : i32
        %101 = tpu.memref_slice %arg7[%0, %c0_i32_62, %c0_i32_63, %c0_i32_64] : memref<2x10x16x128xbf16, #tpu.memory_space<vmem>> -> memref<1x1x16x128xbf16, #tpu.memory_space<vmem>>
        %102 = tpu.memref_squeeze %101 : memref<1x1x16x128xbf16, #tpu.memory_space<vmem>> -> memref<1x16x128xbf16, #tpu.memory_space<vmem>>
        %103 = tpu.memref_slice %arg8[%0, %c1_i32_59] : memref<2x3x!tpu.dma_semaphore, #tpu.memory_space<semaphore_mem>> -> memref<1x1x!tpu.dma_semaphore, #tpu.memory_space<semaphore_mem>>
        %104 = tpu.memref_squeeze %103 : memref<1x1x!tpu.dma_semaphore, #tpu.memory_space<semaphore_mem>> -> memref<!tpu.dma_semaphore, #tpu.memory_space<semaphore_mem>>
        tpu.enqueue_dma source(%100 : memref<1x16x128xbf16, #tpu.memory_space<any>>) target(%102 : memref<1x16x128xbf16, #tpu.memory_space<vmem>>) target_semaphore(%104 : memref<!tpu.dma_semaphore, #tpu.memory_space<semaphore_mem>>)
      } else {
      }
      %c1_i32_55 = arith.constant 1 : i32
      %94 = arith.cmpi slt, %arg1, %c1_i32_55 : i32
      %95 = arith.extui %94 : i1 to i32
      %c0_i32_56 = arith.constant 0 : i32
      %96 = arith.cmpi ne, %95, %c0_i32_56 : i32
      scf.if %96 {
        %c8_i32_57 = arith.constant 8 : i32
        %97 = arith.muli %arg1, %c8_i32_57 : i32
        %c8_i32_58 = arith.constant 8 : i32
        %98 = arith.addi %97, %c8_i32_58 : i32
        %c2_i32_59 = arith.constant 2 : i32
        %c0_i32_60 = arith.constant 0 : i32
        %c0_i32_61 = arith.constant 0 : i32
        %99 = tpu.memref_slice %arg2[%arg0, %98, %c0_i32_60, %c0_i32_61] : memref<2x16x16x128xbf16, #tpu.memory_space<any>> -> memref<1x1x16x128xbf16, #tpu.memory_space<any>>
        %100 = tpu.memref_squeeze %99 : memref<1x1x16x128xbf16, #tpu.memory_space<any>> -> memref<1x16x128xbf16, #tpu.memory_space<any>>
        %c9_i32 = arith.constant 9 : i32
        %c0_i32_62 = arith.constant 0 : i32
        %c0_i32_63 = arith.constant 0 : i32
        %101 = tpu.memref_slice %arg7[%0, %c9_i32, %c0_i32_62, %c0_i32_63] : memref<2x10x16x128xbf16, #tpu.memory_space<vmem>> -> memref<1x1x16x128xbf16, #tpu.memory_space<vmem>>
        %102 = tpu.memref_squeeze %101 : memref<1x1x16x128xbf16, #tpu.memory_space<vmem>> -> memref<1x16x128xbf16, #tpu.memory_space<vmem>>
        %103 = tpu.memref_slice %arg8[%0, %c2_i32_59] : memref<2x3x!tpu.dma_semaphore, #tpu.memory_space<semaphore_mem>> -> memref<1x1x!tpu.dma_semaphore, #tpu.memory_space<semaphore_mem>>
        %104 = tpu.memref_squeeze %103 : memref<1x1x!tpu.dma_semaphore, #tpu.memory_space<semaphore_mem>> -> memref<!tpu.dma_semaphore, #tpu.memory_space<semaphore_mem>>
        tpu.enqueue_dma source(%100 : memref<1x16x128xbf16, #tpu.memory_space<any>>) target(%102 : memref<1x16x128xbf16, #tpu.memory_space<vmem>>) target_semaphore(%104 : memref<!tpu.dma_semaphore, #tpu.memory_space<semaphore_mem>>)
      } else {
      }
    } else {
    }
    %c8_i32 = arith.constant 8 : i32
    %4 = arith.muli %arg1, %c8_i32 : i32
    %c0_i32_1 = arith.constant 0 : i32
    %c0_i32_2 = arith.constant 0 : i32
    %c0_i32_3 = arith.constant 0 : i32
    %5 = tpu.memref_slice %arg2[%arg0, %4, %c0_i32_2, %c0_i32_3] : memref<2x16x16x128xbf16, #tpu.memory_space<any>> -> memref<1x8x16x128xbf16, #tpu.memory_space<any>>
    %6 = tpu.memref_squeeze %5 : memref<1x8x16x128xbf16, #tpu.memory_space<any>> -> memref<8x16x128xbf16, #tpu.memory_space<any>>
    %c1_i32_4 = arith.constant 1 : i32
    %c0_i32_5 = arith.constant 0 : i32
    %c0_i32_6 = arith.constant 0 : i32
    %7 = tpu.memref_slice %arg7[%0, %c1_i32_4, %c0_i32_5, %c0_i32_6] : memref<2x10x16x128xbf16, #tpu.memory_space<vmem>> -> memref<1x8x16x128xbf16, #tpu.memory_space<vmem>>
    %8 = tpu.memref_squeeze %7 : memref<1x8x16x128xbf16, #tpu.memory_space<vmem>> -> memref<8x16x128xbf16, #tpu.memory_space<vmem>>
    %9 = tpu.memref_slice %arg8[%0, %c0_i32_1] : memref<2x3x!tpu.dma_semaphore, #tpu.memory_space<semaphore_mem>> -> memref<1x1x!tpu.dma_semaphore, #tpu.memory_space<semaphore_mem>>
    %10 = tpu.memref_squeeze %9 : memref<1x1x!tpu.dma_semaphore, #tpu.memory_space<semaphore_mem>> -> memref<!tpu.dma_semaphore, #tpu.memory_space<semaphore_mem>>
    tpu.wait_dma2 semaphore(%10 : memref<!tpu.dma_semaphore, #tpu.memory_space<semaphore_mem>>) src(%6 : memref<8x16x128xbf16, #tpu.memory_space<any>>) dst(%8 : memref<8x16x128xbf16, #tpu.memory_space<vmem>>)
    %c0_i32_7 = arith.constant 0 : i32
    %11 = arith.cmpi sgt, %arg1, %c0_i32_7 : i32
    %12 = arith.extui %11 : i1 to i32
    %c0_i32_8 = arith.constant 0 : i32
    %13 = arith.cmpi ne, %12, %c0_i32_8 : i32
    scf.if %13 {
      %c8_i32_46 = arith.constant 8 : i32
      %84 = arith.muli %arg1, %c8_i32_46 : i32
      %c1_i32_47 = arith.constant 1 : i32
      %85 = arith.subi %84, %c1_i32_47 : i32
      %c1_i32_48 = arith.constant 1 : i32
      %c0_i32_49 = arith.constant 0 : i32
      %c0_i32_50 = arith.constant 0 : i32
      %86 = tpu.memref_slice %arg2[%arg0, %85, %c0_i32_49, %c0_i32_50] : memref<2x16x16x128xbf16, #tpu.memory_space<any>> -> memref<1x1x16x128xbf16, #tpu.memory_space<any>>
      %87 = tpu.memref_squeeze %86 : memref<1x1x16x128xbf16, #tpu.memory_space<any>> -> memref<1x16x128xbf16, #tpu.memory_space<any>>
      %c0_i32_51 = arith.constant 0 : i32
      %c0_i32_52 = arith.constant 0 : i32
      %c0_i32_53 = arith.constant 0 : i32
      %88 = tpu.memref_slice %arg7[%0, %c0_i32_51, %c0_i32_52, %c0_i32_53] : memref<2x10x16x128xbf16, #tpu.memory_space<vmem>> -> memref<1x1x16x128xbf16, #tpu.memory_space<vmem>>
      %89 = tpu.memref_squeeze %88 : memref<1x1x16x128xbf16, #tpu.memory_space<vmem>> -> memref<1x16x128xbf16, #tpu.memory_space<vmem>>
      %90 = tpu.memref_slice %arg8[%0, %c1_i32_48] : memref<2x3x!tpu.dma_semaphore, #tpu.memory_space<semaphore_mem>> -> memref<1x1x!tpu.dma_semaphore, #tpu.memory_space<semaphore_mem>>
      %91 = tpu.memref_squeeze %90 : memref<1x1x!tpu.dma_semaphore, #tpu.memory_space<semaphore_mem>> -> memref<!tpu.dma_semaphore, #tpu.memory_space<semaphore_mem>>
      tpu.wait_dma2 semaphore(%91 : memref<!tpu.dma_semaphore, #tpu.memory_space<semaphore_mem>>) src(%87 : memref<1x16x128xbf16, #tpu.memory_space<any>>) dst(%89 : memref<1x16x128xbf16, #tpu.memory_space<vmem>>)
    } else {
    }
    %c1_i32_9 = arith.constant 1 : i32
    %14 = arith.cmpi slt, %arg1, %c1_i32_9 : i32
    %15 = arith.extui %14 : i1 to i32
    %c0_i32_10 = arith.constant 0 : i32
    %16 = arith.cmpi ne, %15, %c0_i32_10 : i32
    scf.if %16 {
      %c8_i32_46 = arith.constant 8 : i32
      %84 = arith.muli %arg1, %c8_i32_46 : i32
      %c8_i32_47 = arith.constant 8 : i32
      %85 = arith.addi %84, %c8_i32_47 : i32
      %c2_i32_48 = arith.constant 2 : i32
      %c0_i32_49 = arith.constant 0 : i32
      %c0_i32_50 = arith.constant 0 : i32
      %86 = tpu.memref_slice %arg2[%arg0, %85, %c0_i32_49, %c0_i32_50] : memref<2x16x16x128xbf16, #tpu.memory_space<any>> -> memref<1x1x16x128xbf16, #tpu.memory_space<any>>
      %87 = tpu.memref_squeeze %86 : memref<1x1x16x128xbf16, #tpu.memory_space<any>> -> memref<1x16x128xbf16, #tpu.memory_space<any>>
      %c9_i32 = arith.constant 9 : i32
      %c0_i32_51 = arith.constant 0 : i32
      %c0_i32_52 = arith.constant 0 : i32
      %88 = tpu.memref_slice %arg7[%0, %c9_i32, %c0_i32_51, %c0_i32_52] : memref<2x10x16x128xbf16, #tpu.memory_space<vmem>> -> memref<1x1x16x128xbf16, #tpu.memory_space<vmem>>
      %89 = tpu.memref_squeeze %88 : memref<1x1x16x128xbf16, #tpu.memory_space<vmem>> -> memref<1x16x128xbf16, #tpu.memory_space<vmem>>
      %90 = tpu.memref_slice %arg8[%0, %c2_i32_48] : memref<2x3x!tpu.dma_semaphore, #tpu.memory_space<semaphore_mem>> -> memref<1x1x!tpu.dma_semaphore, #tpu.memory_space<semaphore_mem>>
      %91 = tpu.memref_squeeze %90 : memref<1x1x!tpu.dma_semaphore, #tpu.memory_space<semaphore_mem>> -> memref<!tpu.dma_semaphore, #tpu.memory_space<semaphore_mem>>
      tpu.wait_dma2 semaphore(%91 : memref<!tpu.dma_semaphore, #tpu.memory_space<semaphore_mem>>) src(%87 : memref<1x16x128xbf16, #tpu.memory_space<any>>) dst(%89 : memref<1x16x128xbf16, #tpu.memory_space<vmem>>)
    } else {
    }
    %c1_i32_11 = arith.constant 1 : i32
    %17 = arith.addi %arg1, %c1_i32_11 : i32
    %c2_i32 = arith.constant 2 : i32
    %18 = arith.cmpi slt, %17, %c2_i32 : i32
    %19 = arith.extui %18 : i1 to i32
    %c0_i32_12 = arith.constant 0 : i32
    %20 = arith.cmpi ne, %19, %c0_i32_12 : i32
    scf.if %20 {
      %c1_i32_46 = arith.constant 1 : i32
      %84 = arith.addi %arg1, %c1_i32_46 : i32
      %c1_i32_47 = arith.constant 1 : i32
      %85 = arith.addi %arg1, %c1_i32_47 : i32
      %c1_i32_48 = arith.constant 1 : i32
      %86 = arith.andi %85, %c1_i32_48 : i32
      %c8_i32_49 = arith.constant 8 : i32
      %87 = arith.muli %84, %c8_i32_49 : i32
      %c0_i32_50 = arith.constant 0 : i32
      %c0_i32_51 = arith.constant 0 : i32
      %c0_i32_52 = arith.constant 0 : i32
      %88 = tpu.memref_slice %arg2[%arg0, %87, %c0_i32_51, %c0_i32_52] : memref<2x16x16x128xbf16, #tpu.memory_space<any>> -> memref<1x8x16x128xbf16, #tpu.memory_space<any>>
      %89 = tpu.memref_squeeze %88 : memref<1x8x16x128xbf16, #tpu.memory_space<any>> -> memref<8x16x128xbf16, #tpu.memory_space<any>>
      %c1_i32_53 = arith.constant 1 : i32
      %c0_i32_54 = arith.constant 0 : i32
      %c0_i32_55 = arith.constant 0 : i32
      %90 = tpu.memref_slice %arg7[%86, %c1_i32_53, %c0_i32_54, %c0_i32_55] : memref<2x10x16x128xbf16, #tpu.memory_space<vmem>> -> memref<1x8x16x128xbf16, #tpu.memory_space<vmem>>
      %91 = tpu.memref_squeeze %90 : memref<1x8x16x128xbf16, #tpu.memory_space<vmem>> -> memref<8x16x128xbf16, #tpu.memory_space<vmem>>
      %92 = tpu.memref_slice %arg8[%86, %c0_i32_50] : memref<2x3x!tpu.dma_semaphore, #tpu.memory_space<semaphore_mem>> -> memref<1x1x!tpu.dma_semaphore, #tpu.memory_space<semaphore_mem>>
      %93 = tpu.memref_squeeze %92 : memref<1x1x!tpu.dma_semaphore, #tpu.memory_space<semaphore_mem>> -> memref<!tpu.dma_semaphore, #tpu.memory_space<semaphore_mem>>
      tpu.enqueue_dma source(%89 : memref<8x16x128xbf16, #tpu.memory_space<any>>) target(%91 : memref<8x16x128xbf16, #tpu.memory_space<vmem>>) target_semaphore(%93 : memref<!tpu.dma_semaphore, #tpu.memory_space<semaphore_mem>>)
      %c0_i32_56 = arith.constant 0 : i32
      %94 = arith.cmpi sgt, %84, %c0_i32_56 : i32
      %95 = arith.extui %94 : i1 to i32
      %c0_i32_57 = arith.constant 0 : i32
      %96 = arith.cmpi ne, %95, %c0_i32_57 : i32
      scf.if %96 {
        %c8_i32_60 = arith.constant 8 : i32
        %100 = arith.muli %84, %c8_i32_60 : i32
        %c1_i32_61 = arith.constant 1 : i32
        %101 = arith.subi %100, %c1_i32_61 : i32
        %c1_i32_62 = arith.constant 1 : i32
        %c0_i32_63 = arith.constant 0 : i32
        %c0_i32_64 = arith.constant 0 : i32
        %102 = tpu.memref_slice %arg2[%arg0, %101, %c0_i32_63, %c0_i32_64] : memref<2x16x16x128xbf16, #tpu.memory_space<any>> -> memref<1x1x16x128xbf16, #tpu.memory_space<any>>
        %103 = tpu.memref_squeeze %102 : memref<1x1x16x128xbf16, #tpu.memory_space<any>> -> memref<1x16x128xbf16, #tpu.memory_space<any>>
        %c0_i32_65 = arith.constant 0 : i32
        %c0_i32_66 = arith.constant 0 : i32
        %c0_i32_67 = arith.constant 0 : i32
        %104 = tpu.memref_slice %arg7[%86, %c0_i32_65, %c0_i32_66, %c0_i32_67] : memref<2x10x16x128xbf16, #tpu.memory_space<vmem>> -> memref<1x1x16x128xbf16, #tpu.memory_space<vmem>>
        %105 = tpu.memref_squeeze %104 : memref<1x1x16x128xbf16, #tpu.memory_space<vmem>> -> memref<1x16x128xbf16, #tpu.memory_space<vmem>>
        %106 = tpu.memref_slice %arg8[%86, %c1_i32_62] : memref<2x3x!tpu.dma_semaphore, #tpu.memory_space<semaphore_mem>> -> memref<1x1x!tpu.dma_semaphore, #tpu.memory_space<semaphore_mem>>
        %107 = tpu.memref_squeeze %106 : memref<1x1x!tpu.dma_semaphore, #tpu.memory_space<semaphore_mem>> -> memref<!tpu.dma_semaphore, #tpu.memory_space<semaphore_mem>>
        tpu.enqueue_dma source(%103 : memref<1x16x128xbf16, #tpu.memory_space<any>>) target(%105 : memref<1x16x128xbf16, #tpu.memory_space<vmem>>) target_semaphore(%107 : memref<!tpu.dma_semaphore, #tpu.memory_space<semaphore_mem>>)
      } else {
      }
      %c1_i32_58 = arith.constant 1 : i32
      %97 = arith.cmpi slt, %84, %c1_i32_58 : i32
      %98 = arith.extui %97 : i1 to i32
      %c0_i32_59 = arith.constant 0 : i32
      %99 = arith.cmpi ne, %98, %c0_i32_59 : i32
      scf.if %99 {
        %c8_i32_60 = arith.constant 8 : i32
        %100 = arith.muli %84, %c8_i32_60 : i32
        %c8_i32_61 = arith.constant 8 : i32
        %101 = arith.addi %100, %c8_i32_61 : i32
        %c2_i32_62 = arith.constant 2 : i32
        %c0_i32_63 = arith.constant 0 : i32
        %c0_i32_64 = arith.constant 0 : i32
        %102 = tpu.memref_slice %arg2[%arg0, %101, %c0_i32_63, %c0_i32_64] : memref<2x16x16x128xbf16, #tpu.memory_space<any>> -> memref<1x1x16x128xbf16, #tpu.memory_space<any>>
        %103 = tpu.memref_squeeze %102 : memref<1x1x16x128xbf16, #tpu.memory_space<any>> -> memref<1x16x128xbf16, #tpu.memory_space<any>>
        %c9_i32 = arith.constant 9 : i32
        %c0_i32_65 = arith.constant 0 : i32
        %c0_i32_66 = arith.constant 0 : i32
        %104 = tpu.memref_slice %arg7[%86, %c9_i32, %c0_i32_65, %c0_i32_66] : memref<2x10x16x128xbf16, #tpu.memory_space<vmem>> -> memref<1x1x16x128xbf16, #tpu.memory_space<vmem>>
        %105 = tpu.memref_squeeze %104 : memref<1x1x16x128xbf16, #tpu.memory_space<vmem>> -> memref<1x16x128xbf16, #tpu.memory_space<vmem>>
        %106 = tpu.memref_slice %arg8[%86, %c2_i32_62] : memref<2x3x!tpu.dma_semaphore, #tpu.memory_space<semaphore_mem>> -> memref<1x1x!tpu.dma_semaphore, #tpu.memory_space<semaphore_mem>>
        %107 = tpu.memref_squeeze %106 : memref<1x1x!tpu.dma_semaphore, #tpu.memory_space<semaphore_mem>> -> memref<!tpu.dma_semaphore, #tpu.memory_space<semaphore_mem>>
        tpu.enqueue_dma source(%103 : memref<1x16x128xbf16, #tpu.memory_space<any>>) target(%105 : memref<1x16x128xbf16, #tpu.memory_space<vmem>>) target_semaphore(%107 : memref<!tpu.dma_semaphore, #tpu.memory_space<semaphore_mem>>)
      } else {
      }
    } else {
    }
    %21 = arith.index_cast %0 : i32 to index
    %c0 = arith.constant 0 : index
    %c0_13 = arith.constant 0 : index
    %c0_14 = arith.constant 0 : index
    %22 = vector.load %arg7[%21, %c0, %c0_13, %c0_14] : memref<2x10x16x128xbf16, #tpu.memory_space<vmem>>, vector<1x10x16x128xbf16>
    %23 = vector.shape_cast %22 : vector<1x10x16x128xbf16> to vector<10x16x128xbf16>
    %24 = tpu.iota {dimensions = array<i32: 0>} : vector<10x1x1xi32>
    %c8_i32_15 = arith.constant 8 : i32
    %25 = arith.muli %arg1, %c8_i32_15 : i32
    %26 = vector.broadcast %25 : i32 to vector<10x1x1xi32>
    %27 = arith.addi %24, %26 : vector<10x1x1xi32>
    %c1_i32_16 = arith.constant 1 : i32
    %28 = vector.broadcast %c1_i32_16 : i32 to vector<10x1x1xi32>
    %29 = arith.subi %27, %28 : vector<10x1x1xi32>
    %c0_i32_17 = arith.constant 0 : i32
    %30 = vector.broadcast %c0_i32_17 : i32 to vector<10x1x1xi32>
    %31 = arith.cmpi sge, %29, %30 : vector<10x1x1xi32>
    %c16_i32 = arith.constant 16 : i32
    %32 = vector.broadcast %c16_i32 : i32 to vector<10x1x1xi32>
    %33 = arith.cmpi slt, %29, %32 : vector<10x1x1xi32>
    %34 = arith.andi %31, %33 : vector<10x1x1xi1>
    %cst = arith.constant 0.000000e+00 : bf16
    %35 = vector.shape_cast %34 : vector<10x1x1xi1> to vector<10x1x1xi1>
    %36 = vector.broadcast %35 : vector<10x1x1xi1> to vector<10x16x128xi1>
    %37 = vector.broadcast %cst : bf16 to vector<10x16x128xbf16>
    %38 = arith.select %36, %23, %37 : vector<10x16x128xi1>, vector<10x16x128xbf16>
    %cst_18 = arith.constant 0.000000e+00 : bf16
    %39 = vector.broadcast %cst_18 : bf16 to vector<10x1x128xbf16>
    %40 = vector.extract_strided_slice %38 {offsets = [0, 0, 0], sizes = [10, 15, 128], strides = [1, 1, 1]} : vector<10x16x128xbf16> to vector<10x15x128xbf16>
    %41 = tpu.concatenate %39, %40 in 1 : vector<10x1x128xbf16>, vector<10x15x128xbf16> -> vector<10x16x128xbf16>
    %42 = vector.extract_strided_slice %38 {offsets = [0, 1, 0], sizes = [10, 15, 128], strides = [1, 1, 1]} : vector<10x16x128xbf16> to vector<10x15x128xbf16>
    %43 = tpu.concatenate %42, %39 in 1 : vector<10x15x128xbf16>, vector<10x1x128xbf16> -> vector<10x16x128xbf16>
    %44 = tpu.concatenate %41, %38, %43 in 2 : vector<10x16x128xbf16>, vector<10x16x128xbf16>, vector<10x16x128xbf16> -> vector<10x16x384xbf16>
    %cst_19 = arith.constant 0.000000e+00 : f32
    %45 = vector.broadcast %cst_19 : f32 to vector<128x128xf32>
    %46 = vector.extract_strided_slice %44 {offsets = [0, 0, 0], sizes = [8, 16, 384], strides = [1, 1, 1]} : vector<10x16x384xbf16> to vector<8x16x384xbf16>
    %47 = vector.shape_cast %46 : vector<8x16x384xbf16> to vector<128x384xbf16>
    %c0_20 = arith.constant 0 : index
    %c0_21 = arith.constant 0 : index
    %c0_22 = arith.constant 0 : index
    %48 = vector.load %arg3[%c0_20, %c0_21, %c0_22] : memref<3x384x128xbf16, #tpu.memory_space<vmem>>, vector<1x384x128xbf16>
    %49 = vector.shape_cast %48 : vector<1x384x128xbf16> to vector<384x128xbf16>
    %cst_23 = arith.constant dense<0.000000e+00> : vector<128x128xf32>
    %50 = tpu.matmul %47, %49, %cst_23 {dimension_numbers = #tpu.dot_dimension_numbers<[1], [0], [0], [1], [0, 0, 1, 1], [], []>} : vector<128x384xbf16>, vector<384x128xbf16>, vector<128x128xf32> -> vector<128x128xf32>
    %51 = arith.addf %45, %50 : vector<128x128xf32>
    %52 = vector.extract_strided_slice %44 {offsets = [1, 0, 0], sizes = [8, 16, 384], strides = [1, 1, 1]} : vector<10x16x384xbf16> to vector<8x16x384xbf16>
    %53 = vector.shape_cast %52 : vector<8x16x384xbf16> to vector<128x384xbf16>
    %c1 = arith.constant 1 : index
    %c0_24 = arith.constant 0 : index
    %c0_25 = arith.constant 0 : index
    %54 = vector.load %arg3[%c1, %c0_24, %c0_25] : memref<3x384x128xbf16, #tpu.memory_space<vmem>>, vector<1x384x128xbf16>
    %55 = vector.shape_cast %54 : vector<1x384x128xbf16> to vector<384x128xbf16>
    %cst_26 = arith.constant dense<0.000000e+00> : vector<128x128xf32>
    %56 = tpu.matmul %53, %55, %cst_26 {dimension_numbers = #tpu.dot_dimension_numbers<[1], [0], [0], [1], [0, 0, 1, 1], [], []>} : vector<128x384xbf16>, vector<384x128xbf16>, vector<128x128xf32> -> vector<128x128xf32>
    %57 = arith.addf %51, %56 : vector<128x128xf32>
    %58 = vector.extract_strided_slice %44 {offsets = [2, 0, 0], sizes = [8, 16, 384], strides = [1, 1, 1]} : vector<10x16x384xbf16> to vector<8x16x384xbf16>
    %59 = vector.shape_cast %58 : vector<8x16x384xbf16> to vector<128x384xbf16>
    %c2 = arith.constant 2 : index
    %c0_27 = arith.constant 0 : index
    %c0_28 = arith.constant 0 : index
    %60 = vector.load %arg3[%c2, %c0_27, %c0_28] : memref<3x384x128xbf16, #tpu.memory_space<vmem>>, vector<1x384x128xbf16>
    %61 = vector.shape_cast %60 : vector<1x384x128xbf16> to vector<384x128xbf16>
    %cst_29 = arith.constant dense<0.000000e+00> : vector<128x128xf32>
    %62 = tpu.matmul %59, %61, %cst_29 {dimension_numbers = #tpu.dot_dimension_numbers<[1], [0], [0], [1], [0, 0, 1, 1], [], []>} : vector<128x384xbf16>, vector<384x128xbf16>, vector<128x128xf32> -> vector<128x128xf32>
    %63 = arith.addf %57, %62 : vector<128x128xf32>
    %c0_30 = arith.constant 0 : index
    %c0_31 = arith.constant 0 : index
    %64 = vector.load %arg4[%c0_30, %c0_31] : memref<1x128xf32, #tpu.memory_space<vmem>>, vector<1x128xf32>
    %65 = vector.broadcast %64 : vector<1x128xf32> to vector<128x128xf32>
    %66 = arith.addf %63, %65 : vector<128x128xf32>
    %67 = arith.truncf %66 : vector<128x128xf32> to vector<128x128xbf16>
    %68 = vector.shape_cast %67 : vector<128x128xbf16> to vector<1x8x16x128xbf16>
    %c0_32 = arith.constant 0 : index
    %c0_33 = arith.constant 0 : index
    %c0_34 = arith.constant 0 : index
    %c0_35 = arith.constant 0 : index
    %69 = vector.load %arg5[%c0_32, %c0_33, %c0_34, %c0_35] : memref<1x8x16x128xbf16, #tpu.memory_space<vmem>>, vector<1x8x16x128xbf16>
    tpu.vector_store %arg5[%c0_32, %c0_33, %c0_34, %c0_35], %68 {strides = array<i32>} : memref<1x8x16x128xbf16, #tpu.memory_space<vmem>>, vector<1x8x16x128xbf16>,
    %70 = arith.extf %67 : vector<128x128xbf16> to vector<128x128xf32>
    %cst_36 = arith.constant dense<0.000000e+00> : vector<128xf32>
    %71 = vector.multi_reduction <add>, %70, %cst_36 [0] : vector<128x128xf32> to vector<128xf32>
    %72 = vector.shape_cast %71 : vector<128xf32> to vector<1x128xf32>
    %73 = arith.mulf %70, %70 : vector<128x128xf32>
    %cst_37 = arith.constant dense<0.000000e+00> : vector<128xf32>
    %74 = vector.multi_reduction <add>, %73, %cst_37 [0] : vector<128x128xf32> to vector<128xf32>
    %75 = vector.shape_cast %74 : vector<128xf32> to vector<1x128xf32>
    %c0_i32_38 = arith.constant 0 : i32
    %76 = arith.cmpi eq, %arg1, %c0_i32_38 : i32
    %77 = arith.extui %76 : i1 to i32
    %c0_i32_39 = arith.constant 0 : i32
    %78 = arith.cmpi ne, %77, %c0_i32_39 : i32
    scf.if %78 {
      %cst_46 = arith.constant 0.000000e+00 : f32
      %84 = vector.broadcast %cst_46 : f32 to vector<1x2x128xf32>
      %c0_47 = arith.constant 0 : index
      %c0_48 = arith.constant 0 : index
      %c0_49 = arith.constant 0 : index
      %85 = vector.load %arg6[%c0_47, %c0_48, %c0_49] : memref<1x2x128xf32, #tpu.memory_space<vmem>>, vector<1x2x128xf32>
      tpu.vector_store %arg6[%c0_47, %c0_48, %c0_49], %84 {strides = array<i32>} : memref<1x2x128xf32, #tpu.memory_space<vmem>>, vector<1x2x128xf32>,
    } else {
    }
    %c0_40 = arith.constant 0 : index
    %c0_41 = arith.constant 0 : index
    %c0_42 = arith.constant 0 : index
    %79 = vector.load %arg6[%c0_40, %c0_41, %c0_42] : memref<1x2x128xf32, #tpu.memory_space<vmem>>, vector<1x2x128xf32>
    %80 = tpu.concatenate %72, %75 in 0 : vector<1x128xf32>, vector<1x128xf32> -> vector<2x128xf32>
    %81 = vector.shape_cast %80 : vector<2x128xf32> to vector<1x2x128xf32>
    %82 = arith.addf %79, %81 : vector<1x2x128xf32>
    %c0_43 = arith.constant 0 : index
    %c0_44 = arith.constant 0 : index
    %c0_45 = arith.constant 0 : index
    %83 = vector.load %arg6[%c0_43, %c0_44, %c0_45] : memref<1x2x128xf32, #tpu.memory_space<vmem>>, vector<1x2x128xf32>
    tpu.vector_store %arg6[%c0_43, %c0_44, %c0_45], %82 {strides = array<i32>} : memref<1x2x128xf32, #tpu.memory_space<vmem>>, vector<1x2x128xf32>,
    return
  }
  func.func @transform_1(%arg0: i32, %arg1: i32) -> (i32, i32, i32) {
    %c0_i32 = arith.constant 0 : i32
    %c0_i32_0 = arith.constant 0 : i32
    %c0_i32_1 = arith.constant 0 : i32
    %c0_i32_2 = arith.constant 0 : i32
    return %c0_i32, %c0_i32_0, %c0_i32_1 : i32, i32, i32
  }
  func.func @transform_2(%arg0: i32, %arg1: i32) -> (i32, i32) {
    %c0_i32 = arith.constant 0 : i32
    %c0_i32_0 = arith.constant 0 : i32
    %c0_i32_1 = arith.constant 0 : i32
    return %c0_i32, %c0_i32_0 : i32, i32
  }
  func.func @transform_3(%arg0: i32, %arg1: i32) -> (i32, i32, i32, i32) {
    %c0_i32 = arith.constant 0 : i32
    %c0_i32_0 = arith.constant 0 : i32
    %c0_i32_1 = arith.constant 0 : i32
    return %arg0, %arg1, %c0_i32, %c0_i32_0 : i32, i32, i32, i32
  }
  func.func @transform_4(%arg0: i32, %arg1: i32) -> (i32, i32, i32) {
    %c0_i32 = arith.constant 0 : i32
    %c0_i32_0 = arith.constant 0 : i32
    %c0_i32_1 = arith.constant 0 : i32
    return %arg0, %c0_i32, %c0_i32_0 : i32, i32, i32
  }
}

module attributes {stable_mosaic.version = 11 : i64} {
  func.func @conv_stats_kernel(%arg0: i32, %arg1: i32, %arg2: memref<2x16x16x128xbf16, #tpu.memory_space<any>>, %arg3: memref<3x384x128xbf16, #tpu.memory_space<vmem>>, %arg4: memref<1x128xf32, #tpu.memory_space<vmem>>, %arg5: memref<1x128xf32, #tpu.memory_space<vmem>>, %arg6: memref<1x128xf32, #tpu.memory_space<vmem>>, %arg7: memref<1x8x16x128xbf16, #tpu.memory_space<vmem>>, %arg8: memref<1x2x128xf32, #tpu.memory_space<vmem>>, %arg9: memref<2x10x16x128xbf16, #tpu.memory_space<vmem>>, %arg10: memref<2x3x!tpu.dma_semaphore, #tpu.memory_space<semaphore_mem>>) attributes {dimension_semantics = [#tpu.dimension_semantics<parallel>, #tpu.dimension_semantics<arbitrary>], iteration_bounds = array<i64: 2, 2>, scalar_prefetch = 0 : i64, scratch_operands = 2 : i64, tpu.core_type = #tpu.core_type<tc>, window_params = [{}, {pipeline_mode = #tpu.pipeline_mode<synchronous>, transform_indices = @transform_1, window_bounds = array<i64: 3, 384, 128>}, {pipeline_mode = #tpu.pipeline_mode<synchronous>, transform_indices = @transform_2, window_bounds = array<i64: 1, 128>}, {pipeline_mode = #tpu.pipeline_mode<synchronous>, transform_indices = @transform_3, window_bounds = array<i64: 1, 128>}, {pipeline_mode = #tpu.pipeline_mode<synchronous>, transform_indices = @transform_4, window_bounds = array<i64: 1, 128>}, {transform_indices = @transform_5, window_bounds = array<i64: 1, 8, 16, 128>}, {transform_indices = @transform_6, window_bounds = array<i64: 1, 2, 128>}]} {
    %c1_i32 = arith.constant 1 : i32
    %0 = arith.andi %arg1, %c1_i32 : i32
    %c0_i32 = arith.constant 0 : i32
    %1 = arith.cmpi eq, %arg1, %c0_i32 : i32
    %2 = arith.extui %1 : i1 to i32
    %c0_i32_0 = arith.constant 0 : i32
    %3 = arith.cmpi ne, %2, %c0_i32_0 : i32
    scf.if %3 {
      %c8_i32_51 = arith.constant 8 : i32
      %96 = arith.muli %arg1, %c8_i32_51 : i32
      %c0_i32_52 = arith.constant 0 : i32
      %c0_i32_53 = arith.constant 0 : i32
      %c0_i32_54 = arith.constant 0 : i32
      %97 = tpu.memref_slice %arg2[%arg0, %96, %c0_i32_53, %c0_i32_54] : memref<2x16x16x128xbf16, #tpu.memory_space<any>> -> memref<1x8x16x128xbf16, #tpu.memory_space<any>>
      %98 = tpu.memref_squeeze %97 : memref<1x8x16x128xbf16, #tpu.memory_space<any>> -> memref<8x16x128xbf16, #tpu.memory_space<any>>
      %c1_i32_55 = arith.constant 1 : i32
      %c0_i32_56 = arith.constant 0 : i32
      %c0_i32_57 = arith.constant 0 : i32
      %99 = tpu.memref_slice %arg9[%0, %c1_i32_55, %c0_i32_56, %c0_i32_57] : memref<2x10x16x128xbf16, #tpu.memory_space<vmem>> -> memref<1x8x16x128xbf16, #tpu.memory_space<vmem>>
      %100 = tpu.memref_squeeze %99 : memref<1x8x16x128xbf16, #tpu.memory_space<vmem>> -> memref<8x16x128xbf16, #tpu.memory_space<vmem>>
      %101 = tpu.memref_slice %arg10[%0, %c0_i32_52] : memref<2x3x!tpu.dma_semaphore, #tpu.memory_space<semaphore_mem>> -> memref<1x1x!tpu.dma_semaphore, #tpu.memory_space<semaphore_mem>>
      %102 = tpu.memref_squeeze %101 : memref<1x1x!tpu.dma_semaphore, #tpu.memory_space<semaphore_mem>> -> memref<!tpu.dma_semaphore, #tpu.memory_space<semaphore_mem>>
      tpu.enqueue_dma source(%98 : memref<8x16x128xbf16, #tpu.memory_space<any>>) target(%100 : memref<8x16x128xbf16, #tpu.memory_space<vmem>>) target_semaphore(%102 : memref<!tpu.dma_semaphore, #tpu.memory_space<semaphore_mem>>)
      %c0_i32_58 = arith.constant 0 : i32
      %103 = arith.cmpi sgt, %arg1, %c0_i32_58 : i32
      %104 = arith.extui %103 : i1 to i32
      %c0_i32_59 = arith.constant 0 : i32
      %105 = arith.cmpi ne, %104, %c0_i32_59 : i32
      scf.if %105 {
        %c8_i32_62 = arith.constant 8 : i32
        %109 = arith.muli %arg1, %c8_i32_62 : i32
        %c1_i32_63 = arith.constant 1 : i32
        %110 = arith.subi %109, %c1_i32_63 : i32
        %c1_i32_64 = arith.constant 1 : i32
        %c0_i32_65 = arith.constant 0 : i32
        %c0_i32_66 = arith.constant 0 : i32
        %111 = tpu.memref_slice %arg2[%arg0, %110, %c0_i32_65, %c0_i32_66] : memref<2x16x16x128xbf16, #tpu.memory_space<any>> -> memref<1x1x16x128xbf16, #tpu.memory_space<any>>
        %112 = tpu.memref_squeeze %111 : memref<1x1x16x128xbf16, #tpu.memory_space<any>> -> memref<1x16x128xbf16, #tpu.memory_space<any>>
        %c0_i32_67 = arith.constant 0 : i32
        %c0_i32_68 = arith.constant 0 : i32
        %c0_i32_69 = arith.constant 0 : i32
        %113 = tpu.memref_slice %arg9[%0, %c0_i32_67, %c0_i32_68, %c0_i32_69] : memref<2x10x16x128xbf16, #tpu.memory_space<vmem>> -> memref<1x1x16x128xbf16, #tpu.memory_space<vmem>>
        %114 = tpu.memref_squeeze %113 : memref<1x1x16x128xbf16, #tpu.memory_space<vmem>> -> memref<1x16x128xbf16, #tpu.memory_space<vmem>>
        %115 = tpu.memref_slice %arg10[%0, %c1_i32_64] : memref<2x3x!tpu.dma_semaphore, #tpu.memory_space<semaphore_mem>> -> memref<1x1x!tpu.dma_semaphore, #tpu.memory_space<semaphore_mem>>
        %116 = tpu.memref_squeeze %115 : memref<1x1x!tpu.dma_semaphore, #tpu.memory_space<semaphore_mem>> -> memref<!tpu.dma_semaphore, #tpu.memory_space<semaphore_mem>>
        tpu.enqueue_dma source(%112 : memref<1x16x128xbf16, #tpu.memory_space<any>>) target(%114 : memref<1x16x128xbf16, #tpu.memory_space<vmem>>) target_semaphore(%116 : memref<!tpu.dma_semaphore, #tpu.memory_space<semaphore_mem>>)
      } else {
      }
      %c1_i32_60 = arith.constant 1 : i32
      %106 = arith.cmpi slt, %arg1, %c1_i32_60 : i32
      %107 = arith.extui %106 : i1 to i32
      %c0_i32_61 = arith.constant 0 : i32
      %108 = arith.cmpi ne, %107, %c0_i32_61 : i32
      scf.if %108 {
        %c8_i32_62 = arith.constant 8 : i32
        %109 = arith.muli %arg1, %c8_i32_62 : i32
        %c8_i32_63 = arith.constant 8 : i32
        %110 = arith.addi %109, %c8_i32_63 : i32
        %c2_i32_64 = arith.constant 2 : i32
        %c0_i32_65 = arith.constant 0 : i32
        %c0_i32_66 = arith.constant 0 : i32
        %111 = tpu.memref_slice %arg2[%arg0, %110, %c0_i32_65, %c0_i32_66] : memref<2x16x16x128xbf16, #tpu.memory_space<any>> -> memref<1x1x16x128xbf16, #tpu.memory_space<any>>
        %112 = tpu.memref_squeeze %111 : memref<1x1x16x128xbf16, #tpu.memory_space<any>> -> memref<1x16x128xbf16, #tpu.memory_space<any>>
        %c9_i32 = arith.constant 9 : i32
        %c0_i32_67 = arith.constant 0 : i32
        %c0_i32_68 = arith.constant 0 : i32
        %113 = tpu.memref_slice %arg9[%0, %c9_i32, %c0_i32_67, %c0_i32_68] : memref<2x10x16x128xbf16, #tpu.memory_space<vmem>> -> memref<1x1x16x128xbf16, #tpu.memory_space<vmem>>
        %114 = tpu.memref_squeeze %113 : memref<1x1x16x128xbf16, #tpu.memory_space<vmem>> -> memref<1x16x128xbf16, #tpu.memory_space<vmem>>
        %115 = tpu.memref_slice %arg10[%0, %c2_i32_64] : memref<2x3x!tpu.dma_semaphore, #tpu.memory_space<semaphore_mem>> -> memref<1x1x!tpu.dma_semaphore, #tpu.memory_space<semaphore_mem>>
        %116 = tpu.memref_squeeze %115 : memref<1x1x!tpu.dma_semaphore, #tpu.memory_space<semaphore_mem>> -> memref<!tpu.dma_semaphore, #tpu.memory_space<semaphore_mem>>
        tpu.enqueue_dma source(%112 : memref<1x16x128xbf16, #tpu.memory_space<any>>) target(%114 : memref<1x16x128xbf16, #tpu.memory_space<vmem>>) target_semaphore(%116 : memref<!tpu.dma_semaphore, #tpu.memory_space<semaphore_mem>>)
      } else {
      }
    } else {
    }
    %c8_i32 = arith.constant 8 : i32
    %4 = arith.muli %arg1, %c8_i32 : i32
    %c0_i32_1 = arith.constant 0 : i32
    %c0_i32_2 = arith.constant 0 : i32
    %c0_i32_3 = arith.constant 0 : i32
    %5 = tpu.memref_slice %arg2[%arg0, %4, %c0_i32_2, %c0_i32_3] : memref<2x16x16x128xbf16, #tpu.memory_space<any>> -> memref<1x8x16x128xbf16, #tpu.memory_space<any>>
    %6 = tpu.memref_squeeze %5 : memref<1x8x16x128xbf16, #tpu.memory_space<any>> -> memref<8x16x128xbf16, #tpu.memory_space<any>>
    %c1_i32_4 = arith.constant 1 : i32
    %c0_i32_5 = arith.constant 0 : i32
    %c0_i32_6 = arith.constant 0 : i32
    %7 = tpu.memref_slice %arg9[%0, %c1_i32_4, %c0_i32_5, %c0_i32_6] : memref<2x10x16x128xbf16, #tpu.memory_space<vmem>> -> memref<1x8x16x128xbf16, #tpu.memory_space<vmem>>
    %8 = tpu.memref_squeeze %7 : memref<1x8x16x128xbf16, #tpu.memory_space<vmem>> -> memref<8x16x128xbf16, #tpu.memory_space<vmem>>
    %9 = tpu.memref_slice %arg10[%0, %c0_i32_1] : memref<2x3x!tpu.dma_semaphore, #tpu.memory_space<semaphore_mem>> -> memref<1x1x!tpu.dma_semaphore, #tpu.memory_space<semaphore_mem>>
    %10 = tpu.memref_squeeze %9 : memref<1x1x!tpu.dma_semaphore, #tpu.memory_space<semaphore_mem>> -> memref<!tpu.dma_semaphore, #tpu.memory_space<semaphore_mem>>
    tpu.wait_dma2 semaphore(%10 : memref<!tpu.dma_semaphore, #tpu.memory_space<semaphore_mem>>) src(%6 : memref<8x16x128xbf16, #tpu.memory_space<any>>) dst(%8 : memref<8x16x128xbf16, #tpu.memory_space<vmem>>)
    %c0_i32_7 = arith.constant 0 : i32
    %11 = arith.cmpi sgt, %arg1, %c0_i32_7 : i32
    %12 = arith.extui %11 : i1 to i32
    %c0_i32_8 = arith.constant 0 : i32
    %13 = arith.cmpi ne, %12, %c0_i32_8 : i32
    scf.if %13 {
      %c8_i32_51 = arith.constant 8 : i32
      %96 = arith.muli %arg1, %c8_i32_51 : i32
      %c1_i32_52 = arith.constant 1 : i32
      %97 = arith.subi %96, %c1_i32_52 : i32
      %c1_i32_53 = arith.constant 1 : i32
      %c0_i32_54 = arith.constant 0 : i32
      %c0_i32_55 = arith.constant 0 : i32
      %98 = tpu.memref_slice %arg2[%arg0, %97, %c0_i32_54, %c0_i32_55] : memref<2x16x16x128xbf16, #tpu.memory_space<any>> -> memref<1x1x16x128xbf16, #tpu.memory_space<any>>
      %99 = tpu.memref_squeeze %98 : memref<1x1x16x128xbf16, #tpu.memory_space<any>> -> memref<1x16x128xbf16, #tpu.memory_space<any>>
      %c0_i32_56 = arith.constant 0 : i32
      %c0_i32_57 = arith.constant 0 : i32
      %c0_i32_58 = arith.constant 0 : i32
      %100 = tpu.memref_slice %arg9[%0, %c0_i32_56, %c0_i32_57, %c0_i32_58] : memref<2x10x16x128xbf16, #tpu.memory_space<vmem>> -> memref<1x1x16x128xbf16, #tpu.memory_space<vmem>>
      %101 = tpu.memref_squeeze %100 : memref<1x1x16x128xbf16, #tpu.memory_space<vmem>> -> memref<1x16x128xbf16, #tpu.memory_space<vmem>>
      %102 = tpu.memref_slice %arg10[%0, %c1_i32_53] : memref<2x3x!tpu.dma_semaphore, #tpu.memory_space<semaphore_mem>> -> memref<1x1x!tpu.dma_semaphore, #tpu.memory_space<semaphore_mem>>
      %103 = tpu.memref_squeeze %102 : memref<1x1x!tpu.dma_semaphore, #tpu.memory_space<semaphore_mem>> -> memref<!tpu.dma_semaphore, #tpu.memory_space<semaphore_mem>>
      tpu.wait_dma2 semaphore(%103 : memref<!tpu.dma_semaphore, #tpu.memory_space<semaphore_mem>>) src(%99 : memref<1x16x128xbf16, #tpu.memory_space<any>>) dst(%101 : memref<1x16x128xbf16, #tpu.memory_space<vmem>>)
    } else {
    }
    %c1_i32_9 = arith.constant 1 : i32
    %14 = arith.cmpi slt, %arg1, %c1_i32_9 : i32
    %15 = arith.extui %14 : i1 to i32
    %c0_i32_10 = arith.constant 0 : i32
    %16 = arith.cmpi ne, %15, %c0_i32_10 : i32
    scf.if %16 {
      %c8_i32_51 = arith.constant 8 : i32
      %96 = arith.muli %arg1, %c8_i32_51 : i32
      %c8_i32_52 = arith.constant 8 : i32
      %97 = arith.addi %96, %c8_i32_52 : i32
      %c2_i32_53 = arith.constant 2 : i32
      %c0_i32_54 = arith.constant 0 : i32
      %c0_i32_55 = arith.constant 0 : i32
      %98 = tpu.memref_slice %arg2[%arg0, %97, %c0_i32_54, %c0_i32_55] : memref<2x16x16x128xbf16, #tpu.memory_space<any>> -> memref<1x1x16x128xbf16, #tpu.memory_space<any>>
      %99 = tpu.memref_squeeze %98 : memref<1x1x16x128xbf16, #tpu.memory_space<any>> -> memref<1x16x128xbf16, #tpu.memory_space<any>>
      %c9_i32 = arith.constant 9 : i32
      %c0_i32_56 = arith.constant 0 : i32
      %c0_i32_57 = arith.constant 0 : i32
      %100 = tpu.memref_slice %arg9[%0, %c9_i32, %c0_i32_56, %c0_i32_57] : memref<2x10x16x128xbf16, #tpu.memory_space<vmem>> -> memref<1x1x16x128xbf16, #tpu.memory_space<vmem>>
      %101 = tpu.memref_squeeze %100 : memref<1x1x16x128xbf16, #tpu.memory_space<vmem>> -> memref<1x16x128xbf16, #tpu.memory_space<vmem>>
      %102 = tpu.memref_slice %arg10[%0, %c2_i32_53] : memref<2x3x!tpu.dma_semaphore, #tpu.memory_space<semaphore_mem>> -> memref<1x1x!tpu.dma_semaphore, #tpu.memory_space<semaphore_mem>>
      %103 = tpu.memref_squeeze %102 : memref<1x1x!tpu.dma_semaphore, #tpu.memory_space<semaphore_mem>> -> memref<!tpu.dma_semaphore, #tpu.memory_space<semaphore_mem>>
      tpu.wait_dma2 semaphore(%103 : memref<!tpu.dma_semaphore, #tpu.memory_space<semaphore_mem>>) src(%99 : memref<1x16x128xbf16, #tpu.memory_space<any>>) dst(%101 : memref<1x16x128xbf16, #tpu.memory_space<vmem>>)
    } else {
    }
    %c1_i32_11 = arith.constant 1 : i32
    %17 = arith.addi %arg1, %c1_i32_11 : i32
    %c2_i32 = arith.constant 2 : i32
    %18 = arith.cmpi slt, %17, %c2_i32 : i32
    %19 = arith.extui %18 : i1 to i32
    %c0_i32_12 = arith.constant 0 : i32
    %20 = arith.cmpi ne, %19, %c0_i32_12 : i32
    scf.if %20 {
      %c1_i32_51 = arith.constant 1 : i32
      %96 = arith.addi %arg1, %c1_i32_51 : i32
      %c1_i32_52 = arith.constant 1 : i32
      %97 = arith.addi %arg1, %c1_i32_52 : i32
      %c1_i32_53 = arith.constant 1 : i32
      %98 = arith.andi %97, %c1_i32_53 : i32
      %c8_i32_54 = arith.constant 8 : i32
      %99 = arith.muli %96, %c8_i32_54 : i32
      %c0_i32_55 = arith.constant 0 : i32
      %c0_i32_56 = arith.constant 0 : i32
      %c0_i32_57 = arith.constant 0 : i32
      %100 = tpu.memref_slice %arg2[%arg0, %99, %c0_i32_56, %c0_i32_57] : memref<2x16x16x128xbf16, #tpu.memory_space<any>> -> memref<1x8x16x128xbf16, #tpu.memory_space<any>>
      %101 = tpu.memref_squeeze %100 : memref<1x8x16x128xbf16, #tpu.memory_space<any>> -> memref<8x16x128xbf16, #tpu.memory_space<any>>
      %c1_i32_58 = arith.constant 1 : i32
      %c0_i32_59 = arith.constant 0 : i32
      %c0_i32_60 = arith.constant 0 : i32
      %102 = tpu.memref_slice %arg9[%98, %c1_i32_58, %c0_i32_59, %c0_i32_60] : memref<2x10x16x128xbf16, #tpu.memory_space<vmem>> -> memref<1x8x16x128xbf16, #tpu.memory_space<vmem>>
      %103 = tpu.memref_squeeze %102 : memref<1x8x16x128xbf16, #tpu.memory_space<vmem>> -> memref<8x16x128xbf16, #tpu.memory_space<vmem>>
      %104 = tpu.memref_slice %arg10[%98, %c0_i32_55] : memref<2x3x!tpu.dma_semaphore, #tpu.memory_space<semaphore_mem>> -> memref<1x1x!tpu.dma_semaphore, #tpu.memory_space<semaphore_mem>>
      %105 = tpu.memref_squeeze %104 : memref<1x1x!tpu.dma_semaphore, #tpu.memory_space<semaphore_mem>> -> memref<!tpu.dma_semaphore, #tpu.memory_space<semaphore_mem>>
      tpu.enqueue_dma source(%101 : memref<8x16x128xbf16, #tpu.memory_space<any>>) target(%103 : memref<8x16x128xbf16, #tpu.memory_space<vmem>>) target_semaphore(%105 : memref<!tpu.dma_semaphore, #tpu.memory_space<semaphore_mem>>)
      %c0_i32_61 = arith.constant 0 : i32
      %106 = arith.cmpi sgt, %96, %c0_i32_61 : i32
      %107 = arith.extui %106 : i1 to i32
      %c0_i32_62 = arith.constant 0 : i32
      %108 = arith.cmpi ne, %107, %c0_i32_62 : i32
      scf.if %108 {
        %c8_i32_65 = arith.constant 8 : i32
        %112 = arith.muli %96, %c8_i32_65 : i32
        %c1_i32_66 = arith.constant 1 : i32
        %113 = arith.subi %112, %c1_i32_66 : i32
        %c1_i32_67 = arith.constant 1 : i32
        %c0_i32_68 = arith.constant 0 : i32
        %c0_i32_69 = arith.constant 0 : i32
        %114 = tpu.memref_slice %arg2[%arg0, %113, %c0_i32_68, %c0_i32_69] : memref<2x16x16x128xbf16, #tpu.memory_space<any>> -> memref<1x1x16x128xbf16, #tpu.memory_space<any>>
        %115 = tpu.memref_squeeze %114 : memref<1x1x16x128xbf16, #tpu.memory_space<any>> -> memref<1x16x128xbf16, #tpu.memory_space<any>>
        %c0_i32_70 = arith.constant 0 : i32
        %c0_i32_71 = arith.constant 0 : i32
        %c0_i32_72 = arith.constant 0 : i32
        %116 = tpu.memref_slice %arg9[%98, %c0_i32_70, %c0_i32_71, %c0_i32_72] : memref<2x10x16x128xbf16, #tpu.memory_space<vmem>> -> memref<1x1x16x128xbf16, #tpu.memory_space<vmem>>
        %117 = tpu.memref_squeeze %116 : memref<1x1x16x128xbf16, #tpu.memory_space<vmem>> -> memref<1x16x128xbf16, #tpu.memory_space<vmem>>
        %118 = tpu.memref_slice %arg10[%98, %c1_i32_67] : memref<2x3x!tpu.dma_semaphore, #tpu.memory_space<semaphore_mem>> -> memref<1x1x!tpu.dma_semaphore, #tpu.memory_space<semaphore_mem>>
        %119 = tpu.memref_squeeze %118 : memref<1x1x!tpu.dma_semaphore, #tpu.memory_space<semaphore_mem>> -> memref<!tpu.dma_semaphore, #tpu.memory_space<semaphore_mem>>
        tpu.enqueue_dma source(%115 : memref<1x16x128xbf16, #tpu.memory_space<any>>) target(%117 : memref<1x16x128xbf16, #tpu.memory_space<vmem>>) target_semaphore(%119 : memref<!tpu.dma_semaphore, #tpu.memory_space<semaphore_mem>>)
      } else {
      }
      %c1_i32_63 = arith.constant 1 : i32
      %109 = arith.cmpi slt, %96, %c1_i32_63 : i32
      %110 = arith.extui %109 : i1 to i32
      %c0_i32_64 = arith.constant 0 : i32
      %111 = arith.cmpi ne, %110, %c0_i32_64 : i32
      scf.if %111 {
        %c8_i32_65 = arith.constant 8 : i32
        %112 = arith.muli %96, %c8_i32_65 : i32
        %c8_i32_66 = arith.constant 8 : i32
        %113 = arith.addi %112, %c8_i32_66 : i32
        %c2_i32_67 = arith.constant 2 : i32
        %c0_i32_68 = arith.constant 0 : i32
        %c0_i32_69 = arith.constant 0 : i32
        %114 = tpu.memref_slice %arg2[%arg0, %113, %c0_i32_68, %c0_i32_69] : memref<2x16x16x128xbf16, #tpu.memory_space<any>> -> memref<1x1x16x128xbf16, #tpu.memory_space<any>>
        %115 = tpu.memref_squeeze %114 : memref<1x1x16x128xbf16, #tpu.memory_space<any>> -> memref<1x16x128xbf16, #tpu.memory_space<any>>
        %c9_i32 = arith.constant 9 : i32
        %c0_i32_70 = arith.constant 0 : i32
        %c0_i32_71 = arith.constant 0 : i32
        %116 = tpu.memref_slice %arg9[%98, %c9_i32, %c0_i32_70, %c0_i32_71] : memref<2x10x16x128xbf16, #tpu.memory_space<vmem>> -> memref<1x1x16x128xbf16, #tpu.memory_space<vmem>>
        %117 = tpu.memref_squeeze %116 : memref<1x1x16x128xbf16, #tpu.memory_space<vmem>> -> memref<1x16x128xbf16, #tpu.memory_space<vmem>>
        %118 = tpu.memref_slice %arg10[%98, %c2_i32_67] : memref<2x3x!tpu.dma_semaphore, #tpu.memory_space<semaphore_mem>> -> memref<1x1x!tpu.dma_semaphore, #tpu.memory_space<semaphore_mem>>
        %119 = tpu.memref_squeeze %118 : memref<1x1x!tpu.dma_semaphore, #tpu.memory_space<semaphore_mem>> -> memref<!tpu.dma_semaphore, #tpu.memory_space<semaphore_mem>>
        tpu.enqueue_dma source(%115 : memref<1x16x128xbf16, #tpu.memory_space<any>>) target(%117 : memref<1x16x128xbf16, #tpu.memory_space<vmem>>) target_semaphore(%119 : memref<!tpu.dma_semaphore, #tpu.memory_space<semaphore_mem>>)
      } else {
      }
    } else {
    }
    %21 = arith.index_cast %0 : i32 to index
    %c0 = arith.constant 0 : index
    %c0_13 = arith.constant 0 : index
    %c0_14 = arith.constant 0 : index
    %22 = vector.load %arg9[%21, %c0, %c0_13, %c0_14] : memref<2x10x16x128xbf16, #tpu.memory_space<vmem>>, vector<1x10x16x128xbf16>
    %23 = vector.shape_cast %22 : vector<1x10x16x128xbf16> to vector<10x16x128xbf16>
    %24 = tpu.iota {dimensions = array<i32: 0>} : vector<10x1x1xi32>
    %c8_i32_15 = arith.constant 8 : i32
    %25 = arith.muli %arg1, %c8_i32_15 : i32
    %26 = vector.broadcast %25 : i32 to vector<10x1x1xi32>
    %27 = arith.addi %24, %26 : vector<10x1x1xi32>
    %c1_i32_16 = arith.constant 1 : i32
    %28 = vector.broadcast %c1_i32_16 : i32 to vector<10x1x1xi32>
    %29 = arith.subi %27, %28 : vector<10x1x1xi32>
    %c0_i32_17 = arith.constant 0 : i32
    %30 = vector.broadcast %c0_i32_17 : i32 to vector<10x1x1xi32>
    %31 = arith.cmpi sge, %29, %30 : vector<10x1x1xi32>
    %c16_i32 = arith.constant 16 : i32
    %32 = vector.broadcast %c16_i32 : i32 to vector<10x1x1xi32>
    %33 = arith.cmpi slt, %29, %32 : vector<10x1x1xi32>
    %34 = arith.andi %31, %33 : vector<10x1x1xi1>
    %35 = arith.extf %23 : vector<10x16x128xbf16> to vector<10x16x128xf32>
    %c0_18 = arith.constant 0 : index
    %c0_19 = arith.constant 0 : index
    %36 = vector.load %arg5[%c0_18, %c0_19] : memref<1x128xf32, #tpu.memory_space<vmem>>, vector<1x128xf32>
    %37 = vector.shape_cast %36 : vector<1x128xf32> to vector<1x1x128xf32>
    %38 = vector.broadcast %37 : vector<1x1x128xf32> to vector<10x16x128xf32>
    %39 = arith.mulf %35, %38 : vector<10x16x128xf32>
    %c0_20 = arith.constant 0 : index
    %c0_21 = arith.constant 0 : index
    %40 = vector.load %arg6[%c0_20, %c0_21] : memref<1x128xf32, #tpu.memory_space<vmem>>, vector<1x128xf32>
    %41 = vector.shape_cast %40 : vector<1x128xf32> to vector<1x1x128xf32>
    %42 = vector.broadcast %41 : vector<1x1x128xf32> to vector<10x16x128xf32>
    %43 = arith.addf %39, %42 : vector<10x16x128xf32>
    %cst = arith.constant 0.000000e+00 : f32
    %44 = vector.broadcast %cst : f32 to vector<10x16x128xf32>
    %45 = arith.maximumf %43, %44 : vector<10x16x128xf32>
    %cst_22 = arith.constant 0.000000e+00 : f32
    %46 = vector.shape_cast %34 : vector<10x1x1xi1> to vector<10x1x1xi1>
    %47 = vector.broadcast %46 : vector<10x1x1xi1> to vector<10x16x128xi1>
    %48 = vector.broadcast %cst_22 : f32 to vector<10x16x128xf32>
    %49 = arith.select %47, %45, %48 : vector<10x16x128xi1>, vector<10x16x128xf32>
    %50 = arith.truncf %49 : vector<10x16x128xf32> to vector<10x16x128xbf16>
    %cst_23 = arith.constant 0.000000e+00 : bf16
    %51 = vector.broadcast %cst_23 : bf16 to vector<10x1x128xbf16>
    %52 = vector.extract_strided_slice %50 {offsets = [0, 0, 0], sizes = [10, 15, 128], strides = [1, 1, 1]} : vector<10x16x128xbf16> to vector<10x15x128xbf16>
    %53 = tpu.concatenate %51, %52 in 1 : vector<10x1x128xbf16>, vector<10x15x128xbf16> -> vector<10x16x128xbf16>
    %54 = vector.extract_strided_slice %50 {offsets = [0, 1, 0], sizes = [10, 15, 128], strides = [1, 1, 1]} : vector<10x16x128xbf16> to vector<10x15x128xbf16>
    %55 = tpu.concatenate %54, %51 in 1 : vector<10x15x128xbf16>, vector<10x1x128xbf16> -> vector<10x16x128xbf16>
    %56 = tpu.concatenate %53, %50, %55 in 2 : vector<10x16x128xbf16>, vector<10x16x128xbf16>, vector<10x16x128xbf16> -> vector<10x16x384xbf16>
    %cst_24 = arith.constant 0.000000e+00 : f32
    %57 = vector.broadcast %cst_24 : f32 to vector<128x128xf32>
    %58 = vector.extract_strided_slice %56 {offsets = [0, 0, 0], sizes = [8, 16, 384], strides = [1, 1, 1]} : vector<10x16x384xbf16> to vector<8x16x384xbf16>
    %59 = vector.shape_cast %58 : vector<8x16x384xbf16> to vector<128x384xbf16>
    %c0_25 = arith.constant 0 : index
    %c0_26 = arith.constant 0 : index
    %c0_27 = arith.constant 0 : index
    %60 = vector.load %arg3[%c0_25, %c0_26, %c0_27] : memref<3x384x128xbf16, #tpu.memory_space<vmem>>, vector<1x384x128xbf16>
    %61 = vector.shape_cast %60 : vector<1x384x128xbf16> to vector<384x128xbf16>
    %cst_28 = arith.constant dense<0.000000e+00> : vector<128x128xf32>
    %62 = tpu.matmul %59, %61, %cst_28 {dimension_numbers = #tpu.dot_dimension_numbers<[1], [0], [0], [1], [0, 0, 1, 1], [], []>} : vector<128x384xbf16>, vector<384x128xbf16>, vector<128x128xf32> -> vector<128x128xf32>
    %63 = arith.addf %57, %62 : vector<128x128xf32>
    %64 = vector.extract_strided_slice %56 {offsets = [1, 0, 0], sizes = [8, 16, 384], strides = [1, 1, 1]} : vector<10x16x384xbf16> to vector<8x16x384xbf16>
    %65 = vector.shape_cast %64 : vector<8x16x384xbf16> to vector<128x384xbf16>
    %c1 = arith.constant 1 : index
    %c0_29 = arith.constant 0 : index
    %c0_30 = arith.constant 0 : index
    %66 = vector.load %arg3[%c1, %c0_29, %c0_30] : memref<3x384x128xbf16, #tpu.memory_space<vmem>>, vector<1x384x128xbf16>
    %67 = vector.shape_cast %66 : vector<1x384x128xbf16> to vector<384x128xbf16>
    %cst_31 = arith.constant dense<0.000000e+00> : vector<128x128xf32>
    %68 = tpu.matmul %65, %67, %cst_31 {dimension_numbers = #tpu.dot_dimension_numbers<[1], [0], [0], [1], [0, 0, 1, 1], [], []>} : vector<128x384xbf16>, vector<384x128xbf16>, vector<128x128xf32> -> vector<128x128xf32>
    %69 = arith.addf %63, %68 : vector<128x128xf32>
    %70 = vector.extract_strided_slice %56 {offsets = [2, 0, 0], sizes = [8, 16, 384], strides = [1, 1, 1]} : vector<10x16x384xbf16> to vector<8x16x384xbf16>
    %71 = vector.shape_cast %70 : vector<8x16x384xbf16> to vector<128x384xbf16>
    %c2 = arith.constant 2 : index
    %c0_32 = arith.constant 0 : index
    %c0_33 = arith.constant 0 : index
    %72 = vector.load %arg3[%c2, %c0_32, %c0_33] : memref<3x384x128xbf16, #tpu.memory_space<vmem>>, vector<1x384x128xbf16>
    %73 = vector.shape_cast %72 : vector<1x384x128xbf16> to vector<384x128xbf16>
    %cst_34 = arith.constant dense<0.000000e+00> : vector<128x128xf32>
    %74 = tpu.matmul %71, %73, %cst_34 {dimension_numbers = #tpu.dot_dimension_numbers<[1], [0], [0], [1], [0, 0, 1, 1], [], []>} : vector<128x384xbf16>, vector<384x128xbf16>, vector<128x128xf32> -> vector<128x128xf32>
    %75 = arith.addf %69, %74 : vector<128x128xf32>
    %c0_35 = arith.constant 0 : index
    %c0_36 = arith.constant 0 : index
    %76 = vector.load %arg4[%c0_35, %c0_36] : memref<1x128xf32, #tpu.memory_space<vmem>>, vector<1x128xf32>
    %77 = vector.broadcast %76 : vector<1x128xf32> to vector<128x128xf32>
    %78 = arith.addf %75, %77 : vector<128x128xf32>
    %79 = arith.truncf %78 : vector<128x128xf32> to vector<128x128xbf16>
    %80 = vector.shape_cast %79 : vector<128x128xbf16> to vector<1x8x16x128xbf16>
    %c0_37 = arith.constant 0 : index
    %c0_38 = arith.constant 0 : index
    %c0_39 = arith.constant 0 : index
    %c0_40 = arith.constant 0 : index
    %81 = vector.load %arg7[%c0_37, %c0_38, %c0_39, %c0_40] : memref<1x8x16x128xbf16, #tpu.memory_space<vmem>>, vector<1x8x16x128xbf16>
    tpu.vector_store %arg7[%c0_37, %c0_38, %c0_39, %c0_40], %80 {strides = array<i32>} : memref<1x8x16x128xbf16, #tpu.memory_space<vmem>>, vector<1x8x16x128xbf16>,
    %82 = arith.extf %79 : vector<128x128xbf16> to vector<128x128xf32>
    %cst_41 = arith.constant dense<0.000000e+00> : vector<128xf32>
    %83 = vector.multi_reduction <add>, %82, %cst_41 [0] : vector<128x128xf32> to vector<128xf32>
    %84 = vector.shape_cast %83 : vector<128xf32> to vector<1x128xf32>
    %85 = arith.mulf %82, %82 : vector<128x128xf32>
    %cst_42 = arith.constant dense<0.000000e+00> : vector<128xf32>
    %86 = vector.multi_reduction <add>, %85, %cst_42 [0] : vector<128x128xf32> to vector<128xf32>
    %87 = vector.shape_cast %86 : vector<128xf32> to vector<1x128xf32>
    %c0_i32_43 = arith.constant 0 : i32
    %88 = arith.cmpi eq, %arg1, %c0_i32_43 : i32
    %89 = arith.extui %88 : i1 to i32
    %c0_i32_44 = arith.constant 0 : i32
    %90 = arith.cmpi ne, %89, %c0_i32_44 : i32
    scf.if %90 {
      %cst_51 = arith.constant 0.000000e+00 : f32
      %96 = vector.broadcast %cst_51 : f32 to vector<1x2x128xf32>
      %c0_52 = arith.constant 0 : index
      %c0_53 = arith.constant 0 : index
      %c0_54 = arith.constant 0 : index
      %97 = vector.load %arg8[%c0_52, %c0_53, %c0_54] : memref<1x2x128xf32, #tpu.memory_space<vmem>>, vector<1x2x128xf32>
      tpu.vector_store %arg8[%c0_52, %c0_53, %c0_54], %96 {strides = array<i32>} : memref<1x2x128xf32, #tpu.memory_space<vmem>>, vector<1x2x128xf32>,
    } else {
    }
    %c0_45 = arith.constant 0 : index
    %c0_46 = arith.constant 0 : index
    %c0_47 = arith.constant 0 : index
    %91 = vector.load %arg8[%c0_45, %c0_46, %c0_47] : memref<1x2x128xf32, #tpu.memory_space<vmem>>, vector<1x2x128xf32>
    %92 = tpu.concatenate %84, %87 in 0 : vector<1x128xf32>, vector<1x128xf32> -> vector<2x128xf32>
    %93 = vector.shape_cast %92 : vector<2x128xf32> to vector<1x2x128xf32>
    %94 = arith.addf %91, %93 : vector<1x2x128xf32>
    %c0_48 = arith.constant 0 : index
    %c0_49 = arith.constant 0 : index
    %c0_50 = arith.constant 0 : index
    %95 = vector.load %arg8[%c0_48, %c0_49, %c0_50] : memref<1x2x128xf32, #tpu.memory_space<vmem>>, vector<1x2x128xf32>
    tpu.vector_store %arg8[%c0_48, %c0_49, %c0_50], %94 {strides = array<i32>} : memref<1x2x128xf32, #tpu.memory_space<vmem>>, vector<1x2x128xf32>,
    return
  }
  func.func @transform_1(%arg0: i32, %arg1: i32) -> (i32, i32, i32) {
    %c0_i32 = arith.constant 0 : i32
    %c0_i32_0 = arith.constant 0 : i32
    %c0_i32_1 = arith.constant 0 : i32
    %c0_i32_2 = arith.constant 0 : i32
    return %c0_i32, %c0_i32_0, %c0_i32_1 : i32, i32, i32
  }
  func.func @transform_2(%arg0: i32, %arg1: i32) -> (i32, i32) {
    %c0_i32 = arith.constant 0 : i32
    %c0_i32_0 = arith.constant 0 : i32
    %c0_i32_1 = arith.constant 0 : i32
    return %c0_i32, %c0_i32_0 : i32, i32
  }
  func.func @transform_3(%arg0: i32, %arg1: i32) -> (i32, i32) {
    %c0_i32 = arith.constant 0 : i32
    %c0_i32_0 = arith.constant 0 : i32
    %c0_i32_1 = arith.constant 0 : i32
    return %c0_i32, %c0_i32_0 : i32, i32
  }
  func.func @transform_4(%arg0: i32, %arg1: i32) -> (i32, i32) {
    %c0_i32 = arith.constant 0 : i32
    %c0_i32_0 = arith.constant 0 : i32
    %c0_i32_1 = arith.constant 0 : i32
    return %c0_i32, %c0_i32_0 : i32, i32
  }
  func.func @transform_5(%arg0: i32, %arg1: i32) -> (i32, i32, i32, i32) {
    %c0_i32 = arith.constant 0 : i32
    %c0_i32_0 = arith.constant 0 : i32
    %c0_i32_1 = arith.constant 0 : i32
    return %arg0, %arg1, %c0_i32, %c0_i32_0 : i32, i32, i32, i32
  }
  func.func @transform_6(%arg0: i32, %arg1: i32) -> (i32, i32, i32) {
    %c0_i32 = arith.constant 0 : i32
    %c0_i32_0 = arith.constant 0 : i32
    %c0_i32_1 = arith.constant 0 : i32
    return %arg0, %c0_i32, %c0_i32_0 : i32, i32, i32
  }
}

module attributes {stable_mosaic.version = 11 : i64} {
  func.func @bn_relu_kernel(%arg0: i32, %arg1: i32, %arg2: memref<1x8x16x128xbf16, #tpu.memory_space<vmem>>, %arg3: memref<1x128xf32, #tpu.memory_space<vmem>>, %arg4: memref<1x128xf32, #tpu.memory_space<vmem>>, %arg5: memref<1x8x16x128xbf16, #tpu.memory_space<vmem>>) attributes {dimension_semantics = [#tpu.dimension_semantics<parallel>, #tpu.dimension_semantics<parallel>], iteration_bounds = array<i64: 2, 2>, scalar_prefetch = 0 : i64, scratch_operands = 0 : i64, tpu.core_type = #tpu.core_type<tc>, window_params = [{transform_indices = @transform_0, window_bounds = array<i64: 1, 8, 16, 128>}, {pipeline_mode = #tpu.pipeline_mode<synchronous>, transform_indices = @transform_1, window_bounds = array<i64: 1, 128>}, {pipeline_mode = #tpu.pipeline_mode<synchronous>, transform_indices = @transform_2, window_bounds = array<i64: 1, 128>}, {transform_indices = @transform_3, window_bounds = array<i64: 1, 8, 16, 128>}]} {
    %c0 = arith.constant 0 : index
    %c0_0 = arith.constant 0 : index
    %c0_1 = arith.constant 0 : index
    %c0_2 = arith.constant 0 : index
    %0 = vector.load %arg2[%c0, %c0_0, %c0_1, %c0_2] : memref<1x8x16x128xbf16, #tpu.memory_space<vmem>>, vector<1x8x16x128xbf16>
    %1 = arith.extf %0 : vector<1x8x16x128xbf16> to vector<1x8x16x128xf32>
    %c0_3 = arith.constant 0 : index
    %c0_4 = arith.constant 0 : index
    %2 = vector.load %arg3[%c0_3, %c0_4] : memref<1x128xf32, #tpu.memory_space<vmem>>, vector<1x128xf32>
    %3 = vector.shape_cast %2 : vector<1x128xf32> to vector<1x1x1x128xf32>
    %4 = vector.broadcast %3 : vector<1x1x1x128xf32> to vector<1x8x16x128xf32>
    %5 = arith.mulf %1, %4 : vector<1x8x16x128xf32>
    %c0_5 = arith.constant 0 : index
    %c0_6 = arith.constant 0 : index
    %6 = vector.load %arg4[%c0_5, %c0_6] : memref<1x128xf32, #tpu.memory_space<vmem>>, vector<1x128xf32>
    %7 = vector.shape_cast %6 : vector<1x128xf32> to vector<1x1x1x128xf32>
    %8 = vector.broadcast %7 : vector<1x1x1x128xf32> to vector<1x8x16x128xf32>
    %9 = arith.addf %5, %8 : vector<1x8x16x128xf32>
    %cst = arith.constant 0.000000e+00 : f32
    %10 = vector.broadcast %cst : f32 to vector<1x8x16x128xf32>
    %11 = arith.maximumf %9, %10 : vector<1x8x16x128xf32>
    %12 = arith.truncf %11 : vector<1x8x16x128xf32> to vector<1x8x16x128xbf16>
    %c0_7 = arith.constant 0 : index
    %c0_8 = arith.constant 0 : index
    %c0_9 = arith.constant 0 : index
    %c0_10 = arith.constant 0 : index
    %13 = vector.load %arg5[%c0_7, %c0_8, %c0_9, %c0_10] : memref<1x8x16x128xbf16, #tpu.memory_space<vmem>>, vector<1x8x16x128xbf16>
    tpu.vector_store %arg5[%c0_7, %c0_8, %c0_9, %c0_10], %12 {strides = array<i32>} : memref<1x8x16x128xbf16, #tpu.memory_space<vmem>>, vector<1x8x16x128xbf16>,
    return
  }
  func.func @transform_0(%arg0: i32, %arg1: i32) -> (i32, i32, i32, i32) {
    %c0_i32 = arith.constant 0 : i32
    %c0_i32_0 = arith.constant 0 : i32
    %c0_i32_1 = arith.constant 0 : i32
    return %arg0, %arg1, %c0_i32, %c0_i32_0 : i32, i32, i32, i32
  }
  func.func @transform_1(%arg0: i32, %arg1: i32) -> (i32, i32) {
    %c0_i32 = arith.constant 0 : i32
    %c0_i32_0 = arith.constant 0 : i32
    %c0_i32_1 = arith.constant 0 : i32
    return %c0_i32, %c0_i32_0 : i32, i32
  }
  func.func @transform_2(%arg0: i32, %arg1: i32) -> (i32, i32) {
    %c0_i32 = arith.constant 0 : i32
    %c0_i32_0 = arith.constant 0 : i32
    %c0_i32_1 = arith.constant 0 : i32
    return %c0_i32, %c0_i32_0 : i32, i32
  }
  func.func @transform_3(%arg0: i32, %arg1: i32) -> (i32, i32, i32, i32) {
    %c0_i32 = arith.constant 0 : i32
    %c0_i32_0 = arith.constant 0 : i32
    %c0_i32_1 = arith.constant 0 : i32
    return %arg0, %arg1, %c0_i32, %c0_i32_0 : i32, i32, i32, i32
  }
}

</mosaic_0001>

<llo_original>
// kernel: vgg_block.5
$region0: #{vgg_block.5}
  #allocation0 [shape = 'u32[]', space=smem, size = 0x4, offset = 0x4, fixed_abs, tag = 'smem constant byte address 0x4 - core index']
  #allocation1 [shape = 'u32[144,128]{1,0:T(1,128)}', space=vmem, size = 0x12000, scoped, tag = 'internal scratch']
  %s0 = inlined_call_operand.vmem [shape: bf16[2,16,16,128], index: 0, kind: input, shape index: {}]
  %s1 = inlined_call_operand.vmem [shape: f32[1,128], index: 1, kind: input, shape index: {}]
  %s2 = inlined_call_operand.vmem [shape: f32[1,128], index: 2, kind: input, shape index: {}]
  %s3 = inlined_call_operand.vmem [shape: bf16[2,16,16,128], index: 3, kind: output, shape index: {}]
  %s4 = sld [smem:[#allocation0]]
  $region45: #{vgg_block.5} parent=0
    _
  %s6 = ssub.s32 1, %s4
  %s7 = scalar_select 0, %s6, %s4
  loop: start=0, step=1, limit=6
  $region2: #{vgg_block.5} parent=0 // loop_pre_header
    _
  $region3: #{vgg_block.5} parent=0 // loop_header
    %s9 = sphi 0, %s13
    %p10 = scmp.ge.s32.totalorder %s9, 6
    %s16 = sphi 0, %s28
    %s17 = sphi 0, %s24
    %s18 = sphi 0, %s16
    %s19 = sphi 0, %s17
    %s20 = sphi 0, %s18
    %s21 = sphi 0, %s19
    %s33 = sphi 0, %s35
    %s36 = sphi 0, %s33
    %s37 = sphi 0, %s36
    %s53 = sphi 0, %s37
    %s57 = sphi 0, %s57
    %s59 = sphi 0, %s57
    %s60 = sphi 0, %s59
    %s74 = sphi 0, %s60
    %s78 = sphi 0, %s78
    %s80 = sphi 0, %s78
    %s81 = sphi 0, %s80
    %s95 = sphi 0, %s81
    %s103 = sphi 0, %s105
    %s106 = sphi 0, %s103
    %s107 = sphi 0, %s106
    %s123 = sphi 0, %s107
  $region4: #{vgg_block.5} parent=0 // loop_header_branch
    %12 = sbr.rel (%p10) target = $region8
  $region5: #{vgg_block.5} parent=0 // loop_body
    %s14 = ssub.s32 %s9, 1
    %s15 = ssub.s32 %s9, 2
    %s22 = sadd.s32 1, %s17
    %p23 = scmp.ge.s32.totalorder %s22, 2
    %s24 = scalar_select %p23, 0, %s22
    %s25 = sadd.s32 1, %s16
    %s26 = scalar_select %p23, %s25, %s16
    %p27 = scmp.ge.s32.totalorder %s26, 2
    %s28 = scalar_select %p27, 0, %s26
    %s29 = ssub.s32 %s16, %s28
    %s30 = ssub.s32 %s17, %s24
    %s31 = sor.u32 %s29, %s30
    %p32 = scmp.eq.s32.totalorder %s31, 0
    %s34 = sadd.s32 %s33, 1
    %s35 = scalar_select %p32, %s33, %s34
    %p38 = pneg %p32
    %p39 = scmp.eq.s32.totalorder %s9, 3
    %p40 = por %p38, %p39
    %p41 = scmp.ne.s32.totalorder %s33, %s36
    %p42 = scmp.eq.s32.totalorder %s9, 0
    %p43 = por %p41, %p42
    %p44 = scmp.ne.s32.totalorder %s33, %s36
    %p45 = scmp.eq.s32.totalorder %s14, 3
    %p46 = por %p44, %p45
    %p47 = scmp.ne.s32.totalorder %s36, %s37
    %p48 = scmp.eq.s32.totalorder %s14, 0
    %p49 = por %p47, %p48
    %p50 = scmp.ne.s32.totalorder %s36, %s37
    %p51 = scmp.eq.s32.totalorder %s15, 3
    %p52 = por %p50, %p51
    %p54 = scmp.ne.s32.totalorder %s37, %s53
    %p55 = scmp.eq.s32.totalorder %s15, 0
    %p56 = por %p54, %p55
    %s58 = sadd.s32 %s57, 1
    %p61 = scmp.eq.s32.totalorder %s9, 3
    %p62 = scmp.ne.s32.totalorder %s57, %s59
    %p63 = scmp.eq.s32.totalorder %s9, 0
    %p64 = por %p62, %p63
    %p65 = scmp.ne.s32.totalorder %s57, %s59
    %p66 = scmp.eq.s32.totalorder %s14, 3
    %p67 = por %p65, %p66
    %p68 = scmp.ne.s32.totalorder %s59, %s60
    %p69 = scmp.eq.s32.totalorder %s14, 0
    %p70 = por %p68, %p69
    %p71 = scmp.ne.s32.totalorder %s59, %s60
    %p72 = scmp.eq.s32.totalorder %s15, 3
    %p73 = por %p71, %p72
    %p75 = scmp.ne.s32.totalorder %s60, %s74
    %p76 = scmp.eq.s32.totalorder %s15, 0
    %p77 = por %p75, %p76
    %s79 = sadd.s32 %s78, 1
    %p82 = scmp.eq.s32.totalorder %s9, 3
    %p83 = scmp.ne.s32.totalorder %s78, %s80
    %p84 = scmp.eq.s32.totalorder %s9, 0
    %p85 = por %p83, %p84
    %p86 = scmp.ne.s32.totalorder %s78, %s80
    %p87 = scmp.eq.s32.totalorder %s14, 3
    %p88 = por %p86, %p87
    %p89 = scmp.ne.s32.totalorder %s80, %s81
    %p90 = scmp.eq.s32.totalorder %s14, 0
    %p91 = por %p89, %p90
    %p92 = scmp.ne.s32.totalorder %s80, %s81
    %p93 = scmp.eq.s32.totalorder %s15, 3
    %p94 = por %p92, %p93
    %p96 = scmp.ne.s32.totalorder %s81, %s95
    %p97 = scmp.eq.s32.totalorder %s15, 0
    %p98 = por %p96, %p97
    %s99 = ssub.s32 %s16, %s28
    %s100 = ssub.s32 %s17, %s24
    %s101 = sor.u32 %s99, %s100
    %p102 = scmp.eq.s32.totalorder %s101, 0
    %s104 = sadd.s32 %s103, 1
    %s105 = scalar_select %p102, %s103, %s104
    %p108 = pneg %p102
    %p109 = scmp.eq.s32.totalorder %s9, 3
    %p110 = por %p108, %p109
    %p111 = scmp.ne.s32.totalorder %s103, %s106
    %p112 = scmp.eq.s32.totalorder %s9, 0
    %p113 = por %p111, %p112
    %p114 = scmp.ne.s32.totalorder %s103, %s106
    %p115 = scmp.eq.s32.totalorder %s14, 3
    %p116 = por %p114, %p115
    %p117 = scmp.ne.s32.totalorder %s106, %s107
    %p118 = scmp.eq.s32.totalorder %s14, 0
    %p119 = por %p117, %p118
    %p120 = scmp.ne.s32.totalorder %s106, %s107
    %p121 = scmp.eq.s32.totalorder %s15, 3
    %p122 = por %p120, %p121
    %p124 = scmp.ne.s32.totalorder %s107, %s123
    %p125 = scmp.eq.s32.totalorder %s15, 0
    %p126 = por %p124, %p125
    %p127 = scmp.le.s32.totalorder 1, %s9
    %p128 = scmp.lt.s32.totalorder %s9, 5
    %p129 = pnand %p127, %p128
    %p130 = pneg %p129
    // Predicated region
    $region9: #{vgg_block.5} parent=5 // pred_check
      _
    $region10: #{vgg_block.5} parent=5 // pred_check_branch
      %132 = sbr.rel (%p129) target = $region12
    $region11: #{vgg_block.5} parent=5 // pred_region
      %s133 = ssub.s32 %s9, 1
      // Predicated region
      $region13: #{vgg_block.5} parent=11 // pred_check
        %p134 = pneg %p70
      $region14: #{vgg_block.5} parent=11 // pred_check_branch
        %136 = sbr.rel (%p134) target = $region16
      $region15: #{vgg_block.5} parent=11 // pred_region
        _
      $region16: #{vgg_block.5} parent=11 // pred_fallthru
        _
      // Predicated region
      $region17: #{vgg_block.5} parent=11 // pred_check
        %p137 = pneg %p91
      $region18: #{vgg_block.5} parent=11 // pred_check_branch
        %139 = sbr.rel (%p137) target = $region20
      $region19: #{vgg_block.5} parent=11 // pred_region
        _
      $region20: #{vgg_block.5} parent=11 // pred_fallthru
        _
    $region12: #{vgg_block.5} parent=5 // pred_fallthru
      _
    %p140 = scmp.lt.s32.totalorder %s9, 4
    // Predicated region
    $region21: #{vgg_block.5} parent=5 // pred_check
      %p141 = pneg %p140
    $region22: #{vgg_block.5} parent=5 // pred_check_branch
      %143 = sbr.rel (%p141) target = $region24
    $region23: #{vgg_block.5} parent=5 // pred_region
      // Predicated region
      $region25: #{vgg_block.5} parent=23 // pred_check
        %p144 = pneg %p43
      $region26: #{vgg_block.5} parent=23 // pred_check_branch
        %146 = sbr.rel (%p144) target = $region28
      $region27: #{vgg_block.5} parent=23 // pred_region
        %s147 = smul.u32 8, %s17
        %p148 = scmp.lt.s32.totalorder %s16, 1
        %s149 = scalar_select %p148, %s16, 1
        %p150 = scmp.lt.s32.totalorder %s147, 15
        %s151 = scalar_select %p150, %s147, 15
        %s152 = smul.addr %s151, 2
        %s153 = smul.addr %s149, 32
        %s154 = sadd.s32 %s152, %s153
        %s155 = smul.addr %s154, 4
        %s156 = scalar_lea.vmem %s0, %s155
        %s157 = smul.u32 8, %s17
      $region28: #{vgg_block.5} parent=23 // pred_fallthru
        _
    $region24: #{vgg_block.5} parent=5 // pred_fallthru
      _
    %p158 = scmp.le.s32.totalorder 1, %s9
    %p159 = scmp.lt.s32.totalorder %s9, 5
    %p160 = pnand %p158, %p159
    %p161 = pneg %p160
    // Predicated region
    $region29: #{vgg_block.5} parent=5 // pred_check
      _
    $region30: #{vgg_block.5} parent=5 // pred_check_branch
      %163 = sbr.rel (%p160) target = $region32
    $region31: #{vgg_block.5} parent=5 // pred_region
      %s164 = ssub.s32 %s9, 1
      %s165 = smul.u32 8, %s19
      %p166 = scmp.lt.s32.totalorder %s18, 1
      %s167 = scalar_select %p166, %s18, 1
      %p168 = scmp.lt.s32.totalorder %s165, 15
      %s169 = scalar_select %p168, %s165, 15
      %s170 = smul.addr %s169, 2
      %s171 = smul.addr %s167, 32
      %s172 = sadd.s32 %s170, %s171
      %s173 = smul.addr %s172, 4
      %s174 = scalar_lea.vmem %s0, %s173
      %p175 = pneg %p49
      %p176 = pneg %p46
      %p177 = pneg %p70
      %p178 = pneg %p67
      %p179 = pneg %p91
      %p180 = pneg %p88
      %p181 = pneg %p119
      %p182 = pneg %p116
      %s183 = smul.u32 8, %s19
      %p184 = scmp.lt.s32.totalorder %s18, 1
      %s185 = scalar_select %p184, %s18, 1
      %p186 = scmp.lt.s32.totalorder %s183, 15
      %s187 = scalar_select %p186, %s183, 15
      %s188 = smul.addr %s187, 2
      %s189 = smul.addr %s185, 32
      %s190 = sadd.s32 %s188, %s189
      %s191 = smul.addr %s190, 4
      %s192 = scalar_lea.vmem %s3, %s191
      %s193 = smul.u32 8, %s19
      %p194 = scmp.lt.s32.totalorder %s18, 1
      %s195 = scalar_select %p194, %s18, 1
      %p196 = scmp.lt.s32.totalorder %s193, 15
      %s197 = scalar_select %p196, %s193, 15
      %s198 = smul.addr %s197, 2
      %s199 = smul.addr %s195, 32
      %s200 = sadd.s32 %s198, %s199
      %s201 = smul.addr %s200, 4
      %s202 = scalar_lea.vmem %s0, %s201
      %s203 = smul.u32 8, %s19
      %s204 = smul.u32 8, %s19
      %p205 = scmp.lt.s32.totalorder %s18, 1
      %s206 = scalar_select %p205, %s18, 1
      %p207 = scmp.lt.s32.totalorder %s204, 15
      %s208 = scalar_select %p207, %s204, 15
      %s209 = smul.addr %s208, 2
      %s210 = smul.addr %s206, 32
      %s211 = sadd.s32 %s209, %s210
      %s212 = smul.addr %s211, 4
      %s213 = scalar_lea.vmem %s3, %s212
      %s214 = smul.u32 8, %s19
      %v215 = vld [vmem:[%s202] sm:$0xf]
      %v216 = vld [vmem:[%s202 + $0x4] sm:$0xf]
      %v217 = vld [vmem:[%s202 + $0x8] sm:$0xf]
      %v218 = vld [vmem:[%s202 + $0xc] sm:$0xf]
      %v219 = vld [vmem:[%s202 + $0x10] sm:$0xf]
      %v220 = vld [vmem:[%s202 + $0x14] sm:$0xf]
      %v221 = vld [vmem:[%s202 + $0x18] sm:$0xf]
      %v222 = vld [vmem:[%s202 + $0x1c] sm:$0xf]
      %v223 = vld [vmem:[%s202 + $0x20] sm:$0xf]
      %v224 = vld [vmem:[%s202 + $0x24] sm:$0xf]
      %v225 = vld [vmem:[%s202 + $0x28] sm:$0xf]
      %v226 = vld [vmem:[%s202 + $0x2c] sm:$0xf]
      %v227 = vld [vmem:[%s202 + $0x30] sm:$0xf]
      %v228 = vld [vmem:[%s202 + $0x34] sm:$0xf]
      %v229 = vld [vmem:[%s202 + $0x38] sm:$0xf]
      %v230 = vld [vmem:[%s202 + $0x3c] sm:$0xf]
      %v231 = vunpack.c.l.bf16 %v215
      %v232 = vunpack.c.l.bf16 %v216
      %v233 = vunpack.c.l.bf16 %v217
      %v234 = vunpack.c.l.bf16 %v218
      %v235 = vunpack.c.l.bf16 %v219
      %v236 = vunpack.c.l.bf16 %v220
      %v237 = vunpack.c.l.bf16 %v221
      %v238 = vunpack.c.l.bf16 %v222
      %v239 = vunpack.c.l.bf16 %v223
      %v240 = vunpack.c.l.bf16 %v224
      %v241 = vunpack.c.l.bf16 %v225
      %v242 = vunpack.c.l.bf16 %v226
      %v243 = vunpack.c.l.bf16 %v227
      %v244 = vunpack.c.l.bf16 %v228
      %v245 = vunpack.c.l.bf16 %v229
      %v246 = vunpack.c.l.bf16 %v230
      %v247 = vld [vmem:[%s1] sm:$0x1]
      %v249 = vlaneseq
      %v250 = vshrl.u32 %v249, 7
      %v251 = vsub.s32 0, %v250
      %v252 = vrot.slane %v247, %v251
      %v254 = vmul.f32 %v231, %v252
      %v255 = vmul.f32 %v232, %v252
      %v256 = vmul.f32 %v233, %v252
      %v257 = vmul.f32 %v234, %v252
      %v258 = vmul.f32 %v235, %v252
      %v259 = vmul.f32 %v236, %v252
      %v260 = vmul.f32 %v237, %v252
      %v261 = vmul.f32 %v238, %v252
      %v262 = vmul.f32 %v239, %v252
      %v263 = vmul.f32 %v240, %v252
      %v264 = vmul.f32 %v241, %v252
      %v265 = vmul.f32 %v242, %v252
      %v266 = vmul.f32 %v243, %v252
      %v267 = vmul.f32 %v244, %v252
      %v268 = vmul.f32 %v245, %v252
      %v269 = vmul.f32 %v246, %v252
      %v270 = vld [vmem:[%s2] sm:$0x1]
      %v272 = vlaneseq
      %v273 = vshrl.u32 %v272, 7
      %v274 = vsub.s32 0, %v273
      %v275 = vrot.slane %v270, %v274
      %v277 = vadd.f32 %v254, %v275
      %v278 = vadd.f32 %v255, %v275
      %v279 = vadd.f32 %v256, %v275
      %v280 = vadd.f32 %v257, %v275
      %v281 = vadd.f32 %v258, %v275
      %v282 = vadd.f32 %v259, %v275
      %v283 = vadd.f32 %v260, %v275
      %v284 = vadd.f32 %v261, %v275
      %v285 = vadd.f32 %v262, %v275
      %v286 = vadd.f32 %v263, %v275
      %v287 = vadd.f32 %v264, %v275
      %v288 = vadd.f32 %v265, %v275
      %v289 = vadd.f32 %v266, %v275
      %v290 = vadd.f32 %v267, %v275
      %v291 = vadd.f32 %v268, %v275
      %v292 = vadd.f32 %v269, %v275
      %v293 = vmax.f32 %v277, 0.0
      %v294 = vmax.f32 %v278, 0.0
      %v295 = vmax.f32 %v279, 0.0
      %v296 = vmax.f32 %v280, 0.0
      %v297 = vmax.f32 %v281, 0.0
      %v298 = vmax.f32 %v282, 0.0
      %v299 = vmax.f32 %v283, 0.0
      %v300 = vmax.f32 %v284, 0.0
      %v301 = vmax.f32 %v285, 0.0
      %v302 = vmax.f32 %v286, 0.0
      %v303 = vmax.f32 %v287, 0.0
      %v304 = vmax.f32 %v288, 0.0
      %v305 = vmax.f32 %v289, 0.0
      %v306 = vmax.f32 %v290, 0.0
      %v307 = vmax.f32 %v291, 0.0
      %v308 = vmax.f32 %v292, 0.0
      %v309 = vpack.c.bf16 %v294, %v293
      %v310 = vpack.c.bf16 %v296, %v295
      %v311 = vpack.c.bf16 %v298, %v297
      %v312 = vpack.c.bf16 %v300, %v299
      %v313 = vpack.c.bf16 %v302, %v301
      %v314 = vpack.c.bf16 %v304, %v303
      %v315 = vpack.c.bf16 %v306, %v305
      %v316 = vpack.c.bf16 %v308, %v307
      %v325 = vunpack.c.l.b16 %v309
      %v326 = vunpack.c.h.b16 %v309
      %v327 = vunpack.c.l.b16 %v310
      %v328 = vunpack.c.h.b16 %v310
      %v329 = vunpack.c.l.b16 %v311
      %v330 = vunpack.c.h.b16 %v311
      %v331 = vunpack.c.l.b16 %v312
      %v332 = vunpack.c.h.b16 %v312
      %v333 = vunpack.c.l.b16 %v313
      %v334 = vunpack.c.h.b16 %v313
      %v335 = vunpack.c.l.b16 %v314
      %v336 = vunpack.c.h.b16 %v314
      %v337 = vunpack.c.l.b16 %v315
      %v338 = vunpack.c.h.b16 %v315
      %v339 = vunpack.c.l.b16 %v316
      %v340 = vunpack.c.h.b16 %v316
      %v341 = vpack.c.b16 %v325, %v325
      %v342 = vpack.c.b16 %v326, %v326
      %v343 = vpack.c.b16 %v327, %v327
      %v344 = vpack.c.b16 %v328, %v328
      %v345 = vpack.c.b16 %v329, %v329
      %v346 = vpack.c.b16 %v330, %v330
      %v347 = vpack.c.b16 %v331, %v331
      %v348 = vpack.c.b16 %v332, %v332
      %v349 = vpack.c.b16 %v333, %v333
      %v350 = vpack.c.b16 %v334, %v334
      %v351 = vpack.c.b16 %v335, %v335
      %v352 = vpack.c.b16 %v336, %v336
      %v353 = vpack.c.b16 %v337, %v337
      %v354 = vpack.c.b16 %v338, %v338
      %v355 = vpack.c.b16 %v339, %v339
      %v356 = vpack.c.b16 %v340, %v340
      %373 = vst [vmem:[%s213] sm:$0xf] %v341
      %374 = vst [vmem:[%s213 + $0x4] sm:$0xf] %v342
      %375 = vst [vmem:[%s213 + $0x8] sm:$0xf] %v343
      %376 = vst [vmem:[%s213 + $0xc] sm:$0xf] %v344
      %377 = vst [vmem:[%s213 + $0x10] sm:$0xf] %v345
      %378 = vst [vmem:[%s213 + $0x14] sm:$0xf] %v346
      %379 = vst [vmem:[%s213 + $0x18] sm:$0xf] %v347
      %380 = vst [vmem:[%s213 + $0x1c] sm:$0xf] %v348
      %381 = vst [vmem:[%s213 + $0x20] sm:$0xf] %v349
      %382 = vst [vmem:[%s213 + $0x24] sm:$0xf] %v350
      %383 = vst [vmem:[%s213 + $0x28] sm:$0xf] %v351
      %384 = vst [vmem:[%s213 + $0x2c] sm:$0xf] %v352
      %385 = vst [vmem:[%s213 + $0x30] sm:$0xf] %v353
      %386 = vst [vmem:[%s213 + $0x34] sm:$0xf] %v354
      %387 = vst [vmem:[%s213 + $0x38] sm:$0xf] %v355
      %388 = vst [vmem:[%s213 + $0x3c] sm:$0xf] %v356
      %s389 = smul.u32 8, %s19
      %p390 = scmp.lt.s32.totalorder %s18, 1
      %s391 = scalar_select %p390, %s18, 1
      %p392 = scmp.lt.s32.totalorder %s389, 15
      %s393 = scalar_select %p392, %s389, 15
      %s394 = smul.addr %s393, 2
      %s395 = smul.addr %s391, 32
      %s396 = sadd.s32 %s394, %s395
      %s397 = smul.addr %s396, 4
      %s398 = scalar_lea.vmem %s3, %s397
      // Predicated region
      $region33: #{vgg_block.5} parent=31 // pred_check
        %p399 = pneg %p116
      $region34: #{vgg_block.5} parent=31 // pred_check_branch
        %401 = sbr.rel (%p399) target = $region36
      $region35: #{vgg_block.5} parent=31 // pred_region
        %s402 = smul.u32 8, %s19
      $region36: #{vgg_block.5} parent=31 // pred_fallthru
        _
    $region32: #{vgg_block.5} parent=5 // pred_fallthru
      _
    %p403 = scmp.le.s32.totalorder 2, %s9
    // Predicated region
    $region37: #{vgg_block.5} parent=5 // pred_check
      %p404 = pneg %p403
    $region38: #{vgg_block.5} parent=5 // pred_check_branch
      %406 = sbr.rel (%p404) target = $region40
    $region39: #{vgg_block.5} parent=5 // pred_region
      %s407 = ssub.s32 %s9, 2
      // Predicated region
      $region41: #{vgg_block.5} parent=39 // pred_check
        %p408 = pneg %p122
      $region42: #{vgg_block.5} parent=39 // pred_check_branch
        %410 = sbr.rel (%p408) target = $region44
      $region43: #{vgg_block.5} parent=39 // pred_region
        %s411 = smul.u32 8, %s21
        %p412 = scmp.lt.s32.totalorder %s20, 1
        %s413 = scalar_select %p412, %s20, 1
        %p414 = scmp.lt.s32.totalorder %s411, 15
        %s415 = scalar_select %p414, %s411, 15
        %s416 = smul.addr %s415, 2
        %s417 = smul.addr %s413, 32
        %s418 = sadd.s32 %s416, %s417
        %s419 = smul.addr %s418, 4
        %s420 = scalar_lea.vmem %s3, %s419
      $region44: #{vgg_block.5} parent=39 // pred_fallthru
        _
    $region40: #{vgg_block.5} parent=5 // pred_fallthru
      _
  $region6: #{vgg_block.5} parent=0 // loop_footer
    %s13 = sadd.s32 1, %s9
  $region7: #{vgg_block.5} parent=0 // loop_footer_branch
    %8 = sbr.rel target = $region3
  $region8: #{vgg_block.5} parent=0 // loop_exit
    _

// kernel: vgg_block.3
$region0: #{vgg_block.3}
  #allocation0 [shape = 'u32[]', space=smem, size = 0x4, offset = 0x4, fixed_abs, tag = 'smem constant byte address 0x4 - core index']
  #allocation1 [shape = 'u32[144,128]{1,0:T(1,128)}', space=vmem, size = 0x12000, scoped, tag = 'internal scratch']
  #allocation2 [shape = 'bf16[2,10,16,128]{3,2,1,0:T(16,128)(2,1)}', space=vmem, size = 0x14000, scoped, tag = 'scratch operand']
  #allocation3 [shape = 's32[6]{0}', space=sflag, size = 0x18, scoped, tag = 'scratch operand']
  #allocation4 [shape = 's32[]', space=sflag, size = 0x4, offset = 0, fixed_abs, tag = 'sflag constant byte address 0x0 - dummy sync flag']
  #allocation5 [shape = 's32[]', space=sflag, size = 0x4, offset = 0, fixed_abs, tag = 'sflag constant byte address 0x0 - dummy sync flag']
  #allocation6 [shape = 's32[]', space=sflag, size = 0x4, offset = 0, fixed_abs, tag = 'sflag constant byte address 0x0 - dummy sync flag']
  #allocation7 [shape = 's32[]', space=sflag, size = 0x4, offset = 0, fixed_abs, tag = 'sflag constant byte address 0x0 - dummy sync flag']
  #allocation8 [shape = 's32[]', space=sflag, size = 0x4, offset = 0, fixed_abs, tag = 'sflag constant byte address 0x0 - dummy sync flag']
  #allocation9 [shape = 's32[]', space=sflag, size = 0x4, offset = 0, fixed_abs, tag = 'sflag constant byte address 0x0 - dummy sync flag']
  %s0 = inlined_call_operand.vmem [shape: bf16[2,16,16,128], index: 0, kind: input, shape index: {}]
  %s1 = inlined_call_operand.vmem [shape: bf16[3,384,128], index: 1, kind: input, shape index: {}]
  %s2 = inlined_call_operand.vmem [shape: f32[1,128], index: 2, kind: input, shape index: {}]
  %s3 = inlined_call_operand.vmem [shape: bf16[2,16,16,128], index: 3, kind: output, shape index: {0}]
  %s4 = inlined_call_operand.vmem [shape: f32[2,2,128], index: 4, kind: output, shape index: {1}]
  %5 = xla_tuple %s3, %s4
  %s6 = sld [smem:[#allocation0]]
  $region289: #{vgg_block.3} parent=0
    _
  %s8 = ssub.s32 1, %s6
  %s9 = scalar_select 0, %s8, %s6
  loop: start=0, step=1, limit=6
  $region2: #{vgg_block.3} parent=0 // loop_pre_header
    _
  $region3: #{vgg_block.3} parent=0 // loop_header
    %s11 = sphi 0, %s15
    %p12 = scmp.ge.s32.totalorder %s11, 6
    %s18 = sphi 0, %s30
    %s19 = sphi 0, %s26
    %s20 = sphi 0, %s18
    %s21 = sphi 0, %s19
    %s22 = sphi 0, %s20
    %s23 = sphi 0, %s21
    %s31 = sphi 0, %s31
    %s33 = sphi 0, %s31
    %s34 = sphi 0, %s33
    %s48 = sphi 0, %s34
    %s52 = sphi 0, %s52
    %s54 = sphi 0, %s52
    %s55 = sphi 0, %s54
    %s69 = sphi 0, %s55
    %s77 = sphi 0, %s79
    %s80 = sphi 0, %s77
    %s81 = sphi 0, %s80
    %s97 = sphi 0, %s81
    %s103 = sphi 0, %s105
    %s106 = sphi 0, %s103
    %s107 = sphi 0, %s106
    %s123 = sphi 0, %s107
  $region4: #{vgg_block.3} parent=0 // loop_header_branch
    %14 = sbr.rel (%p12) target = $region8
  $region5: #{vgg_block.3} parent=0 // loop_body
    %s16 = ssub.s32 %s11, 1
    %s17 = ssub.s32 %s11, 2
    %s24 = sadd.s32 1, %s19
    %p25 = scmp.ge.s32.totalorder %s24, 2
    %s26 = scalar_select %p25, 0, %s24
    %s27 = sadd.s32 1, %s18
    %s28 = scalar_select %p25, %s27, %s18
    %p29 = scmp.ge.s32.totalorder %s28, 2
    %s30 = scalar_select %p29, 0, %s28
    %s32 = sadd.s32 %s31, 1
    %p35 = scmp.eq.s32.totalorder %s11, 3
    %p36 = scmp.ne.s32.totalorder %s31, %s33
    %p37 = scmp.eq.s32.totalorder %s11, 0
    %p38 = por %p36, %p37
    %p39 = scmp.ne.s32.totalorder %s31, %s33
    %p40 = scmp.eq.s32.totalorder %s16, 3
    %p41 = por %p39, %p40
    %p42 = scmp.ne.s32.totalorder %s33, %s34
    %p43 = scmp.eq.s32.totalorder %s16, 0
    %p44 = por %p42, %p43
    %p45 = scmp.ne.s32.totalorder %s33, %s34
    %p46 = scmp.eq.s32.totalorder %s17, 3
    %p47 = por %p45, %p46
    %p49 = scmp.ne.s32.totalorder %s34, %s48
    %p50 = scmp.eq.s32.totalorder %s17, 0
    %p51 = por %p49, %p50
    %s53 = sadd.s32 %s52, 1
    %p56 = scmp.eq.s32.totalorder %s11, 3
    %p57 = scmp.ne.s32.totalorder %s52, %s54
    %p58 = scmp.eq.s32.totalorder %s11, 0
    %p59 = por %p57, %p58
    %p60 = scmp.ne.s32.totalorder %s52, %s54
    %p61 = scmp.eq.s32.totalorder %s16, 3
    %p62 = por %p60, %p61
    %p63 = scmp.ne.s32.totalorder %s54, %s55
    %p64 = scmp.eq.s32.totalorder %s16, 0
    %p65 = por %p63, %p64
    %p66 = scmp.ne.s32.totalorder %s54, %s55
    %p67 = scmp.eq.s32.totalorder %s17, 3
    %p68 = por %p66, %p67
    %p70 = scmp.ne.s32.totalorder %s55, %s69
    %p71 = scmp.eq.s32.totalorder %s17, 0
    %p72 = por %p70, %p71
    %s73 = ssub.s32 %s18, %s30
    %s74 = ssub.s32 %s19, %s26
    %s75 = sor.u32 %s73, %s74
    %p76 = scmp.eq.s32.totalorder %s75, 0
    %s78 = sadd.s32 %s77, 1
    %s79 = scalar_select %p76, %s77, %s78
    %p82 = pneg %p76
    %p83 = scmp.eq.s32.totalorder %s11, 3
    %p84 = por %p82, %p83
    %p85 = scmp.ne.s32.totalorder %s77, %s80
    %p86 = scmp.eq.s32.totalorder %s11, 0
    %p87 = por %p85, %p86
    %p88 = scmp.ne.s32.totalorder %s77, %s80
    %p89 = scmp.eq.s32.totalorder %s16, 3
    %p90 = por %p88, %p89
    %p91 = scmp.ne.s32.totalorder %s80, %s81
    %p92 = scmp.eq.s32.totalorder %s16, 0
    %p93 = por %p91, %p92
    %p94 = scmp.ne.s32.totalorder %s80, %s81
    %p95 = scmp.eq.s32.totalorder %s17, 3
    %p96 = por %p94, %p95
    %p98 = scmp.ne.s32.totalorder %s81, %s97
    %p99 = scmp.eq.s32.totalorder %s17, 0
    %p100 = por %p98, %p99
    %s101 = ssub.s32 %s18, %s30
    %p102 = scmp.eq.s32.totalorder %s101, 0
    %s104 = sadd.s32 %s103, 1
    %s105 = scalar_select %p102, %s103, %s104
    %p108 = pneg %p102
    %p109 = scmp.eq.s32.totalorder %s11, 3
    %p110 = por %p108, %p109
    %p111 = scmp.ne.s32.totalorder %s103, %s106
    %p112 = scmp.eq.s32.totalorder %s11, 0
    %p113 = por %p111, %p112
    %p114 = scmp.ne.s32.totalorder %s103, %s106
    %p115 = scmp.eq.s32.totalorder %s16, 3
    %p116 = por %p114, %p115
    %p117 = scmp.ne.s32.totalorder %s106, %s107
    %p118 = scmp.eq.s32.totalorder %s16, 0
    %p119 = por %p117, %p118
    %p120 = scmp.ne.s32.totalorder %s106, %s107
    %p121 = scmp.eq.s32.totalorder %s17, 3
    %p122 = por %p120, %p121
    %p124 = scmp.ne.s32.totalorder %s107, %s123
    %p125 = scmp.eq.s32.totalorder %s17, 0
    %p126 = por %p124, %p125
    %p127 = scmp.le.s32.totalorder 1, %s11
    %p128 = scmp.lt.s32.totalorder %s11, 5
    %p129 = pnand %p127, %p128
    %p130 = pneg %p129
    // Predicated region
    $region9: #{vgg_block.3} parent=5 // pred_check
      _
    $region10: #{vgg_block.3} parent=5 // pred_check_branch
      %132 = sbr.rel (%p129) target = $region12
    $region11: #{vgg_block.3} parent=5 // pred_region
      %s133 = ssub.s32 %s11, 1
      // Predicated region
      $region13: #{vgg_block.3} parent=11 // pred_check
        %p134 = pneg %p44
      $region14: #{vgg_block.3} parent=11 // pred_check_branch
        %136 = sbr.rel (%p134) target = $region16
      $region15: #{vgg_block.3} parent=11 // pred_region
        _
      $region16: #{vgg_block.3} parent=11 // pred_fallthru
        _
      // Predicated region
      $region17: #{vgg_block.3} parent=11 // pred_check
        %p137 = pneg %p65
      $region18: #{vgg_block.3} parent=11 // pred_check_branch
        %139 = sbr.rel (%p137) target = $region20
      $region19: #{vgg_block.3} parent=11 // pred_region
        _
      $region20: #{vgg_block.3} parent=11 // pred_fallthru
        _
    $region12: #{vgg_block.3} parent=5 // pred_fallthru
      _
    %p140 = scmp.lt.s32.totalorder %s11, 4
    // Predicated region
    $region21: #{vgg_block.3} parent=5 // pred_check
      %p141 = pneg %p140
    $region22: #{vgg_block.3} parent=5 // pred_check_branch
      %143 = sbr.rel (%p141) target = $region24
    $region23: #{vgg_block.3} parent=5 // pred_region
      _
    $region24: #{vgg_block.3} parent=5 // pred_fallthru
      _
    %p144 = scmp.le.s32.totalorder 1, %s11
    %p145 = scmp.lt.s32.totalorder %s11, 5
    %p146 = pnand %p144, %p145
    %p147 = pneg %p146
    // Predicated region
    $region25: #{vgg_block.3} parent=5 // pred_check
      _
    $region26: #{vgg_block.3} parent=5 // pred_check_branch
      %149 = sbr.rel (%p146) target = $region28
    $region27: #{vgg_block.3} parent=5 // pred_region
      %s150 = ssub.s32 %s11, 1
      %p151 = pneg %p44
      %p152 = pneg %p41
      %p153 = pneg %p65
      %p154 = pneg %p62
      %p155 = pneg %p93
      %p156 = pneg %p90
      %s157 = smul.u32 8, %s21
      %p158 = scmp.lt.s32.totalorder %s20, 1
      %s159 = scalar_select %p158, %s20, 1
      %p160 = scmp.lt.s32.totalorder %s157, 15
      %s161 = scalar_select %p160, %s157, 15
      %s162 = smul.addr %s161, 2
      %s163 = smul.addr %s159, 32
      %s164 = sadd.s32 %s162, %s163
      %s165 = smul.addr %s164, 4
      %s166 = scalar_lea.vmem %s3, %s165
      %p167 = pneg %p119
      %p168 = pneg %p116
      %p169 = scmp.lt.s32.totalorder %s20, 1
      %s170 = scalar_select %p169, %s20, 1
      %s171 = smul.addr %s170, 2
      %s172 = scalar_lea.vmem %s4, %s171
      %s173 = smul.u32 8, %s21
      %p174 = scmp.lt.s32.totalorder %s20, 1
      %s175 = scalar_select %p174, %s20, 1
      %p176 = scmp.lt.s32.totalorder %s173, 15
      %s177 = scalar_select %p176, %s173, 15
      %s178 = smul.addr %s177, 2
      %s179 = smul.addr %s175, 32
      %s180 = sadd.s32 %s178, %s179
      %s181 = smul.addr %s180, 4
      %s182 = scalar_lea.vmem %s3, %s181
      %s183 = smul.u32 8, %s21
      %p184 = scmp.lt.s32.totalorder %s20, 1
      %s185 = scalar_select %p184, %s20, 1
      %s186 = smul.addr %s185, 2
      %s187 = scalar_lea.vmem %s4, %s186
      %s189 = sand.u32 %s21, 1
      %p190 = scmp.eq.s32.totalorder %s21, 0
      // Predicated region
      $region29: #{vgg_block.3} parent=27 // pred_check
        %p191 = pneg %p190
      $region30: #{vgg_block.3} parent=27 // pred_check_branch
        %193 = sbr.rel (%p191) target = $region32
      $region31: #{vgg_block.3} parent=27 // pred_region
        %s194 = smul.u32 %s21, 8
        %s195 = smul.u32 %s194, 2
        %s196 = smul.u32 %s20, 32
        %s197 = sadd.s32 %s195, %s196
        %s198 = smul.addr %s197, 4
        %s199 = scalar_lea.vmem %s0, %s198
        %s200 = smul.u32 %s189, 10
        %s201 = sadd.s32 1, %s200
        %s202 = smul.addr %s201, 8
        %s203 = scalar_lea.vmem [#allocation2], %s202
        %s204 = smul.u32 %s189, 3
        %s205 = scalar_lea.sflag [#allocation3], %s204
        %p207 = scmp.lt.u32.totalorder 64, 8
        %p208 = pneg %p207
        // Predicated region
        $region33: #{vgg_block.3} parent=31 // pred_check
          _
        $region34: #{vgg_block.3} parent=31 // pred_check_branch
          %210 = sbr.rel (%p207) target = $region36
        $region35: #{vgg_block.3} parent=31 // pred_region
          %s225 = sand.u32 64, 7
          %p226 = scmp.eq.s32.totalorder %s225, 0
          // Predicated region
          $region48: #{vgg_block.3} parent=35 // pred_check
            %p227 = pneg %p226
          $region49: #{vgg_block.3} parent=35 // pred_check_branch
            %229 = sbr.rel (%p227) target = $region51
          $region50: #{vgg_block.3} parent=35 // pred_region
            loop: start=0, step=1, limit=1
            $region52: #{vgg_block.3} parent=50 // loop_pre_header
              _
            $region53: #{vgg_block.3} parent=50 // loop_header
              %s231 = sphi 0, %s235
              %p232 = scmp.ge.s32.totalorder %s231, 1
              %s236 = sphi %s199, %s199
              %s237 = sphi %s203, %s203
            $region54: #{vgg_block.3} parent=50 // loop_header_branch
              %234 = sbr.rel (%p232) target = $region58
            $region55: #{vgg_block.3} parent=50 // loop_body
              %v238 = vld [vmem:[%s236] sm:$0xff]
              %239 = vst [vmem:[%s237] sm:$0xff] %v238
              %v240 = vld [vmem:[%s236 + $0x8] sm:$0xff]
              %241 = vst [vmem:[%s237 + $0x8] sm:$0xff] %v240
              %v242 = vld [vmem:[%s236 + $0x10] sm:$0xff]
              %243 = vst [vmem:[%s237 + $0x10] sm:$0xff] %v242
              %v244 = vld [vmem:[%s236 + $0x18] sm:$0xff]
              %245 = vst [vmem:[%s237 + $0x18] sm:$0xff] %v244
              %v246 = vld [vmem:[%s236 + $0x20] sm:$0xff]
              %247 = vst [vmem:[%s237 + $0x20] sm:$0xff] %v246
              %v248 = vld [vmem:[%s236 + $0x28] sm:$0xff]
              %249 = vst [vmem:[%s237 + $0x28] sm:$0xff] %v248
              %v250 = vld [vmem:[%s236 + $0x30] sm:$0xff]
              %251 = vst [vmem:[%s237 + $0x30] sm:$0xff] %v250
              %v252 = vld [vmem:[%s236 + $0x38] sm:$0xff]
              %253 = vst [vmem:[%s237 + $0x38] sm:$0xff] %v252
            $region56: #{vgg_block.3} parent=50 // loop_footer
              %s235 = sadd.s32 1, %s231
            $region57: #{vgg_block.3} parent=50 // loop_footer_branch
              %230 = sbr.rel target = $region53
            $region58: #{vgg_block.3} parent=50 // loop_exit
              _
          $region51: #{vgg_block.3} parent=35 // pred_fallthru
            _
          %p254 = pneg %p226
          // Predicated region
          $region59: #{vgg_block.3} parent=35 // pred_check
            _
          $region60: #{vgg_block.3} parent=35 // pred_check_branch
            %256 = sbr.rel (%p226) target = $region62
          $region61: #{vgg_block.3} parent=35 // pred_region
            %s257 = sand.u32 64, 7
          $region62: #{vgg_block.3} parent=35 // pred_fallthru
            _
        $region36: #{vgg_block.3} parent=31 // pred_fallthru
          _
        // Predicated region
        $region37: #{vgg_block.3} parent=31 // pred_check
          %p211 = pneg %p207
        $region38: #{vgg_block.3} parent=31 // pred_check_branch
          %213 = sbr.rel (%p211) target = $region40
        $region39: #{vgg_block.3} parent=31 // pred_region
          %s214 = sshllo.u32 0, 64
          loop: start=0, step=1, limit=1
          $region41: #{vgg_block.3} parent=39 // loop_pre_header
            _
          $region42: #{vgg_block.3} parent=39 // loop_header
            %s216 = sphi 0, %s220
            %p217 = scmp.ge.s32.totalorder %s216, 1
            %s221 = sphi %s199, %s199
            %s222 = sphi %s203, %s203
          $region43: #{vgg_block.3} parent=39 // loop_header_branch
            %219 = sbr.rel (%p217) target = $region47
          $region44: #{vgg_block.3} parent=39 // loop_body
            %v223 = vld [vmem:[%s221] sm:%s214]
            %224 = vst [vmem:[%s222] sm:%s214] %v223
          $region45: #{vgg_block.3} parent=39 // loop_footer
            %s220 = sadd.s32 1, %s216
          $region46: #{vgg_block.3} parent=39 // loop_footer_branch
            %215 = sbr.rel target = $region42
          $region47: #{vgg_block.3} parent=39 // loop_exit
            _
        $region40: #{vgg_block.3} parent=31 // pred_fallthru
          _
        // Predicated region
        $region63: #{vgg_block.3} parent=31 // pred_check
          _
        $region64: #{vgg_block.3} parent=31 // pred_check_branch
          %260 = sbr.rel (0) target = $region66
        $region65: #{vgg_block.3} parent=31 // pred_region
          %261 = vsyncadd %s205, 1024
        $region66: #{vgg_block.3} parent=31 // pred_fallthru
          _
        %p262 = scmp.gt.s32.totalorder %s21, 0
        // Predicated region
        $region67: #{vgg_block.3} parent=31 // pred_check
          %p263 = pneg %p262
        $region68: #{vgg_block.3} parent=31 // pred_check_branch
          %265 = sbr.rel (%p263) target = $region70
        $region69: #{vgg_block.3} parent=31 // pred_region
          %s266 = ssub.s32 %s194, 1
          %s267 = smul.u32 %s266, 2
          %s268 = sadd.s32 %s267, %s196
          %s269 = smul.addr %s268, 4
          %s270 = scalar_lea.vmem %s0, %s269
          %s271 = smul.addr %s200, 8
          %s272 = scalar_lea.vmem [#allocation2], %s271
          %s273 = sadd.s32 1, %s204
          %s274 = scalar_lea.sflag [#allocation3], %s273
          %p276 = scmp.lt.u32.totalorder 8, 8
          %p277 = pneg %p276
          // Predicated region
          $region71: #{vgg_block.3} parent=69 // pred_check
            _
          $region72: #{vgg_block.3} parent=69 // pred_check_branch
            %279 = sbr.rel (%p276) target = $region74
          $region73: #{vgg_block.3} parent=69 // pred_region
            %s294 = sand.u32 8, 7
            %p295 = scmp.eq.s32.totalorder %s294, 0
            // Predicated region
            $region86: #{vgg_block.3} parent=73 // pred_check
              %p296 = pneg %p295
            $region87: #{vgg_block.3} parent=73 // pred_check_branch
              %298 = sbr.rel (%p296) target = $region89
            $region88: #{vgg_block.3} parent=73 // pred_region
              loop: start=0, step=1, limit=1
              $region90: #{vgg_block.3} parent=88 // loop_pre_header
                _
              $region91: #{vgg_block.3} parent=88 // loop_header
                %s300 = sphi 0, %s304
                %p301 = scmp.ge.s32.totalorder %s300, 1
                %s305 = sphi %s270, %s270
                %s306 = sphi %s272, %s272
              $region92: #{vgg_block.3} parent=88 // loop_header_branch
                %303 = sbr.rel (%p301) target = $region96
              $region93: #{vgg_block.3} parent=88 // loop_body
                %v307 = vld [vmem:[%s305] sm:$0xff]
                %308 = vst [vmem:[%s306] sm:$0xff] %v307
              $region94: #{vgg_block.3} parent=88 // loop_footer
                %s304 = sadd.s32 1, %s300
              $region95: #{vgg_block.3} parent=88 // loop_footer_branch
                %299 = sbr.rel target = $region91
              $region96: #{vgg_block.3} parent=88 // loop_exit
                _
            $region89: #{vgg_block.3} parent=73 // pred_fallthru
              _
            %p309 = pneg %p295
            // Predicated region
            $region97: #{vgg_block.3} parent=73 // pred_check
              _
            $region98: #{vgg_block.3} parent=73 // pred_check_branch
              %311 = sbr.rel (%p295) target = $region100
            $region99: #{vgg_block.3} parent=73 // pred_region
              %s312 = sand.u32 8, 7
            $region100: #{vgg_block.3} parent=73 // pred_fallthru
              _
          $region74: #{vgg_block.3} parent=69 // pred_fallthru
            _
          // Predicated region
          $region75: #{vgg_block.3} parent=69 // pred_check
            %p280 = pneg %p276
          $region76: #{vgg_block.3} parent=69 // pred_check_branch
            %282 = sbr.rel (%p280) target = $region78
          $region77: #{vgg_block.3} parent=69 // pred_region
            %s283 = sshllo.u32 0, 8
            loop: start=0, step=1, limit=1
            $region79: #{vgg_block.3} parent=77 // loop_pre_header
              _
            $region80: #{vgg_block.3} parent=77 // loop_header
              %s285 = sphi 0, %s289
              %p286 = scmp.ge.s32.totalorder %s285, 1
              %s290 = sphi %s270, %s270
              %s291 = sphi %s272, %s272
            $region81: #{vgg_block.3} parent=77 // loop_header_branch
              %288 = sbr.rel (%p286) target = $region85
            $region82: #{vgg_block.3} parent=77 // loop_body
              %v292 = vld [vmem:[%s290] sm:%s283]
              %293 = vst [vmem:[%s291] sm:%s283] %v292
            $region83: #{vgg_block.3} parent=77 // loop_footer
              %s289 = sadd.s32 1, %s285
            $region84: #{vgg_block.3} parent=77 // loop_footer_branch
              %284 = sbr.rel target = $region80
            $region85: #{vgg_block.3} parent=77 // loop_exit
              _
          $region78: #{vgg_block.3} parent=69 // pred_fallthru
            _
          // Predicated region
          $region101: #{vgg_block.3} parent=69 // pred_check
            _
          $region102: #{vgg_block.3} parent=69 // pred_check_branch
            %315 = sbr.rel (0) target = $region104
          $region103: #{vgg_block.3} parent=69 // pred_region
            %316 = vsyncadd %s274, 128
          $region104: #{vgg_block.3} parent=69 // pred_fallthru
            _
        $region70: #{vgg_block.3} parent=31 // pred_fallthru
          _
        %p317 = scmp.lt.s32.totalorder %s21, 1
        // Predicated region
        $region105: #{vgg_block.3} parent=31 // pred_check
          %p318 = pneg %p317
        $region106: #{vgg_block.3} parent=31 // pred_check_branch
          %320 = sbr.rel (%p318) target = $region108
        $region107: #{vgg_block.3} parent=31 // pred_region
          %s321 = sadd.s32 %s194, 8
          %s322 = smul.u32 %s321, 2
          %s323 = sadd.s32 %s322, %s196
          %s324 = smul.addr %s323, 4
          %s325 = scalar_lea.vmem %s0, %s324
          %s326 = sadd.s32 9, %s200
          %s327 = smul.addr %s326, 8
          %s328 = scalar_lea.vmem [#allocation2], %s327
          %s329 = sadd.s32 2, %s204
          %s330 = scalar_lea.sflag [#allocation3], %s329
          %p332 = scmp.lt.u32.totalorder 8, 8
          %p333 = pneg %p332
          // Predicated region
          $region109: #{vgg_block.3} parent=107 // pred_check
            _
          $region110: #{vgg_block.3} parent=107 // pred_check_branch
            %335 = sbr.rel (%p332) target = $region112
          $region111: #{vgg_block.3} parent=107 // pred_region
            %s350 = sand.u32 8, 7
            %p351 = scmp.eq.s32.totalorder %s350, 0
            // Predicated region
            $region124: #{vgg_block.3} parent=111 // pred_check
              %p352 = pneg %p351
            $region125: #{vgg_block.3} parent=111 // pred_check_branch
              %354 = sbr.rel (%p352) target = $region127
            $region126: #{vgg_block.3} parent=111 // pred_region
              loop: start=0, step=1, limit=1
              $region128: #{vgg_block.3} parent=126 // loop_pre_header
                _
              $region129: #{vgg_block.3} parent=126 // loop_header
                %s356 = sphi 0, %s360
                %p357 = scmp.ge.s32.totalorder %s356, 1
                %s361 = sphi %s325, %s325
                %s362 = sphi %s328, %s328
              $region130: #{vgg_block.3} parent=126 // loop_header_branch
                %359 = sbr.rel (%p357) target = $region134
              $region131: #{vgg_block.3} parent=126 // loop_body
                %v363 = vld [vmem:[%s361] sm:$0xff]
                %364 = vst [vmem:[%s362] sm:$0xff] %v363
              $region132: #{vgg_block.3} parent=126 // loop_footer
                %s360 = sadd.s32 1, %s356
              $region133: #{vgg_block.3} parent=126 // loop_footer_branch
                %355 = sbr.rel target = $region129
              $region134: #{vgg_block.3} parent=126 // loop_exit
                _
            $region127: #{vgg_block.3} parent=111 // pred_fallthru
              _
            %p365 = pneg %p351
            // Predicated region
            $region135: #{vgg_block.3} parent=111 // pred_check
              _
            $region136: #{vgg_block.3} parent=111 // pred_check_branch
              %367 = sbr.rel (%p351) target = $region138
            $region137: #{vgg_block.3} parent=111 // pred_region
              %s368 = sand.u32 8, 7
            $region138: #{vgg_block.3} parent=111 // pred_fallthru
              _
          $region112: #{vgg_block.3} parent=107 // pred_fallthru
            _
          // Predicated region
          $region113: #{vgg_block.3} parent=107 // pred_check
            %p336 = pneg %p332
          $region114: #{vgg_block.3} parent=107 // pred_check_branch
            %338 = sbr.rel (%p336) target = $region116
          $region115: #{vgg_block.3} parent=107 // pred_region
            %s339 = sshllo.u32 0, 8
            loop: start=0, step=1, limit=1
            $region117: #{vgg_block.3} parent=115 // loop_pre_header
              _
            $region118: #{vgg_block.3} parent=115 // loop_header
              %s341 = sphi 0, %s345
              %p342 = scmp.ge.s32.totalorder %s341, 1
              %s346 = sphi %s325, %s325
              %s347 = sphi %s328, %s328
            $region119: #{vgg_block.3} parent=115 // loop_header_branch
              %344 = sbr.rel (%p342) target = $region123
            $region120: #{vgg_block.3} parent=115 // loop_body
              %v348 = vld [vmem:[%s346] sm:%s339]
              %349 = vst [vmem:[%s347] sm:%s339] %v348
            $region121: #{vgg_block.3} parent=115 // loop_footer
              %s345 = sadd.s32 1, %s341
            $region122: #{vgg_block.3} parent=115 // loop_footer_branch
              %340 = sbr.rel target = $region118
            $region123: #{vgg_block.3} parent=115 // loop_exit
              _
          $region116: #{vgg_block.3} parent=107 // pred_fallthru
            _
          // Predicated region
          $region139: #{vgg_block.3} parent=107 // pred_check
            _
          $region140: #{vgg_block.3} parent=107 // pred_check_branch
            %371 = sbr.rel (0) target = $region142
          $region141: #{vgg_block.3} parent=107 // pred_region
            %372 = vsyncadd %s330, 128
          $region142: #{vgg_block.3} parent=107 // pred_fallthru
            _
        $region108: #{vgg_block.3} parent=31 // pred_fallthru
          _
      $region32: #{vgg_block.3} parent=27 // pred_fallthru
        _
      %s373 = smul.u32 %s21, 8
      %s374 = smul.u32 %s189, 3
      %s375 = scalar_lea.sflag [#allocation3], %s374
      %s376 = smul.u32 4, 8
      %s377 = smul.u32 %s376, 2
      %s378 = smul.u32 %s377, 1
      %s379 = sshll.u32 %s378, 4
      %380 = dma.done %s375, %s379
      %p381 = scmp.gt.s32.totalorder %s21, 0
      // Predicated region
      $region143: #{vgg_block.3} parent=27 // pred_check
        %p382 = pneg %p381
      $region144: #{vgg_block.3} parent=27 // pred_check_branch
        %384 = sbr.rel (%p382) target = $region146
      $region145: #{vgg_block.3} parent=27 // pred_region
        %s385 = sadd.s32 1, %s374
        %s386 = scalar_lea.sflag [#allocation3], %s385
        %s387 = smul.u32 4, 1
        %s388 = smul.u32 %s387, 2
        %s389 = smul.u32 %s388, 1
        %s390 = sshll.u32 %s389, 4
        %391 = dma.done %s386, %s390
      $region146: #{vgg_block.3} parent=27 // pred_fallthru
        _
      %p392 = scmp.lt.s32.totalorder %s21, 1
      // Predicated region
      $region147: #{vgg_block.3} parent=27 // pred_check
        %p393 = pneg %p392
      $region148: #{vgg_block.3} parent=27 // pred_check_branch
        %395 = sbr.rel (%p393) target = $region150
      $region149: #{vgg_block.3} parent=27 // pred_region
        %s396 = sadd.s32 2, %s374
        %s397 = scalar_lea.sflag [#allocation3], %s396
        %s398 = smul.u32 4, 1
        %s399 = smul.u32 %s398, 2
        %s400 = smul.u32 %s399, 1
        %s401 = sshll.u32 %s400, 4
        %402 = dma.done %s397, %s401
      $region150: #{vgg_block.3} parent=27 // pred_fallthru
        _
      %s403 = sadd.s32 %s21, 1
      %p404 = scmp.lt.s32.totalorder %s403, 2
      // Predicated region
      $region151: #{vgg_block.3} parent=27 // pred_check
        %p405 = pneg %p404
      $region152: #{vgg_block.3} parent=27 // pred_check_branch
        %407 = sbr.rel (%p405) target = $region154
      $region153: #{vgg_block.3} parent=27 // pred_region
        %s408 = sand.u32 %s403, 1
        %s409 = smul.u32 %s403, 8
        %s410 = smul.u32 %s409, 2
        %s411 = smul.u32 %s20, 32
        %s412 = sadd.s32 %s410, %s411
        %s413 = smul.addr %s412, 4
        %s414 = scalar_lea.vmem %s0, %s413
        %s415 = smul.u32 %s408, 10
        %s416 = sadd.s32 1, %s415
        %s417 = smul.addr %s416, 8
        %s418 = scalar_lea.vmem [#allocation2], %s417
        %s419 = smul.u32 %s408, 3
        %s420 = scalar_lea.sflag [#allocation3], %s419
        %p422 = scmp.lt.u32.totalorder 64, 8
        %p423 = pneg %p422
        // Predicated region
        $region155: #{vgg_block.3} parent=153 // pred_check
          _
        $region156: #{vgg_block.3} parent=153 // pred_check_branch
          %425 = sbr.rel (%p422) target = $region158
        $region157: #{vgg_block.3} parent=153 // pred_region
          %s440 = sand.u32 64, 7
          %p441 = scmp.eq.s32.totalorder %s440, 0
          // Predicated region
          $region170: #{vgg_block.3} parent=157 // pred_check
            %p442 = pneg %p441
          $region171: #{vgg_block.3} parent=157 // pred_check_branch
            %444 = sbr.rel (%p442) target = $region173
          $region172: #{vgg_block.3} parent=157 // pred_region
            loop: start=0, step=1, limit=1
            $region174: #{vgg_block.3} parent=172 // loop_pre_header
              _
            $region175: #{vgg_block.3} parent=172 // loop_header
              %s446 = sphi 0, %s450
              %p447 = scmp.ge.s32.totalorder %s446, 1
              %s451 = sphi %s414, %s414
              %s452 = sphi %s418, %s418
            $region176: #{vgg_block.3} parent=172 // loop_header_branch
              %449 = sbr.rel (%p447) target = $region180
            $region177: #{vgg_block.3} parent=172 // loop_body
              %v453 = vld [vmem:[%s451] sm:$0xff]
              %454 = vst [vmem:[%s452] sm:$0xff] %v453
              %v455 = vld [vmem:[%s451 + $0x8] sm:$0xff]
              %456 = vst [vmem:[%s452 + $0x8] sm:$0xff] %v455
              %v457 = vld [vmem:[%s451 + $0x10] sm:$0xff]
              %458 = vst [vmem:[%s452 + $0x10] sm:$0xff] %v457
              %v459 = vld [vmem:[%s451 + $0x18] sm:$0xff]
              %460 = vst [vmem:[%s452 + $0x18] sm:$0xff] %v459
              %v461 = vld [vmem:[%s451 + $0x20] sm:$0xff]
              %462 = vst [vmem:[%s452 + $0x20] sm:$0xff] %v461
              %v463 = vld [vmem:[%s451 + $0x28] sm:$0xff]
              %464 = vst [vmem:[%s452 + $0x28] sm:$0xff] %v463
              %v465 = vld [vmem:[%s451 + $0x30] sm:$0xff]
              %466 = vst [vmem:[%s452 + $0x30] sm:$0xff] %v465
              %v467 = vld [vmem:[%s451 + $0x38] sm:$0xff]
              %468 = vst [vmem:[%s452 + $0x38] sm:$0xff] %v467
            $region178: #{vgg_block.3} parent=172 // loop_footer
              %s450 = sadd.s32 1, %s446
            $region179: #{vgg_block.3} parent=172 // loop_footer_branch
              %445 = sbr.rel target = $region175
            $region180: #{vgg_block.3} parent=172 // loop_exit
              _
          $region173: #{vgg_block.3} parent=157 // pred_fallthru
            _
          %p469 = pneg %p441
          // Predicated region
          $region181: #{vgg_block.3} parent=157 // pred_check
            _
          $region182: #{vgg_block.3} parent=157 // pred_check_branch
            %471 = sbr.rel (%p441) target = $region184
          $region183: #{vgg_block.3} parent=157 // pred_region
            %s472 = sand.u32 64, 7
          $region184: #{vgg_block.3} parent=157 // pred_fallthru
            _
        $region158: #{vgg_block.3} parent=153 // pred_fallthru
          _
        // Predicated region
        $region159: #{vgg_block.3} parent=153 // pred_check
          %p426 = pneg %p422
        $region160: #{vgg_block.3} parent=153 // pred_check_branch
          %428 = sbr.rel (%p426) target = $region162
        $region161: #{vgg_block.3} parent=153 // pred_region
          %s429 = sshllo.u32 0, 64
          loop: start=0, step=1, limit=1
          $region163: #{vgg_block.3} parent=161 // loop_pre_header
            _
          $region164: #{vgg_block.3} parent=161 // loop_header
            %s431 = sphi 0, %s435
            %p432 = scmp.ge.s32.totalorder %s431, 1
            %s436 = sphi %s414, %s414
            %s437 = sphi %s418, %s418
          $region165: #{vgg_block.3} parent=161 // loop_header_branch
            %434 = sbr.rel (%p432) target = $region169
          $region166: #{vgg_block.3} parent=161 // loop_body
            %v438 = vld [vmem:[%s436] sm:%s429]
            %439 = vst [vmem:[%s437] sm:%s429] %v438
          $region167: #{vgg_block.3} parent=161 // loop_footer
            %s435 = sadd.s32 1, %s431
          $region168: #{vgg_block.3} parent=161 // loop_footer_branch
            %430 = sbr.rel target = $region164
          $region169: #{vgg_block.3} parent=161 // loop_exit
            _
        $region162: #{vgg_block.3} parent=153 // pred_fallthru
          _
        // Predicated region
        $region185: #{vgg_block.3} parent=153 // pred_check
          _
        $region186: #{vgg_block.3} parent=153 // pred_check_branch
          %475 = sbr.rel (0) target = $region188
        $region187: #{vgg_block.3} parent=153 // pred_region
          %476 = vsyncadd %s420, 1024
        $region188: #{vgg_block.3} parent=153 // pred_fallthru
          _
        %p477 = scmp.gt.s32.totalorder %s403, 0
        // Predicated region
        $region189: #{vgg_block.3} parent=153 // pred_check
          %p478 = pneg %p477
        $region190: #{vgg_block.3} parent=153 // pred_check_branch
          %480 = sbr.rel (%p478) target = $region192
        $region191: #{vgg_block.3} parent=153 // pred_region
          %s481 = ssub.s32 %s409, 1
          %s482 = smul.u32 %s481, 2
          %s483 = sadd.s32 %s482, %s411
          %s484 = smul.addr %s483, 4
          %s485 = scalar_lea.vmem %s0, %s484
          %s486 = smul.addr %s415, 8
          %s487 = scalar_lea.vmem [#allocation2], %s486
          %s488 = sadd.s32 1, %s419
          %s489 = scalar_lea.sflag [#allocation3], %s488
          %p491 = scmp.lt.u32.totalorder 8, 8
          %p492 = pneg %p491
          // Predicated region
          $region193: #{vgg_block.3} parent=191 // pred_check
            _
          $region194: #{vgg_block.3} parent=191 // pred_check_branch
            %494 = sbr.rel (%p491) target = $region196
          $region195: #{vgg_block.3} parent=191 // pred_region
            %s509 = sand.u32 8, 7
            %p510 = scmp.eq.s32.totalorder %s509, 0
            // Predicated region
            $region208: #{vgg_block.3} parent=195 // pred_check
              %p511 = pneg %p510
            $region209: #{vgg_block.3} parent=195 // pred_check_branch
              %513 = sbr.rel (%p511) target = $region211
            $region210: #{vgg_block.3} parent=195 // pred_region
              loop: start=0, step=1, limit=1
              $region212: #{vgg_block.3} parent=210 // loop_pre_header
                _
              $region213: #{vgg_block.3} parent=210 // loop_header
                %s515 = sphi 0, %s519
                %p516 = scmp.ge.s32.totalorder %s515, 1
                %s520 = sphi %s485, %s485
                %s521 = sphi %s487, %s487
              $region214: #{vgg_block.3} parent=210 // loop_header_branch
                %518 = sbr.rel (%p516) target = $region218
              $region215: #{vgg_block.3} parent=210 // loop_body
                %v522 = vld [vmem:[%s520] sm:$0xff]
                %523 = vst [vmem:[%s521] sm:$0xff] %v522
              $region216: #{vgg_block.3} parent=210 // loop_footer
                %s519 = sadd.s32 1, %s515
              $region217: #{vgg_block.3} parent=210 // loop_footer_branch
                %514 = sbr.rel target = $region213
              $region218: #{vgg_block.3} parent=210 // loop_exit
                _
            $region211: #{vgg_block.3} parent=195 // pred_fallthru
              _
            %p524 = pneg %p510
            // Predicated region
            $region219: #{vgg_block.3} parent=195 // pred_check
              _
            $region220: #{vgg_block.3} parent=195 // pred_check_branch
              %526 = sbr.rel (%p510) target = $region222
            $region221: #{vgg_block.3} parent=195 // pred_region
              %s527 = sand.u32 8, 7
            $region222: #{vgg_block.3} parent=195 // pred_fallthru
              _
          $region196: #{vgg_block.3} parent=191 // pred_fallthru
            _
          // Predicated region
          $region197: #{vgg_block.3} parent=191 // pred_check
            %p495 = pneg %p491
          $region198: #{vgg_block.3} parent=191 // pred_check_branch
            %497 = sbr.rel (%p495) target = $region200
          $region199: #{vgg_block.3} parent=191 // pred_region
            %s498 = sshllo.u32 0, 8
            loop: start=0, step=1, limit=1
            $region201: #{vgg_block.3} parent=199 // loop_pre_header
              _
            $region202: #{vgg_block.3} parent=199 // loop_header
              %s500 = sphi 0, %s504
              %p501 = scmp.ge.s32.totalorder %s500, 1
              %s505 = sphi %s485, %s485
              %s506 = sphi %s487, %s487
            $region203: #{vgg_block.3} parent=199 // loop_header_branch
              %503 = sbr.rel (%p501) target = $region207
            $region204: #{vgg_block.3} parent=199 // loop_body
              %v507 = vld [vmem:[%s505] sm:%s498]
              %508 = vst [vmem:[%s506] sm:%s498] %v507
            $region205: #{vgg_block.3} parent=199 // loop_footer
              %s504 = sadd.s32 1, %s500
            $region206: #{vgg_block.3} parent=199 // loop_footer_branch
              %499 = sbr.rel target = $region202
            $region207: #{vgg_block.3} parent=199 // loop_exit
              _
          $region200: #{vgg_block.3} parent=191 // pred_fallthru
            _
          // Predicated region
          $region223: #{vgg_block.3} parent=191 // pred_check
            _
          $region224: #{vgg_block.3} parent=191 // pred_check_branch
            %530 = sbr.rel (0) target = $region226
          $region225: #{vgg_block.3} parent=191 // pred_region
            %531 = vsyncadd %s489, 128
          $region226: #{vgg_block.3} parent=191 // pred_fallthru
            _
        $region192: #{vgg_block.3} parent=153 // pred_fallthru
          _
        %p532 = scmp.lt.s32.totalorder %s403, 1
        // Predicated region
        $region227: #{vgg_block.3} parent=153 // pred_check
          %p533 = pneg %p532
        $region228: #{vgg_block.3} parent=153 // pred_check_branch
          %535 = sbr.rel (%p533) target = $region230
        $region229: #{vgg_block.3} parent=153 // pred_region
          %s536 = sadd.s32 %s409, 8
          %s537 = smul.u32 %s536, 2
          %s538 = sadd.s32 %s537, %s411
          %s539 = smul.addr %s538, 4
          %s540 = scalar_lea.vmem %s0, %s539
          %s541 = sadd.s32 9, %s415
          %s542 = smul.addr %s541, 8
          %s543 = scalar_lea.vmem [#allocation2], %s542
          %s544 = sadd.s32 2, %s419
          %s545 = scalar_lea.sflag [#allocation3], %s544
          %p547 = scmp.lt.u32.totalorder 8, 8
          %p548 = pneg %p547
          // Predicated region
          $region231: #{vgg_block.3} parent=229 // pred_check
            _
          $region232: #{vgg_block.3} parent=229 // pred_check_branch
            %550 = sbr.rel (%p547) target = $region234
          $region233: #{vgg_block.3} parent=229 // pred_region
            %s565 = sand.u32 8, 7
            %p566 = scmp.eq.s32.totalorder %s565, 0
            // Predicated region
            $region246: #{vgg_block.3} parent=233 // pred_check
              %p567 = pneg %p566
            $region247: #{vgg_block.3} parent=233 // pred_check_branch
              %569 = sbr.rel (%p567) target = $region249
            $region248: #{vgg_block.3} parent=233 // pred_region
              loop: start=0, step=1, limit=1
              $region250: #{vgg_block.3} parent=248 // loop_pre_header
                _
              $region251: #{vgg_block.3} parent=248 // loop_header
                %s571 = sphi 0, %s575
                %p572 = scmp.ge.s32.totalorder %s571, 1
                %s576 = sphi %s540, %s540
                %s577 = sphi %s543, %s543
              $region252: #{vgg_block.3} parent=248 // loop_header_branch
                %574 = sbr.rel (%p572) target = $region256
              $region253: #{vgg_block.3} parent=248 // loop_body
                %v578 = vld [vmem:[%s576] sm:$0xff]
                %579 = vst [vmem:[%s577] sm:$0xff] %v578
              $region254: #{vgg_block.3} parent=248 // loop_footer
                %s575 = sadd.s32 1, %s571
              $region255: #{vgg_block.3} parent=248 // loop_footer_branch
                %570 = sbr.rel target = $region251
              $region256: #{vgg_block.3} parent=248 // loop_exit
                _
            $region249: #{vgg_block.3} parent=233 // pred_fallthru
              _
            %p580 = pneg %p566
            // Predicated region
            $region257: #{vgg_block.3} parent=233 // pred_check
              _
            $region258: #{vgg_block.3} parent=233 // pred_check_branch
              %582 = sbr.rel (%p566) target = $region260
            $region259: #{vgg_block.3} parent=233 // pred_region
              %s583 = sand.u32 8, 7
            $region260: #{vgg_block.3} parent=233 // pred_fallthru
              _
          $region234: #{vgg_block.3} parent=229 // pred_fallthru
            _
          // Predicated region
          $region235: #{vgg_block.3} parent=229 // pred_check
            %p551 = pneg %p547
          $region236: #{vgg_block.3} parent=229 // pred_check_branch
            %553 = sbr.rel (%p551) target = $region238
          $region237: #{vgg_block.3} parent=229 // pred_region
            %s554 = sshllo.u32 0, 8
            loop: start=0, step=1, limit=1
            $region239: #{vgg_block.3} parent=237 // loop_pre_header
              _
            $region240: #{vgg_block.3} parent=237 // loop_header
              %s556 = sphi 0, %s560
              %p557 = scmp.ge.s32.totalorder %s556, 1
              %s561 = sphi %s540, %s540
              %s562 = sphi %s543, %s543
            $region241: #{vgg_block.3} parent=237 // loop_header_branch
              %559 = sbr.rel (%p557) target = $region245
            $region242: #{vgg_block.3} parent=237 // loop_body
              %v563 = vld [vmem:[%s561] sm:%s554]
              %564 = vst [vmem:[%s562] sm:%s554] %v563
            $region243: #{vgg_block.3} parent=237 // loop_footer
              %s560 = sadd.s32 1, %s556
            $region244: #{vgg_block.3} parent=237 // loop_footer_branch
              %555 = sbr.rel target = $region240
            $region245: #{vgg_block.3} parent=237 // loop_exit
              _
          $region238: #{vgg_block.3} parent=229 // pred_fallthru
            _
          // Predicated region
          $region261: #{vgg_block.3} parent=229 // pred_check
            _
          $region262: #{vgg_block.3} parent=229 // pred_check_branch
            %586 = sbr.rel (0) target = $region264
          $region263: #{vgg_block.3} parent=229 // pred_region
            %587 = vsyncadd %s545, 128
          $region264: #{vgg_block.3} parent=229 // pred_fallthru
            _
        $region230: #{vgg_block.3} parent=153 // pred_fallthru
          _
      $region154: #{vgg_block.3} parent=27 // pred_fallthru
        _
      %s588 = smul.u32 %s189, 10
      %s589 = smul.addr %s588, 8
      %s590 = scalar_lea.vmem [#allocation2], %s589
      %v591 = vld [vmem:[%s590] sm:$0xff]
      %v592 = vld [vmem:[%s590 + $0x8] sm:$0xff]
      %v593 = vld [vmem:[%s590 + $0x10] sm:$0xff]
      %v594 = vld [vmem:[%s590 + $0x18] sm:$0xff]
      %v595 = vld [vmem:[%s590 + $0x20] sm:$0xff]
      %v596 = vld [vmem:[%s590 + $0x28] sm:$0xff]
      %v597 = vld [vmem:[%s590 + $0x30] sm:$0xff]
      %v598 = vld [vmem:[%s590 + $0x38] sm:$0xff]
      %v599 = vld [vmem:[%s590 + $0x40] sm:$0xff]
      %v600 = vld [vmem:[%s590 + $0x48] sm:$0xff]
      %v601 = vstv %s373
      %v602 = vadd.s32 %v601, 2
      %v603 = vadd.s32 %v601, 3
      %v604 = vadd.s32 %v601, 4
      %v605 = vadd.s32 %v601, 5
      %v606 = vadd.s32 %v601, 6
      %v607 = vadd.s32 %v601, 7
      %v608 = vadd.s32 %v601, 8
      %v609 = vadd.s32 %v601, 9
      %v610 = vsub.s32 %v601, 1
      %v611 = vsub.s32 %v602, 1
      %v612 = vsub.s32 %v603, 1
      %v613 = vsub.s32 %v604, 1
      %v614 = vsub.s32 %v605, 1
      %v615 = vsub.s32 %v606, 1
      %v616 = vsub.s32 %v607, 1
      %v617 = vsub.s32 %v608, 1
      %v618 = vsub.s32 %v609, 1
      %vm619 = vcmp.ge.s32.totalorder %v610, 0
      %vm620 = vcmp.ge.s32.totalorder %v601, 0
      %vm621 = vcmp.ge.s32.totalorder %v611, 0
      %vm622 = vcmp.ge.s32.totalorder %v612, 0
      %vm623 = vcmp.ge.s32.totalorder %v613, 0
      %vm624 = vcmp.ge.s32.totalorder %v614, 0
      %vm625 = vcmp.ge.s32.totalorder %v615, 0
      %vm626 = vcmp.ge.s32.totalorder %v616, 0
      %vm627 = vcmp.ge.s32.totalorder %v617, 0
      %vm628 = vcmp.ge.s32.totalorder %v618, 0
      %vm629 = vcmp.lt.s32.totalorder %v610, 16
      %vm630 = vcmp.lt.s32.totalorder %v601, 16
      %vm631 = vcmp.lt.s32.totalorder %v611, 16
      %vm632 = vcmp.lt.s32.totalorder %v612, 16
      %vm633 = vcmp.lt.s32.totalorder %v613, 16
      %vm634 = vcmp.lt.s32.totalorder %v614, 16
      %vm635 = vcmp.lt.s32.totalorder %v615, 16
      %vm636 = vcmp.lt.s32.totalorder %v616, 16
      %vm637 = vcmp.lt.s32.totalorder %v617, 16
      %vm638 = vcmp.lt.s32.totalorder %v618, 16
      %vm639 = vmand %vm619, %vm629
      %vm640 = vmand %vm620, %vm630
      %vm641 = vmand %vm621, %vm631
      %vm642 = vmand %vm622, %vm632
      %vm643 = vmand %vm623, %vm633
      %vm644 = vmand %vm624, %vm634
      %vm645 = vmand %vm625, %vm635
      %vm646 = vmand %vm626, %vm636
      %vm647 = vmand %vm627, %vm637
      %vm648 = vmand %vm628, %vm638
      %v649 = vsel %vm639, 1, 0
      %v650 = vsel %vm640, 1, 0
      %v651 = vsel %vm641, 1, 0
      %v652 = vsel %vm642, 1, 0
      %v653 = vsel %vm643, 1, 0
      %v654 = vsel %vm644, 1, 0
      %v655 = vsel %vm645, 1, 0
      %v656 = vsel %vm646, 1, 0
      %v657 = vsel %vm647, 1, 0
      %v658 = vsel %vm648, 1, 0
      %vm659 = vcmp.eq.s32.totalorder %v649, 1
      %vm660 = vcmp.eq.s32.totalorder %v650, 1
      %vm661 = vcmp.eq.s32.totalorder %v651, 1
      %vm662 = vcmp.eq.s32.totalorder %v652, 1
      %vm663 = vcmp.eq.s32.totalorder %v653, 1
      %vm664 = vcmp.eq.s32.totalorder %v654, 1
      %vm665 = vcmp.eq.s32.totalorder %v655, 1
      %vm666 = vcmp.eq.s32.totalorder %v656, 1
      %vm667 = vcmp.eq.s32.totalorder %v657, 1
      %vm668 = vcmp.eq.s32.totalorder %v658, 1
      %v669 = vsel %vm659, %v591, 0
      %v670 = vsel %vm660, %v592, 0
      %v671 = vsel %vm661, %v593, 0
      %v672 = vsel %vm662, %v594, 0
      %v673 = vsel %vm663, %v595, 0
      %v674 = vsel %vm664, %v596, 0
      %v675 = vsel %vm665, %v597, 0
      %v676 = vsel %vm666, %v598, 0
      %v677 = vsel %vm667, %v599, 0
      %v678 = vsel %vm668, %v600, 0
      %v680 = vshrl.u32 %v669, 16
      %v682 = vrot.slane %v680, 7
      %v683 = vshll.u32 %v669, 16
      %v685 = vor.u32 %v682, %v683
      %v687 = vshrl.u32 %v670, 16
      %v689 = vrot.slane %v687, 7
      %v690 = vshll.u32 %v670, 16
      %v692 = vor.u32 %v689, %v690
      %v694 = vshrl.u32 %v671, 16
      %v696 = vrot.slane %v694, 7
      %v697 = vshll.u32 %v671, 16
      %v699 = vor.u32 %v696, %v697
      %v701 = vshrl.u32 %v672, 16
      %v703 = vrot.slane %v701, 7
      %v704 = vshll.u32 %v672, 16
      %v706 = vor.u32 %v703, %v704
      %v708 = vshrl.u32 %v673, 16
      %v710 = vrot.slane %v708, 7
      %v711 = vshll.u32 %v673, 16
      %v713 = vor.u32 %v710, %v711
      %v715 = vshrl.u32 %v674, 16
      %v717 = vrot.slane %v715, 7
      %v718 = vshll.u32 %v674, 16
      %v720 = vor.u32 %v717, %v718
      %v722 = vshrl.u32 %v675, 16
      %v724 = vrot.slane %v722, 7
      %v725 = vshll.u32 %v675, 16
      %v727 = vor.u32 %v724, %v725
      %v729 = vshrl.u32 %v676, 16
      %v731 = vrot.slane %v729, 7
      %v732 = vshll.u32 %v676, 16
      %v734 = vor.u32 %v731, %v732
      %v736 = vshrl.u32 %v677, 16
      %v738 = vrot.slane %v736, 7
      %v739 = vshll.u32 %v677, 16
      %v741 = vor.u32 %v738, %v739
      %v743 = vshrl.u32 %v678, 16
      %v745 = vrot.slane %v743, 7
      %v746 = vshll.u32 %v678, 16
      %v748 = vor.u32 %v745, %v746
      %vm759 = vcmask 1040384
      %vm760 = vsmask.f32 256
      %vm761 = vmand %vm759, %vm760
      %v762 = vsel %vm761, 0, %v685
      %v763 = vsel %vm761, 0, %v692
      %v764 = vsel %vm761, 0, %v699
      %v765 = vsel %vm761, 0, %v706
      %v766 = vsel %vm761, 0, %v713
      %v767 = vsel %vm761, 0, %v720
      %v768 = vsel %vm761, 0, %v727
      %v769 = vsel %vm761, 0, %v734
      %v770 = vsel %vm761, 0, %v741
      %v771 = vsel %vm761, 0, %v748
      %v772 = vrot.slane %v683, 1
      %v773 = vor.u32 %v680, %v772
      %v774 = vrot.slane %v690, 1
      %v775 = vor.u32 %v687, %v774
      %v776 = vrot.slane %v697, 1
      %v777 = vor.u32 %v694, %v776
      %v778 = vrot.slane %v704, 1
      %v779 = vor.u32 %v701, %v778
      %v780 = vrot.slane %v711, 1
      %v781 = vor.u32 %v708, %v780
      %v782 = vrot.slane %v718, 1
      %v783 = vor.u32 %v715, %v782
      %v784 = vrot.slane %v725, 1
      %v785 = vor.u32 %v722, %v784
      %v786 = vrot.slane %v732, 1
      %v787 = vor.u32 %v729, %v786
      %v788 = vrot.slane %v739, 1
      %v789 = vor.u32 %v736, %v788
      %v790 = vrot.slane %v746, 1
      %v791 = vor.u32 %v743, %v790
      %vm802 = vcmask 1047552
      %vm803 = vsmask.f32 7424
      %vm804 = vmand %vm802, %vm803
      %v805 = vsel %vm804, %v773, 0
      %v806 = vsel %vm804, %v775, 0
      %v807 = vsel %vm804, %v777, 0
      %v808 = vsel %vm804, %v779, 0
      %v809 = vsel %vm804, %v781, 0
      %v810 = vsel %vm804, %v783, 0
      %v811 = vsel %vm804, %v785, 0
      %v812 = vsel %vm804, %v787, 0
      %v813 = vsel %vm804, %v789, 0
      %v814 = vsel %vm804, %v791, 0
      %v815 = vld [vmem:[%s1] sm:$0xf]
      %v816 = vld [vmem:[%s1 + $0x4] sm:$0xf]
      %v817 = vld [vmem:[%s1 + $0x8] sm:$0xf]
      %v818 = vld [vmem:[%s1 + $0xc] sm:$0xf]
      %v819 = vld [vmem:[%s1 + $0x10] sm:$0xf]
      %v820 = vld [vmem:[%s1 + $0x14] sm:$0xf]
      %v821 = vld [vmem:[%s1 + $0x18] sm:$0xf]
      %v822 = vld [vmem:[%s1 + $0x1c] sm:$0xf]
      %v823 = vld [vmem:[%s1 + $0x20] sm:$0xf]
      %v824 = vld [vmem:[%s1 + $0x24] sm:$0xf]
      %v825 = vld [vmem:[%s1 + $0x28] sm:$0xf]
      %v826 = vld [vmem:[%s1 + $0x2c] sm:$0xf]
      %v827 = vld [vmem:[%s1 + $0x30] sm:$0xf]
      %v828 = vld [vmem:[%s1 + $0x34] sm:$0xf]
      %v829 = vld [vmem:[%s1 + $0x38] sm:$0xf]
      %v830 = vld [vmem:[%s1 + $0x3c] sm:$0xf]
      %v831 = vld [vmem:[%s1 + $0x40] sm:$0xf]
      %v832 = vld [vmem:[%s1 + $0x44] sm:$0xf]
      %v833 = vld [vmem:[%s1 + $0x48] sm:$0xf]
      %v834 = vld [vmem:[%s1 + $0x4c] sm:$0xf]
      %v835 = vld [vmem:[%s1 + $0x50] sm:$0xf]
      %v836 = vld [vmem:[%s1 + $0x54] sm:$0xf]
      %v837 = vld [vmem:[%s1 + $0x58] sm:$0xf]
      %v838 = vld [vmem:[%s1 + $0x5c] sm:$0xf]
      %v839 = vld [vmem:[%s1 + $0x60] sm:$0xf]
      %v840 = vld [vmem:[%s1 + $0x64] sm:$0xf]
      %v841 = vld [vmem:[%s1 + $0x68] sm:$0xf]
      %v842 = vld [vmem:[%s1 + $0x6c] sm:$0xf]
      %v843 = vld [vmem:[%s1 + $0x70] sm:$0xf]
      %v844 = vld [vmem:[%s1 + $0x74] sm:$0xf]
      %v845 = vld [vmem:[%s1 + $0x78] sm:$0xf]
      %v846 = vld [vmem:[%s1 + $0x7c] sm:$0xf]
      %v847 = vld [vmem:[%s1 + $0x80] sm:$0xf]
      %v848 = vld [vmem:[%s1 + $0x84] sm:$0xf]
      %v849 = vld [vmem:[%s1 + $0x88] sm:$0xf]
      %v850 = vld [vmem:[%s1 + $0x8c] sm:$0xf]
      %v851 = vld [vmem:[%s1 + $0x90] sm:$0xf]
      %v852 = vld [vmem:[%s1 + $0x94] sm:$0xf]
      %v853 = vld [vmem:[%s1 + $0x98] sm:$0xf]
      %v854 = vld [vmem:[%s1 + $0x9c] sm:$0xf]
      %v855 = vld [vmem:[%s1 + $0xa0] sm:$0xf]
      %v856 = vld [vmem:[%s1 + $0xa4] sm:$0xf]
      %v857 = vld [vmem:[%s1 + $0xa8] sm:$0xf]
      %v858 = vld [vmem:[%s1 + $0xac] sm:$0xf]
      %v859 = vld [vmem:[%s1 + $0xb0] sm:$0xf]
      %v860 = vld [vmem:[%s1 + $0xb4] sm:$0xf]
      %v861 = vld [vmem:[%s1 + $0xb8] sm:$0xf]
      %v862 = vld [vmem:[%s1 + $0xbc] sm:$0xf]
      %s863 = scalar_lea.vmem %s1, 192
      %v864 = vld [vmem:[%s863] sm:$0xf]
      %v865 = vld [vmem:[%s863 + $0x4] sm:$0xf]
      %v866 = vld [vmem:[%s863 + $0x8] sm:$0xf]
      %v867 = vld [vmem:[%s863 + $0xc] sm:$0xf]
      %v868 = vld [vmem:[%s863 + $0x10] sm:$0xf]
      %v869 = vld [vmem:[%s863 + $0x14] sm:$0xf]
      %v870 = vld [vmem:[%s863 + $0x18] sm:$0xf]
      %v871 = vld [vmem:[%s863 + $0x1c] sm:$0xf]
      %v872 = vld [vmem:[%s863 + $0x20] sm:$0xf]
      %v873 = vld [vmem:[%s863 + $0x24] sm:$0xf]
      %v874 = vld [vmem:[%s863 + $0x28] sm:$0xf]
      %v875 = vld [vmem:[%s863 + $0x2c] sm:$0xf]
      %v876 = vld [vmem:[%s863 + $0x30] sm:$0xf]
      %v877 = vld [vmem:[%s863 + $0x34] sm:$0xf]
      %v878 = vld [vmem:[%s863 + $0x38] sm:$0xf]
      %v879 = vld [vmem:[%s863 + $0x3c] sm:$0xf]
      %v880 = vld [vmem:[%s863 + $0x40] sm:$0xf]
      %v881 = vld [vmem:[%s863 + $0x44] sm:$0xf]
      %v882 = vld [vmem:[%s863 + $0x48] sm:$0xf]
      %v883 = vld [vmem:[%s863 + $0x4c] sm:$0xf]
      %v884 = vld [vmem:[%s863 + $0x50] sm:$0xf]
      %v885 = vld [vmem:[%s863 + $0x54] sm:$0xf]
      %v886 = vld [vmem:[%s863 + $0x58] sm:$0xf]
      %v887 = vld [vmem:[%s863 + $0x5c] sm:$0xf]
      %v888 = vld [vmem:[%s863 + $0x60] sm:$0xf]
      %v889 = vld [vmem:[%s863 + $0x64] sm:$0xf]
      %v890 = vld [vmem:[%s863 + $0x68] sm:$0xf]
      %v891 = vld [vmem:[%s863 + $0x6c] sm:$0xf]
      %v892 = vld [vmem:[%s863 + $0x70] sm:$0xf]
      %v893 = vld [vmem:[%s863 + $0x74] sm:$0xf]
      %v894 = vld [vmem:[%s863 + $0x78] sm:$0xf]
      %v895 = vld [vmem:[%s863 + $0x7c] sm:$0xf]
      %v896 = vld [vmem:[%s863 + $0x80] sm:$0xf]
      %v897 = vld [vmem:[%s863 + $0x84] sm:$0xf]
      %v898 = vld [vmem:[%s863 + $0x88] sm:$0xf]
      %v899 = vld [vmem:[%s863 + $0x8c] sm:$0xf]
      %v900 = vld [vmem:[%s863 + $0x90] sm:$0xf]
      %v901 = vld [vmem:[%s863 + $0x94] sm:$0xf]
      %v902 = vld [vmem:[%s863 + $0x98] sm:$0xf]
      %v903 = vld [vmem:[%s863 + $0x9c] sm:$0xf]
      %v904 = vld [vmem:[%s863 + $0xa0] sm:$0xf]
      %v905 = vld [vmem:[%s863 + $0xa4] sm:$0xf]
      %v906 = vld [vmem:[%s863 + $0xa8] sm:$0xf]
      %v907 = vld [vmem:[%s863 + $0xac] sm:$0xf]
      %v908 = vld [vmem:[%s863 + $0xb0] sm:$0xf]
      %v909 = vld [vmem:[%s863 + $0xb4] sm:$0xf]
      %v910 = vld [vmem:[%s863 + $0xb8] sm:$0xf]
      %v911 = vld [vmem:[%s863 + $0xbc] sm:$0xf]
      %v960 = vunpack.c.l.b16 %v864
      %v961 = vunpack.c.l.b16 %v865
      %v962 = vunpack.c.l.b16 %v866
      %v963 = vunpack.c.l.b16 %v867
      %v964 = vunpack.c.l.b16 %v868
      %v965 = vunpack.c.l.b16 %v869
      %v966 = vunpack.c.l.b16 %v870
      %v967 = vunpack.c.l.b16 %v871
      %v968 = vunpack.c.l.b16 %v872
      %v969 = vunpack.c.l.b16 %v873
      %v970 = vunpack.c.l.b16 %v874
      %v971 = vunpack.c.l.b16 %v875
      %v972 = vunpack.c.l.b16 %v876
      %v973 = vunpack.c.l.b16 %v877
      %v974 = vunpack.c.l.b16 %v878
      %v975 = vunpack.c.l.b16 %v879
      %v976 = vunpack.c.l.b16 %v880
      %v977 = vunpack.c.l.b16 %v881
      %v978 = vunpack.c.l.b16 %v882
      %v979 = vunpack.c.l.b16 %v883
      %v980 = vunpack.c.l.b16 %v884
      %v981 = vunpack.c.l.b16 %v885
      %v982 = vunpack.c.l.b16 %v886
      %v983 = vunpack.c.l.b16 %v887
      %v984 = vunpack.c.l.b16 %v888
      %v985 = vunpack.c.l.b16 %v889
      %v986 = vunpack.c.l.b16 %v890
      %v987 = vunpack.c.l.b16 %v891
      %v988 = vunpack.c.l.b16 %v892
      %v989 = vunpack.c.l.b16 %v893
      %v990 = vunpack.c.l.b16 %v894
      %v991 = vunpack.c.l.b16 %v895
      %v992 = vunpack.c.l.b16 %v896
      %v993 = vunpack.c.l.b16 %v897
      %v994 = vunpack.c.l.b16 %v898
      %v995 = vunpack.c.l.b16 %v899
      %v996 = vunpack.c.l.b16 %v900
      %v997 = vunpack.c.l.b16 %v901
      %v998 = vunpack.c.l.b16 %v902
      %v999 = vunpack.c.l.b16 %v903
      %v1000 = vunpack.c.l.b16 %v904
      %v1001 = vunpack.c.l.b16 %v905
      %v1002 = vunpack.c.l.b16 %v906
      %v1003 = vunpack.c.l.b16 %v907
      %v1004 = vunpack.c.l.b16 %v908
      %v1005 = vunpack.c.l.b16 %v909
      %v1006 = vunpack.c.l.b16 %v910
      %v1007 = vunpack.c.l.b16 %v911
      %v1008 = vpack.c.b16 %v961, %v960
      %v1009 = vpack.c.b16 %v963, %v962
      %v1010 = vpack.c.b16 %v965, %v964
      %v1011 = vpack.c.b16 %v967, %v966
      %v1012 = vpack.c.b16 %v969, %v968
      %v1013 = vpack.c.b16 %v971, %v970
      %v1014 = vpack.c.b16 %v973, %v972
      %v1015 = vpack.c.b16 %v975, %v974
      %v1016 = vpack.c.b16 %v977, %v976
      %v1017 = vpack.c.b16 %v979, %v978
      %v1018 = vpack.c.b16 %v981, %v980
      %v1019 = vpack.c.b16 %v983, %v982
      %v1020 = vpack.c.b16 %v985, %v984
      %v1021 = vpack.c.b16 %v987, %v986
      %v1022 = vpack.c.b16 %v989, %v988
      %v1023 = vpack.c.b16 %v991, %v990
      %v1024 = vpack.c.b16 %v993, %v992
      %v1025 = vpack.c.b16 %v995, %v994
      %v1026 = vpack.c.b16 %v997, %v996
      %v1027 = vpack.c.b16 %v999, %v998
      %v1028 = vpack.c.b16 %v1001, %v1000
      %v1029 = vpack.c.b16 %v1003, %v1002
      %v1030 = vpack.c.b16 %v1005, %v1004
      %v1031 = vpack.c.b16 %v1007, %v1006
      %1056 = vmatprep.subr.bf16.mxu0 0
      %1057 = vmatpush1.bf16.msra.mxu0 %v1008
      %1058 = vmatprep.subr.bf16.mxu0 0
      %1059 = vmatpush1.bf16.msra.mxu0 %v1009
      %1060 = vmatprep.subr.bf16.mxu0 0
      %1061 = vmatpush1.bf16.msra.mxu0 %v1010
      %1062 = vmatprep.subr.bf16.mxu0 0
      %1063 = vmatpush1.bf16.msra.mxu0 %v1011
      %1064 = vmatprep.subr.bf16.mxu0 0
      %1065 = vmatpush1.bf16.msra.mxu0 %v1012
      %1066 = vmatprep.subr.bf16.mxu0 0
      %1067 = vmatpush1.bf16.msra.mxu0 %v1013
      %1068 = vmatprep.subr.bf16.mxu0 0
      %1069 = vmatpush1.bf16.msra.mxu0 %v1014
      %1070 = vmatprep.subr.bf16.mxu0 0
      %1071 = vmatpush1.bf16.msra.mxu0 %v1015
      %1072 = vmatprep.subr.bf16.mxu0 0
      %1073 = vmatpush1.bf16.msra.mxu0 %v1016
      %1074 = vmatprep.subr.bf16.mxu0 0
      %1075 = vmatpush1.bf16.msra.mxu0 %v1017
      %1076 = vmatprep.subr.bf16.mxu0 0
      %1077 = vmatpush1.bf16.msra.mxu0 %v1018
      %1078 = vmatprep.subr.bf16.mxu0 0
      %1079 = vmatpush1.bf16.msra.mxu0 %v1019
      %1080 = vmatprep.subr.bf16.mxu0 0
      %1081 = vmatpush1.bf16.msra.mxu0 %v1020
      %1082 = vmatprep.subr.bf16.mxu0 0
      %1083 = vmatpush1.bf16.msra.mxu0 %v1021
      %1084 = vmatprep.subr.bf16.mxu0 0
      %1085 = vmatpush1.bf16.msra.mxu0 %v1022
      %1086 = vmatprep.subr.bf16.mxu0 0
      %1087 = vmatpush1.bf16.msra.mxu0 %v1023
      %1088 = vmatprep.mubr.bf16.mxu0 %v670
      %1089 = vmatmul.mubr.bf16.gmra.mrb[0].mxu0 %v763
      %v1090 = vpop.f32.mrb[0].mxu0
      %v1091 = vadd.f32 0.0, %v1090
      %v1092 = vpop.f32.mrb[0].mxu0
      %v1093 = vpop.f32.mrb[0].mxu0
      %v1094 = vadd.f32 0.0, %v1093
      %v1095 = vpop.f32.mrb[0].mxu0
      %1096 = vmatprep.mubr.bf16.mxu0 %v671
      %1097 = vmatmul.mubr.bf16.gmra.mrb[0].mxu0 %v764
      %v1098 = vpop.f32.mrb[0].mxu0
      %v1099 = vadd.f32 0.0, %v1098
      %v1100 = vpop.f32.mrb[0].mxu0
      %v1101 = vpop.f32.mrb[0].mxu0
      %v1102 = vadd.f32 0.0, %v1101
      %v1103 = vpop.f32.mrb[0].mxu0
      %1104 = vmatprep.mubr.bf16.mxu0 %v672
      %1105 = vmatmul.mubr.bf16.gmra.mrb[0].mxu0 %v765
      %v1106 = vpop.f32.mrb[0].mxu0
      %v1107 = vadd.f32 0.0, %v1106
      %v1108 = vpop.f32.mrb[0].mxu0
      %v1109 = vpop.f32.mrb[0].mxu0
      %v1110 = vadd.f32 0.0, %v1109
      %v1111 = vpop.f32.mrb[0].mxu0
      %1112 = vmatprep.mubr.bf16.mxu0 %v673
      %1113 = vmatmul.mubr.bf16.gmra.mrb[0].mxu0 %v766
      %v1114 = vpop.f32.mrb[0].mxu0
      %v1115 = vadd.f32 0.0, %v1114
      %v1116 = vpop.f32.mrb[0].mxu0
      %v1117 = vpop.f32.mrb[0].mxu0
      %v1118 = vadd.f32 0.0, %v1117
      %v1119 = vpop.f32.mrb[0].mxu0
      %1120 = vmatprep.mubr.bf16.mxu0 %v674
      %1121 = vmatmul.mubr.bf16.gmra.mrb[0].mxu0 %v767
      %v1122 = vpop.f32.mrb[0].mxu0
      %v1123 = vadd.f32 0.0, %v1122
      %v1124 = vpop.f32.mrb[0].mxu0
      %v1125 = vpop.f32.mrb[0].mxu0
      %v1126 = vadd.f32 0.0, %v1125
      %v1127 = vpop.f32.mrb[0].mxu0
      %1128 = vmatprep.mubr.bf16.mxu0 %v675
      %1129 = vmatmul.mubr.bf16.gmra.mrb[0].mxu0 %v768
      %v1130 = vpop.f32.mrb[0].mxu0
      %v1131 = vadd.f32 0.0, %v1130
      %v1132 = vpop.f32.mrb[0].mxu0
      %v1133 = vpop.f32.mrb[0].mxu0
      %v1134 = vadd.f32 0.0, %v1133
      %v1135 = vpop.f32.mrb[0].mxu0
      %1136 = vmatprep.mubr.bf16.mxu0 %v676
      %1137 = vmatmul.mubr.bf16.gmra.mrb[0].mxu0 %v769
      %v1138 = vpop.f32.mrb[0].mxu0
      %v1139 = vadd.f32 0.0, %v1138
      %v1140 = vpop.f32.mrb[0].mxu0
      %v1141 = vpop.f32.mrb[0].mxu0
      %v1142 = vadd.f32 0.0, %v1141
      %v1143 = vpop.f32.mrb[0].mxu0
      %1144 = vmatprep.mubr.bf16.mxu0 %v677
      %1145 = vmatmul.mubr.bf16.gmra.mrb[0].mxu0 %v770
      %v1146 = vpop.f32.mrb[0].mxu0
      %v1147 = vadd.f32 0.0, %v1146
      %v1148 = vpop.f32.mrb[0].mxu0
      %v1149 = vpop.f32.mrb[0].mxu0
      %v1150 = vadd.f32 0.0, %v1149
      %v1151 = vpop.f32.mrb[0].mxu0
      %1152 = vdwg.mxu0
      %1153 = vmatprep.subr.bf16.mxu0 0
      %1154 = vmatpush1.bf16.msra.mxu0 %v1024
      %1155 = vmatprep.subr.bf16.mxu0 0
      %1156 = vmatpush1.bf16.msra.mxu0 %v1025
      %1157 = vmatprep.subr.bf16.mxu0 0
      %1158 = vmatpush1.bf16.msra.mxu0 %v1026
      %1159 = vmatprep.subr.bf16.mxu0 0
      %1160 = vmatpush1.bf16.msra.mxu0 %v1027
      %1161 = vmatprep.subr.bf16.mxu0 0
      %1162 = vmatpush1.bf16.msra.mxu0 %v1028
      %1163 = vmatprep.subr.bf16.mxu0 0
      %1164 = vmatpush1.bf16.msra.mxu0 %v1029
      %1165 = vmatprep.subr.bf16.mxu0 0
      %1166 = vmatpush1.bf16.msra.mxu0 %v1030
      %1167 = vmatprep.subr.bf16.mxu0 0
      %1168 = vmatpush1.bf16.msra.mxu0 %v1031
      %1169 = vmatprep.subr.bf16.mxu0 0
      %1170 = vmatpush1.bf16.msra.mxu0 0
      %1171 = vmatprep.subr.bf16.mxu0 0
      %1172 = vmatpush1.bf16.msra.mxu0 0
      %1173 = vmatprep.subr.bf16.mxu0 0
      %1174 = vmatpush1.bf16.msra.mxu0 0
      %1175 = vmatprep.subr.bf16.mxu0 0
      %1176 = vmatpush1.bf16.msra.mxu0 0
      %1177 = vmatprep.subr.bf16.mxu0 0
      %1178 = vmatpush1.bf16.msra.mxu0 0
      %1179 = vmatprep.subr.bf16.mxu0 0
      %1180 = vmatpush1.bf16.msra.mxu0 0
      %1181 = vmatprep.subr.bf16.mxu0 0
      %1182 = vmatpush1.bf16.msra.mxu0 0
      %1183 = vmatprep.subr.bf16.mxu0 0
      %1184 = vmatpush1.bf16.msra.mxu0 0
      %1185 = vmatprep.mubr.bf16.mxu0 0
      %1186 = vmatmul.mubr.bf16.gmra.mrb[0].mxu0 %v806
      %v1187 = vpop.f32.mrb[0].mxu0
      %v1188 = vadd.f32 %v1091, %v1187
      %v1189 = vpop.f32.mrb[0].mxu0
      %v1190 = vpop.f32.mrb[0].mxu0
      %v1191 = vadd.f32 %v1094, %v1190
      %v1192 = vpop.f32.mrb[0].mxu0
      %1193 = vmatprep.mubr.bf16.mxu0 0
      %1194 = vmatmul.mubr.bf16.gmra.mrb[0].mxu0 %v807
      %v1195 = vpop.f32.mrb[0].mxu0
      %v1196 = vadd.f32 %v1099, %v1195
      %v1197 = vpop.f32.mrb[0].mxu0
      %v1198 = vpop.f32.mrb[0].mxu0
      %v1199 = vadd.f32 %v1102, %v1198
      %v1200 = vpop.f32.mrb[0].mxu0
      %1201 = vmatprep.mubr.bf16.mxu0 0
      %1202 = vmatmul.mubr.bf16.gmra.mrb[0].mxu0 %v808
      %v1203 = vpop.f32.mrb[0].mxu0
      %v1204 = vadd.f32 %v1107, %v1203
      %v1205 = vpop.f32.mrb[0].mxu0
      %v1206 = vpop.f32.mrb[0].mxu0
      %v1207 = vadd.f32 %v1110, %v1206
      %v1208 = vpop.f32.mrb[0].mxu0
      %1209 = vmatprep.mubr.bf16.mxu0 0
      %1210 = vmatmul.mubr.bf16.gmra.mrb[0].mxu0 %v809
      %v1211 = vpop.f32.mrb[0].mxu0
      %v1212 = vadd.f32 %v1115, %v1211
      %v1213 = vpop.f32.mrb[0].mxu0
      %v1214 = vpop.f32.mrb[0].mxu0
      %v1215 = vadd.f32 %v1118, %v1214
      %v1216 = vpop.f32.mrb[0].mxu0
      %1217 = vmatprep.mubr.bf16.mxu0 0
      %1218 = vmatmul.mubr.bf16.gmra.mrb[0].mxu0 %v810
      %v1219 = vpop.f32.mrb[0].mxu0
      %v1220 = vadd.f32 %v1123, %v1219
      %v1221 = vpop.f32.mrb[0].mxu0
      %v1222 = vpop.f32.mrb[0].mxu0
      %v1223 = vadd.f32 %v1126, %v1222
      %v1224 = vpop.f32.mrb[0].mxu0
      %1225 = vmatprep.mubr.bf16.mxu0 0
      %1226 = vmatmul.mubr.bf16.gmra.mrb[0].mxu0 %v811
      %v1227 = vpop.f32.mrb[0].mxu0
      %v1228 = vadd.f32 %v1131, %v1227
      %v1229 = vpop.f32.mrb[0].mxu0
      %v1230 = vpop.f32.mrb[0].mxu0
      %v1231 = vadd.f32 %v1134, %v1230
      %v1232 = vpop.f32.mrb[0].mxu0
      %1233 = vmatprep.mubr.bf16.mxu0 0
      %1234 = vmatmul.mubr.bf16.gmra.mrb[0].mxu0 %v812
      %v1235 = vpop.f32.mrb[0].mxu0
      %v1236 = vadd.f32 %v1139, %v1235
      %v1237 = vpop.f32.mrb[0].mxu0
      %v1238 = vpop.f32.mrb[0].mxu0
      %v1239 = vadd.f32 %v1142, %v1238
      %v1240 = vpop.f32.mrb[0].mxu0
      %1241 = vmatprep.mubr.bf16.mxu0 0
      %1242 = vmatmul.mubr.bf16.gmra.mrb[0].mxu0 %v813
      %v1243 = vpop.f32.mrb[0].mxu0
      %v1244 = vadd.f32 %v1147, %v1243
      %v1245 = vpop.f32.mrb[0].mxu0
      %v1246 = vpop.f32.mrb[0].mxu0
      %v1247 = vadd.f32 %v1150, %v1246
      %v1248 = vpop.f32.mrb[0].mxu0
      %1249 = vdwg.mxu0
      %v1298 = vunpack.c.l.b16 %v815
      %v1299 = vunpack.c.l.b16 %v816
      %v1300 = vunpack.c.l.b16 %v817
      %v1301 = vunpack.c.l.b16 %v818
      %v1302 = vunpack.c.l.b16 %v819
      %v1303 = vunpack.c.l.b16 %v820
      %v1304 = vunpack.c.l.b16 %v821
      %v1305 = vunpack.c.l.b16 %v822
      %v1306 = vunpack.c.l.b16 %v823
      %v1307 = vunpack.c.l.b16 %v824
      %v1308 = vunpack.c.l.b16 %v825
      %v1309 = vunpack.c.l.b16 %v826
      %v1310 = vunpack.c.l.b16 %v827
      %v1311 = vunpack.c.l.b16 %v828
      %v1312 = vunpack.c.l.b16 %v829
      %v1313 = vunpack.c.l.b16 %v830
      %v1314 = vunpack.c.l.b16 %v831
      %v1315 = vunpack.c.l.b16 %v832
      %v1316 = vunpack.c.l.b16 %v833
      %v1317 = vunpack.c.l.b16 %v834
      %v1318 = vunpack.c.l.b16 %v835
      %v1319 = vunpack.c.l.b16 %v836
      %v1320 = vunpack.c.l.b16 %v837
      %v1321 = vunpack.c.l.b16 %v838
      %v1322 = vunpack.c.l.b16 %v839
      %v1323 = vunpack.c.l.b16 %v840
      %v1324 = vunpack.c.l.b16 %v841
      %v1325 = vunpack.c.l.b16 %v842
      %v1326 = vunpack.c.l.b16 %v843
      %v1327 = vunpack.c.l.b16 %v844
      %v1328 = vunpack.c.l.b16 %v845
      %v1329 = vunpack.c.l.b16 %v846
      %v1330 = vunpack.c.l.b16 %v847
      %v1331 = vunpack.c.l.b16 %v848
      %v1332 = vunpack.c.l.b16 %v849
      %v1333 = vunpack.c.l.b16 %v850
      %v1334 = vunpack.c.l.b16 %v851
      %v1335 = vunpack.c.l.b16 %v852
      %v1336 = vunpack.c.l.b16 %v853
      %v1337 = vunpack.c.l.b16 %v854
      %v1338 = vunpack.c.l.b16 %v855
      %v1339 = vunpack.c.l.b16 %v856
      %v1340 = vunpack.c.l.b16 %v857
      %v1341 = vunpack.c.l.b16 %v858
      %v1342 = vunpack.c.l.b16 %v859
      %v1343 = vunpack.c.l.b16 %v860
      %v1344 = vunpack.c.l.b16 %v861
      %v1345 = vunpack.c.l.b16 %v862
      %v1346 = vpack.c.b16 %v1299, %v1298
      %v1347 = vpack.c.b16 %v1301, %v1300
      %v1348 = vpack.c.b16 %v1303, %v1302
      %v1349 = vpack.c.b16 %v1305, %v1304
      %v1350 = vpack.c.b16 %v1307, %v1306
      %v1351 = vpack.c.b16 %v1309, %v1308
      %v1352 = vpack.c.b16 %v1311, %v1310
      %v1353 = vpack.c.b16 %v1313, %v1312
      %v1354 = vpack.c.b16 %v1315, %v1314
      %v1355 = vpack.c.b16 %v1317, %v1316
      %v1356 = vpack.c.b16 %v1319, %v1318
      %v1357 = vpack.c.b16 %v1321, %v1320
      %v1358 = vpack.c.b16 %v1323, %v1322
      %v1359 = vpack.c.b16 %v1325, %v1324
      %v1360 = vpack.c.b16 %v1327, %v1326
      %v1361 = vpack.c.b16 %v1329, %v1328
      %v1362 = vpack.c.b16 %v1331, %v1330
      %v1363 = vpack.c.b16 %v1333, %v1332
      %v1364 = vpack.c.b16 %v1335, %v1334
      %v1365 = vpack.c.b16 %v1337, %v1336
      %v1366 = vpack.c.b16 %v1339, %v1338
      %v1367 = vpack.c.b16 %v1341, %v1340
      %v1368 = vpack.c.b16 %v1343, %v1342
      %v1369 = vpack.c.b16 %v1345, %v1344
      %1394 = vmatprep.subr.bf16.mxu0 0
      %1395 = vmatpush1.bf16.msra.mxu0 %v1346
      %1396 = vmatprep.subr.bf16.mxu0 0
      %1397 = vmatpush1.bf16.msra.mxu0 %v1347
      %1398 = vmatprep.subr.bf16.mxu0 0
      %1399 = vmatpush1.bf16.msra.mxu0 %v1348
      %1400 = vmatprep.subr.bf16.mxu0 0
      %1401 = vmatpush1.bf16.msra.mxu0 %v1349
      %1402 = vmatprep.subr.bf16.mxu0 0
      %1403 = vmatpush1.bf16.msra.mxu0 %v1350
      %1404 = vmatprep.subr.bf16.mxu0 0
      %1405 = vmatpush1.bf16.msra.mxu0 %v1351
      %1406 = vmatprep.subr.bf16.mxu0 0
      %1407 = vmatpush1.bf16.msra.mxu0 %v1352
      %1408 = vmatprep.subr.bf16.mxu0 0
      %1409 = vmatpush1.bf16.msra.mxu0 %v1353
      %1410 = vmatprep.subr.bf16.mxu0 0
      %1411 = vmatpush1.bf16.msra.mxu0 %v1354
      %1412 = vmatprep.subr.bf16.mxu0 0
      %1413 = vmatpush1.bf16.msra.mxu0 %v1355
      %1414 = vmatprep.subr.bf16.mxu0 0
      %1415 = vmatpush1.bf16.msra.mxu0 %v1356
      %1416 = vmatprep.subr.bf16.mxu0 0
      %1417 = vmatpush1.bf16.msra.mxu0 %v1357
      %1418 = vmatprep.subr.bf16.mxu0 0
      %1419 = vmatpush1.bf16.msra.mxu0 %v1358
      %1420 = vmatprep.subr.bf16.mxu0 0
      %1421 = vmatpush1.bf16.msra.mxu0 %v1359
      %1422 = vmatprep.subr.bf16.mxu0 0
      %1423 = vmatpush1.bf16.msra.mxu0 %v1360
      %1424 = vmatprep.subr.bf16.mxu0 0
      %1425 = vmatpush1.bf16.msra.mxu0 %v1361
      %1426 = vmatprep.mubr.bf16.mxu0 %v669
      %1427 = vmatmul.mubr.bf16.gmra.mrb[0].mxu0 %v762
      %v1428 = vpop.f32.mrb[0].mxu0
      %v1429 = vadd.f32 %v1188, %v1428
      %v1430 = vpop.f32.mrb[0].mxu0
      %v1431 = vpop.f32.mrb[0].mxu0
      %v1432 = vadd.f32 %v1191, %v1431
      %v1433 = vpop.f32.mrb[0].mxu0
      %1434 = vmatprep.mubr.bf16.mxu0 %v670
      %1435 = vmatmul.mubr.bf16.gmra.mrb[0].mxu0 %v763
      %v1436 = vpop.f32.mrb[0].mxu0
      %v1437 = vadd.f32 %v1196, %v1436
      %v1438 = vpop.f32.mrb[0].mxu0
      %v1439 = vpop.f32.mrb[0].mxu0
      %v1440 = vadd.f32 %v1199, %v1439
      %v1441 = vpop.f32.mrb[0].mxu0
      %1442 = vmatprep.mubr.bf16.mxu0 %v671
      %1443 = vmatmul.mubr.bf16.gmra.mrb[0].mxu0 %v764
      %v1444 = vpop.f32.mrb[0].mxu0
      %v1445 = vadd.f32 %v1204, %v1444
      %v1446 = vpop.f32.mrb[0].mxu0
      %v1447 = vpop.f32.mrb[0].mxu0
      %v1448 = vadd.f32 %v1207, %v1447
      %v1449 = vpop.f32.mrb[0].mxu0
      %1450 = vmatprep.mubr.bf16.mxu0 %v672
      %1451 = vmatmul.mubr.bf16.gmra.mrb[0].mxu0 %v765
      %v1452 = vpop.f32.mrb[0].mxu0
      %v1453 = vadd.f32 %v1212, %v1452
      %v1454 = vpop.f32.mrb[0].mxu0
      %v1455 = vpop.f32.mrb[0].mxu0
      %v1456 = vadd.f32 %v1215, %v1455
      %v1457 = vpop.f32.mrb[0].mxu0
      %1458 = vmatprep.mubr.bf16.mxu0 %v673
      %1459 = vmatmul.mubr.bf16.gmra.mrb[0].mxu0 %v766
      %v1460 = vpop.f32.mrb[0].mxu0
      %v1461 = vadd.f32 %v1220, %v1460
      %v1462 = vpop.f32.mrb[0].mxu0
      %v1463 = vpop.f32.mrb[0].mxu0
      %v1464 = vadd.f32 %v1223, %v1463
      %v1465 = vpop.f32.mrb[0].mxu0
      %1466 = vmatprep.mubr.bf16.mxu0 %v674
      %1467 = vmatmul.mubr.bf16.gmra.mrb[0].mxu0 %v767
      %v1468 = vpop.f32.mrb[0].mxu0
      %v1469 = vadd.f32 %v1228, %v1468
      %v1470 = vpop.f32.mrb[0].mxu0
      %v1471 = vpop.f32.mrb[0].mxu0
      %v1472 = vadd.f32 %v1231, %v1471
      %v1473 = vpop.f32.mrb[0].mxu0
      %1474 = vmatprep.mubr.bf16.mxu0 %v675
      %1475 = vmatmul.mubr.bf16.gmra.mrb[0].mxu0 %v768
      %v1476 = vpop.f32.mrb[0].mxu0
      %v1477 = vadd.f32 %v1236, %v1476
      %v1478 = vpop.f32.mrb[0].mxu0
      %v1479 = vpop.f32.mrb[0].mxu0
      %v1480 = vadd.f32 %v1239, %v1479
      %v1481 = vpop.f32.mrb[0].mxu0
      %1482 = vmatprep.mubr.bf16.mxu0 %v676
      %1483 = vmatmul.mubr.bf16.gmra.mrb[0].mxu0 %v769
      %v1484 = vpop.f32.mrb[0].mxu0
      %v1485 = vadd.f32 %v1244, %v1484
      %v1486 = vpop.f32.mrb[0].mxu0
      %v1487 = vpop.f32.mrb[0].mxu0
      %v1488 = vadd.f32 %v1247, %v1487
      %v1489 = vpop.f32.mrb[0].mxu0
      %1490 = vdwg.mxu0
      %1491 = vmatprep.subr.bf16.mxu0 0
      %1492 = vmatpush1.bf16.msra.mxu0 %v1362
      %1493 = vmatprep.subr.bf16.mxu0 0
      %1494 = vmatpush1.bf16.msra.mxu0 %v1363
      %1495 = vmatprep.subr.bf16.mxu0 0
      %1496 = vmatpush1.bf16.msra.mxu0 %v1364
      %1497 = vmatprep.subr.bf16.mxu0 0
      %1498 = vmatpush1.bf16.msra.mxu0 %v1365
      %1499 = vmatprep.subr.bf16.mxu0 0
      %1500 = vmatpush1.bf16.msra.mxu0 %v1366
      %1501 = vmatprep.subr.bf16.mxu0 0
      %1502 = vmatpush1.bf16.msra.mxu0 %v1367
      %1503 = vmatprep.subr.bf16.mxu0 0
      %1504 = vmatpush1.bf16.msra.mxu0 %v1368
      %1505 = vmatprep.subr.bf16.mxu0 0
      %1506 = vmatpush1.bf16.msra.mxu0 %v1369
      %1507 = vmatprep.subr.bf16.mxu0 0
      %1508 = vmatpush1.bf16.msra.mxu0 0
      %1509 = vmatprep.subr.bf16.mxu0 0
      %1510 = vmatpush1.bf16.msra.mxu0 0
      %1511 = vmatprep.subr.bf16.mxu0 0
      %1512 = vmatpush1.bf16.msra.mxu0 0
      %1513 = vmatprep.subr.bf16.mxu0 0
      %1514 = vmatpush1.bf16.msra.mxu0 0
      %1515 = vmatprep.subr.bf16.mxu0 0
      %1516 = vmatpush1.bf16.msra.mxu0 0
      %1517 = vmatprep.subr.bf16.mxu0 0
      %1518 = vmatpush1.bf16.msra.mxu0 0
      %1519 = vmatprep.subr.bf16.mxu0 0
      %1520 = vmatpush1.bf16.msra.mxu0 0
      %1521 = vmatprep.subr.bf16.mxu0 0
      %1522 = vmatpush1.bf16.msra.mxu0 0
      %1523 = vmatprep.mubr.bf16.mxu0 0
      %1524 = vmatmul.mubr.bf16.gmra.mrb[0].mxu0 %v805
      %v1525 = vpop.f32.mrb[0].mxu0
      %v1526 = vadd.f32 %v1429, %v1525
      %v1527 = vpop.f32.mrb[0].mxu0
      %v1528 = vpop.f32.mrb[0].mxu0
      %v1529 = vadd.f32 %v1432, %v1528
      %v1530 = vpop.f32.mrb[0].mxu0
      %1531 = vmatprep.mubr.bf16.mxu0 0
      %1532 = vmatmul.mubr.bf16.gmra.mrb[0].mxu0 %v806
      %v1533 = vpop.f32.mrb[0].mxu0
      %v1534 = vadd.f32 %v1437, %v1533
      %v1535 = vpop.f32.mrb[0].mxu0
      %v1536 = vpop.f32.mrb[0].mxu0
      %v1537 = vadd.f32 %v1440, %v1536
      %v1538 = vpop.f32.mrb[0].mxu0
      %1539 = vmatprep.mubr.bf16.mxu0 0
      %1540 = vmatmul.mubr.bf16.gmra.mrb[0].mxu0 %v807
      %v1541 = vpop.f32.mrb[0].mxu0
      %v1542 = vadd.f32 %v1445, %v1541
      %v1543 = vpop.f32.mrb[0].mxu0
      %v1544 = vpop.f32.mrb[0].mxu0
      %v1545 = vadd.f32 %v1448, %v1544
      %v1546 = vpop.f32.mrb[0].mxu0
      %1547 = vmatprep.mubr.bf16.mxu0 0
      %1548 = vmatmul.mubr.bf16.gmra.mrb[0].mxu0 %v808
      %v1549 = vpop.f32.mrb[0].mxu0
      %v1550 = vadd.f32 %v1453, %v1549
      %v1551 = vpop.f32.mrb[0].mxu0
      %v1552 = vpop.f32.mrb[0].mxu0
      %v1553 = vadd.f32 %v1456, %v1552
      %v1554 = vpop.f32.mrb[0].mxu0
      %1555 = vmatprep.mubr.bf16.mxu0 0
      %1556 = vmatmul.mubr.bf16.gmra.mrb[0].mxu0 %v809
      %v1557 = vpop.f32.mrb[0].mxu0
      %v1558 = vadd.f32 %v1461, %v1557
      %v1559 = vpop.f32.mrb[0].mxu0
      %v1560 = vpop.f32.mrb[0].mxu0
      %v1561 = vadd.f32 %v1464, %v1560
      %v1562 = vpop.f32.mrb[0].mxu0
      %1563 = vmatprep.mubr.bf16.mxu0 0
      %1564 = vmatmul.mubr.bf16.gmra.mrb[0].mxu0 %v810
      %v1565 = vpop.f32.mrb[0].mxu0
      %v1566 = vadd.f32 %v1469, %v1565
      %v1567 = vpop.f32.mrb[0].mxu0
      %v1568 = vpop.f32.mrb[0].mxu0
      %v1569 = vadd.f32 %v1472, %v1568
      %v1570 = vpop.f32.mrb[0].mxu0
      %1571 = vmatprep.mubr.bf16.mxu0 0
      %1572 = vmatmul.mubr.bf16.gmra.mrb[0].mxu0 %v811
      %v1573 = vpop.f32.mrb[0].mxu0
      %v1574 = vadd.f32 %v1477, %v1573
      %v1575 = vpop.f32.mrb[0].mxu0
      %v1576 = vpop.f32.mrb[0].mxu0
      %v1577 = vadd.f32 %v1480, %v1576
      %v1578 = vpop.f32.mrb[0].mxu0
      %1579 = vmatprep.mubr.bf16.mxu0 0
      %1580 = vmatmul.mubr.bf16.gmra.mrb[0].mxu0 %v812
      %v1581 = vpop.f32.mrb[0].mxu0
      %v1582 = vadd.f32 %v1485, %v1581
      %v1583 = vpop.f32.mrb[0].mxu0
      %v1584 = vpop.f32.mrb[0].mxu0
      %v1585 = vadd.f32 %v1488, %v1584
      %v1586 = vpop.f32.mrb[0].mxu0
      %1587 = vdwg.mxu0
      %s1588 = scalar_lea.vmem %s1, 384
      %v1589 = vld [vmem:[%s1588] sm:$0xf]
      %v1590 = vld [vmem:[%s1588 + $0x4] sm:$0xf]
      %v1591 = vld [vmem:[%s1588 + $0x8] sm:$0xf]
      %v1592 = vld [vmem:[%s1588 + $0xc] sm:$0xf]
      %v1593 = vld [vmem:[%s1588 + $0x10] sm:$0xf]
      %v1594 = vld [vmem:[%s1588 + $0x14] sm:$0xf]
      %v1595 = vld [vmem:[%s1588 + $0x18] sm:$0xf]
      %v1596 = vld [vmem:[%s1588 + $0x1c] sm:$0xf]
      %v1597 = vld [vmem:[%s1588 + $0x20] sm:$0xf]
      %v1598 = vld [vmem:[%s1588 + $0x24] sm:$0xf]
      %v1599 = vld [vmem:[%s1588 + $0x28] sm:$0xf]
      %v1600 = vld [vmem:[%s1588 + $0x2c] sm:$0xf]
      %v1601 = vld [vmem:[%s1588 + $0x30] sm:$0xf]
      %v1602 = vld [vmem:[%s1588 + $0x34] sm:$0xf]
      %v1603 = vld [vmem:[%s1588 + $0x38] sm:$0xf]
      %v1604 = vld [vmem:[%s1588 + $0x3c] sm:$0xf]
      %v1605 = vld [vmem:[%s1588 + $0x40] sm:$0xf]
      %v1606 = vld [vmem:[%s1588 + $0x44] sm:$0xf]
      %v1607 = vld [vmem:[%s1588 + $0x48] sm:$0xf]
      %v1608 = vld [vmem:[%s1588 + $0x4c] sm:$0xf]
      %v1609 = vld [vmem:[%s1588 + $0x50] sm:$0xf]
      %v1610 = vld [vmem:[%s1588 + $0x54] sm:$0xf]
      %v1611 = vld [vmem:[%s1588 + $0x58] sm:$0xf]
      %v1612 = vld [vmem:[%s1588 + $0x5c] sm:$0xf]
      %v1613 = vld [vmem:[%s1588 + $0x60] sm:$0xf]
      %v1614 = vld [vmem:[%s1588 + $0x64] sm:$0xf]
      %v1615 = vld [vmem:[%s1588 + $0x68] sm:$0xf]
      %v1616 = vld [vmem:[%s1588 + $0x6c] sm:$0xf]
      %v1617 = vld [vmem:[%s1588 + $0x70] sm:$0xf]
      %v1618 = vld [vmem:[%s1588 + $0x74] sm:$0xf]
      %v1619 = vld [vmem:[%s1588 + $0x78] sm:$0xf]
      %v1620 = vld [vmem:[%s1588 + $0x7c] sm:$0xf]
      %v1621 = vld [vmem:[%s1588 + $0x80] sm:$0xf]
      %v1622 = vld [vmem:[%s1588 + $0x84] sm:$0xf]
      %v1623 = vld [vmem:[%s1588 + $0x88] sm:$0xf]
      %v1624 = vld [vmem:[%s1588 + $0x8c] sm:$0xf]
      %v1625 = vld [vmem:[%s1588 + $0x90] sm:$0xf]
      %v1626 = vld [vmem:[%s1588 + $0x94] sm:$0xf]
      %v1627 = vld [vmem:[%s1588 + $0x98] sm:$0xf]
      %v1628 = vld [vmem:[%s1588 + $0x9c] sm:$0xf]
      %v1629 = vld [vmem:[%s1588 + $0xa0] sm:$0xf]
      %v1630 = vld [vmem:[%s1588 + $0xa4] sm:$0xf]
      %v1631 = vld [vmem:[%s1588 + $0xa8] sm:$0xf]
      %v1632 = vld [vmem:[%s1588 + $0xac] sm:$0xf]
      %v1633 = vld [vmem:[%s1588 + $0xb0] sm:$0xf]
      %v1634 = vld [vmem:[%s1588 + $0xb4] sm:$0xf]
      %v1635 = vld [vmem:[%s1588 + $0xb8] sm:$0xf]
      %v1636 = vld [vmem:[%s1588 + $0xbc] sm:$0xf]
      %v1685 = vunpack.c.l.b16 %v1589
      %v1686 = vunpack.c.l.b16 %v1590
      %v1687 = vunpack.c.l.b16 %v1591
      %v1688 = vunpack.c.l.b16 %v1592
      %v1689 = vunpack.c.l.b16 %v1593
      %v1690 = vunpack.c.l.b16 %v1594
      %v1691 = vunpack.c.l.b16 %v1595
      %v1692 = vunpack.c.l.b16 %v1596
      %v1693 = vunpack.c.l.b16 %v1597
      %v1694 = vunpack.c.l.b16 %v1598
      %v1695 = vunpack.c.l.b16 %v1599
      %v1696 = vunpack.c.l.b16 %v1600
      %v1697 = vunpack.c.l.b16 %v1601
      %v1698 = vunpack.c.l.b16 %v1602
      %v1699 = vunpack.c.l.b16 %v1603
      %v1700 = vunpack.c.l.b16 %v1604
      %v1701 = vunpack.c.l.b16 %v1605
      %v1702 = vunpack.c.l.b16 %v1606
      %v1703 = vunpack.c.l.b16 %v1607
      %v1704 = vunpack.c.l.b16 %v1608
      %v1705 = vunpack.c.l.b16 %v1609
      %v1706 = vunpack.c.l.b16 %v1610
      %v1707 = vunpack.c.l.b16 %v1611
      %v1708 = vunpack.c.l.b16 %v1612
      %v1709 = vunpack.c.l.b16 %v1613
      %v1710 = vunpack.c.l.b16 %v1614
      %v1711 = vunpack.c.l.b16 %v1615
      %v1712 = vunpack.c.l.b16 %v1616
      %v1713 = vunpack.c.l.b16 %v1617
      %v1714 = vunpack.c.l.b16 %v1618
      %v1715 = vunpack.c.l.b16 %v1619
      %v1716 = vunpack.c.l.b16 %v1620
      %v1717 = vunpack.c.l.b16 %v1621
      %v1718 = vunpack.c.l.b16 %v1622
      %v1719 = vunpack.c.l.b16 %v1623
      %v1720 = vunpack.c.l.b16 %v1624
      %v1721 = vunpack.c.l.b16 %v1625
      %v1722 = vunpack.c.l.b16 %v1626
      %v1723 = vunpack.c.l.b16 %v1627
      %v1724 = vunpack.c.l.b16 %v1628
      %v1725 = vunpack.c.l.b16 %v1629
      %v1726 = vunpack.c.l.b16 %v1630
      %v1727 = vunpack.c.l.b16 %v1631
      %v1728 = vunpack.c.l.b16 %v1632
      %v1729 = vunpack.c.l.b16 %v1633
      %v1730 = vunpack.c.l.b16 %v1634
      %v1731 = vunpack.c.l.b16 %v1635
      %v1732 = vunpack.c.l.b16 %v1636
      %v1733 = vpack.c.b16 %v1686, %v1685
      %v1734 = vpack.c.b16 %v1688, %v1687
      %v1735 = vpack.c.b16 %v1690, %v1689
      %v1736 = vpack.c.b16 %v1692, %v1691
      %v1737 = vpack.c.b16 %v1694, %v1693
      %v1738 = vpack.c.b16 %v1696, %v1695
      %v1739 = vpack.c.b16 %v1698, %v1697
      %v1740 = vpack.c.b16 %v1700, %v1699
      %v1741 = vpack.c.b16 %v1702, %v1701
      %v1742 = vpack.c.b16 %v1704, %v1703
      %v1743 = vpack.c.b16 %v1706, %v1705
      %v1744 = vpack.c.b16 %v1708, %v1707
      %v1745 = vpack.c.b16 %v1710, %v1709
      %v1746 = vpack.c.b16 %v1712, %v1711
      %v1747 = vpack.c.b16 %v1714, %v1713
      %v1748 = vpack.c.b16 %v1716, %v1715
      %v1749 = vpack.c.b16 %v1718, %v1717
      %v1750 = vpack.c.b16 %v1720, %v1719
      %v1751 = vpack.c.b16 %v1722, %v1721
      %v1752 = vpack.c.b16 %v1724, %v1723
      %v1753 = vpack.c.b16 %v1726, %v1725
      %v1754 = vpack.c.b16 %v1728, %v1727
      %v1755 = vpack.c.b16 %v1730, %v1729
      %v1756 = vpack.c.b16 %v1732, %v1731
      %1781 = vmatprep.subr.bf16.mxu0 0
      %1782 = vmatpush1.bf16.msra.mxu0 %v1733
      %1783 = vmatprep.subr.bf16.mxu0 0
      %1784 = vmatpush1.bf16.msra.mxu0 %v1734
      %1785 = vmatprep.subr.bf16.mxu0 0
      %1786 = vmatpush1.bf16.msra.mxu0 %v1735
      %1787 = vmatprep.subr.bf16.mxu0 0
      %1788 = vmatpush1.bf16.msra.mxu0 %v1736
      %1789 = vmatprep.subr.bf16.mxu0 0
      %1790 = vmatpush1.bf16.msra.mxu0 %v1737
      %1791 = vmatprep.subr.bf16.mxu0 0
      %1792 = vmatpush1.bf16.msra.mxu0 %v1738
      %1793 = vmatprep.subr.bf16.mxu0 0
      %1794 = vmatpush1.bf16.msra.mxu0 %v1739
      %1795 = vmatprep.subr.bf16.mxu0 0
      %1796 = vmatpush1.bf16.msra.mxu0 %v1740
      %1797 = vmatprep.subr.bf16.mxu0 0
      %1798 = vmatpush1.bf16.msra.mxu0 %v1741
      %1799 = vmatprep.subr.bf16.mxu0 0
      %1800 = vmatpush1.bf16.msra.mxu0 %v1742
      %1801 = vmatprep.subr.bf16.mxu0 0
      %1802 = vmatpush1.bf16.msra.mxu0 %v1743
      %1803 = vmatprep.subr.bf16.mxu0 0
      %1804 = vmatpush1.bf16.msra.mxu0 %v1744
      %1805 = vmatprep.subr.bf16.mxu0 0
      %1806 = vmatpush1.bf16.msra.mxu0 %v1745
      %1807 = vmatprep.subr.bf16.mxu0 0
      %1808 = vmatpush1.bf16.msra.mxu0 %v1746
      %1809 = vmatprep.subr.bf16.mxu0 0
      %1810 = vmatpush1.bf16.msra.mxu0 %v1747
      %1811 = vmatprep.subr.bf16.mxu0 0
      %1812 = vmatpush1.bf16.msra.mxu0 %v1748
      %1813 = vmatprep.mubr.bf16.mxu0 %v671
      %1814 = vmatmul.mubr.bf16.gmra.mrb[0].mxu0 %v764
      %v1815 = vpop.f32.mrb[0].mxu0
      %v1816 = vadd.f32 0.0, %v1815
      %v1817 = vpop.f32.mrb[0].mxu0
      %v1818 = vpop.f32.mrb[0].mxu0
      %v1819 = vadd.f32 0.0, %v1818
      %v1820 = vpop.f32.mrb[0].mxu0
      %1821 = vmatprep.mubr.bf16.mxu0 %v672
      %1822 = vmatmul.mubr.bf16.gmra.mrb[0].mxu0 %v765
      %v1823 = vpop.f32.mrb[0].mxu0
      %v1824 = vadd.f32 0.0, %v1823
      %v1825 = vpop.f32.mrb[0].mxu0
      %v1826 = vpop.f32.mrb[0].mxu0
      %v1827 = vadd.f32 0.0, %v1826
      %v1828 = vpop.f32.mrb[0].mxu0
      %1829 = vmatprep.mubr.bf16.mxu0 %v673
      %1830 = vmatmul.mubr.bf16.gmra.mrb[0].mxu0 %v766
      %v1831 = vpop.f32.mrb[0].mxu0
      %v1832 = vadd.f32 0.0, %v1831
      %v1833 = vpop.f32.mrb[0].mxu0
      %v1834 = vpop.f32.mrb[0].mxu0
      %v1835 = vadd.f32 0.0, %v1834
      %v1836 = vpop.f32.mrb[0].mxu0
      %1837 = vmatprep.mubr.bf16.mxu0 %v674
      %1838 = vmatmul.mubr.bf16.gmra.mrb[0].mxu0 %v767
      %v1839 = vpop.f32.mrb[0].mxu0
      %v1840 = vadd.f32 0.0, %v1839
      %v1841 = vpop.f32.mrb[0].mxu0
      %v1842 = vpop.f32.mrb[0].mxu0
      %v1843 = vadd.f32 0.0, %v1842
      %v1844 = vpop.f32.mrb[0].mxu0
      %1845 = vmatprep.mubr.bf16.mxu0 %v675
      %1846 = vmatmul.mubr.bf16.gmra.mrb[0].mxu0 %v768
      %v1847 = vpop.f32.mrb[0].mxu0
      %v1848 = vadd.f32 0.0, %v1847
      %v1849 = vpop.f32.mrb[0].mxu0
      %v1850 = vpop.f32.mrb[0].mxu0
      %v1851 = vadd.f32 0.0, %v1850
      %v1852 = vpop.f32.mrb[0].mxu0
      %1853 = vmatprep.mubr.bf16.mxu0 %v676
      %1854 = vmatmul.mubr.bf16.gmra.mrb[0].mxu0 %v769
      %v1855 = vpop.f32.mrb[0].mxu0
      %v1856 = vadd.f32 0.0, %v1855
      %v1857 = vpop.f32.mrb[0].mxu0
      %v1858 = vpop.f32.mrb[0].mxu0
      %v1859 = vadd.f32 0.0, %v1858
      %v1860 = vpop.f32.mrb[0].mxu0
      %1861 = vmatprep.mubr.bf16.mxu0 %v677
      %1862 = vmatmul.mubr.bf16.gmra.mrb[0].mxu0 %v770
      %v1863 = vpop.f32.mrb[0].mxu0
      %v1864 = vadd.f32 0.0, %v1863
      %v1865 = vpop.f32.mrb[0].mxu0
      %v1866 = vpop.f32.mrb[0].mxu0
      %v1867 = vadd.f32 0.0, %v1866
      %v1868 = vpop.f32.mrb[0].mxu0
      %1869 = vmatprep.mubr.bf16.mxu0 %v678
      %1870 = vmatmul.mubr.bf16.gmra.mrb[0].mxu0 %v771
      %v1871 = vpop.f32.mrb[0].mxu0
      %v1872 = vadd.f32 0.0, %v1871
      %v1873 = vpop.f32.mrb[0].mxu0
      %v1874 = vpop.f32.mrb[0].mxu0
      %v1875 = vadd.f32 0.0, %v1874
      %v1876 = vpop.f32.mrb[0].mxu0
      %1877 = vdwg.mxu0
      %1878 = vmatprep.subr.bf16.mxu0 0
      %1879 = vmatpush1.bf16.msra.mxu0 %v1749
      %1880 = vmatprep.subr.bf16.mxu0 0
      %1881 = vmatpush1.bf16.msra.mxu0 %v1750
      %1882 = vmatprep.subr.bf16.mxu0 0
      %1883 = vmatpush1.bf16.msra.mxu0 %v1751
      %1884 = vmatprep.subr.bf16.mxu0 0
      %1885 = vmatpush1.bf16.msra.mxu0 %v1752
      %1886 = vmatprep.subr.bf16.mxu0 0
      %1887 = vmatpush1.bf16.msra.mxu0 %v1753
      %1888 = vmatprep.subr.bf16.mxu0 0
      %1889 = vmatpush1.bf16.msra.mxu0 %v1754
      %1890 = vmatprep.subr.bf16.mxu0 0
      %1891 = vmatpush1.bf16.msra.mxu0 %v1755
      %1892 = vmatprep.subr.bf16.mxu0 0
      %1893 = vmatpush1.bf16.msra.mxu0 %v1756
      %1894 = vmatprep.subr.bf16.mxu0 0
      %1895 = vmatpush1.bf16.msra.mxu0 0
      %1896 = vmatprep.subr.bf16.mxu0 0
      %1897 = vmatpush1.bf16.msra.mxu0 0
      %1898 = vmatprep.subr.bf16.mxu0 0
      %1899 = vmatpush1.bf16.msra.mxu0 0
      %1900 = vmatprep.subr.bf16.mxu0 0
      %1901 = vmatpush1.bf16.msra.mxu0 0
      %1902 = vmatprep.subr.bf16.mxu0 0
      %1903 = vmatpush1.bf16.msra.mxu0 0
      %1904 = vmatprep.subr.bf16.mxu0 0
      %1905 = vmatpush1.bf16.msra.mxu0 0
      %1906 = vmatprep.subr.bf16.mxu0 0
      %1907 = vmatpush1.bf16.msra.mxu0 0
      %1908 = vmatprep.subr.bf16.mxu0 0
      %1909 = vmatpush1.bf16.msra.mxu0 0
      %1910 = vmatprep.mubr.bf16.mxu0 0
      %1911 = vmatmul.mubr.bf16.gmra.mrb[0].mxu0 %v807
      %v1912 = vpop.f32.mrb[0].mxu0
      %v1913 = vadd.f32 %v1816, %v1912
      %v1914 = vpop.f32.mrb[0].mxu0
      %v1915 = vpop.f32.mrb[0].mxu0
      %v1916 = vadd.f32 %v1819, %v1915
      %v1917 = vpop.f32.mrb[0].mxu0
      %1918 = vmatprep.mubr.bf16.mxu0 0
      %1919 = vmatmul.mubr.bf16.gmra.mrb[0].mxu0 %v808
      %v1920 = vpop.f32.mrb[0].mxu0
      %v1921 = vadd.f32 %v1824, %v1920
      %v1922 = vpop.f32.mrb[0].mxu0
      %v1923 = vpop.f32.mrb[0].mxu0
      %v1924 = vadd.f32 %v1827, %v1923
      %v1925 = vpop.f32.mrb[0].mxu0
      %1926 = vmatprep.mubr.bf16.mxu0 0
      %1927 = vmatmul.mubr.bf16.gmra.mrb[0].mxu0 %v809
      %v1928 = vpop.f32.mrb[0].mxu0
      %v1929 = vadd.f32 %v1832, %v1928
      %v1930 = vpop.f32.mrb[0].mxu0
      %v1931 = vpop.f32.mrb[0].mxu0
      %v1932 = vadd.f32 %v1835, %v1931
      %v1933 = vpop.f32.mrb[0].mxu0
      %1934 = vmatprep.mubr.bf16.mxu0 0
      %1935 = vmatmul.mubr.bf16.gmra.mrb[0].mxu0 %v810
      %v1936 = vpop.f32.mrb[0].mxu0
      %v1937 = vadd.f32 %v1840, %v1936
      %v1938 = vpop.f32.mrb[0].mxu0
      %v1939 = vpop.f32.mrb[0].mxu0
      %v1940 = vadd.f32 %v1843, %v1939
      %v1941 = vpop.f32.mrb[0].mxu0
      %1942 = vmatprep.mubr.bf16.mxu0 0
      %1943 = vmatmul.mubr.bf16.gmra.mrb[0].mxu0 %v811
      %v1944 = vpop.f32.mrb[0].mxu0
      %v1945 = vadd.f32 %v1848, %v1944
      %v1946 = vpop.f32.mrb[0].mxu0
      %v1947 = vpop.f32.mrb[0].mxu0
      %v1948 = vadd.f32 %v1851, %v1947
      %v1949 = vpop.f32.mrb[0].mxu0
      %1950 = vmatprep.mubr.bf16.mxu0 0
      %1951 = vmatmul.mubr.bf16.gmra.mrb[0].mxu0 %v812
      %v1952 = vpop.f32.mrb[0].mxu0
      %v1953 = vadd.f32 %v1856, %v1952
      %v1954 = vpop.f32.mrb[0].mxu0
      %v1955 = vpop.f32.mrb[0].mxu0
      %v1956 = vadd.f32 %v1859, %v1955
      %v1957 = vpop.f32.mrb[0].mxu0
      %1958 = vmatprep.mubr.bf16.mxu0 0
      %1959 = vmatmul.mubr.bf16.gmra.mrb[0].mxu0 %v813
      %v1960 = vpop.f32.mrb[0].mxu0
      %v1961 = vadd.f32 %v1864, %v1960
      %v1962 = vpop.f32.mrb[0].mxu0
      %v1963 = vpop.f32.mrb[0].mxu0
      %v1964 = vadd.f32 %v1867, %v1963
      %v1965 = vpop.f32.mrb[0].mxu0
      %1966 = vmatprep.mubr.bf16.mxu0 0
      %1967 = vmatmul.mubr.bf16.gmra.mrb[0].mxu0 %v814
      %v1968 = vpop.f32.mrb[0].mxu0
      %v1969 = vadd.f32 %v1872, %v1968
      %v1970 = vpop.f32.mrb[0].mxu0
      %v1971 = vpop.f32.mrb[0].mxu0
      %v1972 = vadd.f32 %v1875, %v1971
      %v1973 = vpop.f32.mrb[0].mxu0
      %1974 = vdwg.mxu0
      %v1975 = vadd.f32 %v1526, %v1913
      %v1976 = vadd.f32 %v1529, %v1916
      %v1977 = vadd.f32 %v1534, %v1921
      %v1978 = vadd.f32 %v1537, %v1924
      %v1979 = vadd.f32 %v1542, %v1929
      %v1980 = vadd.f32 %v1545, %v1932
      %v1981 = vadd.f32 %v1550, %v1937
      %v1982 = vadd.f32 %v1553, %v1940
      %v1983 = vadd.f32 %v1558, %v1945
      %v1984 = vadd.f32 %v1561, %v1948
      %v1985 = vadd.f32 %v1566, %v1953
      %v1986 = vadd.f32 %v1569, %v1956
      %v1987 = vadd.f32 %v1574, %v1961
      %v1988 = vadd.f32 %v1577, %v1964
      %v1989 = vadd.f32 %v1582, %v1969
      %v1990 = vadd.f32 %v1585, %v1972
      %v1991 = vld [vmem:[%s2] sm:$0x1]
      %v1993 = vlaneseq
      %v1994 = vshrl.u32 %v1993, 7
      %v1995 = vsub.s32 0, %v1994
      %v1996 = vrot.slane %v1991, %v1995
      %v1998 = vadd.f32 %v1975, %v1996
      %v1999 = vadd.f32 %v1976, %v1996
      %v2000 = vadd.f32 %v1977, %v1996
      %v2001 = vadd.f32 %v1978, %v1996
      %v2002 = vadd.f32 %v1979, %v1996
      %v2003 = vadd.f32 %v1980, %v1996
      %v2004 = vadd.f32 %v1981, %v1996
      %v2005 = vadd.f32 %v1982, %v1996
      %v2006 = vadd.f32 %v1983, %v1996
      %v2007 = vadd.f32 %v1984, %v1996
      %v2008 = vadd.f32 %v1985, %v1996
      %v2009 = vadd.f32 %v1986, %v1996
      %v2010 = vadd.f32 %v1987, %v1996
      %v2011 = vadd.f32 %v1988, %v1996
      %v2012 = vadd.f32 %v1989, %v1996
      %v2013 = vadd.f32 %v1990, %v1996
      %v2014 = vpack.c.bf16 %v1999, %v1998
      %v2015 = vpack.c.bf16 %v2001, %v2000
      %v2016 = vpack.c.bf16 %v2003, %v2002
      %v2017 = vpack.c.bf16 %v2005, %v2004
      %v2018 = vpack.c.bf16 %v2007, %v2006
      %v2019 = vpack.c.bf16 %v2009, %v2008
      %v2020 = vpack.c.bf16 %v2011, %v2010
      %v2021 = vpack.c.bf16 %v2013, %v2012
      %v2030 = vunpack.c.l.b16 %v2014
      %v2031 = vunpack.c.h.b16 %v2014
      %v2032 = vunpack.c.l.b16 %v2015
      %v2033 = vunpack.c.h.b16 %v2015
      %v2034 = vunpack.c.l.b16 %v2016
      %v2035 = vunpack.c.h.b16 %v2016
      %v2036 = vunpack.c.l.b16 %v2017
      %v2037 = vunpack.c.h.b16 %v2017
      %v2038 = vunpack.c.l.b16 %v2018
      %v2039 = vunpack.c.h.b16 %v2018
      %v2040 = vunpack.c.l.b16 %v2019
      %v2041 = vunpack.c.h.b16 %v2019
      %v2042 = vunpack.c.l.b16 %v2020
      %v2043 = vunpack.c.h.b16 %v2020
      %v2044 = vunpack.c.l.b16 %v2021
      %v2045 = vunpack.c.h.b16 %v2021
      %v2046 = vpack.c.b16 %v2030, %v2030
      %v2047 = vpack.c.b16 %v2031, %v2031
      %v2048 = vpack.c.b16 %v2032, %v2032
      %v2049 = vpack.c.b16 %v2033, %v2033
      %v2050 = vpack.c.b16 %v2034, %v2034
      %v2051 = vpack.c.b16 %v2035, %v2035
      %v2052 = vpack.c.b16 %v2036, %v2036
      %v2053 = vpack.c.b16 %v2037, %v2037
      %v2054 = vpack.c.b16 %v2038, %v2038
      %v2055 = vpack.c.b16 %v2039, %v2039
      %v2056 = vpack.c.b16 %v2040, %v2040
      %v2057 = vpack.c.b16 %v2041, %v2041
      %v2058 = vpack.c.b16 %v2042, %v2042
      %v2059 = vpack.c.b16 %v2043, %v2043
      %v2060 = vpack.c.b16 %v2044, %v2044
      %v2061 = vpack.c.b16 %v2045, %v2045
      %2078 = vst [vmem:[%s182] sm:$0xf] %v2046
      %2079 = vst [vmem:[%s182 + $0x4] sm:$0xf] %v2047
      %2080 = vst [vmem:[%s182 + $0x8] sm:$0xf] %v2048
      %2081 = vst [vmem:[%s182 + $0xc] sm:$0xf] %v2049
      %2082 = vst [vmem:[%s182 + $0x10] sm:$0xf] %v2050
      %2083 = vst [vmem:[%s182 + $0x14] sm:$0xf] %v2051
      %2084 = vst [vmem:[%s182 + $0x18] sm:$0xf] %v2052
      %2085 = vst [vmem:[%s182 + $0x1c] sm:$0xf] %v2053
      %2086 = vst [vmem:[%s182 + $0x20] sm:$0xf] %v2054
      %2087 = vst [vmem:[%s182 + $0x24] sm:$0xf] %v2055
      %2088 = vst [vmem:[%s182 + $0x28] sm:$0xf] %v2056
      %2089 = vst [vmem:[%s182 + $0x2c] sm:$0xf] %v2057
      %2090 = vst [vmem:[%s182 + $0x30] sm:$0xf] %v2058
      %2091 = vst [vmem:[%s182 + $0x34] sm:$0xf] %v2059
      %2092 = vst [vmem:[%s182 + $0x38] sm:$0xf] %v2060
      %2093 = vst [vmem:[%s182 + $0x3c] sm:$0xf] %v2061
      %v2094 = vunpack.c.l.bf16 %v2014
      %v2095 = vunpack.c.h.bf16 %v2014
      %v2096 = vunpack.c.l.bf16 %v2015
      %v2097 = vunpack.c.h.bf16 %v2015
      %v2098 = vunpack.c.l.bf16 %v2016
      %v2099 = vunpack.c.h.bf16 %v2016
      %v2100 = vunpack.c.l.bf16 %v2017
      %v2101 = vunpack.c.h.bf16 %v2017
      %v2102 = vunpack.c.l.bf16 %v2018
      %v2103 = vunpack.c.h.bf16 %v2018
      %v2104 = vunpack.c.l.bf16 %v2019
      %v2105 = vunpack.c.h.bf16 %v2019
      %v2106 = vunpack.c.l.bf16 %v2020
      %v2107 = vunpack.c.h.bf16 %v2020
      %v2108 = vunpack.c.l.bf16 %v2021
      %v2109 = vunpack.c.h.bf16 %v2021
      %v2110 = vadd.f32 %v2094, %v2095
      %v2111 = vadd.f32 %v2110, %v2096
      %v2112 = vadd.f32 %v2111, %v2097
      %v2113 = vadd.f32 %v2112, %v2098
      %v2114 = vadd.f32 %v2113, %v2099
      %v2115 = vadd.f32 %v2114, %v2100
      %v2116 = vadd.f32 %v2115, %v2101
      %v2117 = vadd.f32 %v2116, %v2102
      %v2118 = vadd.f32 %v2117, %v2103
      %v2119 = vadd.f32 %v2118, %v2104
      %v2120 = vadd.f32 %v2119, %v2105
      %v2121 = vadd.f32 %v2120, %v2106
      %v2122 = vadd.f32 %v2121, %v2107
      %v2123 = vadd.f32 %v2122, %v2108
      %v2124 = vadd.f32 %v2123, %v2109
      %v2125 = vrot.slane %v2124, 4
      %v2126 = vadd.f32 %v2124, %v2125
      %v2127 = vrot.slane %v2126, 2
      %v2128 = vadd.f32 %v2126, %v2127
      %v2129 = vrot.slane %v2128, 1
      %v2130 = vadd.f32 %v2128, %v2129
      %v2131 = vmul.f32 %v2094, %v2094
      %v2132 = vmul.f32 %v2095, %v2095
      %v2133 = vmul.f32 %v2096, %v2096
      %v2134 = vmul.f32 %v2097, %v2097
      %v2135 = vmul.f32 %v2098, %v2098
      %v2136 = vmul.f32 %v2099, %v2099
      %v2137 = vmul.f32 %v2100, %v2100
      %v2138 = vmul.f32 %v2101, %v2101
      %v2139 = vmul.f32 %v2102, %v2102
      %v2140 = vmul.f32 %v2103, %v2103
      %v2141 = vmul.f32 %v2104, %v2104
      %v2142 = vmul.f32 %v2105, %v2105
      %v2143 = vmul.f32 %v2106, %v2106
      %v2144 = vmul.f32 %v2107, %v2107
      %v2145 = vmul.f32 %v2108, %v2108
      %v2146 = vmul.f32 %v2109, %v2109
      %v2147 = vadd.f32 %v2131, %v2132
      %v2148 = vadd.f32 %v2147, %v2133
      %v2149 = vadd.f32 %v2148, %v2134
      %v2150 = vadd.f32 %v2149, %v2135
      %v2151 = vadd.f32 %v2150, %v2136
      %v2152 = vadd.f32 %v2151, %v2137
      %v2153 = vadd.f32 %v2152, %v2138
      %v2154 = vadd.f32 %v2153, %v2139
      %v2155 = vadd.f32 %v2154, %v2140
      %v2156 = vadd.f32 %v2155, %v2141
      %v2157 = vadd.f32 %v2156, %v2142
      %v2158 = vadd.f32 %v2157, %v2143
      %v2159 = vadd.f32 %v2158, %v2144
      %v2160 = vadd.f32 %v2159, %v2145
      %v2161 = vadd.f32 %v2160, %v2146
      %v2162 = vrot.slane %v2161, 4
      %v2163 = vadd.f32 %v2161, %v2162
      %v2164 = vrot.slane %v2163, 2
      %v2165 = vadd.f32 %v2163, %v2164
      %v2166 = vrot.slane %v2165, 1
      %v2167 = vadd.f32 %v2165, %v2166
      // Predicated region
      $region265: #{vgg_block.3} parent=27 // pred_check
        %p2168 = pneg %p190
      $region266: #{vgg_block.3} parent=27 // pred_check_branch
        %2170 = sbr.rel (%p2168) target = $region268
      $region267: #{vgg_block.3} parent=27 // pred_region
        %2171 = vst [vmem:[%s187] sm:$0x3] 0.0
      $region268: #{vgg_block.3} parent=27 // pred_fallthru
        _
      %v2172 = vld [vmem:[%s187] sm:$0x3]
      %vm2173 = vcmask 1040384
      %v2174 = vsel %vm2173, %v2130, %v2167
      %v2175 = vadd.f32 %v2172, %v2174
      %2176 = vst [vmem:[%s187] sm:$0x3] %v2175
      %s2177 = smul.u32 8, %s21
      %p2178 = scmp.lt.s32.totalorder %s20, 1
      %s2179 = scalar_select %p2178, %s20, 1
      %p2180 = scmp.lt.s32.totalorder %s2177, 15
      %s2181 = scalar_select %p2180, %s2177, 15
      %s2182 = smul.addr %s2181, 2
      %s2183 = smul.addr %s2179, 32
      %s2184 = sadd.s32 %s2182, %s2183
      %s2185 = smul.addr %s2184, 4
      %s2186 = scalar_lea.vmem %s3, %s2185
      %p2187 = scmp.lt.s32.totalorder %s20, 1
      %s2188 = scalar_select %p2187, %s20, 1
      %s2189 = smul.addr %s2188, 2
      %s2190 = scalar_lea.vmem %s4, %s2189
      // Predicated region
      $region269: #{vgg_block.3} parent=27 // pred_check
        %p2191 = pneg %p90
      $region270: #{vgg_block.3} parent=27 // pred_check_branch
        %2193 = sbr.rel (%p2191) target = $region272
      $region271: #{vgg_block.3} parent=27 // pred_region
        %s2194 = smul.u32 8, %s21
      $region272: #{vgg_block.3} parent=27 // pred_fallthru
        _
      // Predicated region
      $region273: #{vgg_block.3} parent=27 // pred_check
        %p2195 = pneg %p116
      $region274: #{vgg_block.3} parent=27 // pred_check_branch
        %2197 = sbr.rel (%p2195) target = $region276
      $region275: #{vgg_block.3} parent=27 // pred_region
        _
      $region276: #{vgg_block.3} parent=27 // pred_fallthru
        _
    $region28: #{vgg_block.3} parent=5 // pred_fallthru
      _
    %p2198 = scmp.le.s32.totalorder 2, %s11
    // Predicated region
    $region277: #{vgg_block.3} parent=5 // pred_check
      %p2199 = pneg %p2198
    $region278: #{vgg_block.3} parent=5 // pred_check_branch
      %2201 = sbr.rel (%p2199) target = $region280
    $region279: #{vgg_block.3} parent=5 // pred_region
      %s2202 = ssub.s32 %s11, 2
      // Predicated region
      $region281: #{vgg_block.3} parent=279 // pred_check
        %p2203 = pneg %p96
      $region282: #{vgg_block.3} parent=279 // pred_check_branch
        %2205 = sbr.rel (%p2203) target = $region284
      $region283: #{vgg_block.3} parent=279 // pred_region
        %s2206 = smul.u32 8, %s23
        %p2207 = scmp.lt.s32.totalorder %s22, 1
        %s2208 = scalar_select %p2207, %s22, 1
        %p2209 = scmp.lt.s32.totalorder %s2206, 15
        %s2210 = scalar_select %p2209, %s2206, 15
        %s2211 = smul.addr %s2210, 2
        %s2212 = smul.addr %s2208, 32
        %s2213 = sadd.s32 %s2211, %s2212
        %s2214 = smul.addr %s2213, 4
        %s2215 = scalar_lea.vmem %s3, %s2214
      $region284: #{vgg_block.3} parent=279 // pred_fallthru
        _
      // Predicated region
      $region285: #{vgg_block.3} parent=279 // pred_check
        %p2216 = pneg %p122
      $region286: #{vgg_block.3} parent=279 // pred_check_branch
        %2218 = sbr.rel (%p2216) target = $region288
      $region287: #{vgg_block.3} parent=279 // pred_region
        %p2219 = scmp.lt.s32.totalorder %s22, 1
        %s2220 = scalar_select %p2219, %s22, 1
        %s2221 = smul.addr %s2220, 2
        %s2222 = scalar_lea.vmem %s4, %s2221
      $region288: #{vgg_block.3} parent=279 // pred_fallthru
        _
    $region280: #{vgg_block.3} parent=5 // pred_fallthru
      _
  $region6: #{vgg_block.3} parent=0 // loop_footer
    %s15 = sadd.s32 1, %s11
  $region7: #{vgg_block.3} parent=0 // loop_footer_branch
    %10 = sbr.rel target = $region3
  $region8: #{vgg_block.3} parent=0 // loop_exit
    _
  %2223 = vsyncmov [#allocation3]
  %s2224 = vpop.sfrf %2223
  %p2225 = scmp.eq.s32.totalorder %s2224, 0
  %p2226 = pneg %p2225
  %2228 = shalt.err (%p2226)
  %s2229 = scalar_lea.sflag [#allocation3], 1
  %2230 = vsyncmov %s2229
  %s2231 = vpop.sfrf %2230
  %p2232 = scmp.eq.s32.totalorder %s2231, 0
  %p2233 = pneg %p2232
  %2235 = shalt.err (%p2233)
  %s2236 = scalar_lea.sflag [#allocation3], 2
  %2237 = vsyncmov %s2236
  %s2238 = vpop.sfrf %2237
  %p2239 = scmp.eq.s32.totalorder %s2238, 0
  %p2240 = pneg %p2239
  %2242 = shalt.err (%p2240)
  %s2243 = scalar_lea.sflag [#allocation3], 3
  %2244 = vsyncmov %s2243
  %s2245 = vpop.sfrf %2244
  %p2246 = scmp.eq.s32.totalorder %s2245, 0
  %p2247 = pneg %p2246
  %2249 = shalt.err (%p2247)
  %s2250 = scalar_lea.sflag [#allocation3], 4
  %2251 = vsyncmov %s2250
  %s2252 = vpop.sfrf %2251
  %p2253 = scmp.eq.s32.totalorder %s2252, 0
  %p2254 = pneg %p2253
  %2256 = shalt.err (%p2254)
  %s2257 = scalar_lea.sflag [#allocation3], 5
  %2258 = vsyncmov %s2257
  %s2259 = vpop.sfrf %2258
  %p2260 = scmp.eq.s32.totalorder %s2259, 0
  %p2261 = pneg %p2260
  %2263 = shalt.err (%p2261)

// kernel: vgg_block.4
$region0: #{vgg_block.4}
  #allocation0 [shape = 'u32[]', space=smem, size = 0x4, offset = 0x4, fixed_abs, tag = 'smem constant byte address 0x4 - core index']
  #allocation1 [shape = 'u32[144,128]{1,0:T(1,128)}', space=vmem, size = 0x12000, scoped, tag = 'internal scratch']
  #allocation2 [shape = 'bf16[2,10,16,128]{3,2,1,0:T(16,128)(2,1)}', space=vmem, size = 0x14000, scoped, tag = 'scratch operand']
  #allocation3 [shape = 's32[6]{0}', space=sflag, size = 0x18, scoped, tag = 'scratch operand']
  #allocation4 [shape = 's32[]', space=sflag, size = 0x4, offset = 0, fixed_abs, tag = 'sflag constant byte address 0x0 - dummy sync flag']
  #allocation5 [shape = 's32[]', space=sflag, size = 0x4, offset = 0, fixed_abs, tag = 'sflag constant byte address 0x0 - dummy sync flag']
  #allocation6 [shape = 's32[]', space=sflag, size = 0x4, offset = 0, fixed_abs, tag = 'sflag constant byte address 0x0 - dummy sync flag']
  #allocation7 [shape = 's32[]', space=sflag, size = 0x4, offset = 0, fixed_abs, tag = 'sflag constant byte address 0x0 - dummy sync flag']
  #allocation8 [shape = 's32[]', space=sflag, size = 0x4, offset = 0, fixed_abs, tag = 'sflag constant byte address 0x0 - dummy sync flag']
  #allocation9 [shape = 's32[]', space=sflag, size = 0x4, offset = 0, fixed_abs, tag = 'sflag constant byte address 0x0 - dummy sync flag']
  %s0 = inlined_call_operand.vmem [shape: bf16[2,16,16,128], index: 0, kind: input, shape index: {}]
  %s1 = inlined_call_operand.vmem [shape: bf16[3,384,128], index: 1, kind: input, shape index: {}]
  %s2 = inlined_call_operand.vmem [shape: f32[1,128], index: 2, kind: input, shape index: {}]
  %s3 = inlined_call_operand.vmem [shape: f32[1,128], index: 3, kind: input, shape index: {}]
  %s4 = inlined_call_operand.vmem [shape: f32[1,128], index: 4, kind: input, shape index: {}]
  %s5 = inlined_call_operand.vmem [shape: bf16[2,16,16,128], index: 5, kind: output, shape index: {0}]
  %s6 = inlined_call_operand.vmem [shape: f32[2,2,128], index: 6, kind: output, shape index: {1}]
  %7 = xla_tuple %s5, %s6
  %s8 = sld [smem:[#allocation0]]
  $region297: #{vgg_block.4} parent=0
    _
  %s10 = ssub.s32 1, %s8
  %s11 = scalar_select 0, %s10, %s8
  loop: start=0, step=1, limit=6
  $region2: #{vgg_block.4} parent=0 // loop_pre_header
    _
  $region3: #{vgg_block.4} parent=0 // loop_header
    %s13 = sphi 0, %s17
    %p14 = scmp.ge.s32.totalorder %s13, 6
    %s20 = sphi 0, %s32
    %s21 = sphi 0, %s28
    %s22 = sphi 0, %s20
    %s23 = sphi 0, %s21
    %s24 = sphi 0, %s22
    %s25 = sphi 0, %s23
    %s33 = sphi 0, %s33
    %s35 = sphi 0, %s33
    %s36 = sphi 0, %s35
    %s50 = sphi 0, %s36
    %s54 = sphi 0, %s54
    %s56 = sphi 0, %s54
    %s57 = sphi 0, %s56
    %s71 = sphi 0, %s57
    %s75 = sphi 0, %s75
    %s77 = sphi 0, %s75
    %s78 = sphi 0, %s77
    %s92 = sphi 0, %s78
    %s96 = sphi 0, %s96
    %s98 = sphi 0, %s96
    %s99 = sphi 0, %s98
    %s113 = sphi 0, %s99
    %s121 = sphi 0, %s123
    %s124 = sphi 0, %s121
    %s125 = sphi 0, %s124
    %s141 = sphi 0, %s125
    %s147 = sphi 0, %s149
    %s150 = sphi 0, %s147
    %s151 = sphi 0, %s150
    %s167 = sphi 0, %s151
  $region4: #{vgg_block.4} parent=0 // loop_header_branch
    %16 = sbr.rel (%p14) target = $region8
  $region5: #{vgg_block.4} parent=0 // loop_body
    %s18 = ssub.s32 %s13, 1
    %s19 = ssub.s32 %s13, 2
    %s26 = sadd.s32 1, %s21
    %p27 = scmp.ge.s32.totalorder %s26, 2
    %s28 = scalar_select %p27, 0, %s26
    %s29 = sadd.s32 1, %s20
    %s30 = scalar_select %p27, %s29, %s20
    %p31 = scmp.ge.s32.totalorder %s30, 2
    %s32 = scalar_select %p31, 0, %s30
    %s34 = sadd.s32 %s33, 1
    %p37 = scmp.eq.s32.totalorder %s13, 3
    %p38 = scmp.ne.s32.totalorder %s33, %s35
    %p39 = scmp.eq.s32.totalorder %s13, 0
    %p40 = por %p38, %p39
    %p41 = scmp.ne.s32.totalorder %s33, %s35
    %p42 = scmp.eq.s32.totalorder %s18, 3
    %p43 = por %p41, %p42
    %p44 = scmp.ne.s32.totalorder %s35, %s36
    %p45 = scmp.eq.s32.totalorder %s18, 0
    %p46 = por %p44, %p45
    %p47 = scmp.ne.s32.totalorder %s35, %s36
    %p48 = scmp.eq.s32.totalorder %s19, 3
    %p49 = por %p47, %p48
    %p51 = scmp.ne.s32.totalorder %s36, %s50
    %p52 = scmp.eq.s32.totalorder %s19, 0
    %p53 = por %p51, %p52
    %s55 = sadd.s32 %s54, 1
    %p58 = scmp.eq.s32.totalorder %s13, 3
    %p59 = scmp.ne.s32.totalorder %s54, %s56
    %p60 = scmp.eq.s32.totalorder %s13, 0
    %p61 = por %p59, %p60
    %p62 = scmp.ne.s32.totalorder %s54, %s56
    %p63 = scmp.eq.s32.totalorder %s18, 3
    %p64 = por %p62, %p63
    %p65 = scmp.ne.s32.totalorder %s56, %s57
    %p66 = scmp.eq.s32.totalorder %s18, 0
    %p67 = por %p65, %p66
    %p68 = scmp.ne.s32.totalorder %s56, %s57
    %p69 = scmp.eq.s32.totalorder %s19, 3
    %p70 = por %p68, %p69
    %p72 = scmp.ne.s32.totalorder %s57, %s71
    %p73 = scmp.eq.s32.totalorder %s19, 0
    %p74 = por %p72, %p73
    %s76 = sadd.s32 %s75, 1
    %p79 = scmp.eq.s32.totalorder %s13, 3
    %p80 = scmp.ne.s32.totalorder %s75, %s77
    %p81 = scmp.eq.s32.totalorder %s13, 0
    %p82 = por %p80, %p81
    %p83 = scmp.ne.s32.totalorder %s75, %s77
    %p84 = scmp.eq.s32.totalorder %s18, 3
    %p85 = por %p83, %p84
    %p86 = scmp.ne.s32.totalorder %s77, %s78
    %p87 = scmp.eq.s32.totalorder %s18, 0
    %p88 = por %p86, %p87
    %p89 = scmp.ne.s32.totalorder %s77, %s78
    %p90 = scmp.eq.s32.totalorder %s19, 3
    %p91 = por %p89, %p90
    %p93 = scmp.ne.s32.totalorder %s78, %s92
    %p94 = scmp.eq.s32.totalorder %s19, 0
    %p95 = por %p93, %p94
    %s97 = sadd.s32 %s96, 1
    %p100 = scmp.eq.s32.totalorder %s13, 3
    %p101 = scmp.ne.s32.totalorder %s96, %s98
    %p102 = scmp.eq.s32.totalorder %s13, 0
    %p103 = por %p101, %p102
    %p104 = scmp.ne.s32.totalorder %s96, %s98
    %p105 = scmp.eq.s32.totalorder %s18, 3
    %p106 = por %p104, %p105
    %p107 = scmp.ne.s32.totalorder %s98, %s99
    %p108 = scmp.eq.s32.totalorder %s18, 0
    %p109 = por %p107, %p108
    %p110 = scmp.ne.s32.totalorder %s98, %s99
    %p111 = scmp.eq.s32.totalorder %s19, 3
    %p112 = por %p110, %p111
    %p114 = scmp.ne.s32.totalorder %s99, %s113
    %p115 = scmp.eq.s32.totalorder %s19, 0
    %p116 = por %p114, %p115
    %s117 = ssub.s32 %s20, %s32
    %s118 = ssub.s32 %s21, %s28
    %s119 = sor.u32 %s117, %s118
    %p120 = scmp.eq.s32.totalorder %s119, 0
    %s122 = sadd.s32 %s121, 1
    %s123 = scalar_select %p120, %s121, %s122
    %p126 = pneg %p120
    %p127 = scmp.eq.s32.totalorder %s13, 3
    %p128 = por %p126, %p127
    %p129 = scmp.ne.s32.totalorder %s121, %s124
    %p130 = scmp.eq.s32.totalorder %s13, 0
    %p131 = por %p129, %p130
    %p132 = scmp.ne.s32.totalorder %s121, %s124
    %p133 = scmp.eq.s32.totalorder %s18, 3
    %p134 = por %p132, %p133
    %p135 = scmp.ne.s32.totalorder %s124, %s125
    %p136 = scmp.eq.s32.totalorder %s18, 0
    %p137 = por %p135, %p136
    %p138 = scmp.ne.s32.totalorder %s124, %s125
    %p139 = scmp.eq.s32.totalorder %s19, 3
    %p140 = por %p138, %p139
    %p142 = scmp.ne.s32.totalorder %s125, %s141
    %p143 = scmp.eq.s32.totalorder %s19, 0
    %p144 = por %p142, %p143
    %s145 = ssub.s32 %s20, %s32
    %p146 = scmp.eq.s32.totalorder %s145, 0
    %s148 = sadd.s32 %s147, 1
    %s149 = scalar_select %p146, %s147, %s148
    %p152 = pneg %p146
    %p153 = scmp.eq.s32.totalorder %s13, 3
    %p154 = por %p152, %p153
    %p155 = scmp.ne.s32.totalorder %s147, %s150
    %p156 = scmp.eq.s32.totalorder %s13, 0
    %p157 = por %p155, %p156
    %p158 = scmp.ne.s32.totalorder %s147, %s150
    %p159 = scmp.eq.s32.totalorder %s18, 3
    %p160 = por %p158, %p159
    %p161 = scmp.ne.s32.totalorder %s150, %s151
    %p162 = scmp.eq.s32.totalorder %s18, 0
    %p163 = por %p161, %p162
    %p164 = scmp.ne.s32.totalorder %s150, %s151
    %p165 = scmp.eq.s32.totalorder %s19, 3
    %p166 = por %p164, %p165
    %p168 = scmp.ne.s32.totalorder %s151, %s167
    %p169 = scmp.eq.s32.totalorder %s19, 0
    %p170 = por %p168, %p169
    %p171 = scmp.le.s32.totalorder 1, %s13
    %p172 = scmp.lt.s32.totalorder %s13, 5
    %p173 = pnand %p171, %p172
    %p174 = pneg %p173
    // Predicated region
    $region9: #{vgg_block.4} parent=5 // pred_check
      _
    $region10: #{vgg_block.4} parent=5 // pred_check_branch
      %176 = sbr.rel (%p173) target = $region12
    $region11: #{vgg_block.4} parent=5 // pred_region
      %s177 = ssub.s32 %s13, 1
      // Predicated region
      $region13: #{vgg_block.4} parent=11 // pred_check
        %p178 = pneg %p46
      $region14: #{vgg_block.4} parent=11 // pred_check_branch
        %180 = sbr.rel (%p178) target = $region16
      $region15: #{vgg_block.4} parent=11 // pred_region
        _
      $region16: #{vgg_block.4} parent=11 // pred_fallthru
        _
      // Predicated region
      $region17: #{vgg_block.4} parent=11 // pred_check
        %p181 = pneg %p67
      $region18: #{vgg_block.4} parent=11 // pred_check_branch
        %183 = sbr.rel (%p181) target = $region20
      $region19: #{vgg_block.4} parent=11 // pred_region
        _
      $region20: #{vgg_block.4} parent=11 // pred_fallthru
        _
      // Predicated region
      $region21: #{vgg_block.4} parent=11 // pred_check
        %p184 = pneg %p88
      $region22: #{vgg_block.4} parent=11 // pred_check_branch
        %186 = sbr.rel (%p184) target = $region24
      $region23: #{vgg_block.4} parent=11 // pred_region
        _
      $region24: #{vgg_block.4} parent=11 // pred_fallthru
        _
      // Predicated region
      $region25: #{vgg_block.4} parent=11 // pred_check
        %p187 = pneg %p109
      $region26: #{vgg_block.4} parent=11 // pred_check_branch
        %189 = sbr.rel (%p187) target = $region28
      $region27: #{vgg_block.4} parent=11 // pred_region
        _
      $region28: #{vgg_block.4} parent=11 // pred_fallthru
        _
    $region12: #{vgg_block.4} parent=5 // pred_fallthru
      _
    %p190 = scmp.lt.s32.totalorder %s13, 4
    // Predicated region
    $region29: #{vgg_block.4} parent=5 // pred_check
      %p191 = pneg %p190
    $region30: #{vgg_block.4} parent=5 // pred_check_branch
      %193 = sbr.rel (%p191) target = $region32
    $region31: #{vgg_block.4} parent=5 // pred_region
      _
    $region32: #{vgg_block.4} parent=5 // pred_fallthru
      _
    %p194 = scmp.le.s32.totalorder 1, %s13
    %p195 = scmp.lt.s32.totalorder %s13, 5
    %p196 = pnand %p194, %p195
    %p197 = pneg %p196
    // Predicated region
    $region33: #{vgg_block.4} parent=5 // pred_check
      _
    $region34: #{vgg_block.4} parent=5 // pred_check_branch
      %199 = sbr.rel (%p196) target = $region36
    $region35: #{vgg_block.4} parent=5 // pred_region
      %s200 = ssub.s32 %s13, 1
      %p201 = pneg %p46
      %p202 = pneg %p43
      %p203 = pneg %p67
      %p204 = pneg %p64
      %p205 = pneg %p88
      %p206 = pneg %p85
      %p207 = pneg %p109
      %p208 = pneg %p106
      %p209 = pneg %p137
      %p210 = pneg %p134
      %s211 = smul.u32 8, %s23
      %p212 = scmp.lt.s32.totalorder %s22, 1
      %s213 = scalar_select %p212, %s22, 1
      %p214 = scmp.lt.s32.totalorder %s211, 15
      %s215 = scalar_select %p214, %s211, 15
      %s216 = smul.addr %s215, 2
      %s217 = smul.addr %s213, 32
      %s218 = sadd.s32 %s216, %s217
      %s219 = smul.addr %s218, 4
      %s220 = scalar_lea.vmem %s5, %s219
      %p221 = pneg %p163
      %p222 = pneg %p160
      %p223 = scmp.lt.s32.totalorder %s22, 1
      %s224 = scalar_select %p223, %s22, 1
      %s225 = smul.addr %s224, 2
      %s226 = scalar_lea.vmem %s6, %s225
      %s227 = smul.u32 8, %s23
      %p228 = scmp.lt.s32.totalorder %s22, 1
      %s229 = scalar_select %p228, %s22, 1
      %p230 = scmp.lt.s32.totalorder %s227, 15
      %s231 = scalar_select %p230, %s227, 15
      %s232 = smul.addr %s231, 2
      %s233 = smul.addr %s229, 32
      %s234 = sadd.s32 %s232, %s233
      %s235 = smul.addr %s234, 4
      %s236 = scalar_lea.vmem %s5, %s235
      %s237 = smul.u32 8, %s23
      %p238 = scmp.lt.s32.totalorder %s22, 1
      %s239 = scalar_select %p238, %s22, 1
      %s240 = smul.addr %s239, 2
      %s241 = scalar_lea.vmem %s6, %s240
      %s243 = sand.u32 %s23, 1
      %p244 = scmp.eq.s32.totalorder %s23, 0
      // Predicated region
      $region37: #{vgg_block.4} parent=35 // pred_check
        %p245 = pneg %p244
      $region38: #{vgg_block.4} parent=35 // pred_check_branch
        %247 = sbr.rel (%p245) target = $region40
      $region39: #{vgg_block.4} parent=35 // pred_region
        %s248 = smul.u32 %s23, 8
        %s249 = smul.u32 %s248, 2
        %s250 = smul.u32 %s22, 32
        %s251 = sadd.s32 %s249, %s250
        %s252 = smul.addr %s251, 4
        %s253 = scalar_lea.vmem %s0, %s252
        %s254 = smul.u32 %s243, 10
        %s255 = sadd.s32 1, %s254
        %s256 = smul.addr %s255, 8
        %s257 = scalar_lea.vmem [#allocation2], %s256
        %s258 = smul.u32 %s243, 3
        %s259 = scalar_lea.sflag [#allocation3], %s258
        %p261 = scmp.lt.u32.totalorder 64, 8
        %p262 = pneg %p261
        // Predicated region
        $region41: #{vgg_block.4} parent=39 // pred_check
          _
        $region42: #{vgg_block.4} parent=39 // pred_check_branch
          %264 = sbr.rel (%p261) target = $region44
        $region43: #{vgg_block.4} parent=39 // pred_region
          %s279 = sand.u32 64, 7
          %p280 = scmp.eq.s32.totalorder %s279, 0
          // Predicated region
          $region56: #{vgg_block.4} parent=43 // pred_check
            %p281 = pneg %p280
          $region57: #{vgg_block.4} parent=43 // pred_check_branch
            %283 = sbr.rel (%p281) target = $region59
          $region58: #{vgg_block.4} parent=43 // pred_region
            loop: start=0, step=1, limit=1
            $region60: #{vgg_block.4} parent=58 // loop_pre_header
              _
            $region61: #{vgg_block.4} parent=58 // loop_header
              %s285 = sphi 0, %s289
              %p286 = scmp.ge.s32.totalorder %s285, 1
              %s290 = sphi %s253, %s253
              %s291 = sphi %s257, %s257
            $region62: #{vgg_block.4} parent=58 // loop_header_branch
              %288 = sbr.rel (%p286) target = $region66
            $region63: #{vgg_block.4} parent=58 // loop_body
              %v292 = vld [vmem:[%s290] sm:$0xff]
              %293 = vst [vmem:[%s291] sm:$0xff] %v292
              %v294 = vld [vmem:[%s290 + $0x8] sm:$0xff]
              %295 = vst [vmem:[%s291 + $0x8] sm:$0xff] %v294
              %v296 = vld [vmem:[%s290 + $0x10] sm:$0xff]
              %297 = vst [vmem:[%s291 + $0x10] sm:$0xff] %v296
              %v298 = vld [vmem:[%s290 + $0x18] sm:$0xff]
              %299 = vst [vmem:[%s291 + $0x18] sm:$0xff] %v298
              %v300 = vld [vmem:[%s290 + $0x20] sm:$0xff]
              %301 = vst [vmem:[%s291 + $0x20] sm:$0xff] %v300
              %v302 = vld [vmem:[%s290 + $0x28] sm:$0xff]
              %303 = vst [vmem:[%s291 + $0x28] sm:$0xff] %v302
              %v304 = vld [vmem:[%s290 + $0x30] sm:$0xff]
              %305 = vst [vmem:[%s291 + $0x30] sm:$0xff] %v304
              %v306 = vld [vmem:[%s290 + $0x38] sm:$0xff]
              %307 = vst [vmem:[%s291 + $0x38] sm:$0xff] %v306
            $region64: #{vgg_block.4} parent=58 // loop_footer
              %s289 = sadd.s32 1, %s285
            $region65: #{vgg_block.4} parent=58 // loop_footer_branch
              %284 = sbr.rel target = $region61
            $region66: #{vgg_block.4} parent=58 // loop_exit
              _
          $region59: #{vgg_block.4} parent=43 // pred_fallthru
            _
          %p308 = pneg %p280
          // Predicated region
          $region67: #{vgg_block.4} parent=43 // pred_check
            _
          $region68: #{vgg_block.4} parent=43 // pred_check_branch
            %310 = sbr.rel (%p280) target = $region70
          $region69: #{vgg_block.4} parent=43 // pred_region
            %s311 = sand.u32 64, 7
          $region70: #{vgg_block.4} parent=43 // pred_fallthru
            _
        $region44: #{vgg_block.4} parent=39 // pred_fallthru
          _
        // Predicated region
        $region45: #{vgg_block.4} parent=39 // pred_check
          %p265 = pneg %p261
        $region46: #{vgg_block.4} parent=39 // pred_check_branch
          %267 = sbr.rel (%p265) target = $region48
        $region47: #{vgg_block.4} parent=39 // pred_region
          %s268 = sshllo.u32 0, 64
          loop: start=0, step=1, limit=1
          $region49: #{vgg_block.4} parent=47 // loop_pre_header
            _
          $region50: #{vgg_block.4} parent=47 // loop_header
            %s270 = sphi 0, %s274
            %p271 = scmp.ge.s32.totalorder %s270, 1
            %s275 = sphi %s253, %s253
            %s276 = sphi %s257, %s257
          $region51: #{vgg_block.4} parent=47 // loop_header_branch
            %273 = sbr.rel (%p271) target = $region55
          $region52: #{vgg_block.4} parent=47 // loop_body
            %v277 = vld [vmem:[%s275] sm:%s268]
            %278 = vst [vmem:[%s276] sm:%s268] %v277
          $region53: #{vgg_block.4} parent=47 // loop_footer
            %s274 = sadd.s32 1, %s270
          $region54: #{vgg_block.4} parent=47 // loop_footer_branch
            %269 = sbr.rel target = $region50
          $region55: #{vgg_block.4} parent=47 // loop_exit
            _
        $region48: #{vgg_block.4} parent=39 // pred_fallthru
          _
        // Predicated region
        $region71: #{vgg_block.4} parent=39 // pred_check
          _
        $region72: #{vgg_block.4} parent=39 // pred_check_branch
          %314 = sbr.rel (0) target = $region74
        $region73: #{vgg_block.4} parent=39 // pred_region
          %315 = vsyncadd %s259, 1024
        $region74: #{vgg_block.4} parent=39 // pred_fallthru
          _
        %p316 = scmp.gt.s32.totalorder %s23, 0
        // Predicated region
        $region75: #{vgg_block.4} parent=39 // pred_check
          %p317 = pneg %p316
        $region76: #{vgg_block.4} parent=39 // pred_check_branch
          %319 = sbr.rel (%p317) target = $region78
        $region77: #{vgg_block.4} parent=39 // pred_region
          %s320 = ssub.s32 %s248, 1
          %s321 = smul.u32 %s320, 2
          %s322 = sadd.s32 %s321, %s250
          %s323 = smul.addr %s322, 4
          %s324 = scalar_lea.vmem %s0, %s323
          %s325 = smul.addr %s254, 8
          %s326 = scalar_lea.vmem [#allocation2], %s325
          %s327 = sadd.s32 1, %s258
          %s328 = scalar_lea.sflag [#allocation3], %s327
          %p330 = scmp.lt.u32.totalorder 8, 8
          %p331 = pneg %p330
          // Predicated region
          $region79: #{vgg_block.4} parent=77 // pred_check
            _
          $region80: #{vgg_block.4} parent=77 // pred_check_branch
            %333 = sbr.rel (%p330) target = $region82
          $region81: #{vgg_block.4} parent=77 // pred_region
            %s348 = sand.u32 8, 7
            %p349 = scmp.eq.s32.totalorder %s348, 0
            // Predicated region
            $region94: #{vgg_block.4} parent=81 // pred_check
              %p350 = pneg %p349
            $region95: #{vgg_block.4} parent=81 // pred_check_branch
              %352 = sbr.rel (%p350) target = $region97
            $region96: #{vgg_block.4} parent=81 // pred_region
              loop: start=0, step=1, limit=1
              $region98: #{vgg_block.4} parent=96 // loop_pre_header
                _
              $region99: #{vgg_block.4} parent=96 // loop_header
                %s354 = sphi 0, %s358
                %p355 = scmp.ge.s32.totalorder %s354, 1
                %s359 = sphi %s324, %s324
                %s360 = sphi %s326, %s326
              $region100: #{vgg_block.4} parent=96 // loop_header_branch
                %357 = sbr.rel (%p355) target = $region104
              $region101: #{vgg_block.4} parent=96 // loop_body
                %v361 = vld [vmem:[%s359] sm:$0xff]
                %362 = vst [vmem:[%s360] sm:$0xff] %v361
              $region102: #{vgg_block.4} parent=96 // loop_footer
                %s358 = sadd.s32 1, %s354
              $region103: #{vgg_block.4} parent=96 // loop_footer_branch
                %353 = sbr.rel target = $region99
              $region104: #{vgg_block.4} parent=96 // loop_exit
                _
            $region97: #{vgg_block.4} parent=81 // pred_fallthru
              _
            %p363 = pneg %p349
            // Predicated region
            $region105: #{vgg_block.4} parent=81 // pred_check
              _
            $region106: #{vgg_block.4} parent=81 // pred_check_branch
              %365 = sbr.rel (%p349) target = $region108
            $region107: #{vgg_block.4} parent=81 // pred_region
              %s366 = sand.u32 8, 7
            $region108: #{vgg_block.4} parent=81 // pred_fallthru
              _
          $region82: #{vgg_block.4} parent=77 // pred_fallthru
            _
          // Predicated region
          $region83: #{vgg_block.4} parent=77 // pred_check
            %p334 = pneg %p330
          $region84: #{vgg_block.4} parent=77 // pred_check_branch
            %336 = sbr.rel (%p334) target = $region86
          $region85: #{vgg_block.4} parent=77 // pred_region
            %s337 = sshllo.u32 0, 8
            loop: start=0, step=1, limit=1
            $region87: #{vgg_block.4} parent=85 // loop_pre_header
              _
            $region88: #{vgg_block.4} parent=85 // loop_header
              %s339 = sphi 0, %s343
              %p340 = scmp.ge.s32.totalorder %s339, 1
              %s344 = sphi %s324, %s324
              %s345 = sphi %s326, %s326
            $region89: #{vgg_block.4} parent=85 // loop_header_branch
              %342 = sbr.rel (%p340) target = $region93
            $region90: #{vgg_block.4} parent=85 // loop_body
              %v346 = vld [vmem:[%s344] sm:%s337]
              %347 = vst [vmem:[%s345] sm:%s337] %v346
            $region91: #{vgg_block.4} parent=85 // loop_footer
              %s343 = sadd.s32 1, %s339
            $region92: #{vgg_block.4} parent=85 // loop_footer_branch
              %338 = sbr.rel target = $region88
            $region93: #{vgg_block.4} parent=85 // loop_exit
              _
          $region86: #{vgg_block.4} parent=77 // pred_fallthru
            _
          // Predicated region
          $region109: #{vgg_block.4} parent=77 // pred_check
            _
          $region110: #{vgg_block.4} parent=77 // pred_check_branch
            %369 = sbr.rel (0) target = $region112
          $region111: #{vgg_block.4} parent=77 // pred_region
            %370 = vsyncadd %s328, 128
          $region112: #{vgg_block.4} parent=77 // pred_fallthru
            _
        $region78: #{vgg_block.4} parent=39 // pred_fallthru
          _
        %p371 = scmp.lt.s32.totalorder %s23, 1
        // Predicated region
        $region113: #{vgg_block.4} parent=39 // pred_check
          %p372 = pneg %p371
        $region114: #{vgg_block.4} parent=39 // pred_check_branch
          %374 = sbr.rel (%p372) target = $region116
        $region115: #{vgg_block.4} parent=39 // pred_region
          %s375 = sadd.s32 %s248, 8
          %s376 = smul.u32 %s375, 2
          %s377 = sadd.s32 %s376, %s250
          %s378 = smul.addr %s377, 4
          %s379 = scalar_lea.vmem %s0, %s378
          %s380 = sadd.s32 9, %s254
          %s381 = smul.addr %s380, 8
          %s382 = scalar_lea.vmem [#allocation2], %s381
          %s383 = sadd.s32 2, %s258
          %s384 = scalar_lea.sflag [#allocation3], %s383
          %p386 = scmp.lt.u32.totalorder 8, 8
          %p387 = pneg %p386
          // Predicated region
          $region117: #{vgg_block.4} parent=115 // pred_check
            _
          $region118: #{vgg_block.4} parent=115 // pred_check_branch
            %389 = sbr.rel (%p386) target = $region120
          $region119: #{vgg_block.4} parent=115 // pred_region
            %s404 = sand.u32 8, 7
            %p405 = scmp.eq.s32.totalorder %s404, 0
            // Predicated region
            $region132: #{vgg_block.4} parent=119 // pred_check
              %p406 = pneg %p405
            $region133: #{vgg_block.4} parent=119 // pred_check_branch
              %408 = sbr.rel (%p406) target = $region135
            $region134: #{vgg_block.4} parent=119 // pred_region
              loop: start=0, step=1, limit=1
              $region136: #{vgg_block.4} parent=134 // loop_pre_header
                _
              $region137: #{vgg_block.4} parent=134 // loop_header
                %s410 = sphi 0, %s414
                %p411 = scmp.ge.s32.totalorder %s410, 1
                %s415 = sphi %s379, %s379
                %s416 = sphi %s382, %s382
              $region138: #{vgg_block.4} parent=134 // loop_header_branch
                %413 = sbr.rel (%p411) target = $region142
              $region139: #{vgg_block.4} parent=134 // loop_body
                %v417 = vld [vmem:[%s415] sm:$0xff]
                %418 = vst [vmem:[%s416] sm:$0xff] %v417
              $region140: #{vgg_block.4} parent=134 // loop_footer
                %s414 = sadd.s32 1, %s410
              $region141: #{vgg_block.4} parent=134 // loop_footer_branch
                %409 = sbr.rel target = $region137
              $region142: #{vgg_block.4} parent=134 // loop_exit
                _
            $region135: #{vgg_block.4} parent=119 // pred_fallthru
              _
            %p419 = pneg %p405
            // Predicated region
            $region143: #{vgg_block.4} parent=119 // pred_check
              _
            $region144: #{vgg_block.4} parent=119 // pred_check_branch
              %421 = sbr.rel (%p405) target = $region146
            $region145: #{vgg_block.4} parent=119 // pred_region
              %s422 = sand.u32 8, 7
            $region146: #{vgg_block.4} parent=119 // pred_fallthru
              _
          $region120: #{vgg_block.4} parent=115 // pred_fallthru
            _
          // Predicated region
          $region121: #{vgg_block.4} parent=115 // pred_check
            %p390 = pneg %p386
          $region122: #{vgg_block.4} parent=115 // pred_check_branch
            %392 = sbr.rel (%p390) target = $region124
          $region123: #{vgg_block.4} parent=115 // pred_region
            %s393 = sshllo.u32 0, 8
            loop: start=0, step=1, limit=1
            $region125: #{vgg_block.4} parent=123 // loop_pre_header
              _
            $region126: #{vgg_block.4} parent=123 // loop_header
              %s395 = sphi 0, %s399
              %p396 = scmp.ge.s32.totalorder %s395, 1
              %s400 = sphi %s379, %s379
              %s401 = sphi %s382, %s382
            $region127: #{vgg_block.4} parent=123 // loop_header_branch
              %398 = sbr.rel (%p396) target = $region131
            $region128: #{vgg_block.4} parent=123 // loop_body
              %v402 = vld [vmem:[%s400] sm:%s393]
              %403 = vst [vmem:[%s401] sm:%s393] %v402
            $region129: #{vgg_block.4} parent=123 // loop_footer
              %s399 = sadd.s32 1, %s395
            $region130: #{vgg_block.4} parent=123 // loop_footer_branch
              %394 = sbr.rel target = $region126
            $region131: #{vgg_block.4} parent=123 // loop_exit
              _
          $region124: #{vgg_block.4} parent=115 // pred_fallthru
            _
          // Predicated region
          $region147: #{vgg_block.4} parent=115 // pred_check
            _
          $region148: #{vgg_block.4} parent=115 // pred_check_branch
            %425 = sbr.rel (0) target = $region150
          $region149: #{vgg_block.4} parent=115 // pred_region
            %426 = vsyncadd %s384, 128
          $region150: #{vgg_block.4} parent=115 // pred_fallthru
            _
        $region116: #{vgg_block.4} parent=39 // pred_fallthru
          _
      $region40: #{vgg_block.4} parent=35 // pred_fallthru
        _
      %s427 = smul.u32 %s23, 8
      %s428 = smul.u32 %s243, 3
      %s429 = scalar_lea.sflag [#allocation3], %s428
      %s430 = smul.u32 4, 8
      %s431 = smul.u32 %s430, 2
      %s432 = smul.u32 %s431, 1
      %s433 = sshll.u32 %s432, 4
      %434 = dma.done %s429, %s433
      %p435 = scmp.gt.s32.totalorder %s23, 0
      // Predicated region
      $region151: #{vgg_block.4} parent=35 // pred_check
        %p436 = pneg %p435
      $region152: #{vgg_block.4} parent=35 // pred_check_branch
        %438 = sbr.rel (%p436) target = $region154
      $region153: #{vgg_block.4} parent=35 // pred_region
        %s439 = sadd.s32 1, %s428
        %s440 = scalar_lea.sflag [#allocation3], %s439
        %s441 = smul.u32 4, 1
        %s442 = smul.u32 %s441, 2
        %s443 = smul.u32 %s442, 1
        %s444 = sshll.u32 %s443, 4
        %445 = dma.done %s440, %s444
      $region154: #{vgg_block.4} parent=35 // pred_fallthru
        _
      %p446 = scmp.lt.s32.totalorder %s23, 1
      // Predicated region
      $region155: #{vgg_block.4} parent=35 // pred_check
        %p447 = pneg %p446
      $region156: #{vgg_block.4} parent=35 // pred_check_branch
        %449 = sbr.rel (%p447) target = $region158
      $region157: #{vgg_block.4} parent=35 // pred_region
        %s450 = sadd.s32 2, %s428
        %s451 = scalar_lea.sflag [#allocation3], %s450
        %s452 = smul.u32 4, 1
        %s453 = smul.u32 %s452, 2
        %s454 = smul.u32 %s453, 1
        %s455 = sshll.u32 %s454, 4
        %456 = dma.done %s451, %s455
      $region158: #{vgg_block.4} parent=35 // pred_fallthru
        _
      %s457 = sadd.s32 %s23, 1
      %p458 = scmp.lt.s32.totalorder %s457, 2
      // Predicated region
      $region159: #{vgg_block.4} parent=35 // pred_check
        %p459 = pneg %p458
      $region160: #{vgg_block.4} parent=35 // pred_check_branch
        %461 = sbr.rel (%p459) target = $region162
      $region161: #{vgg_block.4} parent=35 // pred_region
        %s462 = sand.u32 %s457, 1
        %s463 = smul.u32 %s457, 8
        %s464 = smul.u32 %s463, 2
        %s465 = smul.u32 %s22, 32
        %s466 = sadd.s32 %s464, %s465
        %s467 = smul.addr %s466, 4
        %s468 = scalar_lea.vmem %s0, %s467
        %s469 = smul.u32 %s462, 10
        %s470 = sadd.s32 1, %s469
        %s471 = smul.addr %s470, 8
        %s472 = scalar_lea.vmem [#allocation2], %s471
        %s473 = smul.u32 %s462, 3
        %s474 = scalar_lea.sflag [#allocation3], %s473
        %p476 = scmp.lt.u32.totalorder 64, 8
        %p477 = pneg %p476
        // Predicated region
        $region163: #{vgg_block.4} parent=161 // pred_check
          _
        $region164: #{vgg_block.4} parent=161 // pred_check_branch
          %479 = sbr.rel (%p476) target = $region166
        $region165: #{vgg_block.4} parent=161 // pred_region
          %s494 = sand.u32 64, 7
          %p495 = scmp.eq.s32.totalorder %s494, 0
          // Predicated region
          $region178: #{vgg_block.4} parent=165 // pred_check
            %p496 = pneg %p495
          $region179: #{vgg_block.4} parent=165 // pred_check_branch
            %498 = sbr.rel (%p496) target = $region181
          $region180: #{vgg_block.4} parent=165 // pred_region
            loop: start=0, step=1, limit=1
            $region182: #{vgg_block.4} parent=180 // loop_pre_header
              _
            $region183: #{vgg_block.4} parent=180 // loop_header
              %s500 = sphi 0, %s504
              %p501 = scmp.ge.s32.totalorder %s500, 1
              %s505 = sphi %s468, %s468
              %s506 = sphi %s472, %s472
            $region184: #{vgg_block.4} parent=180 // loop_header_branch
              %503 = sbr.rel (%p501) target = $region188
            $region185: #{vgg_block.4} parent=180 // loop_body
              %v507 = vld [vmem:[%s505] sm:$0xff]
              %508 = vst [vmem:[%s506] sm:$0xff] %v507
              %v509 = vld [vmem:[%s505 + $0x8] sm:$0xff]
              %510 = vst [vmem:[%s506 + $0x8] sm:$0xff] %v509
              %v511 = vld [vmem:[%s505 + $0x10] sm:$0xff]
              %512 = vst [vmem:[%s506 + $0x10] sm:$0xff] %v511
              %v513 = vld [vmem:[%s505 + $0x18] sm:$0xff]
              %514 = vst [vmem:[%s506 + $0x18] sm:$0xff] %v513
              %v515 = vld [vmem:[%s505 + $0x20] sm:$0xff]
              %516 = vst [vmem:[%s506 + $0x20] sm:$0xff] %v515
              %v517 = vld [vmem:[%s505 + $0x28] sm:$0xff]
              %518 = vst [vmem:[%s506 + $0x28] sm:$0xff] %v517
              %v519 = vld [vmem:[%s505 + $0x30] sm:$0xff]
              %520 = vst [vmem:[%s506 + $0x30] sm:$0xff] %v519
              %v521 = vld [vmem:[%s505 + $0x38] sm:$0xff]
              %522 = vst [vmem:[%s506 + $0x38] sm:$0xff] %v521
            $region186: #{vgg_block.4} parent=180 // loop_footer
              %s504 = sadd.s32 1, %s500
            $region187: #{vgg_block.4} parent=180 // loop_footer_branch
              %499 = sbr.rel target = $region183
            $region188: #{vgg_block.4} parent=180 // loop_exit
              _
          $region181: #{vgg_block.4} parent=165 // pred_fallthru
            _
          %p523 = pneg %p495
          // Predicated region
          $region189: #{vgg_block.4} parent=165 // pred_check
            _
          $region190: #{vgg_block.4} parent=165 // pred_check_branch
            %525 = sbr.rel (%p495) target = $region192
          $region191: #{vgg_block.4} parent=165 // pred_region
            %s526 = sand.u32 64, 7
          $region192: #{vgg_block.4} parent=165 // pred_fallthru
            _
        $region166: #{vgg_block.4} parent=161 // pred_fallthru
          _
        // Predicated region
        $region167: #{vgg_block.4} parent=161 // pred_check
          %p480 = pneg %p476
        $region168: #{vgg_block.4} parent=161 // pred_check_branch
          %482 = sbr.rel (%p480) target = $region170
        $region169: #{vgg_block.4} parent=161 // pred_region
          %s483 = sshllo.u32 0, 64
          loop: start=0, step=1, limit=1
          $region171: #{vgg_block.4} parent=169 // loop_pre_header
            _
          $region172: #{vgg_block.4} parent=169 // loop_header
            %s485 = sphi 0, %s489
            %p486 = scmp.ge.s32.totalorder %s485, 1
            %s490 = sphi %s468, %s468
            %s491 = sphi %s472, %s472
          $region173: #{vgg_block.4} parent=169 // loop_header_branch
            %488 = sbr.rel (%p486) target = $region177
          $region174: #{vgg_block.4} parent=169 // loop_body
            %v492 = vld [vmem:[%s490] sm:%s483]
            %493 = vst [vmem:[%s491] sm:%s483] %v492
          $region175: #{vgg_block.4} parent=169 // loop_footer
            %s489 = sadd.s32 1, %s485
          $region176: #{vgg_block.4} parent=169 // loop_footer_branch
            %484 = sbr.rel target = $region172
          $region177: #{vgg_block.4} parent=169 // loop_exit
            _
        $region170: #{vgg_block.4} parent=161 // pred_fallthru
          _
        // Predicated region
        $region193: #{vgg_block.4} parent=161 // pred_check
          _
        $region194: #{vgg_block.4} parent=161 // pred_check_branch
          %529 = sbr.rel (0) target = $region196
        $region195: #{vgg_block.4} parent=161 // pred_region
          %530 = vsyncadd %s474, 1024
        $region196: #{vgg_block.4} parent=161 // pred_fallthru
          _
        %p531 = scmp.gt.s32.totalorder %s457, 0
        // Predicated region
        $region197: #{vgg_block.4} parent=161 // pred_check
          %p532 = pneg %p531
        $region198: #{vgg_block.4} parent=161 // pred_check_branch
          %534 = sbr.rel (%p532) target = $region200
        $region199: #{vgg_block.4} parent=161 // pred_region
          %s535 = ssub.s32 %s463, 1
          %s536 = smul.u32 %s535, 2
          %s537 = sadd.s32 %s536, %s465
          %s538 = smul.addr %s537, 4
          %s539 = scalar_lea.vmem %s0, %s538
          %s540 = smul.addr %s469, 8
          %s541 = scalar_lea.vmem [#allocation2], %s540
          %s542 = sadd.s32 1, %s473
          %s543 = scalar_lea.sflag [#allocation3], %s542
          %p545 = scmp.lt.u32.totalorder 8, 8
          %p546 = pneg %p545
          // Predicated region
          $region201: #{vgg_block.4} parent=199 // pred_check
            _
          $region202: #{vgg_block.4} parent=199 // pred_check_branch
            %548 = sbr.rel (%p545) target = $region204
          $region203: #{vgg_block.4} parent=199 // pred_region
            %s563 = sand.u32 8, 7
            %p564 = scmp.eq.s32.totalorder %s563, 0
            // Predicated region
            $region216: #{vgg_block.4} parent=203 // pred_check
              %p565 = pneg %p564
            $region217: #{vgg_block.4} parent=203 // pred_check_branch
              %567 = sbr.rel (%p565) target = $region219
            $region218: #{vgg_block.4} parent=203 // pred_region
              loop: start=0, step=1, limit=1
              $region220: #{vgg_block.4} parent=218 // loop_pre_header
                _
              $region221: #{vgg_block.4} parent=218 // loop_header
                %s569 = sphi 0, %s573
                %p570 = scmp.ge.s32.totalorder %s569, 1
                %s574 = sphi %s539, %s539
                %s575 = sphi %s541, %s541
              $region222: #{vgg_block.4} parent=218 // loop_header_branch
                %572 = sbr.rel (%p570) target = $region226
              $region223: #{vgg_block.4} parent=218 // loop_body
                %v576 = vld [vmem:[%s574] sm:$0xff]
                %577 = vst [vmem:[%s575] sm:$0xff] %v576
              $region224: #{vgg_block.4} parent=218 // loop_footer
                %s573 = sadd.s32 1, %s569
              $region225: #{vgg_block.4} parent=218 // loop_footer_branch
                %568 = sbr.rel target = $region221
              $region226: #{vgg_block.4} parent=218 // loop_exit
                _
            $region219: #{vgg_block.4} parent=203 // pred_fallthru
              _
            %p578 = pneg %p564
            // Predicated region
            $region227: #{vgg_block.4} parent=203 // pred_check
              _
            $region228: #{vgg_block.4} parent=203 // pred_check_branch
              %580 = sbr.rel (%p564) target = $region230
            $region229: #{vgg_block.4} parent=203 // pred_region
              %s581 = sand.u32 8, 7
            $region230: #{vgg_block.4} parent=203 // pred_fallthru
              _
          $region204: #{vgg_block.4} parent=199 // pred_fallthru
            _
          // Predicated region
          $region205: #{vgg_block.4} parent=199 // pred_check
            %p549 = pneg %p545
          $region206: #{vgg_block.4} parent=199 // pred_check_branch
            %551 = sbr.rel (%p549) target = $region208
          $region207: #{vgg_block.4} parent=199 // pred_region
            %s552 = sshllo.u32 0, 8
            loop: start=0, step=1, limit=1
            $region209: #{vgg_block.4} parent=207 // loop_pre_header
              _
            $region210: #{vgg_block.4} parent=207 // loop_header
              %s554 = sphi 0, %s558
              %p555 = scmp.ge.s32.totalorder %s554, 1
              %s559 = sphi %s539, %s539
              %s560 = sphi %s541, %s541
            $region211: #{vgg_block.4} parent=207 // loop_header_branch
              %557 = sbr.rel (%p555) target = $region215
            $region212: #{vgg_block.4} parent=207 // loop_body
              %v561 = vld [vmem:[%s559] sm:%s552]
              %562 = vst [vmem:[%s560] sm:%s552] %v561
            $region213: #{vgg_block.4} parent=207 // loop_footer
              %s558 = sadd.s32 1, %s554
            $region214: #{vgg_block.4} parent=207 // loop_footer_branch
              %553 = sbr.rel target = $region210
            $region215: #{vgg_block.4} parent=207 // loop_exit
              _
          $region208: #{vgg_block.4} parent=199 // pred_fallthru
            _
          // Predicated region
          $region231: #{vgg_block.4} parent=199 // pred_check
            _
          $region232: #{vgg_block.4} parent=199 // pred_check_branch
            %584 = sbr.rel (0) target = $region234
          $region233: #{vgg_block.4} parent=199 // pred_region
            %585 = vsyncadd %s543, 128
          $region234: #{vgg_block.4} parent=199 // pred_fallthru
            _
        $region200: #{vgg_block.4} parent=161 // pred_fallthru
          _
        %p586 = scmp.lt.s32.totalorder %s457, 1
        // Predicated region
        $region235: #{vgg_block.4} parent=161 // pred_check
          %p587 = pneg %p586
        $region236: #{vgg_block.4} parent=161 // pred_check_branch
          %589 = sbr.rel (%p587) target = $region238
        $region237: #{vgg_block.4} parent=161 // pred_region
          %s590 = sadd.s32 %s463, 8
          %s591 = smul.u32 %s590, 2
          %s592 = sadd.s32 %s591, %s465
          %s593 = smul.addr %s592, 4
          %s594 = scalar_lea.vmem %s0, %s593
          %s595 = sadd.s32 9, %s469
          %s596 = smul.addr %s595, 8
          %s597 = scalar_lea.vmem [#allocation2], %s596
          %s598 = sadd.s32 2, %s473
          %s599 = scalar_lea.sflag [#allocation3], %s598
          %p601 = scmp.lt.u32.totalorder 8, 8
          %p602 = pneg %p601
          // Predicated region
          $region239: #{vgg_block.4} parent=237 // pred_check
            _
          $region240: #{vgg_block.4} parent=237 // pred_check_branch
            %604 = sbr.rel (%p601) target = $region242
          $region241: #{vgg_block.4} parent=237 // pred_region
            %s619 = sand.u32 8, 7
            %p620 = scmp.eq.s32.totalorder %s619, 0
            // Predicated region
            $region254: #{vgg_block.4} parent=241 // pred_check
              %p621 = pneg %p620
            $region255: #{vgg_block.4} parent=241 // pred_check_branch
              %623 = sbr.rel (%p621) target = $region257
            $region256: #{vgg_block.4} parent=241 // pred_region
              loop: start=0, step=1, limit=1
              $region258: #{vgg_block.4} parent=256 // loop_pre_header
                _
              $region259: #{vgg_block.4} parent=256 // loop_header
                %s625 = sphi 0, %s629
                %p626 = scmp.ge.s32.totalorder %s625, 1
                %s630 = sphi %s594, %s594
                %s631 = sphi %s597, %s597
              $region260: #{vgg_block.4} parent=256 // loop_header_branch
                %628 = sbr.rel (%p626) target = $region264
              $region261: #{vgg_block.4} parent=256 // loop_body
                %v632 = vld [vmem:[%s630] sm:$0xff]
                %633 = vst [vmem:[%s631] sm:$0xff] %v632
              $region262: #{vgg_block.4} parent=256 // loop_footer
                %s629 = sadd.s32 1, %s625
              $region263: #{vgg_block.4} parent=256 // loop_footer_branch
                %624 = sbr.rel target = $region259
              $region264: #{vgg_block.4} parent=256 // loop_exit
                _
            $region257: #{vgg_block.4} parent=241 // pred_fallthru
              _
            %p634 = pneg %p620
            // Predicated region
            $region265: #{vgg_block.4} parent=241 // pred_check
              _
            $region266: #{vgg_block.4} parent=241 // pred_check_branch
              %636 = sbr.rel (%p620) target = $region268
            $region267: #{vgg_block.4} parent=241 // pred_region
              %s637 = sand.u32 8, 7
            $region268: #{vgg_block.4} parent=241 // pred_fallthru
              _
          $region242: #{vgg_block.4} parent=237 // pred_fallthru
            _
          // Predicated region
          $region243: #{vgg_block.4} parent=237 // pred_check
            %p605 = pneg %p601
          $region244: #{vgg_block.4} parent=237 // pred_check_branch
            %607 = sbr.rel (%p605) target = $region246
          $region245: #{vgg_block.4} parent=237 // pred_region
            %s608 = sshllo.u32 0, 8
            loop: start=0, step=1, limit=1
            $region247: #{vgg_block.4} parent=245 // loop_pre_header
              _
            $region248: #{vgg_block.4} parent=245 // loop_header
              %s610 = sphi 0, %s614
              %p611 = scmp.ge.s32.totalorder %s610, 1
              %s615 = sphi %s594, %s594
              %s616 = sphi %s597, %s597
            $region249: #{vgg_block.4} parent=245 // loop_header_branch
              %613 = sbr.rel (%p611) target = $region253
            $region250: #{vgg_block.4} parent=245 // loop_body
              %v617 = vld [vmem:[%s615] sm:%s608]
              %618 = vst [vmem:[%s616] sm:%s608] %v617
            $region251: #{vgg_block.4} parent=245 // loop_footer
              %s614 = sadd.s32 1, %s610
            $region252: #{vgg_block.4} parent=245 // loop_footer_branch
              %609 = sbr.rel target = $region248
            $region253: #{vgg_block.4} parent=245 // loop_exit
              _
          $region246: #{vgg_block.4} parent=237 // pred_fallthru
            _
          // Predicated region
          $region269: #{vgg_block.4} parent=237 // pred_check
            _
          $region270: #{vgg_block.4} parent=237 // pred_check_branch
            %640 = sbr.rel (0) target = $region272
          $region271: #{vgg_block.4} parent=237 // pred_region
            %641 = vsyncadd %s599, 128
          $region272: #{vgg_block.4} parent=237 // pred_fallthru
            _
        $region238: #{vgg_block.4} parent=161 // pred_fallthru
          _
      $region162: #{vgg_block.4} parent=35 // pred_fallthru
        _
      %s642 = smul.u32 %s243, 10
      %s643 = smul.addr %s642, 8
      %s644 = scalar_lea.vmem [#allocation2], %s643
      %v645 = vld [vmem:[%s644] sm:$0xff]
      %v646 = vld [vmem:[%s644 + $0x8] sm:$0xff]
      %v647 = vld [vmem:[%s644 + $0x10] sm:$0xff]
      %v648 = vld [vmem:[%s644 + $0x18] sm:$0xff]
      %v649 = vld [vmem:[%s644 + $0x20] sm:$0xff]
      %v650 = vld [vmem:[%s644 + $0x28] sm:$0xff]
      %v651 = vld [vmem:[%s644 + $0x30] sm:$0xff]
      %v652 = vld [vmem:[%s644 + $0x38] sm:$0xff]
      %v653 = vld [vmem:[%s644 + $0x40] sm:$0xff]
      %v654 = vld [vmem:[%s644 + $0x48] sm:$0xff]
      %v655 = vstv %s427
      %v656 = vadd.s32 %v655, 2
      %v657 = vadd.s32 %v655, 3
      %v658 = vadd.s32 %v655, 4
      %v659 = vadd.s32 %v655, 5
      %v660 = vadd.s32 %v655, 6
      %v661 = vadd.s32 %v655, 7
      %v662 = vadd.s32 %v655, 8
      %v663 = vadd.s32 %v655, 9
      %v664 = vsub.s32 %v655, 1
      %v665 = vsub.s32 %v656, 1
      %v666 = vsub.s32 %v657, 1
      %v667 = vsub.s32 %v658, 1
      %v668 = vsub.s32 %v659, 1
      %v669 = vsub.s32 %v660, 1
      %v670 = vsub.s32 %v661, 1
      %v671 = vsub.s32 %v662, 1
      %v672 = vsub.s32 %v663, 1
      %vm673 = vcmp.ge.s32.totalorder %v664, 0
      %vm674 = vcmp.ge.s32.totalorder %v655, 0
      %vm675 = vcmp.ge.s32.totalorder %v665, 0
      %vm676 = vcmp.ge.s32.totalorder %v666, 0
      %vm677 = vcmp.ge.s32.totalorder %v667, 0
      %vm678 = vcmp.ge.s32.totalorder %v668, 0
      %vm679 = vcmp.ge.s32.totalorder %v669, 0
      %vm680 = vcmp.ge.s32.totalorder %v670, 0
      %vm681 = vcmp.ge.s32.totalorder %v671, 0
      %vm682 = vcmp.ge.s32.totalorder %v672, 0
      %vm683 = vcmp.lt.s32.totalorder %v664, 16
      %vm684 = vcmp.lt.s32.totalorder %v655, 16
      %vm685 = vcmp.lt.s32.totalorder %v665, 16
      %vm686 = vcmp.lt.s32.totalorder %v666, 16
      %vm687 = vcmp.lt.s32.totalorder %v667, 16
      %vm688 = vcmp.lt.s32.totalorder %v668, 16
      %vm689 = vcmp.lt.s32.totalorder %v669, 16
      %vm690 = vcmp.lt.s32.totalorder %v670, 16
      %vm691 = vcmp.lt.s32.totalorder %v671, 16
      %vm692 = vcmp.lt.s32.totalorder %v672, 16
      %vm693 = vmand %vm673, %vm683
      %vm694 = vmand %vm674, %vm684
      %vm695 = vmand %vm675, %vm685
      %vm696 = vmand %vm676, %vm686
      %vm697 = vmand %vm677, %vm687
      %vm698 = vmand %vm678, %vm688
      %vm699 = vmand %vm679, %vm689
      %vm700 = vmand %vm680, %vm690
      %vm701 = vmand %vm681, %vm691
      %vm702 = vmand %vm682, %vm692
      %v703 = vunpack.c.l.bf16 %v645
      %v704 = vunpack.c.h.bf16 %v645
      %v705 = vunpack.c.l.bf16 %v646
      %v706 = vunpack.c.h.bf16 %v646
      %v707 = vunpack.c.l.bf16 %v647
      %v708 = vunpack.c.h.bf16 %v647
      %v709 = vunpack.c.l.bf16 %v648
      %v710 = vunpack.c.h.bf16 %v648
      %v711 = vunpack.c.l.bf16 %v649
      %v712 = vunpack.c.h.bf16 %v649
      %v713 = vunpack.c.l.bf16 %v650
      %v714 = vunpack.c.h.bf16 %v650
      %v715 = vunpack.c.l.bf16 %v651
      %v716 = vunpack.c.h.bf16 %v651
      %v717 = vunpack.c.l.bf16 %v652
      %v718 = vunpack.c.h.bf16 %v652
      %v719 = vunpack.c.l.bf16 %v653
      %v720 = vunpack.c.h.bf16 %v653
      %v721 = vunpack.c.l.bf16 %v654
      %v722 = vunpack.c.h.bf16 %v654
      %v723 = vld [vmem:[%s3] sm:$0x1]
      %v725 = vlaneseq
      %v726 = vshrl.u32 %v725, 7
      %v727 = vsub.s32 0, %v726
      %v728 = vrot.slane %v723, %v727
      %v730 = vmul.f32 %v703, %v728
      %v731 = vmul.f32 %v704, %v728
      %v732 = vmul.f32 %v705, %v728
      %v733 = vmul.f32 %v706, %v728
      %v734 = vmul.f32 %v707, %v728
      %v735 = vmul.f32 %v708, %v728
      %v736 = vmul.f32 %v709, %v728
      %v737 = vmul.f32 %v710, %v728
      %v738 = vmul.f32 %v711, %v728
      %v739 = vmul.f32 %v712, %v728
      %v740 = vmul.f32 %v713, %v728
      %v741 = vmul.f32 %v714, %v728
      %v742 = vmul.f32 %v715, %v728
      %v743 = vmul.f32 %v716, %v728
      %v744 = vmul.f32 %v717, %v728
      %v745 = vmul.f32 %v718, %v728
      %v746 = vmul.f32 %v719, %v728
      %v747 = vmul.f32 %v720, %v728
      %v748 = vmul.f32 %v721, %v728
      %v749 = vmul.f32 %v722, %v728
      %v750 = vld [vmem:[%s4] sm:$0x1]
      %v752 = vlaneseq
      %v753 = vshrl.u32 %v752, 7
      %v754 = vsub.s32 0, %v753
      %v755 = vrot.slane %v750, %v754
      %v757 = vadd.f32 %v730, %v755
      %v758 = vadd.f32 %v731, %v755
      %v759 = vadd.f32 %v732, %v755
      %v760 = vadd.f32 %v733, %v755
      %v761 = vadd.f32 %v734, %v755
      %v762 = vadd.f32 %v735, %v755
      %v763 = vadd.f32 %v736, %v755
      %v764 = vadd.f32 %v737, %v755
      %v765 = vadd.f32 %v738, %v755
      %v766 = vadd.f32 %v739, %v755
      %v767 = vadd.f32 %v740, %v755
      %v768 = vadd.f32 %v741, %v755
      %v769 = vadd.f32 %v742, %v755
      %v770 = vadd.f32 %v743, %v755
      %v771 = vadd.f32 %v744, %v755
      %v772 = vadd.f32 %v745, %v755
      %v773 = vadd.f32 %v746, %v755
      %v774 = vadd.f32 %v747, %v755
      %v775 = vadd.f32 %v748, %v755
      %v776 = vadd.f32 %v749, %v755
      %v777 = vmax.f32 %v757, 0.0
      %v778 = vmax.f32 %v758, 0.0
      %v779 = vmax.f32 %v759, 0.0
      %v780 = vmax.f32 %v760, 0.0
      %v781 = vmax.f32 %v761, 0.0
      %v782 = vmax.f32 %v762, 0.0
      %v783 = vmax.f32 %v763, 0.0
      %v784 = vmax.f32 %v764, 0.0
      %v785 = vmax.f32 %v765, 0.0
      %v786 = vmax.f32 %v766, 0.0
      %v787 = vmax.f32 %v767, 0.0
      %v788 = vmax.f32 %v768, 0.0
      %v789 = vmax.f32 %v769, 0.0
      %v790 = vmax.f32 %v770, 0.0
      %v791 = vmax.f32 %v771, 0.0
      %v792 = vmax.f32 %v772, 0.0
      %v793 = vmax.f32 %v773, 0.0
      %v794 = vmax.f32 %v774, 0.0
      %v795 = vmax.f32 %v775, 0.0
      %v796 = vmax.f32 %v776, 0.0
      %v797 = vsel %vm693, 1, 0
      %v798 = vsel %vm694, 1, 0
      %v799 = vsel %vm695, 1, 0
      %v800 = vsel %vm696, 1, 0
      %v801 = vsel %vm697, 1, 0
      %v802 = vsel %vm698, 1, 0
      %v803 = vsel %vm699, 1, 0
      %v804 = vsel %vm700, 1, 0
      %v805 = vsel %vm701, 1, 0
      %v806 = vsel %vm702, 1, 0
      %vm807 = vcmp.eq.s32.totalorder %v797, 1
      %vm808 = vcmp.eq.s32.totalorder %v798, 1
      %vm809 = vcmp.eq.s32.totalorder %v799, 1
      %vm810 = vcmp.eq.s32.totalorder %v800, 1
      %vm811 = vcmp.eq.s32.totalorder %v801, 1
      %vm812 = vcmp.eq.s32.totalorder %v802, 1
      %vm813 = vcmp.eq.s32.totalorder %v803, 1
      %vm814 = vcmp.eq.s32.totalorder %v804, 1
      %vm815 = vcmp.eq.s32.totalorder %v805, 1
      %vm816 = vcmp.eq.s32.totalorder %v806, 1
      %v817 = vsel %vm807, %v777, 0.0
      %v818 = vsel %vm807, %v778, 0.0
      %v819 = vsel %vm808, %v779, 0.0
      %v820 = vsel %vm808, %v780, 0.0
      %v821 = vsel %vm809, %v781, 0.0
      %v822 = vsel %vm809, %v782, 0.0
      %v823 = vsel %vm810, %v783, 0.0
      %v824 = vsel %vm810, %v784, 0.0
      %v825 = vsel %vm811, %v785, 0.0
      %v826 = vsel %vm811, %v786, 0.0
      %v827 = vsel %vm812, %v787, 0.0
      %v828 = vsel %vm812, %v788, 0.0
      %v829 = vsel %vm813, %v789, 0.0
      %v830 = vsel %vm813, %v790, 0.0
      %v831 = vsel %vm814, %v791, 0.0
      %v832 = vsel %vm814, %v792, 0.0
      %v833 = vsel %vm815, %v793, 0.0
      %v834 = vsel %vm815, %v794, 0.0
      %v835 = vsel %vm816, %v795, 0.0
      %v836 = vsel %vm816, %v796, 0.0
      %v837 = vpack.c.bf16 %v818, %v817
      %v838 = vpack.c.bf16 %v820, %v819
      %v839 = vpack.c.bf16 %v822, %v821
      %v840 = vpack.c.bf16 %v824, %v823
      %v841 = vpack.c.bf16 %v826, %v825
      %v842 = vpack.c.bf16 %v828, %v827
      %v843 = vpack.c.bf16 %v830, %v829
      %v844 = vpack.c.bf16 %v832, %v831
      %v845 = vpack.c.bf16 %v834, %v833
      %v846 = vpack.c.bf16 %v836, %v835
      %v848 = vshrl.u32 %v837, 16
      %v850 = vrot.slane %v848, 7
      %v851 = vshll.u32 %v837, 16
      %v853 = vor.u32 %v850, %v851
      %v855 = vshrl.u32 %v838, 16
      %v857 = vrot.slane %v855, 7
      %v858 = vshll.u32 %v838, 16
      %v860 = vor.u32 %v857, %v858
      %v862 = vshrl.u32 %v839, 16
      %v864 = vrot.slane %v862, 7
      %v865 = vshll.u32 %v839, 16
      %v867 = vor.u32 %v864, %v865
      %v869 = vshrl.u32 %v840, 16
      %v871 = vrot.slane %v869, 7
      %v872 = vshll.u32 %v840, 16
      %v874 = vor.u32 %v871, %v872
      %v876 = vshrl.u32 %v841, 16
      %v878 = vrot.slane %v876, 7
      %v879 = vshll.u32 %v841, 16
      %v881 = vor.u32 %v878, %v879
      %v883 = vshrl.u32 %v842, 16
      %v885 = vrot.slane %v883, 7
      %v886 = vshll.u32 %v842, 16
      %v888 = vor.u32 %v885, %v886
      %v890 = vshrl.u32 %v843, 16
      %v892 = vrot.slane %v890, 7
      %v893 = vshll.u32 %v843, 16
      %v895 = vor.u32 %v892, %v893
      %v897 = vshrl.u32 %v844, 16
      %v899 = vrot.slane %v897, 7
      %v900 = vshll.u32 %v844, 16
      %v902 = vor.u32 %v899, %v900
      %v904 = vshrl.u32 %v845, 16
      %v906 = vrot.slane %v904, 7
      %v907 = vshll.u32 %v845, 16
      %v909 = vor.u32 %v906, %v907
      %v911 = vshrl.u32 %v846, 16
      %v913 = vrot.slane %v911, 7
      %v914 = vshll.u32 %v846, 16
      %v916 = vor.u32 %v913, %v914
      %vm927 = vcmask 1040384
      %vm928 = vsmask.f32 256
      %vm929 = vmand %vm927, %vm928
      %v930 = vsel %vm929, 0, %v853
      %v931 = vsel %vm929, 0, %v860
      %v932 = vsel %vm929, 0, %v867
      %v933 = vsel %vm929, 0, %v874
      %v934 = vsel %vm929, 0, %v881
      %v935 = vsel %vm929, 0, %v888
      %v936 = vsel %vm929, 0, %v895
      %v937 = vsel %vm929, 0, %v902
      %v938 = vsel %vm929, 0, %v909
      %v939 = vsel %vm929, 0, %v916
      %v940 = vrot.slane %v851, 1
      %v941 = vor.u32 %v848, %v940
      %v942 = vrot.slane %v858, 1
      %v943 = vor.u32 %v855, %v942
      %v944 = vrot.slane %v865, 1
      %v945 = vor.u32 %v862, %v944
      %v946 = vrot.slane %v872, 1
      %v947 = vor.u32 %v869, %v946
      %v948 = vrot.slane %v879, 1
      %v949 = vor.u32 %v876, %v948
      %v950 = vrot.slane %v886, 1
      %v951 = vor.u32 %v883, %v950
      %v952 = vrot.slane %v893, 1
      %v953 = vor.u32 %v890, %v952
      %v954 = vrot.slane %v900, 1
      %v955 = vor.u32 %v897, %v954
      %v956 = vrot.slane %v907, 1
      %v957 = vor.u32 %v904, %v956
      %v958 = vrot.slane %v914, 1
      %v959 = vor.u32 %v911, %v958
      %vm970 = vcmask 1047552
      %vm971 = vsmask.f32 7424
      %vm972 = vmand %vm970, %vm971
      %v973 = vsel %vm972, %v941, 0
      %v974 = vsel %vm972, %v943, 0
      %v975 = vsel %vm972, %v945, 0
      %v976 = vsel %vm972, %v947, 0
      %v977 = vsel %vm972, %v949, 0
      %v978 = vsel %vm972, %v951, 0
      %v979 = vsel %vm972, %v953, 0
      %v980 = vsel %vm972, %v955, 0
      %v981 = vsel %vm972, %v957, 0
      %v982 = vsel %vm972, %v959, 0
      %v983 = vld [vmem:[%s1] sm:$0xf]
      %v984 = vld [vmem:[%s1 + $0x4] sm:$0xf]
      %v985 = vld [vmem:[%s1 + $0x8] sm:$0xf]
      %v986 = vld [vmem:[%s1 + $0xc] sm:$0xf]
      %v987 = vld [vmem:[%s1 + $0x10] sm:$0xf]
      %v988 = vld [vmem:[%s1 + $0x14] sm:$0xf]
      %v989 = vld [vmem:[%s1 + $0x18] sm:$0xf]
      %v990 = vld [vmem:[%s1 + $0x1c] sm:$0xf]
      %v991 = vld [vmem:[%s1 + $0x20] sm:$0xf]
      %v992 = vld [vmem:[%s1 + $0x24] sm:$0xf]
      %v993 = vld [vmem:[%s1 + $0x28] sm:$0xf]
      %v994 = vld [vmem:[%s1 + $0x2c] sm:$0xf]
      %v995 = vld [vmem:[%s1 + $0x30] sm:$0xf]
      %v996 = vld [vmem:[%s1 + $0x34] sm:$0xf]
      %v997 = vld [vmem:[%s1 + $0x38] sm:$0xf]
      %v998 = vld [vmem:[%s1 + $0x3c] sm:$0xf]
      %v999 = vld [vmem:[%s1 + $0x40] sm:$0xf]
      %v1000 = vld [vmem:[%s1 + $0x44] sm:$0xf]
      %v1001 = vld [vmem:[%s1 + $0x48] sm:$0xf]
      %v1002 = vld [vmem:[%s1 + $0x4c] sm:$0xf]
      %v1003 = vld [vmem:[%s1 + $0x50] sm:$0xf]
      %v1004 = vld [vmem:[%s1 + $0x54] sm:$0xf]
      %v1005 = vld [vmem:[%s1 + $0x58] sm:$0xf]
      %v1006 = vld [vmem:[%s1 + $0x5c] sm:$0xf]
      %v1007 = vld [vmem:[%s1 + $0x60] sm:$0xf]
      %v1008 = vld [vmem:[%s1 + $0x64] sm:$0xf]
      %v1009 = vld [vmem:[%s1 + $0x68] sm:$0xf]
      %v1010 = vld [vmem:[%s1 + $0x6c] sm:$0xf]
      %v1011 = vld [vmem:[%s1 + $0x70] sm:$0xf]
      %v1012 = vld [vmem:[%s1 + $0x74] sm:$0xf]
      %v1013 = vld [vmem:[%s1 + $0x78] sm:$0xf]
      %v1014 = vld [vmem:[%s1 + $0x7c] sm:$0xf]
      %v1015 = vld [vmem:[%s1 + $0x80] sm:$0xf]
      %v1016 = vld [vmem:[%s1 + $0x84] sm:$0xf]
      %v1017 = vld [vmem:[%s1 + $0x88] sm:$0xf]
      %v1018 = vld [vmem:[%s1 + $0x8c] sm:$0xf]
      %v1019 = vld [vmem:[%s1 + $0x90] sm:$0xf]
      %v1020 = vld [vmem:[%s1 + $0x94] sm:$0xf]
      %v1021 = vld [vmem:[%s1 + $0x98] sm:$0xf]
      %v1022 = vld [vmem:[%s1 + $0x9c] sm:$0xf]
      %v1023 = vld [vmem:[%s1 + $0xa0] sm:$0xf]
      %v1024 = vld [vmem:[%s1 + $0xa4] sm:$0xf]
      %v1025 = vld [vmem:[%s1 + $0xa8] sm:$0xf]
      %v1026 = vld [vmem:[%s1 + $0xac] sm:$0xf]
      %v1027 = vld [vmem:[%s1 + $0xb0] sm:$0xf]
      %v1028 = vld [vmem:[%s1 + $0xb4] sm:$0xf]
      %v1029 = vld [vmem:[%s1 + $0xb8] sm:$0xf]
      %v1030 = vld [vmem:[%s1 + $0xbc] sm:$0xf]
      %s1031 = scalar_lea.vmem %s1, 192
      %v1032 = vld [vmem:[%s1031] sm:$0xf]
      %v1033 = vld [vmem:[%s1031 + $0x4] sm:$0xf]
      %v1034 = vld [vmem:[%s1031 + $0x8] sm:$0xf]
      %v1035 = vld [vmem:[%s1031 + $0xc] sm:$0xf]
      %v1036 = vld [vmem:[%s1031 + $0x10] sm:$0xf]
      %v1037 = vld [vmem:[%s1031 + $0x14] sm:$0xf]
      %v1038 = vld [vmem:[%s1031 + $0x18] sm:$0xf]
      %v1039 = vld [vmem:[%s1031 + $0x1c] sm:$0xf]
      %v1040 = vld [vmem:[%s1031 + $0x20] sm:$0xf]
      %v1041 = vld [vmem:[%s1031 + $0x24] sm:$0xf]
      %v1042 = vld [vmem:[%s1031 + $0x28] sm:$0xf]
      %v1043 = vld [vmem:[%s1031 + $0x2c] sm:$0xf]
      %v1044 = vld [vmem:[%s1031 + $0x30] sm:$0xf]
      %v1045 = vld [vmem:[%s1031 + $0x34] sm:$0xf]
      %v1046 = vld [vmem:[%s1031 + $0x38] sm:$0xf]
      %v1047 = vld [vmem:[%s1031 + $0x3c] sm:$0xf]
      %v1048 = vld [vmem:[%s1031 + $0x40] sm:$0xf]
      %v1049 = vld [vmem:[%s1031 + $0x44] sm:$0xf]
      %v1050 = vld [vmem:[%s1031 + $0x48] sm:$0xf]
      %v1051 = vld [vmem:[%s1031 + $0x4c] sm:$0xf]
      %v1052 = vld [vmem:[%s1031 + $0x50] sm:$0xf]
      %v1053 = vld [vmem:[%s1031 + $0x54] sm:$0xf]
      %v1054 = vld [vmem:[%s1031 + $0x58] sm:$0xf]
      %v1055 = vld [vmem:[%s1031 + $0x5c] sm:$0xf]
      %v1056 = vld [vmem:[%s1031 + $0x60] sm:$0xf]
      %v1057 = vld [vmem:[%s1031 + $0x64] sm:$0xf]
      %v1058 = vld [vmem:[%s1031 + $0x68] sm:$0xf]
      %v1059 = vld [vmem:[%s1031 + $0x6c] sm:$0xf]
      %v1060 = vld [vmem:[%s1031 + $0x70] sm:$0xf]
      %v1061 = vld [vmem:[%s1031 + $0x74] sm:$0xf]
      %v1062 = vld [vmem:[%s1031 + $0x78] sm:$0xf]
      %v1063 = vld [vmem:[%s1031 + $0x7c] sm:$0xf]
      %v1064 = vld [vmem:[%s1031 + $0x80] sm:$0xf]
      %v1065 = vld [vmem:[%s1031 + $0x84] sm:$0xf]
      %v1066 = vld [vmem:[%s1031 + $0x88] sm:$0xf]
      %v1067 = vld [vmem:[%s1031 + $0x8c] sm:$0xf]
      %v1068 = vld [vmem:[%s1031 + $0x90] sm:$0xf]
      %v1069 = vld [vmem:[%s1031 + $0x94] sm:$0xf]
      %v1070 = vld [vmem:[%s1031 + $0x98] sm:$0xf]
      %v1071 = vld [vmem:[%s1031 + $0x9c] sm:$0xf]
      %v1072 = vld [vmem:[%s1031 + $0xa0] sm:$0xf]
      %v1073 = vld [vmem:[%s1031 + $0xa4] sm:$0xf]
      %v1074 = vld [vmem:[%s1031 + $0xa8] sm:$0xf]
      %v1075 = vld [vmem:[%s1031 + $0xac] sm:$0xf]
      %v1076 = vld [vmem:[%s1031 + $0xb0] sm:$0xf]
      %v1077 = vld [vmem:[%s1031 + $0xb4] sm:$0xf]
      %v1078 = vld [vmem:[%s1031 + $0xb8] sm:$0xf]
      %v1079 = vld [vmem:[%s1031 + $0xbc] sm:$0xf]
      %v1128 = vunpack.c.l.b16 %v1032
      %v1129 = vunpack.c.l.b16 %v1033
      %v1130 = vunpack.c.l.b16 %v1034
      %v1131 = vunpack.c.l.b16 %v1035
      %v1132 = vunpack.c.l.b16 %v1036
      %v1133 = vunpack.c.l.b16 %v1037
      %v1134 = vunpack.c.l.b16 %v1038
      %v1135 = vunpack.c.l.b16 %v1039
      %v1136 = vunpack.c.l.b16 %v1040
      %v1137 = vunpack.c.l.b16 %v1041
      %v1138 = vunpack.c.l.b16 %v1042
      %v1139 = vunpack.c.l.b16 %v1043
      %v1140 = vunpack.c.l.b16 %v1044
      %v1141 = vunpack.c.l.b16 %v1045
      %v1142 = vunpack.c.l.b16 %v1046
      %v1143 = vunpack.c.l.b16 %v1047
      %v1144 = vunpack.c.l.b16 %v1048
      %v1145 = vunpack.c.l.b16 %v1049
      %v1146 = vunpack.c.l.b16 %v1050
      %v1147 = vunpack.c.l.b16 %v1051
      %v1148 = vunpack.c.l.b16 %v1052
      %v1149 = vunpack.c.l.b16 %v1053
      %v1150 = vunpack.c.l.b16 %v1054
      %v1151 = vunpack.c.l.b16 %v1055
      %v1152 = vunpack.c.l.b16 %v1056
      %v1153 = vunpack.c.l.b16 %v1057
      %v1154 = vunpack.c.l.b16 %v1058
      %v1155 = vunpack.c.l.b16 %v1059
      %v1156 = vunpack.c.l.b16 %v1060
      %v1157 = vunpack.c.l.b16 %v1061
      %v1158 = vunpack.c.l.b16 %v1062
      %v1159 = vunpack.c.l.b16 %v1063
      %v1160 = vunpack.c.l.b16 %v1064
      %v1161 = vunpack.c.l.b16 %v1065
      %v1162 = vunpack.c.l.b16 %v1066
      %v1163 = vunpack.c.l.b16 %v1067
      %v1164 = vunpack.c.l.b16 %v1068
      %v1165 = vunpack.c.l.b16 %v1069
      %v1166 = vunpack.c.l.b16 %v1070
      %v1167 = vunpack.c.l.b16 %v1071
      %v1168 = vunpack.c.l.b16 %v1072
      %v1169 = vunpack.c.l.b16 %v1073
      %v1170 = vunpack.c.l.b16 %v1074
      %v1171 = vunpack.c.l.b16 %v1075
      %v1172 = vunpack.c.l.b16 %v1076
      %v1173 = vunpack.c.l.b16 %v1077
      %v1174 = vunpack.c.l.b16 %v1078
      %v1175 = vunpack.c.l.b16 %v1079
      %v1176 = vpack.c.b16 %v1129, %v1128
      %v1177 = vpack.c.b16 %v1131, %v1130
      %v1178 = vpack.c.b16 %v1133, %v1132
      %v1179 = vpack.c.b16 %v1135, %v1134
      %v1180 = vpack.c.b16 %v1137, %v1136
      %v1181 = vpack.c.b16 %v1139, %v1138
      %v1182 = vpack.c.b16 %v1141, %v1140
      %v1183 = vpack.c.b16 %v1143, %v1142
      %v1184 = vpack.c.b16 %v1145, %v1144
      %v1185 = vpack.c.b16 %v1147, %v1146
      %v1186 = vpack.c.b16 %v1149, %v1148
      %v1187 = vpack.c.b16 %v1151, %v1150
      %v1188 = vpack.c.b16 %v1153, %v1152
      %v1189 = vpack.c.b16 %v1155, %v1154
      %v1190 = vpack.c.b16 %v1157, %v1156
      %v1191 = vpack.c.b16 %v1159, %v1158
      %v1192 = vpack.c.b16 %v1161, %v1160
      %v1193 = vpack.c.b16 %v1163, %v1162
      %v1194 = vpack.c.b16 %v1165, %v1164
      %v1195 = vpack.c.b16 %v1167, %v1166
      %v1196 = vpack.c.b16 %v1169, %v1168
      %v1197 = vpack.c.b16 %v1171, %v1170
      %v1198 = vpack.c.b16 %v1173, %v1172
      %v1199 = vpack.c.b16 %v1175, %v1174
      %1224 = vmatprep.subr.bf16.mxu0 0
      %1225 = vmatpush1.bf16.msra.mxu0 %v1176
      %1226 = vmatprep.subr.bf16.mxu0 0
      %1227 = vmatpush1.bf16.msra.mxu0 %v1177
      %1228 = vmatprep.subr.bf16.mxu0 0
      %1229 = vmatpush1.bf16.msra.mxu0 %v1178
      %1230 = vmatprep.subr.bf16.mxu0 0
      %1231 = vmatpush1.bf16.msra.mxu0 %v1179
      %1232 = vmatprep.subr.bf16.mxu0 0
      %1233 = vmatpush1.bf16.msra.mxu0 %v1180
      %1234 = vmatprep.subr.bf16.mxu0 0
      %1235 = vmatpush1.bf16.msra.mxu0 %v1181
      %1236 = vmatprep.subr.bf16.mxu0 0
      %1237 = vmatpush1.bf16.msra.mxu0 %v1182
      %1238 = vmatprep.subr.bf16.mxu0 0
      %1239 = vmatpush1.bf16.msra.mxu0 %v1183
      %1240 = vmatprep.subr.bf16.mxu0 0
      %1241 = vmatpush1.bf16.msra.mxu0 %v1184
      %1242 = vmatprep.subr.bf16.mxu0 0
      %1243 = vmatpush1.bf16.msra.mxu0 %v1185
      %1244 = vmatprep.subr.bf16.mxu0 0
      %1245 = vmatpush1.bf16.msra.mxu0 %v1186
      %1246 = vmatprep.subr.bf16.mxu0 0
      %1247 = vmatpush1.bf16.msra.mxu0 %v1187
      %1248 = vmatprep.subr.bf16.mxu0 0
      %1249 = vmatpush1.bf16.msra.mxu0 %v1188
      %1250 = vmatprep.subr.bf16.mxu0 0
      %1251 = vmatpush1.bf16.msra.mxu0 %v1189
      %1252 = vmatprep.subr.bf16.mxu0 0
      %1253 = vmatpush1.bf16.msra.mxu0 %v1190
      %1254 = vmatprep.subr.bf16.mxu0 0
      %1255 = vmatpush1.bf16.msra.mxu0 %v1191
      %1256 = vmatprep.mubr.bf16.mxu0 %v838
      %1257 = vmatmul.mubr.bf16.gmra.mrb[0].mxu0 %v931
      %v1258 = vpop.f32.mrb[0].mxu0
      %v1259 = vadd.f32 0.0, %v1258
      %v1260 = vpop.f32.mrb[0].mxu0
      %v1261 = vpop.f32.mrb[0].mxu0
      %v1262 = vadd.f32 0.0, %v1261
      %v1263 = vpop.f32.mrb[0].mxu0
      %1264 = vmatprep.mubr.bf16.mxu0 %v839
      %1265 = vmatmul.mubr.bf16.gmra.mrb[0].mxu0 %v932
      %v1266 = vpop.f32.mrb[0].mxu0
      %v1267 = vadd.f32 0.0, %v1266
      %v1268 = vpop.f32.mrb[0].mxu0
      %v1269 = vpop.f32.mrb[0].mxu0
      %v1270 = vadd.f32 0.0, %v1269
      %v1271 = vpop.f32.mrb[0].mxu0
      %1272 = vmatprep.mubr.bf16.mxu0 %v840
      %1273 = vmatmul.mubr.bf16.gmra.mrb[0].mxu0 %v933
      %v1274 = vpop.f32.mrb[0].mxu0
      %v1275 = vadd.f32 0.0, %v1274
      %v1276 = vpop.f32.mrb[0].mxu0
      %v1277 = vpop.f32.mrb[0].mxu0
      %v1278 = vadd.f32 0.0, %v1277
      %v1279 = vpop.f32.mrb[0].mxu0
      %1280 = vmatprep.mubr.bf16.mxu0 %v841
      %1281 = vmatmul.mubr.bf16.gmra.mrb[0].mxu0 %v934
      %v1282 = vpop.f32.mrb[0].mxu0
      %v1283 = vadd.f32 0.0, %v1282
      %v1284 = vpop.f32.mrb[0].mxu0
      %v1285 = vpop.f32.mrb[0].mxu0
      %v1286 = vadd.f32 0.0, %v1285
      %v1287 = vpop.f32.mrb[0].mxu0
      %1288 = vmatprep.mubr.bf16.mxu0 %v842
      %1289 = vmatmul.mubr.bf16.gmra.mrb[0].mxu0 %v935
      %v1290 = vpop.f32.mrb[0].mxu0
      %v1291 = vadd.f32 0.0, %v1290
      %v1292 = vpop.f32.mrb[0].mxu0
      %v1293 = vpop.f32.mrb[0].mxu0
      %v1294 = vadd.f32 0.0, %v1293
      %v1295 = vpop.f32.mrb[0].mxu0
      %1296 = vmatprep.mubr.bf16.mxu0 %v843
      %1297 = vmatmul.mubr.bf16.gmra.mrb[0].mxu0 %v936
      %v1298 = vpop.f32.mrb[0].mxu0
      %v1299 = vadd.f32 0.0, %v1298
      %v1300 = vpop.f32.mrb[0].mxu0
      %v1301 = vpop.f32.mrb[0].mxu0
      %v1302 = vadd.f32 0.0, %v1301
      %v1303 = vpop.f32.mrb[0].mxu0
      %1304 = vmatprep.mubr.bf16.mxu0 %v844
      %1305 = vmatmul.mubr.bf16.gmra.mrb[0].mxu0 %v937
      %v1306 = vpop.f32.mrb[0].mxu0
      %v1307 = vadd.f32 0.0, %v1306
      %v1308 = vpop.f32.mrb[0].mxu0
      %v1309 = vpop.f32.mrb[0].mxu0
      %v1310 = vadd.f32 0.0, %v1309
      %v1311 = vpop.f32.mrb[0].mxu0
      %1312 = vmatprep.mubr.bf16.mxu0 %v845
      %1313 = vmatmul.mubr.bf16.gmra.mrb[0].mxu0 %v938
      %v1314 = vpop.f32.mrb[0].mxu0
      %v1315 = vadd.f32 0.0, %v1314
      %v1316 = vpop.f32.mrb[0].mxu0
      %v1317 = vpop.f32.mrb[0].mxu0
      %v1318 = vadd.f32 0.0, %v1317
      %v1319 = vpop.f32.mrb[0].mxu0
      %1320 = vdwg.mxu0
      %1321 = vmatprep.subr.bf16.mxu0 0
      %1322 = vmatpush1.bf16.msra.mxu0 %v1192
      %1323 = vmatprep.subr.bf16.mxu0 0
      %1324 = vmatpush1.bf16.msra.mxu0 %v1193
      %1325 = vmatprep.subr.bf16.mxu0 0
      %1326 = vmatpush1.bf16.msra.mxu0 %v1194
      %1327 = vmatprep.subr.bf16.mxu0 0
      %1328 = vmatpush1.bf16.msra.mxu0 %v1195
      %1329 = vmatprep.subr.bf16.mxu0 0
      %1330 = vmatpush1.bf16.msra.mxu0 %v1196
      %1331 = vmatprep.subr.bf16.mxu0 0
      %1332 = vmatpush1.bf16.msra.mxu0 %v1197
      %1333 = vmatprep.subr.bf16.mxu0 0
      %1334 = vmatpush1.bf16.msra.mxu0 %v1198
      %1335 = vmatprep.subr.bf16.mxu0 0
      %1336 = vmatpush1.bf16.msra.mxu0 %v1199
      %1337 = vmatprep.subr.bf16.mxu0 0
      %1338 = vmatpush1.bf16.msra.mxu0 0
      %1339 = vmatprep.subr.bf16.mxu0 0
      %1340 = vmatpush1.bf16.msra.mxu0 0
      %1341 = vmatprep.subr.bf16.mxu0 0
      %1342 = vmatpush1.bf16.msra.mxu0 0
      %1343 = vmatprep.subr.bf16.mxu0 0
      %1344 = vmatpush1.bf16.msra.mxu0 0
      %1345 = vmatprep.subr.bf16.mxu0 0
      %1346 = vmatpush1.bf16.msra.mxu0 0
      %1347 = vmatprep.subr.bf16.mxu0 0
      %1348 = vmatpush1.bf16.msra.mxu0 0
      %1349 = vmatprep.subr.bf16.mxu0 0
      %1350 = vmatpush1.bf16.msra.mxu0 0
      %1351 = vmatprep.subr.bf16.mxu0 0
      %1352 = vmatpush1.bf16.msra.mxu0 0
      %1353 = vmatprep.mubr.bf16.mxu0 0
      %1354 = vmatmul.mubr.bf16.gmra.mrb[0].mxu0 %v974
      %v1355 = vpop.f32.mrb[0].mxu0
      %v1356 = vadd.f32 %v1259, %v1355
      %v1357 = vpop.f32.mrb[0].mxu0
      %v1358 = vpop.f32.mrb[0].mxu0
      %v1359 = vadd.f32 %v1262, %v1358
      %v1360 = vpop.f32.mrb[0].mxu0
      %1361 = vmatprep.mubr.bf16.mxu0 0
      %1362 = vmatmul.mubr.bf16.gmra.mrb[0].mxu0 %v975
      %v1363 = vpop.f32.mrb[0].mxu0
      %v1364 = vadd.f32 %v1267, %v1363
      %v1365 = vpop.f32.mrb[0].mxu0
      %v1366 = vpop.f32.mrb[0].mxu0
      %v1367 = vadd.f32 %v1270, %v1366
      %v1368 = vpop.f32.mrb[0].mxu0
      %1369 = vmatprep.mubr.bf16.mxu0 0
      %1370 = vmatmul.mubr.bf16.gmra.mrb[0].mxu0 %v976
      %v1371 = vpop.f32.mrb[0].mxu0
      %v1372 = vadd.f32 %v1275, %v1371
      %v1373 = vpop.f32.mrb[0].mxu0
      %v1374 = vpop.f32.mrb[0].mxu0
      %v1375 = vadd.f32 %v1278, %v1374
      %v1376 = vpop.f32.mrb[0].mxu0
      %1377 = vmatprep.mubr.bf16.mxu0 0
      %1378 = vmatmul.mubr.bf16.gmra.mrb[0].mxu0 %v977
      %v1379 = vpop.f32.mrb[0].mxu0
      %v1380 = vadd.f32 %v1283, %v1379
      %v1381 = vpop.f32.mrb[0].mxu0
      %v1382 = vpop.f32.mrb[0].mxu0
      %v1383 = vadd.f32 %v1286, %v1382
      %v1384 = vpop.f32.mrb[0].mxu0
      %1385 = vmatprep.mubr.bf16.mxu0 0
      %1386 = vmatmul.mubr.bf16.gmra.mrb[0].mxu0 %v978
      %v1387 = vpop.f32.mrb[0].mxu0
      %v1388 = vadd.f32 %v1291, %v1387
      %v1389 = vpop.f32.mrb[0].mxu0
      %v1390 = vpop.f32.mrb[0].mxu0
      %v1391 = vadd.f32 %v1294, %v1390
      %v1392 = vpop.f32.mrb[0].mxu0
      %1393 = vmatprep.mubr.bf16.mxu0 0
      %1394 = vmatmul.mubr.bf16.gmra.mrb[0].mxu0 %v979
      %v1395 = vpop.f32.mrb[0].mxu0
      %v1396 = vadd.f32 %v1299, %v1395
      %v1397 = vpop.f32.mrb[0].mxu0
      %v1398 = vpop.f32.mrb[0].mxu0
      %v1399 = vadd.f32 %v1302, %v1398
      %v1400 = vpop.f32.mrb[0].mxu0
      %1401 = vmatprep.mubr.bf16.mxu0 0
      %1402 = vmatmul.mubr.bf16.gmra.mrb[0].mxu0 %v980
      %v1403 = vpop.f32.mrb[0].mxu0
      %v1404 = vadd.f32 %v1307, %v1403
      %v1405 = vpop.f32.mrb[0].mxu0
      %v1406 = vpop.f32.mrb[0].mxu0
      %v1407 = vadd.f32 %v1310, %v1406
      %v1408 = vpop.f32.mrb[0].mxu0
      %1409 = vmatprep.mubr.bf16.mxu0 0
      %1410 = vmatmul.mubr.bf16.gmra.mrb[0].mxu0 %v981
      %v1411 = vpop.f32.mrb[0].mxu0
      %v1412 = vadd.f32 %v1315, %v1411
      %v1413 = vpop.f32.mrb[0].mxu0
      %v1414 = vpop.f32.mrb[0].mxu0
      %v1415 = vadd.f32 %v1318, %v1414
      %v1416 = vpop.f32.mrb[0].mxu0
      %1417 = vdwg.mxu0
      %v1466 = vunpack.c.l.b16 %v983
      %v1467 = vunpack.c.l.b16 %v984
      %v1468 = vunpack.c.l.b16 %v985
      %v1469 = vunpack.c.l.b16 %v986
      %v1470 = vunpack.c.l.b16 %v987
      %v1471 = vunpack.c.l.b16 %v988
      %v1472 = vunpack.c.l.b16 %v989
      %v1473 = vunpack.c.l.b16 %v990
      %v1474 = vunpack.c.l.b16 %v991
      %v1475 = vunpack.c.l.b16 %v992
      %v1476 = vunpack.c.l.b16 %v993
      %v1477 = vunpack.c.l.b16 %v994
      %v1478 = vunpack.c.l.b16 %v995
      %v1479 = vunpack.c.l.b16 %v996
      %v1480 = vunpack.c.l.b16 %v997
      %v1481 = vunpack.c.l.b16 %v998
      %v1482 = vunpack.c.l.b16 %v999
      %v1483 = vunpack.c.l.b16 %v1000
      %v1484 = vunpack.c.l.b16 %v1001
      %v1485 = vunpack.c.l.b16 %v1002
      %v1486 = vunpack.c.l.b16 %v1003
      %v1487 = vunpack.c.l.b16 %v1004
      %v1488 = vunpack.c.l.b16 %v1005
      %v1489 = vunpack.c.l.b16 %v1006
      %v1490 = vunpack.c.l.b16 %v1007
      %v1491 = vunpack.c.l.b16 %v1008
      %v1492 = vunpack.c.l.b16 %v1009
      %v1493 = vunpack.c.l.b16 %v1010
      %v1494 = vunpack.c.l.b16 %v1011
      %v1495 = vunpack.c.l.b16 %v1012
      %v1496 = vunpack.c.l.b16 %v1013
      %v1497 = vunpack.c.l.b16 %v1014
      %v1498 = vunpack.c.l.b16 %v1015
      %v1499 = vunpack.c.l.b16 %v1016
      %v1500 = vunpack.c.l.b16 %v1017
      %v1501 = vunpack.c.l.b16 %v1018
      %v1502 = vunpack.c.l.b16 %v1019
      %v1503 = vunpack.c.l.b16 %v1020
      %v1504 = vunpack.c.l.b16 %v1021
      %v1505 = vunpack.c.l.b16 %v1022
      %v1506 = vunpack.c.l.b16 %v1023
      %v1507 = vunpack.c.l.b16 %v1024
      %v1508 = vunpack.c.l.b16 %v1025
      %v1509 = vunpack.c.l.b16 %v1026
      %v1510 = vunpack.c.l.b16 %v1027
      %v1511 = vunpack.c.l.b16 %v1028
      %v1512 = vunpack.c.l.b16 %v1029
      %v1513 = vunpack.c.l.b16 %v1030
      %v1514 = vpack.c.b16 %v1467, %v1466
      %v1515 = vpack.c.b16 %v1469, %v1468
      %v1516 = vpack.c.b16 %v1471, %v1470
      %v1517 = vpack.c.b16 %v1473, %v1472
      %v1518 = vpack.c.b16 %v1475, %v1474
      %v1519 = vpack.c.b16 %v1477, %v1476
      %v1520 = vpack.c.b16 %v1479, %v1478
      %v1521 = vpack.c.b16 %v1481, %v1480
      %v1522 = vpack.c.b16 %v1483, %v1482
      %v1523 = vpack.c.b16 %v1485, %v1484
      %v1524 = vpack.c.b16 %v1487, %v1486
      %v1525 = vpack.c.b16 %v1489, %v1488
      %v1526 = vpack.c.b16 %v1491, %v1490
      %v1527 = vpack.c.b16 %v1493, %v1492
      %v1528 = vpack.c.b16 %v1495, %v1494
      %v1529 = vpack.c.b16 %v1497, %v1496
      %v1530 = vpack.c.b16 %v1499, %v1498
      %v1531 = vpack.c.b16 %v1501, %v1500
      %v1532 = vpack.c.b16 %v1503, %v1502
      %v1533 = vpack.c.b16 %v1505, %v1504
      %v1534 = vpack.c.b16 %v1507, %v1506
      %v1535 = vpack.c.b16 %v1509, %v1508
      %v1536 = vpack.c.b16 %v1511, %v1510
      %v1537 = vpack.c.b16 %v1513, %v1512
      %1562 = vmatprep.subr.bf16.mxu0 0
      %1563 = vmatpush1.bf16.msra.mxu0 %v1514
      %1564 = vmatprep.subr.bf16.mxu0 0
      %1565 = vmatpush1.bf16.msra.mxu0 %v1515
      %1566 = vmatprep.subr.bf16.mxu0 0
      %1567 = vmatpush1.bf16.msra.mxu0 %v1516
      %1568 = vmatprep.subr.bf16.mxu0 0
      %1569 = vmatpush1.bf16.msra.mxu0 %v1517
      %1570 = vmatprep.subr.bf16.mxu0 0
      %1571 = vmatpush1.bf16.msra.mxu0 %v1518
      %1572 = vmatprep.subr.bf16.mxu0 0
      %1573 = vmatpush1.bf16.msra.mxu0 %v1519
      %1574 = vmatprep.subr.bf16.mxu0 0
      %1575 = vmatpush1.bf16.msra.mxu0 %v1520
      %1576 = vmatprep.subr.bf16.mxu0 0
      %1577 = vmatpush1.bf16.msra.mxu0 %v1521
      %1578 = vmatprep.subr.bf16.mxu0 0
      %1579 = vmatpush1.bf16.msra.mxu0 %v1522
      %1580 = vmatprep.subr.bf16.mxu0 0
      %1581 = vmatpush1.bf16.msra.mxu0 %v1523
      %1582 = vmatprep.subr.bf16.mxu0 0
      %1583 = vmatpush1.bf16.msra.mxu0 %v1524
      %1584 = vmatprep.subr.bf16.mxu0 0
      %1585 = vmatpush1.bf16.msra.mxu0 %v1525
      %1586 = vmatprep.subr.bf16.mxu0 0
      %1587 = vmatpush1.bf16.msra.mxu0 %v1526
      %1588 = vmatprep.subr.bf16.mxu0 0
      %1589 = vmatpush1.bf16.msra.mxu0 %v1527
      %1590 = vmatprep.subr.bf16.mxu0 0
      %1591 = vmatpush1.bf16.msra.mxu0 %v1528
      %1592 = vmatprep.subr.bf16.mxu0 0
      %1593 = vmatpush1.bf16.msra.mxu0 %v1529
      %1594 = vmatprep.mubr.bf16.mxu0 %v837
      %1595 = vmatmul.mubr.bf16.gmra.mrb[0].mxu0 %v930
      %v1596 = vpop.f32.mrb[0].mxu0
      %v1597 = vadd.f32 %v1356, %v1596
      %v1598 = vpop.f32.mrb[0].mxu0
      %v1599 = vpop.f32.mrb[0].mxu0
      %v1600 = vadd.f32 %v1359, %v1599
      %v1601 = vpop.f32.mrb[0].mxu0
      %1602 = vmatprep.mubr.bf16.mxu0 %v838
      %1603 = vmatmul.mubr.bf16.gmra.mrb[0].mxu0 %v931
      %v1604 = vpop.f32.mrb[0].mxu0
      %v1605 = vadd.f32 %v1364, %v1604
      %v1606 = vpop.f32.mrb[0].mxu0
      %v1607 = vpop.f32.mrb[0].mxu0
      %v1608 = vadd.f32 %v1367, %v1607
      %v1609 = vpop.f32.mrb[0].mxu0
      %1610 = vmatprep.mubr.bf16.mxu0 %v839
      %1611 = vmatmul.mubr.bf16.gmra.mrb[0].mxu0 %v932
      %v1612 = vpop.f32.mrb[0].mxu0
      %v1613 = vadd.f32 %v1372, %v1612
      %v1614 = vpop.f32.mrb[0].mxu0
      %v1615 = vpop.f32.mrb[0].mxu0
      %v1616 = vadd.f32 %v1375, %v1615
      %v1617 = vpop.f32.mrb[0].mxu0
      %1618 = vmatprep.mubr.bf16.mxu0 %v840
      %1619 = vmatmul.mubr.bf16.gmra.mrb[0].mxu0 %v933
      %v1620 = vpop.f32.mrb[0].mxu0
      %v1621 = vadd.f32 %v1380, %v1620
      %v1622 = vpop.f32.mrb[0].mxu0
      %v1623 = vpop.f32.mrb[0].mxu0
      %v1624 = vadd.f32 %v1383, %v1623
      %v1625 = vpop.f32.mrb[0].mxu0
      %1626 = vmatprep.mubr.bf16.mxu0 %v841
      %1627 = vmatmul.mubr.bf16.gmra.mrb[0].mxu0 %v934
      %v1628 = vpop.f32.mrb[0].mxu0
      %v1629 = vadd.f32 %v1388, %v1628
      %v1630 = vpop.f32.mrb[0].mxu0
      %v1631 = vpop.f32.mrb[0].mxu0
      %v1632 = vadd.f32 %v1391, %v1631
      %v1633 = vpop.f32.mrb[0].mxu0
      %1634 = vmatprep.mubr.bf16.mxu0 %v842
      %1635 = vmatmul.mubr.bf16.gmra.mrb[0].mxu0 %v935
      %v1636 = vpop.f32.mrb[0].mxu0
      %v1637 = vadd.f32 %v1396, %v1636
      %v1638 = vpop.f32.mrb[0].mxu0
      %v1639 = vpop.f32.mrb[0].mxu0
      %v1640 = vadd.f32 %v1399, %v1639
      %v1641 = vpop.f32.mrb[0].mxu0
      %1642 = vmatprep.mubr.bf16.mxu0 %v843
      %1643 = vmatmul.mubr.bf16.gmra.mrb[0].mxu0 %v936
      %v1644 = vpop.f32.mrb[0].mxu0
      %v1645 = vadd.f32 %v1404, %v1644
      %v1646 = vpop.f32.mrb[0].mxu0
      %v1647 = vpop.f32.mrb[0].mxu0
      %v1648 = vadd.f32 %v1407, %v1647
      %v1649 = vpop.f32.mrb[0].mxu0
      %1650 = vmatprep.mubr.bf16.mxu0 %v844
      %1651 = vmatmul.mubr.bf16.gmra.mrb[0].mxu0 %v937
      %v1652 = vpop.f32.mrb[0].mxu0
      %v1653 = vadd.f32 %v1412, %v1652
      %v1654 = vpop.f32.mrb[0].mxu0
      %v1655 = vpop.f32.mrb[0].mxu0
      %v1656 = vadd.f32 %v1415, %v1655
      %v1657 = vpop.f32.mrb[0].mxu0
      %1658 = vdwg.mxu0
      %1659 = vmatprep.subr.bf16.mxu0 0
      %1660 = vmatpush1.bf16.msra.mxu0 %v1530
      %1661 = vmatprep.subr.bf16.mxu0 0
      %1662 = vmatpush1.bf16.msra.mxu0 %v1531
      %1663 = vmatprep.subr.bf16.mxu0 0
      %1664 = vmatpush1.bf16.msra.mxu0 %v1532
      %1665 = vmatprep.subr.bf16.mxu0 0
      %1666 = vmatpush1.bf16.msra.mxu0 %v1533
      %1667 = vmatprep.subr.bf16.mxu0 0
      %1668 = vmatpush1.bf16.msra.mxu0 %v1534
      %1669 = vmatprep.subr.bf16.mxu0 0
      %1670 = vmatpush1.bf16.msra.mxu0 %v1535
      %1671 = vmatprep.subr.bf16.mxu0 0
      %1672 = vmatpush1.bf16.msra.mxu0 %v1536
      %1673 = vmatprep.subr.bf16.mxu0 0
      %1674 = vmatpush1.bf16.msra.mxu0 %v1537
      %1675 = vmatprep.subr.bf16.mxu0 0
      %1676 = vmatpush1.bf16.msra.mxu0 0
      %1677 = vmatprep.subr.bf16.mxu0 0
      %1678 = vmatpush1.bf16.msra.mxu0 0
      %1679 = vmatprep.subr.bf16.mxu0 0
      %1680 = vmatpush1.bf16.msra.mxu0 0
      %1681 = vmatprep.subr.bf16.mxu0 0
      %1682 = vmatpush1.bf16.msra.mxu0 0
      %1683 = vmatprep.subr.bf16.mxu0 0
      %1684 = vmatpush1.bf16.msra.mxu0 0
      %1685 = vmatprep.subr.bf16.mxu0 0
      %1686 = vmatpush1.bf16.msra.mxu0 0
      %1687 = vmatprep.subr.bf16.mxu0 0
      %1688 = vmatpush1.bf16.msra.mxu0 0
      %1689 = vmatprep.subr.bf16.mxu0 0
      %1690 = vmatpush1.bf16.msra.mxu0 0
      %1691 = vmatprep.mubr.bf16.mxu0 0
      %1692 = vmatmul.mubr.bf16.gmra.mrb[0].mxu0 %v973
      %v1693 = vpop.f32.mrb[0].mxu0
      %v1694 = vadd.f32 %v1597, %v1693
      %v1695 = vpop.f32.mrb[0].mxu0
      %v1696 = vpop.f32.mrb[0].mxu0
      %v1697 = vadd.f32 %v1600, %v1696
      %v1698 = vpop.f32.mrb[0].mxu0
      %1699 = vmatprep.mubr.bf16.mxu0 0
      %1700 = vmatmul.mubr.bf16.gmra.mrb[0].mxu0 %v974
      %v1701 = vpop.f32.mrb[0].mxu0
      %v1702 = vadd.f32 %v1605, %v1701
      %v1703 = vpop.f32.mrb[0].mxu0
      %v1704 = vpop.f32.mrb[0].mxu0
      %v1705 = vadd.f32 %v1608, %v1704
      %v1706 = vpop.f32.mrb[0].mxu0
      %1707 = vmatprep.mubr.bf16.mxu0 0
      %1708 = vmatmul.mubr.bf16.gmra.mrb[0].mxu0 %v975
      %v1709 = vpop.f32.mrb[0].mxu0
      %v1710 = vadd.f32 %v1613, %v1709
      %v1711 = vpop.f32.mrb[0].mxu0
      %v1712 = vpop.f32.mrb[0].mxu0
      %v1713 = vadd.f32 %v1616, %v1712
      %v1714 = vpop.f32.mrb[0].mxu0
      %1715 = vmatprep.mubr.bf16.mxu0 0
      %1716 = vmatmul.mubr.bf16.gmra.mrb[0].mxu0 %v976
      %v1717 = vpop.f32.mrb[0].mxu0
      %v1718 = vadd.f32 %v1621, %v1717
      %v1719 = vpop.f32.mrb[0].mxu0
      %v1720 = vpop.f32.mrb[0].mxu0
      %v1721 = vadd.f32 %v1624, %v1720
      %v1722 = vpop.f32.mrb[0].mxu0
      %1723 = vmatprep.mubr.bf16.mxu0 0
      %1724 = vmatmul.mubr.bf16.gmra.mrb[0].mxu0 %v977
      %v1725 = vpop.f32.mrb[0].mxu0
      %v1726 = vadd.f32 %v1629, %v1725
      %v1727 = vpop.f32.mrb[0].mxu0
      %v1728 = vpop.f32.mrb[0].mxu0
      %v1729 = vadd.f32 %v1632, %v1728
      %v1730 = vpop.f32.mrb[0].mxu0
      %1731 = vmatprep.mubr.bf16.mxu0 0
      %1732 = vmatmul.mubr.bf16.gmra.mrb[0].mxu0 %v978
      %v1733 = vpop.f32.mrb[0].mxu0
      %v1734 = vadd.f32 %v1637, %v1733
      %v1735 = vpop.f32.mrb[0].mxu0
      %v1736 = vpop.f32.mrb[0].mxu0
      %v1737 = vadd.f32 %v1640, %v1736
      %v1738 = vpop.f32.mrb[0].mxu0
      %1739 = vmatprep.mubr.bf16.mxu0 0
      %1740 = vmatmul.mubr.bf16.gmra.mrb[0].mxu0 %v979
      %v1741 = vpop.f32.mrb[0].mxu0
      %v1742 = vadd.f32 %v1645, %v1741
      %v1743 = vpop.f32.mrb[0].mxu0
      %v1744 = vpop.f32.mrb[0].mxu0
      %v1745 = vadd.f32 %v1648, %v1744
      %v1746 = vpop.f32.mrb[0].mxu0
      %1747 = vmatprep.mubr.bf16.mxu0 0
      %1748 = vmatmul.mubr.bf16.gmra.mrb[0].mxu0 %v980
      %v1749 = vpop.f32.mrb[0].mxu0
      %v1750 = vadd.f32 %v1653, %v1749
      %v1751 = vpop.f32.mrb[0].mxu0
      %v1752 = vpop.f32.mrb[0].mxu0
      %v1753 = vadd.f32 %v1656, %v1752
      %v1754 = vpop.f32.mrb[0].mxu0
      %1755 = vdwg.mxu0
      %s1756 = scalar_lea.vmem %s1, 384
      %v1757 = vld [vmem:[%s1756] sm:$0xf]
      %v1758 = vld [vmem:[%s1756 + $0x4] sm:$0xf]
      %v1759 = vld [vmem:[%s1756 + $0x8] sm:$0xf]
      %v1760 = vld [vmem:[%s1756 + $0xc] sm:$0xf]
      %v1761 = vld [vmem:[%s1756 + $0x10] sm:$0xf]
      %v1762 = vld [vmem:[%s1756 + $0x14] sm:$0xf]
      %v1763 = vld [vmem:[%s1756 + $0x18] sm:$0xf]
      %v1764 = vld [vmem:[%s1756 + $0x1c] sm:$0xf]
      %v1765 = vld [vmem:[%s1756 + $0x20] sm:$0xf]
      %v1766 = vld [vmem:[%s1756 + $0x24] sm:$0xf]
      %v1767 = vld [vmem:[%s1756 + $0x28] sm:$0xf]
      %v1768 = vld [vmem:[%s1756 + $0x2c] sm:$0xf]
      %v1769 = vld [vmem:[%s1756 + $0x30] sm:$0xf]
      %v1770 = vld [vmem:[%s1756 + $0x34] sm:$0xf]
      %v1771 = vld [vmem:[%s1756 + $0x38] sm:$0xf]
      %v1772 = vld [vmem:[%s1756 + $0x3c] sm:$0xf]
      %v1773 = vld [vmem:[%s1756 + $0x40] sm:$0xf]
      %v1774 = vld [vmem:[%s1756 + $0x44] sm:$0xf]
      %v1775 = vld [vmem:[%s1756 + $0x48] sm:$0xf]
      %v1776 = vld [vmem:[%s1756 + $0x4c] sm:$0xf]
      %v1777 = vld [vmem:[%s1756 + $0x50] sm:$0xf]
      %v1778 = vld [vmem:[%s1756 + $0x54] sm:$0xf]
      %v1779 = vld [vmem:[%s1756 + $0x58] sm:$0xf]
      %v1780 = vld [vmem:[%s1756 + $0x5c] sm:$0xf]
      %v1781 = vld [vmem:[%s1756 + $0x60] sm:$0xf]
      %v1782 = vld [vmem:[%s1756 + $0x64] sm:$0xf]
      %v1783 = vld [vmem:[%s1756 + $0x68] sm:$0xf]
      %v1784 = vld [vmem:[%s1756 + $0x6c] sm:$0xf]
      %v1785 = vld [vmem:[%s1756 + $0x70] sm:$0xf]
      %v1786 = vld [vmem:[%s1756 + $0x74] sm:$0xf]
      %v1787 = vld [vmem:[%s1756 + $0x78] sm:$0xf]
      %v1788 = vld [vmem:[%s1756 + $0x7c] sm:$0xf]
      %v1789 = vld [vmem:[%s1756 + $0x80] sm:$0xf]
      %v1790 = vld [vmem:[%s1756 + $0x84] sm:$0xf]
      %v1791 = vld [vmem:[%s1756 + $0x88] sm:$0xf]
      %v1792 = vld [vmem:[%s1756 + $0x8c] sm:$0xf]
      %v1793 = vld [vmem:[%s1756 + $0x90] sm:$0xf]
      %v1794 = vld [vmem:[%s1756 + $0x94] sm:$0xf]
      %v1795 = vld [vmem:[%s1756 + $0x98] sm:$0xf]
      %v1796 = vld [vmem:[%s1756 + $0x9c] sm:$0xf]
      %v1797 = vld [vmem:[%s1756 + $0xa0] sm:$0xf]
      %v1798 = vld [vmem:[%s1756 + $0xa4] sm:$0xf]
      %v1799 = vld [vmem:[%s1756 + $0xa8] sm:$0xf]
      %v1800 = vld [vmem:[%s1756 + $0xac] sm:$0xf]
      %v1801 = vld [vmem:[%s1756 + $0xb0] sm:$0xf]
      %v1802 = vld [vmem:[%s1756 + $0xb4] sm:$0xf]
      %v1803 = vld [vmem:[%s1756 + $0xb8] sm:$0xf]
      %v1804 = vld [vmem:[%s1756 + $0xbc] sm:$0xf]
      %v1853 = vunpack.c.l.b16 %v1757
      %v1854 = vunpack.c.l.b16 %v1758
      %v1855 = vunpack.c.l.b16 %v1759
      %v1856 = vunpack.c.l.b16 %v1760
      %v1857 = vunpack.c.l.b16 %v1761
      %v1858 = vunpack.c.l.b16 %v1762
      %v1859 = vunpack.c.l.b16 %v1763
      %v1860 = vunpack.c.l.b16 %v1764
      %v1861 = vunpack.c.l.b16 %v1765
      %v1862 = vunpack.c.l.b16 %v1766
      %v1863 = vunpack.c.l.b16 %v1767
      %v1864 = vunpack.c.l.b16 %v1768
      %v1865 = vunpack.c.l.b16 %v1769
      %v1866 = vunpack.c.l.b16 %v1770
      %v1867 = vunpack.c.l.b16 %v1771
      %v1868 = vunpack.c.l.b16 %v1772
      %v1869 = vunpack.c.l.b16 %v1773
      %v1870 = vunpack.c.l.b16 %v1774
      %v1871 = vunpack.c.l.b16 %v1775
      %v1872 = vunpack.c.l.b16 %v1776
      %v1873 = vunpack.c.l.b16 %v1777
      %v1874 = vunpack.c.l.b16 %v1778
      %v1875 = vunpack.c.l.b16 %v1779
      %v1876 = vunpack.c.l.b16 %v1780
      %v1877 = vunpack.c.l.b16 %v1781
      %v1878 = vunpack.c.l.b16 %v1782
      %v1879 = vunpack.c.l.b16 %v1783
      %v1880 = vunpack.c.l.b16 %v1784
      %v1881 = vunpack.c.l.b16 %v1785
      %v1882 = vunpack.c.l.b16 %v1786
      %v1883 = vunpack.c.l.b16 %v1787
      %v1884 = vunpack.c.l.b16 %v1788
      %v1885 = vunpack.c.l.b16 %v1789
      %v1886 = vunpack.c.l.b16 %v1790
      %v1887 = vunpack.c.l.b16 %v1791
      %v1888 = vunpack.c.l.b16 %v1792
      %v1889 = vunpack.c.l.b16 %v1793
      %v1890 = vunpack.c.l.b16 %v1794
      %v1891 = vunpack.c.l.b16 %v1795
      %v1892 = vunpack.c.l.b16 %v1796
      %v1893 = vunpack.c.l.b16 %v1797
      %v1894 = vunpack.c.l.b16 %v1798
      %v1895 = vunpack.c.l.b16 %v1799
      %v1896 = vunpack.c.l.b16 %v1800
      %v1897 = vunpack.c.l.b16 %v1801
      %v1898 = vunpack.c.l.b16 %v1802
      %v1899 = vunpack.c.l.b16 %v1803
      %v1900 = vunpack.c.l.b16 %v1804
      %v1901 = vpack.c.b16 %v1854, %v1853
      %v1902 = vpack.c.b16 %v1856, %v1855
      %v1903 = vpack.c.b16 %v1858, %v1857
      %v1904 = vpack.c.b16 %v1860, %v1859
      %v1905 = vpack.c.b16 %v1862, %v1861
      %v1906 = vpack.c.b16 %v1864, %v1863
      %v1907 = vpack.c.b16 %v1866, %v1865
      %v1908 = vpack.c.b16 %v1868, %v1867
      %v1909 = vpack.c.b16 %v1870, %v1869
      %v1910 = vpack.c.b16 %v1872, %v1871
      %v1911 = vpack.c.b16 %v1874, %v1873
      %v1912 = vpack.c.b16 %v1876, %v1875
      %v1913 = vpack.c.b16 %v1878, %v1877
      %v1914 = vpack.c.b16 %v1880, %v1879
      %v1915 = vpack.c.b16 %v1882, %v1881
      %v1916 = vpack.c.b16 %v1884, %v1883
      %v1917 = vpack.c.b16 %v1886, %v1885
      %v1918 = vpack.c.b16 %v1888, %v1887
      %v1919 = vpack.c.b16 %v1890, %v1889
      %v1920 = vpack.c.b16 %v1892, %v1891
      %v1921 = vpack.c.b16 %v1894, %v1893
      %v1922 = vpack.c.b16 %v1896, %v1895
      %v1923 = vpack.c.b16 %v1898, %v1897
      %v1924 = vpack.c.b16 %v1900, %v1899
      %1949 = vmatprep.subr.bf16.mxu0 0
      %1950 = vmatpush1.bf16.msra.mxu0 %v1901
      %1951 = vmatprep.subr.bf16.mxu0 0
      %1952 = vmatpush1.bf16.msra.mxu0 %v1902
      %1953 = vmatprep.subr.bf16.mxu0 0
      %1954 = vmatpush1.bf16.msra.mxu0 %v1903
      %1955 = vmatprep.subr.bf16.mxu0 0
      %1956 = vmatpush1.bf16.msra.mxu0 %v1904
      %1957 = vmatprep.subr.bf16.mxu0 0
      %1958 = vmatpush1.bf16.msra.mxu0 %v1905
      %1959 = vmatprep.subr.bf16.mxu0 0
      %1960 = vmatpush1.bf16.msra.mxu0 %v1906
      %1961 = vmatprep.subr.bf16.mxu0 0
      %1962 = vmatpush1.bf16.msra.mxu0 %v1907
      %1963 = vmatprep.subr.bf16.mxu0 0
      %1964 = vmatpush1.bf16.msra.mxu0 %v1908
      %1965 = vmatprep.subr.bf16.mxu0 0
      %1966 = vmatpush1.bf16.msra.mxu0 %v1909
      %1967 = vmatprep.subr.bf16.mxu0 0
      %1968 = vmatpush1.bf16.msra.mxu0 %v1910
      %1969 = vmatprep.subr.bf16.mxu0 0
      %1970 = vmatpush1.bf16.msra.mxu0 %v1911
      %1971 = vmatprep.subr.bf16.mxu0 0
      %1972 = vmatpush1.bf16.msra.mxu0 %v1912
      %1973 = vmatprep.subr.bf16.mxu0 0
      %1974 = vmatpush1.bf16.msra.mxu0 %v1913
      %1975 = vmatprep.subr.bf16.mxu0 0
      %1976 = vmatpush1.bf16.msra.mxu0 %v1914
      %1977 = vmatprep.subr.bf16.mxu0 0
      %1978 = vmatpush1.bf16.msra.mxu0 %v1915
      %1979 = vmatprep.subr.bf16.mxu0 0
      %1980 = vmatpush1.bf16.msra.mxu0 %v1916
      %1981 = vmatprep.mubr.bf16.mxu0 %v839
      %1982 = vmatmul.mubr.bf16.gmra.mrb[0].mxu0 %v932
      %v1983 = vpop.f32.mrb[0].mxu0
      %v1984 = vadd.f32 0.0, %v1983
      %v1985 = vpop.f32.mrb[0].mxu0
      %v1986 = vpop.f32.mrb[0].mxu0
      %v1987 = vadd.f32 0.0, %v1986
      %v1988 = vpop.f32.mrb[0].mxu0
      %1989 = vmatprep.mubr.bf16.mxu0 %v840
      %1990 = vmatmul.mubr.bf16.gmra.mrb[0].mxu0 %v933
      %v1991 = vpop.f32.mrb[0].mxu0
      %v1992 = vadd.f32 0.0, %v1991
      %v1993 = vpop.f32.mrb[0].mxu0
      %v1994 = vpop.f32.mrb[0].mxu0
      %v1995 = vadd.f32 0.0, %v1994
      %v1996 = vpop.f32.mrb[0].mxu0
      %1997 = vmatprep.mubr.bf16.mxu0 %v841
      %1998 = vmatmul.mubr.bf16.gmra.mrb[0].mxu0 %v934
      %v1999 = vpop.f32.mrb[0].mxu0
      %v2000 = vadd.f32 0.0, %v1999
      %v2001 = vpop.f32.mrb[0].mxu0
      %v2002 = vpop.f32.mrb[0].mxu0
      %v2003 = vadd.f32 0.0, %v2002
      %v2004 = vpop.f32.mrb[0].mxu0
      %2005 = vmatprep.mubr.bf16.mxu0 %v842
      %2006 = vmatmul.mubr.bf16.gmra.mrb[0].mxu0 %v935
      %v2007 = vpop.f32.mrb[0].mxu0
      %v2008 = vadd.f32 0.0, %v2007
      %v2009 = vpop.f32.mrb[0].mxu0
      %v2010 = vpop.f32.mrb[0].mxu0
      %v2011 = vadd.f32 0.0, %v2010
      %v2012 = vpop.f32.mrb[0].mxu0
      %2013 = vmatprep.mubr.bf16.mxu0 %v843
      %2014 = vmatmul.mubr.bf16.gmra.mrb[0].mxu0 %v936
      %v2015 = vpop.f32.mrb[0].mxu0
      %v2016 = vadd.f32 0.0, %v2015
      %v2017 = vpop.f32.mrb[0].mxu0
      %v2018 = vpop.f32.mrb[0].mxu0
      %v2019 = vadd.f32 0.0, %v2018
      %v2020 = vpop.f32.mrb[0].mxu0
      %2021 = vmatprep.mubr.bf16.mxu0 %v844
      %2022 = vmatmul.mubr.bf16.gmra.mrb[0].mxu0 %v937
      %v2023 = vpop.f32.mrb[0].mxu0
      %v2024 = vadd.f32 0.0, %v2023
      %v2025 = vpop.f32.mrb[0].mxu0
      %v2026 = vpop.f32.mrb[0].mxu0
      %v2027 = vadd.f32 0.0, %v2026
      %v2028 = vpop.f32.mrb[0].mxu0
      %2029 = vmatprep.mubr.bf16.mxu0 %v845
      %2030 = vmatmul.mubr.bf16.gmra.mrb[0].mxu0 %v938
      %v2031 = vpop.f32.mrb[0].mxu0
      %v2032 = vadd.f32 0.0, %v2031
      %v2033 = vpop.f32.mrb[0].mxu0
      %v2034 = vpop.f32.mrb[0].mxu0
      %v2035 = vadd.f32 0.0, %v2034
      %v2036 = vpop.f32.mrb[0].mxu0
      %2037 = vmatprep.mubr.bf16.mxu0 %v846
      %2038 = vmatmul.mubr.bf16.gmra.mrb[0].mxu0 %v939
      %v2039 = vpop.f32.mrb[0].mxu0
      %v2040 = vadd.f32 0.0, %v2039
      %v2041 = vpop.f32.mrb[0].mxu0
      %v2042 = vpop.f32.mrb[0].mxu0
      %v2043 = vadd.f32 0.0, %v2042
      %v2044 = vpop.f32.mrb[0].mxu0
      %2045 = vdwg.mxu0
      %2046 = vmatprep.subr.bf16.mxu0 0
      %2047 = vmatpush1.bf16.msra.mxu0 %v1917
      %2048 = vmatprep.subr.bf16.mxu0 0
      %2049 = vmatpush1.bf16.msra.mxu0 %v1918
      %2050 = vmatprep.subr.bf16.mxu0 0
      %2051 = vmatpush1.bf16.msra.mxu0 %v1919
      %2052 = vmatprep.subr.bf16.mxu0 0
      %2053 = vmatpush1.bf16.msra.mxu0 %v1920
      %2054 = vmatprep.subr.bf16.mxu0 0
      %2055 = vmatpush1.bf16.msra.mxu0 %v1921
      %2056 = vmatprep.subr.bf16.mxu0 0
      %2057 = vmatpush1.bf16.msra.mxu0 %v1922
      %2058 = vmatprep.subr.bf16.mxu0 0
      %2059 = vmatpush1.bf16.msra.mxu0 %v1923
      %2060 = vmatprep.subr.bf16.mxu0 0
      %2061 = vmatpush1.bf16.msra.mxu0 %v1924
      %2062 = vmatprep.subr.bf16.mxu0 0
      %2063 = vmatpush1.bf16.msra.mxu0 0
      %2064 = vmatprep.subr.bf16.mxu0 0
      %2065 = vmatpush1.bf16.msra.mxu0 0
      %2066 = vmatprep.subr.bf16.mxu0 0
      %2067 = vmatpush1.bf16.msra.mxu0 0
      %2068 = vmatprep.subr.bf16.mxu0 0
      %2069 = vmatpush1.bf16.msra.mxu0 0
      %2070 = vmatprep.subr.bf16.mxu0 0
      %2071 = vmatpush1.bf16.msra.mxu0 0
      %2072 = vmatprep.subr.bf16.mxu0 0
      %2073 = vmatpush1.bf16.msra.mxu0 0
      %2074 = vmatprep.subr.bf16.mxu0 0
      %2075 = vmatpush1.bf16.msra.mxu0 0
      %2076 = vmatprep.subr.bf16.mxu0 0
      %2077 = vmatpush1.bf16.msra.mxu0 0
      %2078 = vmatprep.mubr.bf16.mxu0 0
      %2079 = vmatmul.mubr.bf16.gmra.mrb[0].mxu0 %v975
      %v2080 = vpop.f32.mrb[0].mxu0
      %v2081 = vadd.f32 %v1984, %v2080
      %v2082 = vpop.f32.mrb[0].mxu0
      %v2083 = vpop.f32.mrb[0].mxu0
      %v2084 = vadd.f32 %v1987, %v2083
      %v2085 = vpop.f32.mrb[0].mxu0
      %2086 = vmatprep.mubr.bf16.mxu0 0
      %2087 = vmatmul.mubr.bf16.gmra.mrb[0].mxu0 %v976
      %v2088 = vpop.f32.mrb[0].mxu0
      %v2089 = vadd.f32 %v1992, %v2088
      %v2090 = vpop.f32.mrb[0].mxu0
      %v2091 = vpop.f32.mrb[0].mxu0
      %v2092 = vadd.f32 %v1995, %v2091
      %v2093 = vpop.f32.mrb[0].mxu0
      %2094 = vmatprep.mubr.bf16.mxu0 0
      %2095 = vmatmul.mubr.bf16.gmra.mrb[0].mxu0 %v977
      %v2096 = vpop.f32.mrb[0].mxu0
      %v2097 = vadd.f32 %v2000, %v2096
      %v2098 = vpop.f32.mrb[0].mxu0
      %v2099 = vpop.f32.mrb[0].mxu0
      %v2100 = vadd.f32 %v2003, %v2099
      %v2101 = vpop.f32.mrb[0].mxu0
      %2102 = vmatprep.mubr.bf16.mxu0 0
      %2103 = vmatmul.mubr.bf16.gmra.mrb[0].mxu0 %v978
      %v2104 = vpop.f32.mrb[0].mxu0
      %v2105 = vadd.f32 %v2008, %v2104
      %v2106 = vpop.f32.mrb[0].mxu0
      %v2107 = vpop.f32.mrb[0].mxu0
      %v2108 = vadd.f32 %v2011, %v2107
      %v2109 = vpop.f32.mrb[0].mxu0
      %2110 = vmatprep.mubr.bf16.mxu0 0
      %2111 = vmatmul.mubr.bf16.gmra.mrb[0].mxu0 %v979
      %v2112 = vpop.f32.mrb[0].mxu0
      %v2113 = vadd.f32 %v2016, %v2112
      %v2114 = vpop.f32.mrb[0].mxu0
      %v2115 = vpop.f32.mrb[0].mxu0
      %v2116 = vadd.f32 %v2019, %v2115
      %v2117 = vpop.f32.mrb[0].mxu0
      %2118 = vmatprep.mubr.bf16.mxu0 0
      %2119 = vmatmul.mubr.bf16.gmra.mrb[0].mxu0 %v980
      %v2120 = vpop.f32.mrb[0].mxu0
      %v2121 = vadd.f32 %v2024, %v2120
      %v2122 = vpop.f32.mrb[0].mxu0
      %v2123 = vpop.f32.mrb[0].mxu0
      %v2124 = vadd.f32 %v2027, %v2123
      %v2125 = vpop.f32.mrb[0].mxu0
      %2126 = vmatprep.mubr.bf16.mxu0 0
      %2127 = vmatmul.mubr.bf16.gmra.mrb[0].mxu0 %v981
      %v2128 = vpop.f32.mrb[0].mxu0
      %v2129 = vadd.f32 %v2032, %v2128
      %v2130 = vpop.f32.mrb[0].mxu0
      %v2131 = vpop.f32.mrb[0].mxu0
      %v2132 = vadd.f32 %v2035, %v2131
      %v2133 = vpop.f32.mrb[0].mxu0
      %2134 = vmatprep.mubr.bf16.mxu0 0
      %2135 = vmatmul.mubr.bf16.gmra.mrb[0].mxu0 %v982
      %v2136 = vpop.f32.mrb[0].mxu0
      %v2137 = vadd.f32 %v2040, %v2136
      %v2138 = vpop.f32.mrb[0].mxu0
      %v2139 = vpop.f32.mrb[0].mxu0
      %v2140 = vadd.f32 %v2043, %v2139
      %v2141 = vpop.f32.mrb[0].mxu0
      %2142 = vdwg.mxu0
      %v2143 = vadd.f32 %v1694, %v2081
      %v2144 = vadd.f32 %v1697, %v2084
      %v2145 = vadd.f32 %v1702, %v2089
      %v2146 = vadd.f32 %v1705, %v2092
      %v2147 = vadd.f32 %v1710, %v2097
      %v2148 = vadd.f32 %v1713, %v2100
      %v2149 = vadd.f32 %v1718, %v2105
      %v2150 = vadd.f32 %v1721, %v2108
      %v2151 = vadd.f32 %v1726, %v2113
      %v2152 = vadd.f32 %v1729, %v2116
      %v2153 = vadd.f32 %v1734, %v2121
      %v2154 = vadd.f32 %v1737, %v2124
      %v2155 = vadd.f32 %v1742, %v2129
      %v2156 = vadd.f32 %v1745, %v2132
      %v2157 = vadd.f32 %v1750, %v2137
      %v2158 = vadd.f32 %v1753, %v2140
      %v2159 = vld [vmem:[%s2] sm:$0x1]
      %v2161 = vlaneseq
      %v2162 = vshrl.u32 %v2161, 7
      %v2163 = vsub.s32 0, %v2162
      %v2164 = vrot.slane %v2159, %v2163
      %v2166 = vadd.f32 %v2143, %v2164
      %v2167 = vadd.f32 %v2144, %v2164
      %v2168 = vadd.f32 %v2145, %v2164
      %v2169 = vadd.f32 %v2146, %v2164
      %v2170 = vadd.f32 %v2147, %v2164
      %v2171 = vadd.f32 %v2148, %v2164
      %v2172 = vadd.f32 %v2149, %v2164
      %v2173 = vadd.f32 %v2150, %v2164
      %v2174 = vadd.f32 %v2151, %v2164
      %v2175 = vadd.f32 %v2152, %v2164
      %v2176 = vadd.f32 %v2153, %v2164
      %v2177 = vadd.f32 %v2154, %v2164
      %v2178 = vadd.f32 %v2155, %v2164
      %v2179 = vadd.f32 %v2156, %v2164
      %v2180 = vadd.f32 %v2157, %v2164
      %v2181 = vadd.f32 %v2158, %v2164
      %v2182 = vpack.c.bf16 %v2167, %v2166
      %v2183 = vpack.c.bf16 %v2169, %v2168
      %v2184 = vpack.c.bf16 %v2171, %v2170
      %v2185 = vpack.c.bf16 %v2173, %v2172
      %v2186 = vpack.c.bf16 %v2175, %v2174
      %v2187 = vpack.c.bf16 %v2177, %v2176
      %v2188 = vpack.c.bf16 %v2179, %v2178
      %v2189 = vpack.c.bf16 %v2181, %v2180
      %v2198 = vunpack.c.l.b16 %v2182
      %v2199 = vunpack.c.h.b16 %v2182
      %v2200 = vunpack.c.l.b16 %v2183
      %v2201 = vunpack.c.h.b16 %v2183
      %v2202 = vunpack.c.l.b16 %v2184
      %v2203 = vunpack.c.h.b16 %v2184
      %v2204 = vunpack.c.l.b16 %v2185
      %v2205 = vunpack.c.h.b16 %v2185
      %v2206 = vunpack.c.l.b16 %v2186
      %v2207 = vunpack.c.h.b16 %v2186
      %v2208 = vunpack.c.l.b16 %v2187
      %v2209 = vunpack.c.h.b16 %v2187
      %v2210 = vunpack.c.l.b16 %v2188
      %v2211 = vunpack.c.h.b16 %v2188
      %v2212 = vunpack.c.l.b16 %v2189
      %v2213 = vunpack.c.h.b16 %v2189
      %v2214 = vpack.c.b16 %v2198, %v2198
      %v2215 = vpack.c.b16 %v2199, %v2199
      %v2216 = vpack.c.b16 %v2200, %v2200
      %v2217 = vpack.c.b16 %v2201, %v2201
      %v2218 = vpack.c.b16 %v2202, %v2202
      %v2219 = vpack.c.b16 %v2203, %v2203
      %v2220 = vpack.c.b16 %v2204, %v2204
      %v2221 = vpack.c.b16 %v2205, %v2205
      %v2222 = vpack.c.b16 %v2206, %v2206
      %v2223 = vpack.c.b16 %v2207, %v2207
      %v2224 = vpack.c.b16 %v2208, %v2208
      %v2225 = vpack.c.b16 %v2209, %v2209
      %v2226 = vpack.c.b16 %v2210, %v2210
      %v2227 = vpack.c.b16 %v2211, %v2211
      %v2228 = vpack.c.b16 %v2212, %v2212
      %v2229 = vpack.c.b16 %v2213, %v2213
      %2246 = vst [vmem:[%s236] sm:$0xf] %v2214
      %2247 = vst [vmem:[%s236 + $0x4] sm:$0xf] %v2215
      %2248 = vst [vmem:[%s236 + $0x8] sm:$0xf] %v2216
      %2249 = vst [vmem:[%s236 + $0xc] sm:$0xf] %v2217
      %2250 = vst [vmem:[%s236 + $0x10] sm:$0xf] %v2218
      %2251 = vst [vmem:[%s236 + $0x14] sm:$0xf] %v2219
      %2252 = vst [vmem:[%s236 + $0x18] sm:$0xf] %v2220
      %2253 = vst [vmem:[%s236 + $0x1c] sm:$0xf] %v2221
      %2254 = vst [vmem:[%s236 + $0x20] sm:$0xf] %v2222
      %2255 = vst [vmem:[%s236 + $0x24] sm:$0xf] %v2223
      %2256 = vst [vmem:[%s236 + $0x28] sm:$0xf] %v2224
      %2257 = vst [vmem:[%s236 + $0x2c] sm:$0xf] %v2225
      %2258 = vst [vmem:[%s236 + $0x30] sm:$0xf] %v2226
      %2259 = vst [vmem:[%s236 + $0x34] sm:$0xf] %v2227
      %2260 = vst [vmem:[%s236 + $0x38] sm:$0xf] %v2228
      %2261 = vst [vmem:[%s236 + $0x3c] sm:$0xf] %v2229
      %v2262 = vunpack.c.l.bf16 %v2182
      %v2263 = vunpack.c.h.bf16 %v2182
      %v2264 = vunpack.c.l.bf16 %v2183
      %v2265 = vunpack.c.h.bf16 %v2183
      %v2266 = vunpack.c.l.bf16 %v2184
      %v2267 = vunpack.c.h.bf16 %v2184
      %v2268 = vunpack.c.l.bf16 %v2185
      %v2269 = vunpack.c.h.bf16 %v2185
      %v2270 = vunpack.c.l.bf16 %v2186
      %v2271 = vunpack.c.h.bf16 %v2186
      %v2272 = vunpack.c.l.bf16 %v2187
      %v2273 = vunpack.c.h.bf16 %v2187
      %v2274 = vunpack.c.l.bf16 %v2188
      %v2275 = vunpack.c.h.bf16 %v2188
      %v2276 = vunpack.c.l.bf16 %v2189
      %v2277 = vunpack.c.h.bf16 %v2189
      %v2278 = vadd.f32 %v2262, %v2263
      %v2279 = vadd.f32 %v2278, %v2264
      %v2280 = vadd.f32 %v2279, %v2265
      %v2281 = vadd.f32 %v2280, %v2266
      %v2282 = vadd.f32 %v2281, %v2267
      %v2283 = vadd.f32 %v2282, %v2268
      %v2284 = vadd.f32 %v2283, %v2269
      %v2285 = vadd.f32 %v2284, %v2270
      %v2286 = vadd.f32 %v2285, %v2271
      %v2287 = vadd.f32 %v2286, %v2272
      %v2288 = vadd.f32 %v2287, %v2273
      %v2289 = vadd.f32 %v2288, %v2274
      %v2290 = vadd.f32 %v2289, %v2275
      %v2291 = vadd.f32 %v2290, %v2276
      %v2292 = vadd.f32 %v2291, %v2277
      %v2293 = vrot.slane %v2292, 4
      %v2294 = vadd.f32 %v2292, %v2293
      %v2295 = vrot.slane %v2294, 2
      %v2296 = vadd.f32 %v2294, %v2295
      %v2297 = vrot.slane %v2296, 1
      %v2298 = vadd.f32 %v2296, %v2297
      %v2299 = vmul.f32 %v2262, %v2262
      %v2300 = vmul.f32 %v2263, %v2263
      %v2301 = vmul.f32 %v2264, %v2264
      %v2302 = vmul.f32 %v2265, %v2265
      %v2303 = vmul.f32 %v2266, %v2266
      %v2304 = vmul.f32 %v2267, %v2267
      %v2305 = vmul.f32 %v2268, %v2268
      %v2306 = vmul.f32 %v2269, %v2269
      %v2307 = vmul.f32 %v2270, %v2270
      %v2308 = vmul.f32 %v2271, %v2271
      %v2309 = vmul.f32 %v2272, %v2272
      %v2310 = vmul.f32 %v2273, %v2273
      %v2311 = vmul.f32 %v2274, %v2274
      %v2312 = vmul.f32 %v2275, %v2275
      %v2313 = vmul.f32 %v2276, %v2276
      %v2314 = vmul.f32 %v2277, %v2277
      %v2315 = vadd.f32 %v2299, %v2300
      %v2316 = vadd.f32 %v2315, %v2301
      %v2317 = vadd.f32 %v2316, %v2302
      %v2318 = vadd.f32 %v2317, %v2303
      %v2319 = vadd.f32 %v2318, %v2304
      %v2320 = vadd.f32 %v2319, %v2305
      %v2321 = vadd.f32 %v2320, %v2306
      %v2322 = vadd.f32 %v2321, %v2307
      %v2323 = vadd.f32 %v2322, %v2308
      %v2324 = vadd.f32 %v2323, %v2309
      %v2325 = vadd.f32 %v2324, %v2310
      %v2326 = vadd.f32 %v2325, %v2311
      %v2327 = vadd.f32 %v2326, %v2312
      %v2328 = vadd.f32 %v2327, %v2313
      %v2329 = vadd.f32 %v2328, %v2314
      %v2330 = vrot.slane %v2329, 4
      %v2331 = vadd.f32 %v2329, %v2330
      %v2332 = vrot.slane %v2331, 2
      %v2333 = vadd.f32 %v2331, %v2332
      %v2334 = vrot.slane %v2333, 1
      %v2335 = vadd.f32 %v2333, %v2334
      // Predicated region
      $region273: #{vgg_block.4} parent=35 // pred_check
        %p2336 = pneg %p244
      $region274: #{vgg_block.4} parent=35 // pred_check_branch
        %2338 = sbr.rel (%p2336) target = $region276
      $region275: #{vgg_block.4} parent=35 // pred_region
        %2339 = vst [vmem:[%s241] sm:$0x3] 0.0
      $region276: #{vgg_block.4} parent=35 // pred_fallthru
        _
      %v2340 = vld [vmem:[%s241] sm:$0x3]
      %vm2341 = vcmask 1040384
      %v2342 = vsel %vm2341, %v2298, %v2335
      %v2343 = vadd.f32 %v2340, %v2342
      %2344 = vst [vmem:[%s241] sm:$0x3] %v2343
      %s2345 = smul.u32 8, %s23
      %p2346 = scmp.lt.s32.totalorder %s22, 1
      %s2347 = scalar_select %p2346, %s22, 1
      %p2348 = scmp.lt.s32.totalorder %s2345, 15
      %s2349 = scalar_select %p2348, %s2345, 15
      %s2350 = smul.addr %s2349, 2
      %s2351 = smul.addr %s2347, 32
      %s2352 = sadd.s32 %s2350, %s2351
      %s2353 = smul.addr %s2352, 4
      %s2354 = scalar_lea.vmem %s5, %s2353
      %p2355 = scmp.lt.s32.totalorder %s22, 1
      %s2356 = scalar_select %p2355, %s22, 1
      %s2357 = smul.addr %s2356, 2
      %s2358 = scalar_lea.vmem %s6, %s2357
      // Predicated region
      $region277: #{vgg_block.4} parent=35 // pred_check
        %p2359 = pneg %p134
      $region278: #{vgg_block.4} parent=35 // pred_check_branch
        %2361 = sbr.rel (%p2359) target = $region280
      $region279: #{vgg_block.4} parent=35 // pred_region
        %s2362 = smul.u32 8, %s23
      $region280: #{vgg_block.4} parent=35 // pred_fallthru
        _
      // Predicated region
      $region281: #{vgg_block.4} parent=35 // pred_check
        %p2363 = pneg %p160
      $region282: #{vgg_block.4} parent=35 // pred_check_branch
        %2365 = sbr.rel (%p2363) target = $region284
      $region283: #{vgg_block.4} parent=35 // pred_region
        _
      $region284: #{vgg_block.4} parent=35 // pred_fallthru
        _
    $region36: #{vgg_block.4} parent=5 // pred_fallthru
      _
    %p2366 = scmp.le.s32.totalorder 2, %s13
    // Predicated region
    $region285: #{vgg_block.4} parent=5 // pred_check
      %p2367 = pneg %p2366
    $region286: #{vgg_block.4} parent=5 // pred_check_branch
      %2369 = sbr.rel (%p2367) target = $region288
    $region287: #{vgg_block.4} parent=5 // pred_region
      %s2370 = ssub.s32 %s13, 2
      // Predicated region
      $region289: #{vgg_block.4} parent=287 // pred_check
        %p2371 = pneg %p140
      $region290: #{vgg_block.4} parent=287 // pred_check_branch
        %2373 = sbr.rel (%p2371) target = $region292
      $region291: #{vgg_block.4} parent=287 // pred_region
        %s2374 = smul.u32 8, %s25
        %p2375 = scmp.lt.s32.totalorder %s24, 1
        %s2376 = scalar_select %p2375, %s24, 1
        %p2377 = scmp.lt.s32.totalorder %s2374, 15
        %s2378 = scalar_select %p2377, %s2374, 15
        %s2379 = smul.addr %s2378, 2
        %s2380 = smul.addr %s2376, 32
        %s2381 = sadd.s32 %s2379, %s2380
        %s2382 = smul.addr %s2381, 4
        %s2383 = scalar_lea.vmem %s5, %s2382
      $region292: #{vgg_block.4} parent=287 // pred_fallthru
        _
      // Predicated region
      $region293: #{vgg_block.4} parent=287 // pred_check
        %p2384 = pneg %p166
      $region294: #{vgg_block.4} parent=287 // pred_check_branch
        %2386 = sbr.rel (%p2384) target = $region296
      $region295: #{vgg_block.4} parent=287 // pred_region
        %p2387 = scmp.lt.s32.totalorder %s24, 1
        %s2388 = scalar_select %p2387, %s24, 1
        %s2389 = smul.addr %s2388, 2
        %s2390 = scalar_lea.vmem %s6, %s2389
      $region296: #{vgg_block.4} parent=287 // pred_fallthru
        _
    $region288: #{vgg_block.4} parent=5 // pred_fallthru
      _
  $region6: #{vgg_block.4} parent=0 // loop_footer
    %s17 = sadd.s32 1, %s13
  $region7: #{vgg_block.4} parent=0 // loop_footer_branch
    %12 = sbr.rel target = $region3
  $region8: #{vgg_block.4} parent=0 // loop_exit
    _
  %2391 = vsyncmov [#allocation3]
  %s2392 = vpop.sfrf %2391
  %p2393 = scmp.eq.s32.totalorder %s2392, 0
  %p2394 = pneg %p2393
  %2396 = shalt.err (%p2394)
  %s2397 = scalar_lea.sflag [#allocation3], 1
  %2398 = vsyncmov %s2397
  %s2399 = vpop.sfrf %2398
  %p2400 = scmp.eq.s32.totalorder %s2399, 0
  %p2401 = pneg %p2400
  %2403 = shalt.err (%p2401)
  %s2404 = scalar_lea.sflag [#allocation3], 2
  %2405 = vsyncmov %s2404
  %s2406 = vpop.sfrf %2405
  %p2407 = scmp.eq.s32.totalorder %s2406, 0
  %p2408 = pneg %p2407
  %2410 = shalt.err (%p2408)
  %s2411 = scalar_lea.sflag [#allocation3], 3
  %2412 = vsyncmov %s2411
  %s2413 = vpop.sfrf %2412
  %p2414 = scmp.eq.s32.totalorder %s2413, 0
  %p2415 = pneg %p2414
  %2417 = shalt.err (%p2415)
  %s2418 = scalar_lea.sflag [#allocation3], 4
  %2419 = vsyncmov %s2418
  %s2420 = vpop.sfrf %2419
  %p2421 = scmp.eq.s32.totalorder %s2420, 0
  %p2422 = pneg %p2421
  %2424 = shalt.err (%p2422)
  %s2425 = scalar_lea.sflag [#allocation3], 5
  %2426 = vsyncmov %s2425
  %s2427 = vpop.sfrf %2426
  %p2428 = scmp.eq.s32.totalorder %s2427, 0
  %p2429 = pneg %p2428
  %2431 = shalt.err (%p2429)

</llo_original>
